<compile_context>
chip_gen: v7x
topology: tpu7x:2x2x1
jax: 0.10.0
libtpu: 0.0.40
codegen_flags: <defaults>
</compile_context>

<pallas_src>
import functools

import jax
import jax.numpy as jnp
from jax import lax
from jax.experimental import pallas as pl
from jax.experimental.pallas import tpu as pltpu


def _residual_block_kernel(x_ref, w1_ref, w2_ref, b1_ref, b2_ref, o_ref,
                           xt_ref, mid_ref, *, H, W, Wa, TH, Cp):
    """One (batch image, TH-row tile) per grid step.

    x_ref  : (1, (H+6)*Wa, Cp) bf16  whole padded image, spatially flattened,
                                     resident in VMEM per batch index.
    w?_ref : (9, Cp, Cp)       bf16  per-tap 3x3 weights (BN scale folded in).
    b?_ref : (1, Cp)           f32   folded BatchNorm shifts.
    o_ref  : (1, TH, W, Cp)    bf16  output row tile (lane-dense, padded Cp).
    xt_ref : ((TH+5)*Wa + 8, Cp) bf16 scratch: staged input rows for this tile.
    mid_ref: ((TH+2)*Wa + 8, Cp) bf16 scratch: conv1 output (with halos).
    """
    f32, bf16 = jnp.float32, jnp.bfloat16
    t = pl.program_id(1)
    nt = pl.num_programs(1)
    L1 = (TH + 2) * Wa      # conv1 rows computed (incl. 1-row halo each side)
    L2 = TH * Wa            # conv2 / output rows

    # Stage the TH+5 padded input rows this tile needs with ONE aligned dynamic
    # copy; every matmul LHS below is then a *static* slice of VMEM scratch.
    n_in = (TH + 5) * Wa
    start = pl.multiple_of(t * (TH * Wa), 8)
    xt_ref[0:n_in, :] = x_ref[0, pl.ds(start, n_in), :]
    xt_ref[n_in:, :] = jnp.zeros((8, Cp), bf16)   # slack rows (wrap reads only)

    # ---- conv1: 9 shift-accumulated per-tap MXU matmuls (no im2col slab) ----
    acc1 = jnp.zeros((L1, Cp), f32)
    for t9 in range(9):
        ky, kx = divmod(t9, 3)
        off = (ky + 1) * Wa + (kx - 1)
        acc1 = acc1 + jnp.dot(xt_ref[off:off + L1, :], w1_ref[t9],
                              preferred_element_type=f32)

    # BN1 shift (scale already folded into w1) + ReLU + halo zeroing fused into
    # one VPU select; stage the bf16 intermediate for conv2.
    h1 = jnp.maximum(acc1 + b1_ref[...], 0.0).reshape(TH + 2, Wa, Cp)
    col = lax.broadcasted_iota(jnp.int32, (TH + 2, Wa, 1), 1)
    row = lax.broadcasted_iota(jnp.int32, (TH + 2, Wa, 1), 0)
    halo = (col == 0) | (col >= W + 1)
    halo = halo | ((t == 0) & (row == 0)) | ((t == nt - 1) & (row == TH + 1))
    mid_ref[0:L1, :] = jnp.where(halo, 0.0, h1).reshape(L1, Cp).astype(bf16)
    mid_ref[L1:, :] = jnp.zeros((8, Cp), bf16)    # slack rows (wrap reads only)

    # ---- conv2: same shift-accumulated per-tap matmuls over the staged mid ----
    acc2 = jnp.zeros((L2, Cp), f32)
    for t9 in range(9):
        ky, kx = divmod(t9, 3)
        off = ky * Wa + kx
        acc2 = acc2 + jnp.dot(mid_ref[off:off + L2, :], w2_ref[t9],
                              preferred_element_type=f32)

    # BN2 shift + identity shortcut + final ReLU; drop padded columns and emit
    # a lane-dense bf16 tile.
    resid = xt_ref[3 * Wa + 1:3 * Wa + 1 + L2, :].reshape(TH, Wa, Cp)[:, :W, :]
    y = acc2.reshape(TH, Wa, Cp)[:, :W, :] + b2_ref[...] + resid.astype(f32)
    o_ref[0] = jnp.maximum(y, 0.0).astype(bf16)


def residual_block_nhwc(x_nhwc, w1_hwio, w2_hwio, scale1, shift1, scale2, shift2,
                        *, row_tile=8):
    """x_nhwc: (N, H, W, C) f32; w?_hwio: (3,3,C,C); scale/shift: (C,) f32.

    Returns (N, H, W, Cp) bf16 with lane-dense padded channels (consumer keeps
    the padded layout or slices it).
    """
    N, H, W, C = x_nhwc.shape
    Cp = max(128, ((C + 127) // 128) * 128)       # lane-dense channel padding
    cpad = Cp - C
    Wa = ((W + 2 + 7) // 8) * 8                   # padded width, multiple of 8
    TH = row_tile if H % row_tile == 0 else H     # row-tile height

    # Single pad pass: 3-row / (1, Wa-W-1)-col halo, channel pad, bf16 cast,
    # then flatten rows*cols into one spatial axis so the kernel can take
    # contiguous shifted row slices.
    xp = jnp.pad(x_nhwc, ((0, 0), (3, 3), (1, Wa - W - 1), (0, cpad)))
    xf = xp.astype(jnp.bfloat16).reshape(N, (H + 6) * Wa, Cp)

    def prep_w(w, scale):
        # Fold BN scale into the conv output channels in f32 *before* bf16 cast.
        w = (w * scale[None, None, None, :]).astype(jnp.float32)
        w = jnp.pad(w, ((0, 0), (0, 0), (0, cpad), (0, cpad)))
        return w.reshape(9, Cp, Cp).astype(jnp.bfloat16)

    w1r = prep_w(w1_hwio, scale1)
    w2r = prep_w(w2_hwio, scale2)
    b1 = jnp.pad(shift1, (0, cpad)).astype(jnp.float32)[None, :]
    b2 = jnp.pad(shift2, (0, cpad)).astype(jnp.float32)[None, :]

    Rf = (H + 6) * Wa
    kernel = functools.partial(_residual_block_kernel,
                               H=H, W=W, Wa=Wa, TH=TH, Cp=Cp)

    # Explicit VMEM budget from the real footprint (never below the 32 MiB default).
    foot = (2 * Rf * Cp * 2                        # resident input, double-buffered
            + 2 * 2 * 9 * Cp * Cp * 2              # both weight tensors, 2 buffers
            + 2 * TH * W * Cp * 2                  # output blocks
            + ((TH + 5) * Wa + 8) * Cp * 2         # xt scratch
            + ((TH + 2) * Wa + 8) * Cp * 2         # mid scratch
            + 4 * (TH + 2) * Wa * Cp * 4)          # f32 accumulators / temporaries
    vmem_limit = int(max(32 * 2**20, min(100 * 2**20, 2 * foot)))

    yp = pl.pallas_call(
        kernel,
        out_shape=jax.ShapeDtypeStruct((N, H, W, Cp), jnp.bfloat16),
        grid_spec=pltpu.PrefetchScalarGridSpec(
            num_scalar_prefetch=0,
            grid=(N, H // TH),
            in_specs=[
                pl.BlockSpec((1, Rf, Cp), lambda n, t: (n, 0, 0)),
                pl.BlockSpec((9, Cp, Cp), lambda n, t: (0, 0, 0)),
                pl.BlockSpec((9, Cp, Cp), lambda n, t: (0, 0, 0)),
                pl.BlockSpec((1, Cp), lambda n, t: (0, 0)),
                pl.BlockSpec((1, Cp), lambda n, t: (0, 0)),
            ],
            out_specs=pl.BlockSpec((1, TH, W, Cp), lambda n, t: (n, t, 0, 0)),
            scratch_shapes=[
                pltpu.VMEM(((TH + 5) * Wa + 8, Cp), jnp.bfloat16),   # staged input
                pltpu.VMEM(((TH + 2) * Wa + 8, Cp), jnp.bfloat16),   # conv1 output
            ],
        ),
        compiler_params=pltpu.CompilerParams(
            dimension_semantics=("parallel", "parallel"),
            vmem_limit_bytes=vmem_limit),
    )(xf, w1r, w2r, b1, b2)
    return yp


def residual_block_nchw(x_nchw, w1_oihw, w2_oihw, bn1, bn2):
    """PyTorch-convention wrapper: NCHW input, OIHW weights, eval-mode BN."""
    C = x_nchw.shape[1]
    assert w1_oihw.shape == (C, C, 3, 3) and w2_oihw.shape == (C, C, 3, 3), (
        "identity-shortcut ResidualBlock requires stride=1, inchannel==outchannel")
    eps = 1e-5
    g1, be1, m1, v1 = bn1
    g2, be2, m2, v2 = bn2
    scale1 = g1 / jnp.sqrt(v1 + eps)
    shift1 = be1 - m1 * scale1
    scale2 = g2 / jnp.sqrt(v2 + eps)
    shift2 = be2 - m2 * scale2

    w1 = jnp.transpose(w1_oihw, (2, 3, 1, 0))        # OIHW -> HWIO
    w2 = jnp.transpose(w2_oihw, (2, 3, 1, 0))
    x_nhwc = jnp.transpose(x_nchw, (0, 2, 3, 1))
    y = residual_block_nhwc(x_nhwc, w1, w2, scale1, shift1, scale2, shift2)
    # The kernel emits lane-dense channel-padded bf16; slice back to C channels
    # only at this torch-layout boundary (real consumers keep the padded layout).
    return jnp.transpose(y[..., :C], (0, 3, 1, 2))   # back to NCHW (bf16)


def _reference_nhwc(x_nhwc, w1, w2, s1, b1, s2, b2):
    dn = ("NHWC", "HWIO", "NHWC")
    y = jax.lax.conv_general_dilated(x_nhwc, w1, (1, 1), "SAME",
                                     dimension_numbers=dn)
    y = jnp.maximum(y * s1 + b1, 0.0)
    y = jax.lax.conv_general_dilated(y, w2, (1, 1), "SAME",
                                     dimension_numbers=dn)
    y = y * s2 + b2
    return jnp.maximum(y + x_nhwc, 0.0)


if __name__ == "__main__":
    N, C, H, W = 2, 8, 16, 16   # inchannel == outchannel, stride = 1
    key = jax.random.PRNGKey(0)
    kx_, kw1, kw2, kg1, kb1, km1, kv1, kg2, kb2, km2, kv2 = jax.random.split(key, 11)

    x_nchw = jax.random.normal(kx_, (N, C, H, W), jnp.float32)

    w1_oihw = 0.1 * jax.random.normal(kw1, (C, C, 3, 3), jnp.float32)
    w2_oihw = 0.1 * jax.random.normal(kw2, (C, C, 3, 3), jnp.float32)

    bn1 = (1.0 + 0.1 * jax.random.normal(kg1, (C,), jnp.float32),   # gamma
           0.1 * jax.random.normal(kb1, (C,), jnp.float32),         # beta
           0.1 * jax.random.normal(km1, (C,), jnp.float32),         # running_mean
           1.0 + 0.1 * jax.random.uniform(kv1, (C,), jnp.float32))  # running_var
    bn2 = (1.0 + 0.1 * jax.random.normal(kg2, (C,), jnp.float32),
           0.1 * jax.random.normal(kb2, (C,), jnp.float32),
           0.1 * jax.random.normal(km2, (C,), jnp.float32),
           1.0 + 0.1 * jax.random.uniform(kv2, (C,), jnp.float32))

    out = jax.block_until_ready(residual_block_nchw(x_nchw, w1_oihw, w2_oihw,
                                                    bn1, bn2))

    # Correctness check against a pure-JAX f32 reference.  Kernel uses bf16
    # activations/weights/output with f32 accumulation, so compare against the
    # bf16-rounded reference with a loose tolerance.
    eps = 1e-5
    s1 = bn1[0] / jnp.sqrt(bn1[3] + eps); b1 = bn1[1] - bn1[2] * s1
    s2 = bn2[0] / jnp.sqrt(bn2[3] + eps); b2 = bn2[1] - bn2[2] * s2
    ref = _reference_nhwc(jnp.transpose(x_nchw, (0, 2, 3, 1)),
                          jnp.transpose(w1_oihw, (2, 3, 1, 0)),
                          jnp.transpose(w2_oihw, (2, 3, 1, 0)),
                          s1, b1, s2, b2)
    ref = jnp.transpose(ref, (0, 3, 1, 2))
    ref_bf16 = ref.astype(jnp.bfloat16).astype(jnp.float32)

    assert out.shape == (N, C, H, W)
    err = float(jnp.max(jnp.abs(out.astype(jnp.float32) - ref_bf16)))
    assert err < 5e-2, err

    print("KERNEL_OK")
</pallas_src>

<mosaic_0001>
module attributes {stable_mosaic.version = 11 : i64} {
  func.func @_residual_block_kernel(%arg0: i32, %arg1: i32, %arg2: memref<1x528x128xbf16, #tpu.memory_space<vmem>>, %arg3: memref<9x128x128xbf16, #tpu.memory_space<vmem>>, %arg4: memref<9x128x128xbf16, #tpu.memory_space<vmem>>, %arg5: memref<1x128xf32, #tpu.memory_space<vmem>>, %arg6: memref<1x128xf32, #tpu.memory_space<vmem>>, %arg7: memref<1x8x16x128xbf16, #tpu.memory_space<vmem>>, %arg8: memref<320x128xbf16, #tpu.memory_space<vmem>>, %arg9: memref<248x128xbf16, #tpu.memory_space<vmem>>) attributes {dimension_semantics = [#tpu.dimension_semantics<parallel>, #tpu.dimension_semantics<parallel>], iteration_bounds = array<i64: 2, 2>, scalar_prefetch = 0 : i64, scratch_operands = 2 : i64, tpu.core_type = #tpu.core_type<tc>, window_params = [{transform_indices = @transform_0, window_bounds = array<i64: 1, 528, 128>}, {pipeline_mode = #tpu.pipeline_mode<synchronous>, transform_indices = @transform_1, window_bounds = array<i64: 9, 128, 128>}, {pipeline_mode = #tpu.pipeline_mode<synchronous>, transform_indices = @transform_2, window_bounds = array<i64: 9, 128, 128>}, {pipeline_mode = #tpu.pipeline_mode<synchronous>, transform_indices = @transform_3, window_bounds = array<i64: 1, 128>}, {pipeline_mode = #tpu.pipeline_mode<synchronous>, transform_indices = @transform_4, window_bounds = array<i64: 1, 128>}, {transform_indices = @transform_5, window_bounds = array<i64: 1, 8, 16, 128>}]} {
    %c192_i32 = arith.constant 192 : i32
    %0 = arith.muli %arg1, %c192_i32 : i32
    %1 = tpu.assume_multiple %0, 8 : i32
    %c0 = arith.constant 0 : index
    %2 = arith.index_cast %1 : i32 to index
    %c0_0 = arith.constant 0 : index
    %3 = vector.load %arg2[%c0, %2, %c0_0] : memref<1x528x128xbf16, #tpu.memory_space<vmem>>, vector<1x312x128xbf16>
    %4 = vector.shape_cast %3 : vector<1x312x128xbf16> to vector<312x128xbf16>
    %c0_1 = arith.constant 0 : index
    %c0_2 = arith.constant 0 : index
    %5 = vector.load %arg8[%c0_1, %c0_2] : memref<320x128xbf16, #tpu.memory_space<vmem>>, vector<312x128xbf16>
    tpu.vector_store %arg8[%c0_1, %c0_2], %4 {strides = array<i32>} : memref<320x128xbf16, #tpu.memory_space<vmem>>, vector<312x128xbf16>,
    %cst = arith.constant 0.000000e+00 : bf16
    %6 = vector.broadcast %cst : bf16 to vector<8x128xbf16>
    %c312 = arith.constant 312 : index
    %c0_3 = arith.constant 0 : index
    %7 = vector.load %arg8[%c312, %c0_3] : memref<320x128xbf16, #tpu.memory_space<vmem>>, vector<8x128xbf16>
    tpu.vector_store %arg8[%c312, %c0_3], %6 {strides = array<i32>} : memref<320x128xbf16, #tpu.memory_space<vmem>>, vector<8x128xbf16>,
    %cst_4 = arith.constant 0.000000e+00 : f32
    %8 = vector.broadcast %cst_4 : f32 to vector<240x128xf32>
    %c23 = arith.constant 23 : index
    %c0_5 = arith.constant 0 : index
    %9 = vector.load %arg8[%c23, %c0_5] : memref<320x128xbf16, #tpu.memory_space<vmem>>, vector<240x128xbf16>
    %c0_6 = arith.constant 0 : index
    %c0_7 = arith.constant 0 : index
    %c0_8 = arith.constant 0 : index
    %10 = vector.load %arg3[%c0_6, %c0_7, %c0_8] : memref<9x128x128xbf16, #tpu.memory_space<vmem>>, vector<1x128x128xbf16>
    %11 = vector.shape_cast %10 : vector<1x128x128xbf16> to vector<128x128xbf16>
    %cst_9 = arith.constant dense<0.000000e+00> : vector<240x128xf32>
    %12 = tpu.matmul %9, %11, %cst_9 {dimension_numbers = #tpu.dot_dimension_numbers<[1], [0], [0], [1], [0, 0, 1, 1], [], []>} : vector<240x128xbf16>, vector<128x128xbf16>, vector<240x128xf32> -> vector<240x128xf32>
    %13 = arith.addf %8, %12 : vector<240x128xf32>
    %c24 = arith.constant 24 : index
    %c0_10 = arith.constant 0 : index
    %14 = vector.load %arg8[%c24, %c0_10] : memref<320x128xbf16, #tpu.memory_space<vmem>>, vector<240x128xbf16>
    %c1 = arith.constant 1 : index
    %c0_11 = arith.constant 0 : index
    %c0_12 = arith.constant 0 : index
    %15 = vector.load %arg3[%c1, %c0_11, %c0_12] : memref<9x128x128xbf16, #tpu.memory_space<vmem>>, vector<1x128x128xbf16>
    %16 = vector.shape_cast %15 : vector<1x128x128xbf16> to vector<128x128xbf16>
    %cst_13 = arith.constant dense<0.000000e+00> : vector<240x128xf32>
    %17 = tpu.matmul %14, %16, %cst_13 {dimension_numbers = #tpu.dot_dimension_numbers<[1], [0], [0], [1], [0, 0, 1, 1], [], []>} : vector<240x128xbf16>, vector<128x128xbf16>, vector<240x128xf32> -> vector<240x128xf32>
    %18 = arith.addf %13, %17 : vector<240x128xf32>
    %c25 = arith.constant 25 : index
    %c0_14 = arith.constant 0 : index
    %19 = vector.load %arg8[%c25, %c0_14] : memref<320x128xbf16, #tpu.memory_space<vmem>>, vector<240x128xbf16>
    %c2 = arith.constant 2 : index
    %c0_15 = arith.constant 0 : index
    %c0_16 = arith.constant 0 : index
    %20 = vector.load %arg3[%c2, %c0_15, %c0_16] : memref<9x128x128xbf16, #tpu.memory_space<vmem>>, vector<1x128x128xbf16>
    %21 = vector.shape_cast %20 : vector<1x128x128xbf16> to vector<128x128xbf16>
    %cst_17 = arith.constant dense<0.000000e+00> : vector<240x128xf32>
    %22 = tpu.matmul %19, %21, %cst_17 {dimension_numbers = #tpu.dot_dimension_numbers<[1], [0], [0], [1], [0, 0, 1, 1], [], []>} : vector<240x128xbf16>, vector<128x128xbf16>, vector<240x128xf32> -> vector<240x128xf32>
    %23 = arith.addf %18, %22 : vector<240x128xf32>
    %c47 = arith.constant 47 : index
    %c0_18 = arith.constant 0 : index
    %24 = vector.load %arg8[%c47, %c0_18] : memref<320x128xbf16, #tpu.memory_space<vmem>>, vector<240x128xbf16>
    %c3 = arith.constant 3 : index
    %c0_19 = arith.constant 0 : index
    %c0_20 = arith.constant 0 : index
    %25 = vector.load %arg3[%c3, %c0_19, %c0_20] : memref<9x128x128xbf16, #tpu.memory_space<vmem>>, vector<1x128x128xbf16>
    %26 = vector.shape_cast %25 : vector<1x128x128xbf16> to vector<128x128xbf16>
    %cst_21 = arith.constant dense<0.000000e+00> : vector<240x128xf32>
    %27 = tpu.matmul %24, %26, %cst_21 {dimension_numbers = #tpu.dot_dimension_numbers<[1], [0], [0], [1], [0, 0, 1, 1], [], []>} : vector<240x128xbf16>, vector<128x128xbf16>, vector<240x128xf32> -> vector<240x128xf32>
    %28 = arith.addf %23, %27 : vector<240x128xf32>
    %c48 = arith.constant 48 : index
    %c0_22 = arith.constant 0 : index
    %29 = vector.load %arg8[%c48, %c0_22] : memref<320x128xbf16, #tpu.memory_space<vmem>>, vector<240x128xbf16>
    %c4 = arith.constant 4 : index
    %c0_23 = arith.constant 0 : index
    %c0_24 = arith.constant 0 : index
    %30 = vector.load %arg3[%c4, %c0_23, %c0_24] : memref<9x128x128xbf16, #tpu.memory_space<vmem>>, vector<1x128x128xbf16>
    %31 = vector.shape_cast %30 : vector<1x128x128xbf16> to vector<128x128xbf16>
    %cst_25 = arith.constant dense<0.000000e+00> : vector<240x128xf32>
    %32 = tpu.matmul %29, %31, %cst_25 {dimension_numbers = #tpu.dot_dimension_numbers<[1], [0], [0], [1], [0, 0, 1, 1], [], []>} : vector<240x128xbf16>, vector<128x128xbf16>, vector<240x128xf32> -> vector<240x128xf32>
    %33 = arith.addf %28, %32 : vector<240x128xf32>
    %c49 = arith.constant 49 : index
    %c0_26 = arith.constant 0 : index
    %34 = vector.load %arg8[%c49, %c0_26] : memref<320x128xbf16, #tpu.memory_space<vmem>>, vector<240x128xbf16>
    %c5 = arith.constant 5 : index
    %c0_27 = arith.constant 0 : index
    %c0_28 = arith.constant 0 : index
    %35 = vector.load %arg3[%c5, %c0_27, %c0_28] : memref<9x128x128xbf16, #tpu.memory_space<vmem>>, vector<1x128x128xbf16>
    %36 = vector.shape_cast %35 : vector<1x128x128xbf16> to vector<128x128xbf16>
    %cst_29 = arith.constant dense<0.000000e+00> : vector<240x128xf32>
    %37 = tpu.matmul %34, %36, %cst_29 {dimension_numbers = #tpu.dot_dimension_numbers<[1], [0], [0], [1], [0, 0, 1, 1], [], []>} : vector<240x128xbf16>, vector<128x128xbf16>, vector<240x128xf32> -> vector<240x128xf32>
    %38 = arith.addf %33, %37 : vector<240x128xf32>
    %c71 = arith.constant 71 : index
    %c0_30 = arith.constant 0 : index
    %39 = vector.load %arg8[%c71, %c0_30] : memref<320x128xbf16, #tpu.memory_space<vmem>>, vector<240x128xbf16>
    %c6 = arith.constant 6 : index
    %c0_31 = arith.constant 0 : index
    %c0_32 = arith.constant 0 : index
    %40 = vector.load %arg3[%c6, %c0_31, %c0_32] : memref<9x128x128xbf16, #tpu.memory_space<vmem>>, vector<1x128x128xbf16>
    %41 = vector.shape_cast %40 : vector<1x128x128xbf16> to vector<128x128xbf16>
    %cst_33 = arith.constant dense<0.000000e+00> : vector<240x128xf32>
    %42 = tpu.matmul %39, %41, %cst_33 {dimension_numbers = #tpu.dot_dimension_numbers<[1], [0], [0], [1], [0, 0, 1, 1], [], []>} : vector<240x128xbf16>, vector<128x128xbf16>, vector<240x128xf32> -> vector<240x128xf32>
    %43 = arith.addf %38, %42 : vector<240x128xf32>
    %c72 = arith.constant 72 : index
    %c0_34 = arith.constant 0 : index
    %44 = vector.load %arg8[%c72, %c0_34] : memref<320x128xbf16, #tpu.memory_space<vmem>>, vector<240x128xbf16>
    %c7 = arith.constant 7 : index
    %c0_35 = arith.constant 0 : index
    %c0_36 = arith.constant 0 : index
    %45 = vector.load %arg3[%c7, %c0_35, %c0_36] : memref<9x128x128xbf16, #tpu.memory_space<vmem>>, vector<1x128x128xbf16>
    %46 = vector.shape_cast %45 : vector<1x128x128xbf16> to vector<128x128xbf16>
    %cst_37 = arith.constant dense<0.000000e+00> : vector<240x128xf32>
    %47 = tpu.matmul %44, %46, %cst_37 {dimension_numbers = #tpu.dot_dimension_numbers<[1], [0], [0], [1], [0, 0, 1, 1], [], []>} : vector<240x128xbf16>, vector<128x128xbf16>, vector<240x128xf32> -> vector<240x128xf32>
    %48 = arith.addf %43, %47 : vector<240x128xf32>
    %c73 = arith.constant 73 : index
    %c0_38 = arith.constant 0 : index
    %49 = vector.load %arg8[%c73, %c0_38] : memref<320x128xbf16, #tpu.memory_space<vmem>>, vector<240x128xbf16>
    %c8 = arith.constant 8 : index
    %c0_39 = arith.constant 0 : index
    %c0_40 = arith.constant 0 : index
    %50 = vector.load %arg3[%c8, %c0_39, %c0_40] : memref<9x128x128xbf16, #tpu.memory_space<vmem>>, vector<1x128x128xbf16>
    %51 = vector.shape_cast %50 : vector<1x128x128xbf16> to vector<128x128xbf16>
    %cst_41 = arith.constant dense<0.000000e+00> : vector<240x128xf32>
    %52 = tpu.matmul %49, %51, %cst_41 {dimension_numbers = #tpu.dot_dimension_numbers<[1], [0], [0], [1], [0, 0, 1, 1], [], []>} : vector<240x128xbf16>, vector<128x128xbf16>, vector<240x128xf32> -> vector<240x128xf32>
    %53 = arith.addf %48, %52 : vector<240x128xf32>
    %c0_42 = arith.constant 0 : index
    %c0_43 = arith.constant 0 : index
    %54 = vector.load %arg5[%c0_42, %c0_43] : memref<1x128xf32, #tpu.memory_space<vmem>>, vector<1x128xf32>
    %55 = vector.broadcast %54 : vector<1x128xf32> to vector<240x128xf32>
    %56 = arith.addf %53, %55 : vector<240x128xf32>
    %cst_44 = arith.constant 0.000000e+00 : f32
    %57 = vector.broadcast %cst_44 : f32 to vector<240x128xf32>
    %58 = arith.maximumf %56, %57 : vector<240x128xf32>
    %59 = vector.shape_cast %58 : vector<240x128xf32> to vector<10x24x128xf32>
    %60 = tpu.iota {dimensions = array<i32: 1>} : vector<10x24x1xi32>
    %61 = tpu.iota {dimensions = array<i32: 0>} : vector<10x24x1xi32>
    %c0_i32 = arith.constant 0 : i32
    %62 = vector.broadcast %c0_i32 : i32 to vector<10x24x1xi32>
    %63 = arith.cmpi eq, %60, %62 : vector<10x24x1xi32>
    %c17_i32 = arith.constant 17 : i32
    %64 = vector.broadcast %c17_i32 : i32 to vector<10x24x1xi32>
    %65 = arith.cmpi sge, %60, %64 : vector<10x24x1xi32>
    %66 = arith.ori %63, %65 : vector<10x24x1xi1>
    %c0_i32_45 = arith.constant 0 : i32
    %67 = arith.cmpi eq, %arg1, %c0_i32_45 : i32
    %c0_i32_46 = arith.constant 0 : i32
    %68 = vector.broadcast %c0_i32_46 : i32 to vector<10x24x1xi32>
    %69 = arith.cmpi eq, %61, %68 : vector<10x24x1xi32>
    %70 = vector.broadcast %67 : i1 to vector<10x24x1xi1>
    %71 = arith.andi %70, %69 : vector<10x24x1xi1>
    %72 = arith.ori %66, %71 : vector<10x24x1xi1>
    %c1_i32 = arith.constant 1 : i32
    %73 = arith.cmpi eq, %arg1, %c1_i32 : i32
    %c9_i32 = arith.constant 9 : i32
    %74 = vector.broadcast %c9_i32 : i32 to vector<10x24x1xi32>
    %75 = arith.cmpi eq, %61, %74 : vector<10x24x1xi32>
    %76 = vector.broadcast %73 : i1 to vector<10x24x1xi1>
    %77 = arith.andi %76, %75 : vector<10x24x1xi1>
    %78 = arith.ori %72, %77 : vector<10x24x1xi1>
    %cst_47 = arith.constant 0.000000e+00 : f32
    %79 = vector.shape_cast %78 : vector<10x24x1xi1> to vector<10x24x1xi1>
    %80 = vector.broadcast %79 : vector<10x24x1xi1> to vector<10x24x128xi1>
    %81 = vector.broadcast %cst_47 : f32 to vector<10x24x128xf32>
    %82 = arith.select %80, %81, %59 : vector<10x24x128xi1>, vector<10x24x128xf32>
    %83 = vector.shape_cast %82 : vector<10x24x128xf32> to vector<240x128xf32>
    %84 = arith.truncf %83 : vector<240x128xf32> to vector<240x128xbf16>
    %c0_48 = arith.constant 0 : index
    %c0_49 = arith.constant 0 : index
    %85 = vector.load %arg9[%c0_48, %c0_49] : memref<248x128xbf16, #tpu.memory_space<vmem>>, vector<240x128xbf16>
    tpu.vector_store %arg9[%c0_48, %c0_49], %84 {strides = array<i32>} : memref<248x128xbf16, #tpu.memory_space<vmem>>, vector<240x128xbf16>,
    %cst_50 = arith.constant 0.000000e+00 : bf16
    %86 = vector.broadcast %cst_50 : bf16 to vector<8x128xbf16>
    %c240 = arith.constant 240 : index
    %c0_51 = arith.constant 0 : index
    %87 = vector.load %arg9[%c240, %c0_51] : memref<248x128xbf16, #tpu.memory_space<vmem>>, vector<8x128xbf16>
    tpu.vector_store %arg9[%c240, %c0_51], %86 {strides = array<i32>} : memref<248x128xbf16, #tpu.memory_space<vmem>>, vector<8x128xbf16>,
    %cst_52 = arith.constant 0.000000e+00 : f32
    %88 = vector.broadcast %cst_52 : f32 to vector<192x128xf32>
    %c0_53 = arith.constant 0 : index
    %c0_54 = arith.constant 0 : index
    %89 = vector.load %arg9[%c0_53, %c0_54] : memref<248x128xbf16, #tpu.memory_space<vmem>>, vector<192x128xbf16>
    %c0_55 = arith.constant 0 : index
    %c0_56 = arith.constant 0 : index
    %c0_57 = arith.constant 0 : index
    %90 = vector.load %arg4[%c0_55, %c0_56, %c0_57] : memref<9x128x128xbf16, #tpu.memory_space<vmem>>, vector<1x128x128xbf16>
    %91 = vector.shape_cast %90 : vector<1x128x128xbf16> to vector<128x128xbf16>
    %cst_58 = arith.constant dense<0.000000e+00> : vector<192x128xf32>
    %92 = tpu.matmul %89, %91, %cst_58 {dimension_numbers = #tpu.dot_dimension_numbers<[1], [0], [0], [1], [0, 0, 1, 1], [], []>} : vector<192x128xbf16>, vector<128x128xbf16>, vector<192x128xf32> -> vector<192x128xf32>
    %93 = arith.addf %88, %92 : vector<192x128xf32>
    %c1_59 = arith.constant 1 : index
    %c0_60 = arith.constant 0 : index
    %94 = vector.load %arg9[%c1_59, %c0_60] : memref<248x128xbf16, #tpu.memory_space<vmem>>, vector<192x128xbf16>
    %c1_61 = arith.constant 1 : index
    %c0_62 = arith.constant 0 : index
    %c0_63 = arith.constant 0 : index
    %95 = vector.load %arg4[%c1_61, %c0_62, %c0_63] : memref<9x128x128xbf16, #tpu.memory_space<vmem>>, vector<1x128x128xbf16>
    %96 = vector.shape_cast %95 : vector<1x128x128xbf16> to vector<128x128xbf16>
    %cst_64 = arith.constant dense<0.000000e+00> : vector<192x128xf32>
    %97 = tpu.matmul %94, %96, %cst_64 {dimension_numbers = #tpu.dot_dimension_numbers<[1], [0], [0], [1], [0, 0, 1, 1], [], []>} : vector<192x128xbf16>, vector<128x128xbf16>, vector<192x128xf32> -> vector<192x128xf32>
    %98 = arith.addf %93, %97 : vector<192x128xf32>
    %c2_65 = arith.constant 2 : index
    %c0_66 = arith.constant 0 : index
    %99 = vector.load %arg9[%c2_65, %c0_66] : memref<248x128xbf16, #tpu.memory_space<vmem>>, vector<192x128xbf16>
    %c2_67 = arith.constant 2 : index
    %c0_68 = arith.constant 0 : index
    %c0_69 = arith.constant 0 : index
    %100 = vector.load %arg4[%c2_67, %c0_68, %c0_69] : memref<9x128x128xbf16, #tpu.memory_space<vmem>>, vector<1x128x128xbf16>
    %101 = vector.shape_cast %100 : vector<1x128x128xbf16> to vector<128x128xbf16>
    %cst_70 = arith.constant dense<0.000000e+00> : vector<192x128xf32>
    %102 = tpu.matmul %99, %101, %cst_70 {dimension_numbers = #tpu.dot_dimension_numbers<[1], [0], [0], [1], [0, 0, 1, 1], [], []>} : vector<192x128xbf16>, vector<128x128xbf16>, vector<192x128xf32> -> vector<192x128xf32>
    %103 = arith.addf %98, %102 : vector<192x128xf32>
    %c24_71 = arith.constant 24 : index
    %c0_72 = arith.constant 0 : index
    %104 = vector.load %arg9[%c24_71, %c0_72] : memref<248x128xbf16, #tpu.memory_space<vmem>>, vector<192x128xbf16>
    %c3_73 = arith.constant 3 : index
    %c0_74 = arith.constant 0 : index
    %c0_75 = arith.constant 0 : index
    %105 = vector.load %arg4[%c3_73, %c0_74, %c0_75] : memref<9x128x128xbf16, #tpu.memory_space<vmem>>, vector<1x128x128xbf16>
    %106 = vector.shape_cast %105 : vector<1x128x128xbf16> to vector<128x128xbf16>
    %cst_76 = arith.constant dense<0.000000e+00> : vector<192x128xf32>
    %107 = tpu.matmul %104, %106, %cst_76 {dimension_numbers = #tpu.dot_dimension_numbers<[1], [0], [0], [1], [0, 0, 1, 1], [], []>} : vector<192x128xbf16>, vector<128x128xbf16>, vector<192x128xf32> -> vector<192x128xf32>
    %108 = arith.addf %103, %107 : vector<192x128xf32>
    %c25_77 = arith.constant 25 : index
    %c0_78 = arith.constant 0 : index
    %109 = vector.load %arg9[%c25_77, %c0_78] : memref<248x128xbf16, #tpu.memory_space<vmem>>, vector<192x128xbf16>
    %c4_79 = arith.constant 4 : index
    %c0_80 = arith.constant 0 : index
    %c0_81 = arith.constant 0 : index
    %110 = vector.load %arg4[%c4_79, %c0_80, %c0_81] : memref<9x128x128xbf16, #tpu.memory_space<vmem>>, vector<1x128x128xbf16>
    %111 = vector.shape_cast %110 : vector<1x128x128xbf16> to vector<128x128xbf16>
    %cst_82 = arith.constant dense<0.000000e+00> : vector<192x128xf32>
    %112 = tpu.matmul %109, %111, %cst_82 {dimension_numbers = #tpu.dot_dimension_numbers<[1], [0], [0], [1], [0, 0, 1, 1], [], []>} : vector<192x128xbf16>, vector<128x128xbf16>, vector<192x128xf32> -> vector<192x128xf32>
    %113 = arith.addf %108, %112 : vector<192x128xf32>
    %c26 = arith.constant 26 : index
    %c0_83 = arith.constant 0 : index
    %114 = vector.load %arg9[%c26, %c0_83] : memref<248x128xbf16, #tpu.memory_space<vmem>>, vector<192x128xbf16>
    %c5_84 = arith.constant 5 : index
    %c0_85 = arith.constant 0 : index
    %c0_86 = arith.constant 0 : index
    %115 = vector.load %arg4[%c5_84, %c0_85, %c0_86] : memref<9x128x128xbf16, #tpu.memory_space<vmem>>, vector<1x128x128xbf16>
    %116 = vector.shape_cast %115 : vector<1x128x128xbf16> to vector<128x128xbf16>
    %cst_87 = arith.constant dense<0.000000e+00> : vector<192x128xf32>
    %117 = tpu.matmul %114, %116, %cst_87 {dimension_numbers = #tpu.dot_dimension_numbers<[1], [0], [0], [1], [0, 0, 1, 1], [], []>} : vector<192x128xbf16>, vector<128x128xbf16>, vector<192x128xf32> -> vector<192x128xf32>
    %118 = arith.addf %113, %117 : vector<192x128xf32>
    %c48_88 = arith.constant 48 : index
    %c0_89 = arith.constant 0 : index
    %119 = vector.load %arg9[%c48_88, %c0_89] : memref<248x128xbf16, #tpu.memory_space<vmem>>, vector<192x128xbf16>
    %c6_90 = arith.constant 6 : index
    %c0_91 = arith.constant 0 : index
    %c0_92 = arith.constant 0 : index
    %120 = vector.load %arg4[%c6_90, %c0_91, %c0_92] : memref<9x128x128xbf16, #tpu.memory_space<vmem>>, vector<1x128x128xbf16>
    %121 = vector.shape_cast %120 : vector<1x128x128xbf16> to vector<128x128xbf16>
    %cst_93 = arith.constant dense<0.000000e+00> : vector<192x128xf32>
    %122 = tpu.matmul %119, %121, %cst_93 {dimension_numbers = #tpu.dot_dimension_numbers<[1], [0], [0], [1], [0, 0, 1, 1], [], []>} : vector<192x128xbf16>, vector<128x128xbf16>, vector<192x128xf32> -> vector<192x128xf32>
    %123 = arith.addf %118, %122 : vector<192x128xf32>
    %c49_94 = arith.constant 49 : index
    %c0_95 = arith.constant 0 : index
    %124 = vector.load %arg9[%c49_94, %c0_95] : memref<248x128xbf16, #tpu.memory_space<vmem>>, vector<192x128xbf16>
    %c7_96 = arith.constant 7 : index
    %c0_97 = arith.constant 0 : index
    %c0_98 = arith.constant 0 : index
    %125 = vector.load %arg4[%c7_96, %c0_97, %c0_98] : memref<9x128x128xbf16, #tpu.memory_space<vmem>>, vector<1x128x128xbf16>
    %126 = vector.shape_cast %125 : vector<1x128x128xbf16> to vector<128x128xbf16>
    %cst_99 = arith.constant dense<0.000000e+00> : vector<192x128xf32>
    %127 = tpu.matmul %124, %126, %cst_99 {dimension_numbers = #tpu.dot_dimension_numbers<[1], [0], [0], [1], [0, 0, 1, 1], [], []>} : vector<192x128xbf16>, vector<128x128xbf16>, vector<192x128xf32> -> vector<192x128xf32>
    %128 = arith.addf %123, %127 : vector<192x128xf32>
    %c50 = arith.constant 50 : index
    %c0_100 = arith.constant 0 : index
    %129 = vector.load %arg9[%c50, %c0_100] : memref<248x128xbf16, #tpu.memory_space<vmem>>, vector<192x128xbf16>
    %c8_101 = arith.constant 8 : index
    %c0_102 = arith.constant 0 : index
    %c0_103 = arith.constant 0 : index
    %130 = vector.load %arg4[%c8_101, %c0_102, %c0_103] : memref<9x128x128xbf16, #tpu.memory_space<vmem>>, vector<1x128x128xbf16>
    %131 = vector.shape_cast %130 : vector<1x128x128xbf16> to vector<128x128xbf16>
    %cst_104 = arith.constant dense<0.000000e+00> : vector<192x128xf32>
    %132 = tpu.matmul %129, %131, %cst_104 {dimension_numbers = #tpu.dot_dimension_numbers<[1], [0], [0], [1], [0, 0, 1, 1], [], []>} : vector<192x128xbf16>, vector<128x128xbf16>, vector<192x128xf32> -> vector<192x128xf32>
    %133 = arith.addf %128, %132 : vector<192x128xf32>
    %c73_105 = arith.constant 73 : index
    %c0_106 = arith.constant 0 : index
    %134 = vector.load %arg8[%c73_105, %c0_106] : memref<320x128xbf16, #tpu.memory_space<vmem>>, vector<192x128xbf16>
    %135 = vector.shape_cast %134 : vector<192x128xbf16> to vector<8x24x128xbf16>
    %136 = vector.extract_strided_slice %135 {offsets = [0, 0, 0], sizes = [8, 16, 128], strides = [1, 1, 1]} : vector<8x24x128xbf16> to vector<8x16x128xbf16>
    %137 = vector.shape_cast %133 : vector<192x128xf32> to vector<8x24x128xf32>
    %138 = vector.extract_strided_slice %137 {offsets = [0, 0, 0], sizes = [8, 16, 128], strides = [1, 1, 1]} : vector<8x24x128xf32> to vector<8x16x128xf32>
    %c0_107 = arith.constant 0 : index
    %c0_108 = arith.constant 0 : index
    %139 = vector.load %arg6[%c0_107, %c0_108] : memref<1x128xf32, #tpu.memory_space<vmem>>, vector<1x128xf32>
    %140 = vector.shape_cast %139 : vector<1x128xf32> to vector<1x1x128xf32>
    %141 = vector.broadcast %140 : vector<1x1x128xf32> to vector<8x16x128xf32>
    %142 = arith.addf %138, %141 : vector<8x16x128xf32>
    %143 = arith.extf %136 : vector<8x16x128xbf16> to vector<8x16x128xf32>
    %144 = arith.addf %142, %143 : vector<8x16x128xf32>
    %cst_109 = arith.constant 0.000000e+00 : f32
    %145 = vector.broadcast %cst_109 : f32 to vector<8x16x128xf32>
    %146 = arith.maximumf %144, %145 : vector<8x16x128xf32>
    %147 = arith.truncf %146 : vector<8x16x128xf32> to vector<8x16x128xbf16>
    %c0_110 = arith.constant 0 : index
    %c0_111 = arith.constant 0 : index
    %c0_112 = arith.constant 0 : index
    %c0_113 = arith.constant 0 : index
    %148 = vector.load %arg7[%c0_110, %c0_111, %c0_112, %c0_113] : memref<1x8x16x128xbf16, #tpu.memory_space<vmem>>, vector<1x8x16x128xbf16>
    %149 = vector.shape_cast %148 : vector<1x8x16x128xbf16> to vector<8x16x128xbf16>
    %150 = vector.shape_cast %147 : vector<8x16x128xbf16> to vector<1x8x16x128xbf16>
    tpu.vector_store %arg7[%c0_110, %c0_111, %c0_112, %c0_113], %150 {strides = array<i32>} : memref<1x8x16x128xbf16, #tpu.memory_space<vmem>>, vector<1x8x16x128xbf16>,
    return
  }
  func.func @transform_0(%arg0: i32, %arg1: i32) -> (i32, i32, i32) {
    %c0_i32 = arith.constant 0 : i32
    %c0_i32_0 = arith.constant 0 : i32
    %c0_i32_1 = arith.constant 0 : i32
    return %arg0, %c0_i32, %c0_i32_0 : i32, i32, i32
  }
  func.func @transform_1(%arg0: i32, %arg1: i32) -> (i32, i32, i32) {
    %c0_i32 = arith.constant 0 : i32
    %c0_i32_0 = arith.constant 0 : i32
    %c0_i32_1 = arith.constant 0 : i32
    %c0_i32_2 = arith.constant 0 : i32
    return %c0_i32, %c0_i32_0, %c0_i32_1 : i32, i32, i32
  }
  func.func @transform_2(%arg0: i32, %arg1: i32) -> (i32, i32, i32) {
    %c0_i32 = arith.constant 0 : i32
    %c0_i32_0 = arith.constant 0 : i32
    %c0_i32_1 = arith.constant 0 : i32
    %c0_i32_2 = arith.constant 0 : i32
    return %c0_i32, %c0_i32_0, %c0_i32_1 : i32, i32, i32
  }
  func.func @transform_3(%arg0: i32, %arg1: i32) -> (i32, i32) {
    %c0_i32 = arith.constant 0 : i32
    %c0_i32_0 = arith.constant 0 : i32
    %c0_i32_1 = arith.constant 0 : i32
    return %c0_i32, %c0_i32_0 : i32, i32
  }
  func.func @transform_4(%arg0: i32, %arg1: i32) -> (i32, i32) {
    %c0_i32 = arith.constant 0 : i32
    %c0_i32_0 = arith.constant 0 : i32
    %c0_i32_1 = arith.constant 0 : i32
    return %c0_i32, %c0_i32_0 : i32, i32
  }
  func.func @transform_5(%arg0: i32, %arg1: i32) -> (i32, i32, i32, i32) {
    %c0_i32 = arith.constant 0 : i32
    %c0_i32_0 = arith.constant 0 : i32
    %c0_i32_1 = arith.constant 0 : i32
    return %arg0, %arg1, %c0_i32, %c0_i32_0 : i32, i32, i32, i32
  }
}

</mosaic_0001>

<llo_original>
// kernel: tpu_custom_call.1
$region0: #{tpu_custom_call.1}
  #allocation0 [shape = 'u32[]', space=smem, size = 0x4, offset = 0x4, fixed_abs, tag = 'smem constant byte address 0x4 - core index']
  #allocation1 [shape = 'u32[144,128]{1,0:T(1,128)}', space=vmem, size = 0x12000, scoped, tag = 'internal scratch']
  #allocation2 [shape = 'bf16[320,128]{1,0:T(16,128)(2,1)}', space=vmem, size = 0x14000, scoped, tag = 'scratch operand']
  #allocation3 [shape = 'bf16[248,128]{1,0:T(8,128)(2,1)}', space=vmem, size = 0xf800, scoped, tag = 'scratch operand']
  %s0 = inlined_call_operand.hbm [shape: bf16[2,528,128], index: 0, kind: input, shape index: {}]
  %s1 = inlined_call_operand.hbm [shape: bf16[9,128,128], index: 1, kind: input, shape index: {}]
  %s2 = inlined_call_operand.hbm [shape: bf16[9,128,128], index: 2, kind: input, shape index: {}]
  %s3 = inlined_call_operand.vmem [shape: f32[1,128], index: 3, kind: input, shape index: {}]
  %s4 = inlined_call_operand.vmem [shape: f32[1,128], index: 4, kind: input, shape index: {}]
  %s5 = inlined_call_operand.hbm [shape: bf16[2,16,16,128], index: 5, kind: output, shape index: {}]
  %s6 = sld [smem:[#allocation0]]
  $region65: #{tpu_custom_call.1} parent=0
    _
  %s8 = ssub.s32 1, %s6
  %s9 = scalar_select 0, %s8, %s6
  $region1: #{tpu_custom_call.1} parent=0
    #allocation4 [shape = 'u8[270336]{0}', space=vmem, size = 0x42000, scoped, tag = 'input window, operand 0']
    #allocation5 [shape = 's32[2]{0}', space=sflag, size = 0x8, scoped, tag = 'scoped memory for tpu_custom_call.1']
    #allocation6 [shape = 's32[2]{0}', space=sflag, size = 0x8, scoped, tag = 'scoped memory for tpu_custom_call.1']
    #allocation7 [shape = 'u8[294912]{0}', space=vmem, size = 0x48000, scoped, tag = 'input window, operand 1, single buffered']
    #allocation8 [shape = 's32[1]{0}', space=sflag, size = 0x4, scoped, tag = 'scoped memory for tpu_custom_call.1']
    #allocation9 [shape = 'u8[294912]{0}', space=vmem, size = 0x48000, scoped, tag = 'input window, operand 2, single buffered']
    #allocation10 [shape = 'u8[65536]{0}', space=vmem, size = 0x10000, scoped, tag = 'output window, operand 0']
    %10 = vsyncpa [#allocation5], 0
    %s11 = scalar_lea.sflag [#allocation5], 1
    %12 = vsyncpa %s11, 0
    %13 = vsyncpa [#allocation8], 0
    %14 = vsyncpa [#allocation6], 0
    %s15 = scalar_lea.sflag [#allocation6], 1
    %16 = vsyncpa %s15, 0
    loop: start=0, step=1, limit=6
    $region2: #{tpu_custom_call.1} parent=1 // loop_pre_header
      _
    $region3: #{tpu_custom_call.1} parent=1 // loop_header
      %s18 = sphi 0, %s22
      %p19 = scmp.ge.s32.totalorder %s18, 6
      %s25 = sphi 0, %s37
      %s26 = sphi 0, %s33
      %s27 = sphi 0, %s25
      %s28 = sphi 0, %s26
      %s29 = sphi 0, %s27
      %s30 = sphi 0, %s28
      %s40 = sphi 0, %s42
      %s43 = sphi 0, %s40
      %s44 = sphi 0, %s43
      %s60 = sphi 0, %s44
      %s64 = sphi 0, %s64
      %s66 = sphi 0, %s64
      %s67 = sphi 0, %s66
      %s81 = sphi 0, %s67
      %s85 = sphi 0, %s85
      %s87 = sphi 0, %s85
      %s88 = sphi 0, %s87
      %s102 = sphi 0, %s88
      %s106 = sphi 0, %s106
      %s108 = sphi 0, %s106
      %s109 = sphi 0, %s108
      %s123 = sphi 0, %s109
      %s127 = sphi 0, %s127
      %s129 = sphi 0, %s127
      %s130 = sphi 0, %s129
      %s144 = sphi 0, %s130
      %s152 = sphi 0, %s154
      %s155 = sphi 0, %s152
      %s156 = sphi 0, %s155
      %s172 = sphi 0, %s156
    $region4: #{tpu_custom_call.1} parent=1 // loop_header_branch
      %21 = sbr.rel (%p19) target = $region8
    $region5: #{tpu_custom_call.1} parent=1 // loop_body
      %s23 = ssub.s32 %s18, 1
      %s24 = ssub.s32 %s18, 2
      %s31 = sadd.s32 1, %s26
      %p32 = scmp.ge.s32.totalorder %s31, 2
      %s33 = scalar_select %p32, 0, %s31
      %s34 = sadd.s32 1, %s25
      %s35 = scalar_select %p32, %s34, %s25
      %p36 = scmp.ge.s32.totalorder %s35, 2
      %s37 = scalar_select %p36, 0, %s35
      %s38 = ssub.s32 %s25, %s37
      %p39 = scmp.eq.s32.totalorder %s38, 0
      %s41 = sadd.s32 %s40, 1
      %s42 = scalar_select %p39, %s40, %s41
      %p45 = pneg %p39
      %p46 = scmp.eq.s32.totalorder %s18, 3
      %p47 = por %p45, %p46
      %p48 = scmp.ne.s32.totalorder %s40, %s43
      %p49 = scmp.eq.s32.totalorder %s18, 0
      %p50 = por %p48, %p49
      %p51 = scmp.ne.s32.totalorder %s40, %s43
      %p52 = scmp.eq.s32.totalorder %s23, 3
      %p53 = por %p51, %p52
      %p54 = scmp.ne.s32.totalorder %s43, %s44
      %p55 = scmp.eq.s32.totalorder %s23, 0
      %p56 = por %p54, %p55
      %p57 = scmp.ne.s32.totalorder %s43, %s44
      %p58 = scmp.eq.s32.totalorder %s24, 3
      %p59 = por %p57, %p58
      %p61 = scmp.ne.s32.totalorder %s44, %s60
      %p62 = scmp.eq.s32.totalorder %s24, 0
      %p63 = por %p61, %p62
      %s65 = sadd.s32 %s64, 1
      %p68 = scmp.eq.s32.totalorder %s18, 3
      %p69 = scmp.ne.s32.totalorder %s64, %s66
      %p70 = scmp.eq.s32.totalorder %s18, 0
      %p71 = por %p69, %p70
      %p72 = scmp.ne.s32.totalorder %s64, %s66
      %p73 = scmp.eq.s32.totalorder %s23, 3
      %p74 = por %p72, %p73
      %p75 = scmp.ne.s32.totalorder %s66, %s67
      %p76 = scmp.eq.s32.totalorder %s23, 0
      %p77 = por %p75, %p76
      %p78 = scmp.ne.s32.totalorder %s66, %s67
      %p79 = scmp.eq.s32.totalorder %s24, 3
      %p80 = por %p78, %p79
      %p82 = scmp.ne.s32.totalorder %s67, %s81
      %p83 = scmp.eq.s32.totalorder %s24, 0
      %p84 = por %p82, %p83
      %s86 = sadd.s32 %s85, 1
      %p89 = scmp.eq.s32.totalorder %s18, 3
      %p90 = scmp.ne.s32.totalorder %s85, %s87
      %p91 = scmp.eq.s32.totalorder %s18, 0
      %p92 = por %p90, %p91
      %p93 = scmp.ne.s32.totalorder %s85, %s87
      %p94 = scmp.eq.s32.totalorder %s23, 3
      %p95 = por %p93, %p94
      %p96 = scmp.ne.s32.totalorder %s87, %s88
      %p97 = scmp.eq.s32.totalorder %s23, 0
      %p98 = por %p96, %p97
      %p99 = scmp.ne.s32.totalorder %s87, %s88
      %p100 = scmp.eq.s32.totalorder %s24, 3
      %p101 = por %p99, %p100
      %p103 = scmp.ne.s32.totalorder %s88, %s102
      %p104 = scmp.eq.s32.totalorder %s24, 0
      %p105 = por %p103, %p104
      %s107 = sadd.s32 %s106, 1
      %p110 = scmp.eq.s32.totalorder %s18, 3
      %p111 = scmp.ne.s32.totalorder %s106, %s108
      %p112 = scmp.eq.s32.totalorder %s18, 0
      %p113 = por %p111, %p112
      %p114 = scmp.ne.s32.totalorder %s106, %s108
      %p115 = scmp.eq.s32.totalorder %s23, 3
      %p116 = por %p114, %p115
      %p117 = scmp.ne.s32.totalorder %s108, %s109
      %p118 = scmp.eq.s32.totalorder %s23, 0
      %p119 = por %p117, %p118
      %p120 = scmp.ne.s32.totalorder %s108, %s109
      %p121 = scmp.eq.s32.totalorder %s24, 3
      %p122 = por %p120, %p121
      %p124 = scmp.ne.s32.totalorder %s109, %s123
      %p125 = scmp.eq.s32.totalorder %s24, 0
      %p126 = por %p124, %p125
      %s128 = sadd.s32 %s127, 1
      %p131 = scmp.eq.s32.totalorder %s18, 3
      %p132 = scmp.ne.s32.totalorder %s127, %s129
      %p133 = scmp.eq.s32.totalorder %s18, 0
      %p134 = por %p132, %p133
      %p135 = scmp.ne.s32.totalorder %s127, %s129
      %p136 = scmp.eq.s32.totalorder %s23, 3
      %p137 = por %p135, %p136
      %p138 = scmp.ne.s32.totalorder %s129, %s130
      %p139 = scmp.eq.s32.totalorder %s23, 0
      %p140 = por %p138, %p139
      %p141 = scmp.ne.s32.totalorder %s129, %s130
      %p142 = scmp.eq.s32.totalorder %s24, 3
      %p143 = por %p141, %p142
      %p145 = scmp.ne.s32.totalorder %s130, %s144
      %p146 = scmp.eq.s32.totalorder %s24, 0
      %p147 = por %p145, %p146
      %s148 = ssub.s32 %s25, %s37
      %s149 = ssub.s32 %s26, %s33
      %s150 = sor.u32 %s148, %s149
      %p151 = scmp.eq.s32.totalorder %s150, 0
      %s153 = sadd.s32 %s152, 1
      %s154 = scalar_select %p151, %s152, %s153
      %p157 = pneg %p151
      %p158 = scmp.eq.s32.totalorder %s18, 3
      %p159 = por %p157, %p158
      %p160 = scmp.ne.s32.totalorder %s152, %s155
      %p161 = scmp.eq.s32.totalorder %s18, 0
      %p162 = por %p160, %p161
      %p163 = scmp.ne.s32.totalorder %s152, %s155
      %p164 = scmp.eq.s32.totalorder %s23, 3
      %p165 = por %p163, %p164
      %p166 = scmp.ne.s32.totalorder %s155, %s156
      %p167 = scmp.eq.s32.totalorder %s23, 0
      %p168 = por %p166, %p167
      %p169 = scmp.ne.s32.totalorder %s155, %s156
      %p170 = scmp.eq.s32.totalorder %s24, 3
      %p171 = por %p169, %p170
      %p173 = scmp.ne.s32.totalorder %s156, %s172
      %p174 = scmp.eq.s32.totalorder %s24, 0
      %p175 = por %p173, %p174
      %p176 = scmp.le.s32.totalorder 1, %s18
      %p177 = scmp.lt.s32.totalorder %s18, 5
      %p178 = pnand %p176, %p177
      %p179 = pneg %p178
      // Predicated region
      $region9: #{tpu_custom_call.1} parent=5 // pred_check
        _
      $region10: #{tpu_custom_call.1} parent=5 // pred_check_branch
        %181 = sbr.rel (%p178) target = $region12
      $region11: #{tpu_custom_call.1} parent=5 // pred_region
        %s182 = ssub.s32 %s18, 1
        // Predicated region
        $region13: #{tpu_custom_call.1} parent=11 // pred_check
          %p183 = pneg %p77
        $region14: #{tpu_custom_call.1} parent=11 // pred_check_branch
          %185 = sbr.rel (%p183) target = $region16
        $region15: #{tpu_custom_call.1} parent=11 // pred_region
          %s187 = ssub.s32 9216, 9216
          %188 = vsyncadd [#allocation8], %s187
          %s189 = sshll.u32 [#allocation7], 4
          %s190 = int_to_ptr.vmem [resolvable:$true] %s189
          %195 = dma.hbm_to_vmem [thread:$0]  %s1, 9216, %s190, [#allocation8], 64, 64, 4
        $region16: #{tpu_custom_call.1} parent=11 // pred_fallthru
          _
        // Predicated region
        $region17: #{tpu_custom_call.1} parent=11 // pred_check
          %p196 = pneg %p98
        $region18: #{tpu_custom_call.1} parent=11 // pred_check_branch
          %198 = sbr.rel (%p196) target = $region20
        $region19: #{tpu_custom_call.1} parent=11 // pred_region
          %s200 = ssub.s32 9216, 9216
          %201 = vsyncadd [#allocation8], %s200
          %s202 = sshll.u32 [#allocation9], 4
          %s203 = int_to_ptr.vmem [resolvable:$true] %s202
          %208 = dma.hbm_to_vmem [thread:$0]  %s2, 9216, %s203, [#allocation8], 64, 64, 4
        $region20: #{tpu_custom_call.1} parent=11 // pred_fallthru
          _
        // Predicated region
        $region21: #{tpu_custom_call.1} parent=11 // pred_check
          %p209 = pneg %p119
        $region22: #{tpu_custom_call.1} parent=11 // pred_check_branch
          %211 = sbr.rel (%p209) target = $region24
        $region23: #{tpu_custom_call.1} parent=11 // pred_region
          _
        $region24: #{tpu_custom_call.1} parent=11 // pred_fallthru
          _
        // Predicated region
        $region25: #{tpu_custom_call.1} parent=11 // pred_check
          %p212 = pneg %p140
        $region26: #{tpu_custom_call.1} parent=11 // pred_check_branch
          %214 = sbr.rel (%p212) target = $region28
        $region27: #{tpu_custom_call.1} parent=11 // pred_region
          _
        $region28: #{tpu_custom_call.1} parent=11 // pred_fallthru
          _
      $region12: #{tpu_custom_call.1} parent=5 // pred_fallthru
        _
      %p215 = scmp.lt.s32.totalorder %s18, 4
      // Predicated region
      $region29: #{tpu_custom_call.1} parent=5 // pred_check
        %p216 = pneg %p215
      $region30: #{tpu_custom_call.1} parent=5 // pred_check_branch
        %218 = sbr.rel (%p216) target = $region32
      $region31: #{tpu_custom_call.1} parent=5 // pred_region
        // Predicated region
        $region33: #{tpu_custom_call.1} parent=31 // pred_check
          %p219 = pneg %p50
        $region34: #{tpu_custom_call.1} parent=31 // pred_check_branch
          %221 = sbr.rel (%p219) target = $region36
        $region35: #{tpu_custom_call.1} parent=31 // pred_region
          %s222 = sand.u32 %s40, 1
          %s223 = scalar_lea.sflag [#allocation5], %s222
          %s224 = sand.u32 %s40, 1
          %s225 = smul.addr %s224, 264
          %s226 = scalar_lea.vmem [#allocation4], %s225
          %s228 = ssub.s32 4224, 4224
          %229 = vsyncadd %s223, %s228
          %s230 = smul.addr %s25, 66
          %s231 = smul.addr %s230, 64
          %s232 = scalar_lea.hbm %s0, %s231
          %s233 = sshll.u32 %s226, 4
          %s234 = int_to_ptr.vmem [resolvable:$true] %s233
          %239 = dma.hbm_to_vmem [thread:$0]  %s232, 4224, %s234, %s223, 64, 64, 4
        $region36: #{tpu_custom_call.1} parent=31 // pred_fallthru
          _
      $region32: #{tpu_custom_call.1} parent=5 // pred_fallthru
        _
      %p240 = scmp.le.s32.totalorder 1, %s18
      %p241 = scmp.lt.s32.totalorder %s18, 5
      %p242 = pnand %p240, %p241
      %p243 = pneg %p242
      // Predicated region
      $region37: #{tpu_custom_call.1} parent=5 // pred_check
        _
      $region38: #{tpu_custom_call.1} parent=5 // pred_check_branch
        %245 = sbr.rel (%p242) target = $region40
      $region39: #{tpu_custom_call.1} parent=5 // pred_region
        %s246 = ssub.s32 %s18, 1
        %s247 = sand.u32 %s43, 1
        %s248 = scalar_lea.sflag [#allocation5], %s247
        %s249 = sand.u32 %s43, 1
        %s250 = smul.addr %s249, 264
        %s251 = scalar_lea.vmem [#allocation4], %s250
        // Predicated region
        $region41: #{tpu_custom_call.1} parent=39 // pred_check
          %p252 = pneg %p56
        $region42: #{tpu_custom_call.1} parent=39 // pred_check_branch
          %254 = sbr.rel (%p252) target = $region44
        $region43: #{tpu_custom_call.1} parent=39 // pred_region
          %255 = dma.done %s248, 4224
        $region44: #{tpu_custom_call.1} parent=39 // pred_fallthru
          _
        // Predicated region
        $region45: #{tpu_custom_call.1} parent=39 // pred_check
          %p256 = pneg %p77
        $region46: #{tpu_custom_call.1} parent=39 // pred_check_branch
          %258 = sbr.rel (%p256) target = $region48
        $region47: #{tpu_custom_call.1} parent=39 // pred_region
          %259 = dma.done [#allocation8], 9216
        $region48: #{tpu_custom_call.1} parent=39 // pred_fallthru
          _
        // Predicated region
        $region49: #{tpu_custom_call.1} parent=39 // pred_check
          %p260 = pneg %p98
        $region50: #{tpu_custom_call.1} parent=39 // pred_check_branch
          %262 = sbr.rel (%p260) target = $region52
        $region51: #{tpu_custom_call.1} parent=39 // pred_region
          %263 = dma.done [#allocation8], 9216
        $region52: #{tpu_custom_call.1} parent=39 // pred_fallthru
          _
        %s264 = sand.u32 %s43, 1
        %s265 = scalar_lea.sflag [#allocation5], %s264
        %s266 = sand.u32 %s43, 1
        %s267 = smul.addr %s266, 264
        %s268 = scalar_lea.vmem [#allocation4], %s267
        %p269 = pneg %p56
        %p270 = pneg %p53
        %p271 = pneg %p77
        %p272 = pneg %p74
        %p273 = pneg %p98
        %p274 = pneg %p95
        %p275 = pneg %p119
        %p276 = pneg %p116
        %p277 = pneg %p140
        %p278 = pneg %p137
        %p279 = pneg %p168
        %p280 = pneg %p165
        %s281 = sand.u32 %s155, 1
        %s282 = scalar_lea.sflag [#allocation6], %s281
        %s283 = sand.u32 %s155, 1
        %s284 = smul.addr %s283, 64
        %s285 = scalar_lea.vmem [#allocation10], %s284
        %s286 = smul.u32 8, %s28
        %s288 = smul.u32 %s28, 192
        %s289 = sshra.s32 %s288, 3
        %s290 = sand.u32 %s288, 7
        %s291 = smul.addr %s289, 4
        %s292 = scalar_lea.vmem %s251, %s291 [#allocation4]
        %v293 = vld [vmem:[%s292] sm:$0xf]
        %v294 = vld [vmem:[%s292 + $0x4] sm:$0xf]
        %v295 = vld [vmem:[%s292 + $0x8] sm:$0xf]
        %v296 = vld [vmem:[%s292 + $0xc] sm:$0xf]
        %v297 = vld [vmem:[%s292 + $0x10] sm:$0xf]
        %v298 = vld [vmem:[%s292 + $0x14] sm:$0xf]
        %v299 = vld [vmem:[%s292 + $0x18] sm:$0xf]
        %v300 = vld [vmem:[%s292 + $0x1c] sm:$0xf]
        %v301 = vld [vmem:[%s292 + $0x20] sm:$0xf]
        %v302 = vld [vmem:[%s292 + $0x24] sm:$0xf]
        %v303 = vld [vmem:[%s292 + $0x28] sm:$0xf]
        %v304 = vld [vmem:[%s292 + $0x2c] sm:$0xf]
        %v305 = vld [vmem:[%s292 + $0x30] sm:$0xf]
        %v306 = vld [vmem:[%s292 + $0x34] sm:$0xf]
        %v307 = vld [vmem:[%s292 + $0x38] sm:$0xf]
        %v308 = vld [vmem:[%s292 + $0x3c] sm:$0xf]
        %v309 = vld [vmem:[%s292 + $0x40] sm:$0xf]
        %v310 = vld [vmem:[%s292 + $0x44] sm:$0xf]
        %v311 = vld [vmem:[%s292 + $0x48] sm:$0xf]
        %v312 = vld [vmem:[%s292 + $0x4c] sm:$0xf]
        %v313 = vld [vmem:[%s292 + $0x50] sm:$0xf]
        %v314 = vld [vmem:[%s292 + $0x54] sm:$0xf]
        %v315 = vld [vmem:[%s292 + $0x58] sm:$0xf]
        %v316 = vld [vmem:[%s292 + $0x5c] sm:$0xf]
        %v317 = vld [vmem:[%s292 + $0x60] sm:$0xf]
        %v318 = vld [vmem:[%s292 + $0x64] sm:$0xf]
        %v319 = vld [vmem:[%s292 + $0x68] sm:$0xf]
        %v320 = vld [vmem:[%s292 + $0x6c] sm:$0xf]
        %v321 = vld [vmem:[%s292 + $0x70] sm:$0xf]
        %v322 = vld [vmem:[%s292 + $0x74] sm:$0xf]
        %v323 = vld [vmem:[%s292 + $0x78] sm:$0xf]
        %v324 = vld [vmem:[%s292 + $0x7c] sm:$0xf]
        %v325 = vld [vmem:[%s292 + $0x80] sm:$0xf]
        %v326 = vld [vmem:[%s292 + $0x84] sm:$0xf]
        %v327 = vld [vmem:[%s292 + $0x88] sm:$0xf]
        %v328 = vld [vmem:[%s292 + $0x8c] sm:$0xf]
        %v329 = vld [vmem:[%s292 + $0x90] sm:$0xf]
        %v330 = vld [vmem:[%s292 + $0x94] sm:$0xf]
        %v331 = vld [vmem:[%s292 + $0x98] sm:$0xf]
        %v371 = vunpack.c.l.b16 %v293
        %v372 = vunpack.c.l.b16 %v294
        %v373 = vunpack.c.l.b16 %v295
        %v374 = vunpack.c.l.b16 %v296
        %v375 = vunpack.c.l.b16 %v297
        %v376 = vunpack.c.l.b16 %v298
        %v377 = vunpack.c.l.b16 %v299
        %v378 = vunpack.c.l.b16 %v300
        %v379 = vunpack.c.l.b16 %v301
        %v380 = vunpack.c.l.b16 %v302
        %v381 = vunpack.c.l.b16 %v303
        %v382 = vunpack.c.l.b16 %v304
        %v383 = vunpack.c.l.b16 %v305
        %v384 = vunpack.c.l.b16 %v306
        %v385 = vunpack.c.l.b16 %v307
        %v386 = vunpack.c.l.b16 %v308
        %v387 = vunpack.c.l.b16 %v309
        %v388 = vunpack.c.l.b16 %v310
        %v389 = vunpack.c.l.b16 %v311
        %v390 = vunpack.c.l.b16 %v312
        %v391 = vunpack.c.l.b16 %v313
        %v392 = vunpack.c.l.b16 %v314
        %v393 = vunpack.c.l.b16 %v315
        %v394 = vunpack.c.l.b16 %v316
        %v395 = vunpack.c.l.b16 %v317
        %v396 = vunpack.c.l.b16 %v318
        %v397 = vunpack.c.l.b16 %v319
        %v398 = vunpack.c.l.b16 %v320
        %v399 = vunpack.c.l.b16 %v321
        %v400 = vunpack.c.l.b16 %v322
        %v401 = vunpack.c.l.b16 %v323
        %v402 = vunpack.c.l.b16 %v324
        %v403 = vunpack.c.l.b16 %v325
        %v404 = vunpack.c.l.b16 %v326
        %v405 = vunpack.c.l.b16 %v327
        %v406 = vunpack.c.l.b16 %v328
        %v407 = vunpack.c.l.b16 %v329
        %v408 = vunpack.c.l.b16 %v330
        %v409 = vunpack.c.l.b16 %v331
        %v410 = vpack.c.b16 %v372, %v371
        %v411 = vpack.c.b16 %v374, %v373
        %v412 = vpack.c.b16 %v376, %v375
        %v413 = vpack.c.b16 %v378, %v377
        %v414 = vpack.c.b16 %v380, %v379
        %v415 = vpack.c.b16 %v382, %v381
        %v416 = vpack.c.b16 %v384, %v383
        %v417 = vpack.c.b16 %v386, %v385
        %v418 = vpack.c.b16 %v388, %v387
        %v419 = vpack.c.b16 %v390, %v389
        %v420 = vpack.c.b16 %v392, %v391
        %v421 = vpack.c.b16 %v394, %v393
        %v422 = vpack.c.b16 %v396, %v395
        %v423 = vpack.c.b16 %v398, %v397
        %v424 = vpack.c.b16 %v400, %v399
        %v425 = vpack.c.b16 %v402, %v401
        %v426 = vpack.c.b16 %v404, %v403
        %v427 = vpack.c.b16 %v406, %v405
        %v428 = vpack.c.b16 %v408, %v407
        %v429 = vpack.c.b16 %v409, %v409
        %450 = vst [vmem:[#allocation2] sm:$0xff] %v410
        %451 = vst [vmem:[#allocation2 + $0x8] sm:$0xff] %v411
        %452 = vst [vmem:[#allocation2 + $0x10] sm:$0xff] %v412
        %453 = vst [vmem:[#allocation2 + $0x18] sm:$0xff] %v413
        %454 = vst [vmem:[#allocation2 + $0x20] sm:$0xff] %v414
        %455 = vst [vmem:[#allocation2 + $0x28] sm:$0xff] %v415
        %456 = vst [vmem:[#allocation2 + $0x30] sm:$0xff] %v416
        %457 = vst [vmem:[#allocation2 + $0x38] sm:$0xff] %v417
        %458 = vst [vmem:[#allocation2 + $0x40] sm:$0xff] %v418
        %459 = vst [vmem:[#allocation2 + $0x48] sm:$0xff] %v419
        %460 = vst [vmem:[#allocation2 + $0x50] sm:$0xff] %v420
        %461 = vst [vmem:[#allocation2 + $0x58] sm:$0xff] %v421
        %462 = vst [vmem:[#allocation2 + $0x60] sm:$0xff] %v422
        %463 = vst [vmem:[#allocation2 + $0x68] sm:$0xff] %v423
        %464 = vst [vmem:[#allocation2 + $0x70] sm:$0xff] %v424
        %465 = vst [vmem:[#allocation2 + $0x78] sm:$0xff] %v425
        %466 = vst [vmem:[#allocation2 + $0x80] sm:$0xff] %v426
        %467 = vst [vmem:[#allocation2 + $0x88] sm:$0xff] %v427
        %468 = vst [vmem:[#allocation2 + $0x90] sm:$0xff] %v428
        %469 = vst [vmem:[#allocation2 + $0x98] sm:$0xf] %v429
        %470 = vst [vmem:[#allocation2 + $0x98] sm:$0xf0] 0
        %v471 = vld [vmem:[#allocation2 + $0x8] sm:$0xf8]
        %v472 = vld [vmem:[#allocation2 + $0x10] sm:$0xff]
        %v473 = vld [vmem:[#allocation2 + $0x18] sm:$0xff]
        %v474 = vld [vmem:[#allocation2 + $0x20] sm:$0xff]
        %v475 = vld [vmem:[#allocation2 + $0x28] sm:$0xff]
        %v476 = vld [vmem:[#allocation2 + $0x30] sm:$0xff]
        %v477 = vld [vmem:[#allocation2 + $0x38] sm:$0xff]
        %v478 = vld [vmem:[#allocation2 + $0x40] sm:$0xff]
        %v479 = vld [vmem:[#allocation2 + $0x48] sm:$0xff]
        %v480 = vld [vmem:[#allocation2 + $0x50] sm:$0xff]
        %v481 = vld [vmem:[#allocation2 + $0x58] sm:$0xff]
        %v482 = vld [vmem:[#allocation2 + $0x60] sm:$0xff]
        %v483 = vld [vmem:[#allocation2 + $0x68] sm:$0xff]
        %v484 = vld [vmem:[#allocation2 + $0x70] sm:$0xff]
        %v485 = vld [vmem:[#allocation2 + $0x78] sm:$0xff]
        %v486 = vld [vmem:[#allocation2 + $0x80] sm:$0xf]
        %v487 = vld [vmem:[#allocation7] sm:$0xf]
        %v488 = vld [vmem:[#allocation7 + $0x4] sm:$0xf]
        %v489 = vld [vmem:[#allocation7 + $0x8] sm:$0xf]
        %v490 = vld [vmem:[#allocation7 + $0xc] sm:$0xf]
        %v491 = vld [vmem:[#allocation7 + $0x10] sm:$0xf]
        %v492 = vld [vmem:[#allocation7 + $0x14] sm:$0xf]
        %v493 = vld [vmem:[#allocation7 + $0x18] sm:$0xf]
        %v494 = vld [vmem:[#allocation7 + $0x1c] sm:$0xf]
        %v495 = vld [vmem:[#allocation7 + $0x20] sm:$0xf]
        %v496 = vld [vmem:[#allocation7 + $0x24] sm:$0xf]
        %v497 = vld [vmem:[#allocation7 + $0x28] sm:$0xf]
        %v498 = vld [vmem:[#allocation7 + $0x2c] sm:$0xf]
        %v499 = vld [vmem:[#allocation7 + $0x30] sm:$0xf]
        %v500 = vld [vmem:[#allocation7 + $0x34] sm:$0xf]
        %v501 = vld [vmem:[#allocation7 + $0x38] sm:$0xf]
        %v502 = vld [vmem:[#allocation7 + $0x3c] sm:$0xf]
        %v503 = vld [vmem:[#allocation2 + $0x8] sm:$0xf0]
        %s504 = scalar_lea.vmem [#allocation7], 64
        %v505 = vld [vmem:[%s504] sm:$0xf]
        %v506 = vld [vmem:[%s504 + $0x4] sm:$0xf]
        %v507 = vld [vmem:[%s504 + $0x8] sm:$0xf]
        %v508 = vld [vmem:[%s504 + $0xc] sm:$0xf]
        %v509 = vld [vmem:[%s504 + $0x10] sm:$0xf]
        %v510 = vld [vmem:[%s504 + $0x14] sm:$0xf]
        %v511 = vld [vmem:[%s504 + $0x18] sm:$0xf]
        %v512 = vld [vmem:[%s504 + $0x1c] sm:$0xf]
        %v513 = vld [vmem:[%s504 + $0x20] sm:$0xf]
        %v514 = vld [vmem:[%s504 + $0x24] sm:$0xf]
        %v515 = vld [vmem:[%s504 + $0x28] sm:$0xf]
        %v516 = vld [vmem:[%s504 + $0x2c] sm:$0xf]
        %v517 = vld [vmem:[%s504 + $0x30] sm:$0xf]
        %v518 = vld [vmem:[%s504 + $0x34] sm:$0xf]
        %v519 = vld [vmem:[%s504 + $0x38] sm:$0xf]
        %v520 = vld [vmem:[%s504 + $0x3c] sm:$0xf]
        %vm537 = vcmask 1043456
        %v538 = vrot.slane %v503, 4
        %v539 = vrot.slane %v472, 4
        %v540 = vsel %vm537, %v538, %v539
        %v541 = vrot.slane %v473, 4
        %v542 = vsel %vm537, %v539, %v541
        %v543 = vrot.slane %v474, 4
        %v544 = vsel %vm537, %v541, %v543
        %v545 = vrot.slane %v475, 4
        %v546 = vsel %vm537, %v543, %v545
        %v547 = vrot.slane %v476, 4
        %v548 = vsel %vm537, %v545, %v547
        %v549 = vrot.slane %v477, 4
        %v550 = vsel %vm537, %v547, %v549
        %v551 = vrot.slane %v478, 4
        %v552 = vsel %vm537, %v549, %v551
        %v553 = vrot.slane %v479, 4
        %v554 = vsel %vm537, %v551, %v553
        %v555 = vrot.slane %v480, 4
        %v556 = vsel %vm537, %v553, %v555
        %v557 = vrot.slane %v481, 4
        %v558 = vsel %vm537, %v555, %v557
        %v559 = vrot.slane %v482, 4
        %v560 = vsel %vm537, %v557, %v559
        %v561 = vrot.slane %v483, 4
        %v562 = vsel %vm537, %v559, %v561
        %v563 = vrot.slane %v484, 4
        %v564 = vsel %vm537, %v561, %v563
        %v565 = vrot.slane %v485, 4
        %v566 = vsel %vm537, %v563, %v565
        %v567 = vrot.slane %v486, 4
        %v568 = vsel %vm537, %v565, %v567
        %v600 = vunpack.c.l.b16 %v505
        %v601 = vunpack.c.l.b16 %v506
        %v602 = vunpack.c.l.b16 %v507
        %v603 = vunpack.c.l.b16 %v508
        %v604 = vunpack.c.l.b16 %v509
        %v605 = vunpack.c.l.b16 %v510
        %v606 = vunpack.c.l.b16 %v511
        %v607 = vunpack.c.l.b16 %v512
        %v608 = vunpack.c.l.b16 %v513
        %v609 = vunpack.c.l.b16 %v514
        %v610 = vunpack.c.l.b16 %v515
        %v611 = vunpack.c.l.b16 %v516
        %v612 = vunpack.c.l.b16 %v517
        %v613 = vunpack.c.l.b16 %v518
        %v614 = vunpack.c.l.b16 %v519
        %v615 = vunpack.c.l.b16 %v520
        %v616 = vpack.c.b16 %v601, %v600
        %v617 = vpack.c.b16 %v603, %v602
        %v618 = vpack.c.b16 %v605, %v604
        %v619 = vpack.c.b16 %v607, %v606
        %v620 = vpack.c.b16 %v609, %v608
        %v621 = vpack.c.b16 %v611, %v610
        %v622 = vpack.c.b16 %v613, %v612
        %v623 = vpack.c.b16 %v615, %v614
        %632 = vmatprep.subr.bf16.mxu0 0
        %633 = vmatpush1.bf16.msra.mxu0 %v616
        %634 = vmatprep.subr.bf16.mxu0 0
        %635 = vmatpush1.bf16.msra.mxu0 %v617
        %636 = vmatprep.subr.bf16.mxu0 0
        %637 = vmatpush1.bf16.msra.mxu0 %v618
        %638 = vmatprep.subr.bf16.mxu0 0
        %639 = vmatpush1.bf16.msra.mxu0 %v619
        %640 = vmatprep.subr.bf16.mxu0 0
        %641 = vmatpush1.bf16.msra.mxu0 %v620
        %642 = vmatprep.subr.bf16.mxu0 0
        %643 = vmatpush1.bf16.msra.mxu0 %v621
        %644 = vmatprep.subr.bf16.mxu0 0
        %645 = vmatpush1.bf16.msra.mxu0 %v622
        %646 = vmatprep.subr.bf16.mxu0 0
        %647 = vmatpush1.bf16.msra.mxu0 %v623
        %648 = vmatprep.subr.bf16.mxu0 0
        %649 = vmatpush1.bf16.msra.mxu0 0
        %650 = vmatprep.subr.bf16.mxu0 0
        %651 = vmatpush1.bf16.msra.mxu0 0
        %652 = vmatprep.subr.bf16.mxu0 0
        %653 = vmatpush1.bf16.msra.mxu0 0
        %654 = vmatprep.subr.bf16.mxu0 0
        %655 = vmatpush1.bf16.msra.mxu0 0
        %656 = vmatprep.subr.bf16.mxu0 0
        %657 = vmatpush1.bf16.msra.mxu0 0
        %658 = vmatprep.subr.bf16.mxu0 0
        %659 = vmatpush1.bf16.msra.mxu0 0
        %660 = vmatprep.subr.bf16.mxu0 0
        %661 = vmatpush1.bf16.msra.mxu0 0
        %662 = vmatprep.subr.bf16.mxu0 0
        %663 = vmatpush1.bf16.msra.mxu0 0
        %664 = vmatprep.mubr.bf16.mxu0 0
        %665 = vmatmul.mubr.bf16.gmra.mrb[0].mxu0 %v540
        %v666 = vpop.f32.mrb[0].mxu0
        %v667 = vadd.f32 0.0, %v666
        %v668 = vpop.f32.mrb[0].mxu0
        %v669 = vpop.f32.mrb[0].mxu0
        %v670 = vadd.f32 0.0, %v669
        %v671 = vpop.f32.mrb[0].mxu0
        %672 = vmatprep.mubr.bf16.mxu0 0
        %673 = vmatmul.mubr.bf16.gmra.mrb[0].mxu0 %v542
        %v674 = vpop.f32.mrb[0].mxu0
        %v675 = vadd.f32 0.0, %v674
        %v676 = vpop.f32.mrb[0].mxu0
        %v677 = vpop.f32.mrb[0].mxu0
        %v678 = vadd.f32 0.0, %v677
        %v679 = vpop.f32.mrb[0].mxu0
        %680 = vmatprep.mubr.bf16.mxu0 0
        %681 = vmatmul.mubr.bf16.gmra.mrb[0].mxu0 %v544
        %v682 = vpop.f32.mrb[0].mxu0
        %v683 = vadd.f32 0.0, %v682
        %v684 = vpop.f32.mrb[0].mxu0
        %v685 = vpop.f32.mrb[0].mxu0
        %v686 = vadd.f32 0.0, %v685
        %v687 = vpop.f32.mrb[0].mxu0
        %688 = vmatprep.mubr.bf16.mxu0 0
        %689 = vmatmul.mubr.bf16.gmra.mrb[0].mxu0 %v546
        %v690 = vpop.f32.mrb[0].mxu0
        %v691 = vadd.f32 0.0, %v690
        %v692 = vpop.f32.mrb[0].mxu0
        %v693 = vpop.f32.mrb[0].mxu0
        %v694 = vadd.f32 0.0, %v693
        %v695 = vpop.f32.mrb[0].mxu0
        %696 = vmatprep.mubr.bf16.mxu0 0
        %697 = vmatmul.mubr.bf16.gmra.mrb[0].mxu0 %v548
        %v698 = vpop.f32.mrb[0].mxu0
        %v699 = vadd.f32 0.0, %v698
        %v700 = vpop.f32.mrb[0].mxu0
        %v701 = vpop.f32.mrb[0].mxu0
        %v702 = vadd.f32 0.0, %v701
        %v703 = vpop.f32.mrb[0].mxu0
        %704 = vmatprep.mubr.bf16.mxu0 0
        %705 = vmatmul.mubr.bf16.gmra.mrb[0].mxu0 %v550
        %v706 = vpop.f32.mrb[0].mxu0
        %v707 = vadd.f32 0.0, %v706
        %v708 = vpop.f32.mrb[0].mxu0
        %v709 = vpop.f32.mrb[0].mxu0
        %v710 = vadd.f32 0.0, %v709
        %v711 = vpop.f32.mrb[0].mxu0
        %712 = vmatprep.mubr.bf16.mxu0 0
        %713 = vmatmul.mubr.bf16.gmra.mrb[0].mxu0 %v552
        %v714 = vpop.f32.mrb[0].mxu0
        %v715 = vadd.f32 0.0, %v714
        %v716 = vpop.f32.mrb[0].mxu0
        %v717 = vpop.f32.mrb[0].mxu0
        %v718 = vadd.f32 0.0, %v717
        %v719 = vpop.f32.mrb[0].mxu0
        %720 = vmatprep.mubr.bf16.mxu0 0
        %721 = vmatmul.mubr.bf16.gmra.mrb[0].mxu0 %v554
        %v722 = vpop.f32.mrb[0].mxu0
        %v723 = vadd.f32 0.0, %v722
        %v724 = vpop.f32.mrb[0].mxu0
        %v725 = vpop.f32.mrb[0].mxu0
        %v726 = vadd.f32 0.0, %v725
        %v727 = vpop.f32.mrb[0].mxu0
        %728 = vmatprep.mubr.bf16.mxu0 0
        %729 = vmatmul.mubr.bf16.gmra.mrb[0].mxu0 %v556
        %v730 = vpop.f32.mrb[0].mxu0
        %v731 = vadd.f32 0.0, %v730
        %v732 = vpop.f32.mrb[0].mxu0
        %v733 = vpop.f32.mrb[0].mxu0
        %v734 = vadd.f32 0.0, %v733
        %v735 = vpop.f32.mrb[0].mxu0
        %736 = vmatprep.mubr.bf16.mxu0 0
        %737 = vmatmul.mubr.bf16.gmra.mrb[0].mxu0 %v558
        %v738 = vpop.f32.mrb[0].mxu0
        %v739 = vadd.f32 0.0, %v738
        %v740 = vpop.f32.mrb[0].mxu0
        %v741 = vpop.f32.mrb[0].mxu0
        %v742 = vadd.f32 0.0, %v741
        %v743 = vpop.f32.mrb[0].mxu0
        %744 = vmatprep.mubr.bf16.mxu0 0
        %745 = vmatmul.mubr.bf16.gmra.mrb[0].mxu0 %v560
        %v746 = vpop.f32.mrb[0].mxu0
        %v747 = vadd.f32 0.0, %v746
        %v748 = vpop.f32.mrb[0].mxu0
        %v749 = vpop.f32.mrb[0].mxu0
        %v750 = vadd.f32 0.0, %v749
        %v751 = vpop.f32.mrb[0].mxu0
        %752 = vmatprep.mubr.bf16.mxu0 0
        %753 = vmatmul.mubr.bf16.gmra.mrb[0].mxu0 %v562
        %v754 = vpop.f32.mrb[0].mxu0
        %v755 = vadd.f32 0.0, %v754
        %v756 = vpop.f32.mrb[0].mxu0
        %v757 = vpop.f32.mrb[0].mxu0
        %v758 = vadd.f32 0.0, %v757
        %v759 = vpop.f32.mrb[0].mxu0
        %760 = vmatprep.mubr.bf16.mxu0 0
        %761 = vmatmul.mubr.bf16.gmra.mrb[0].mxu0 %v564
        %v762 = vpop.f32.mrb[0].mxu0
        %v763 = vadd.f32 0.0, %v762
        %v764 = vpop.f32.mrb[0].mxu0
        %v765 = vpop.f32.mrb[0].mxu0
        %v766 = vadd.f32 0.0, %v765
        %v767 = vpop.f32.mrb[0].mxu0
        %768 = vmatprep.mubr.bf16.mxu0 0
        %769 = vmatmul.mubr.bf16.gmra.mrb[0].mxu0 %v566
        %v770 = vpop.f32.mrb[0].mxu0
        %v771 = vadd.f32 0.0, %v770
        %v772 = vpop.f32.mrb[0].mxu0
        %v773 = vpop.f32.mrb[0].mxu0
        %v774 = vadd.f32 0.0, %v773
        %v775 = vpop.f32.mrb[0].mxu0
        %776 = vmatprep.mubr.bf16.mxu0 0
        %777 = vmatmul.mubr.bf16.gmra.mrb[0].mxu0 %v568
        %v778 = vpop.f32.mrb[0].mxu0
        %v779 = vadd.f32 0.0, %v778
        %v780 = vpop.f32.mrb[0].mxu0
        %v781 = vpop.f32.mrb[0].mxu0
        %v782 = vadd.f32 0.0, %v781
        %v783 = vpop.f32.mrb[0].mxu0
        %784 = vdwg.mxu0
        %vm785 = vsmask.f32 4352
        %v787 = vshrl.u32 %v471, 16
        %v789 = vrot.slane %v787, 3
        %v790 = vshll.u32 %v471, 16
        %v792 = vrot.slane %v790, 4
        %v793 = vor.u32 %v789, %v792
        %v795 = vshrl.u32 %v472, 16
        %v797 = vrot.slane %v795, 3
        %v798 = vshll.u32 %v472, 16
        %v800 = vrot.slane %v798, 4
        %v801 = vor.u32 %v797, %v800
        %v802 = vsel %vm785, %v793, %v801
        %v804 = vshrl.u32 %v473, 16
        %v806 = vrot.slane %v804, 3
        %v807 = vshll.u32 %v473, 16
        %v809 = vrot.slane %v807, 4
        %v810 = vor.u32 %v806, %v809
        %v811 = vsel %vm785, %v801, %v810
        %v813 = vshrl.u32 %v474, 16
        %v815 = vrot.slane %v813, 3
        %v816 = vshll.u32 %v474, 16
        %v818 = vrot.slane %v816, 4
        %v819 = vor.u32 %v815, %v818
        %v820 = vsel %vm785, %v810, %v819
        %v822 = vshrl.u32 %v475, 16
        %v824 = vrot.slane %v822, 3
        %v825 = vshll.u32 %v475, 16
        %v827 = vrot.slane %v825, 4
        %v828 = vor.u32 %v824, %v827
        %v829 = vsel %vm785, %v819, %v828
        %v831 = vshrl.u32 %v476, 16
        %v833 = vrot.slane %v831, 3
        %v834 = vshll.u32 %v476, 16
        %v836 = vrot.slane %v834, 4
        %v837 = vor.u32 %v833, %v836
        %v838 = vsel %vm785, %v828, %v837
        %v840 = vshrl.u32 %v477, 16
        %v842 = vrot.slane %v840, 3
        %v843 = vshll.u32 %v477, 16
        %v845 = vrot.slane %v843, 4
        %v846 = vor.u32 %v842, %v845
        %v847 = vsel %vm785, %v837, %v846
        %v849 = vshrl.u32 %v478, 16
        %v851 = vrot.slane %v849, 3
        %v852 = vshll.u32 %v478, 16
        %v854 = vrot.slane %v852, 4
        %v855 = vor.u32 %v851, %v854
        %v856 = vsel %vm785, %v846, %v855
        %v858 = vshrl.u32 %v479, 16
        %v860 = vrot.slane %v858, 3
        %v861 = vshll.u32 %v479, 16
        %v863 = vrot.slane %v861, 4
        %v864 = vor.u32 %v860, %v863
        %v865 = vsel %vm785, %v855, %v864
        %v867 = vshrl.u32 %v480, 16
        %v869 = vrot.slane %v867, 3
        %v870 = vshll.u32 %v480, 16
        %v872 = vrot.slane %v870, 4
        %v873 = vor.u32 %v869, %v872
        %v874 = vsel %vm785, %v864, %v873
        %v876 = vshrl.u32 %v481, 16
        %v878 = vrot.slane %v876, 3
        %v879 = vshll.u32 %v481, 16
        %v881 = vrot.slane %v879, 4
        %v882 = vor.u32 %v878, %v881
        %v883 = vsel %vm785, %v873, %v882
        %v885 = vshrl.u32 %v482, 16
        %v887 = vrot.slane %v885, 3
        %v888 = vshll.u32 %v482, 16
        %v890 = vrot.slane %v888, 4
        %v891 = vor.u32 %v887, %v890
        %v892 = vsel %vm785, %v882, %v891
        %v894 = vshrl.u32 %v483, 16
        %v896 = vrot.slane %v894, 3
        %v897 = vshll.u32 %v483, 16
        %v899 = vrot.slane %v897, 4
        %v900 = vor.u32 %v896, %v899
        %v901 = vsel %vm785, %v891, %v900
        %v903 = vshrl.u32 %v484, 16
        %v905 = vrot.slane %v903, 3
        %v906 = vshll.u32 %v484, 16
        %v908 = vrot.slane %v906, 4
        %v909 = vor.u32 %v905, %v908
        %v910 = vsel %vm785, %v900, %v909
        %v912 = vshrl.u32 %v485, 16
        %v914 = vrot.slane %v912, 3
        %v915 = vshll.u32 %v485, 16
        %v917 = vrot.slane %v915, 4
        %v918 = vor.u32 %v914, %v917
        %v919 = vsel %vm785, %v909, %v918
        %v921 = vshrl.u32 %v486, 16
        %v923 = vrot.slane %v921, 3
        %v924 = vshll.u32 %v486, 16
        %v926 = vrot.slane %v924, 4
        %v927 = vor.u32 %v923, %v926
        %v928 = vsel %vm785, %v918, %v927
        %v960 = vunpack.c.l.b16 %v487
        %v961 = vunpack.c.l.b16 %v488
        %v962 = vunpack.c.l.b16 %v489
        %v963 = vunpack.c.l.b16 %v490
        %v964 = vunpack.c.l.b16 %v491
        %v965 = vunpack.c.l.b16 %v492
        %v966 = vunpack.c.l.b16 %v493
        %v967 = vunpack.c.l.b16 %v494
        %v968 = vunpack.c.l.b16 %v495
        %v969 = vunpack.c.l.b16 %v496
        %v970 = vunpack.c.l.b16 %v497
        %v971 = vunpack.c.l.b16 %v498
        %v972 = vunpack.c.l.b16 %v499
        %v973 = vunpack.c.l.b16 %v500
        %v974 = vunpack.c.l.b16 %v501
        %v975 = vunpack.c.l.b16 %v502
        %v976 = vpack.c.b16 %v961, %v960
        %v977 = vpack.c.b16 %v963, %v962
        %v978 = vpack.c.b16 %v965, %v964
        %v979 = vpack.c.b16 %v967, %v966
        %v980 = vpack.c.b16 %v969, %v968
        %v981 = vpack.c.b16 %v971, %v970
        %v982 = vpack.c.b16 %v973, %v972
        %v983 = vpack.c.b16 %v975, %v974
        %992 = vmatprep.subr.bf16.mxu0 0
        %993 = vmatpush1.bf16.msra.mxu0 %v976
        %994 = vmatprep.subr.bf16.mxu0 0
        %995 = vmatpush1.bf16.msra.mxu0 %v977
        %996 = vmatprep.subr.bf16.mxu0 0
        %997 = vmatpush1.bf16.msra.mxu0 %v978
        %998 = vmatprep.subr.bf16.mxu0 0
        %999 = vmatpush1.bf16.msra.mxu0 %v979
        %1000 = vmatprep.subr.bf16.mxu0 0
        %1001 = vmatpush1.bf16.msra.mxu0 %v980
        %1002 = vmatprep.subr.bf16.mxu0 0
        %1003 = vmatpush1.bf16.msra.mxu0 %v981
        %1004 = vmatprep.subr.bf16.mxu0 0
        %1005 = vmatpush1.bf16.msra.mxu0 %v982
        %1006 = vmatprep.subr.bf16.mxu0 0
        %1007 = vmatpush1.bf16.msra.mxu0 %v983
        %1008 = vmatprep.subr.bf16.mxu0 0
        %1009 = vmatpush1.bf16.msra.mxu0 0
        %1010 = vmatprep.subr.bf16.mxu0 0
        %1011 = vmatpush1.bf16.msra.mxu0 0
        %1012 = vmatprep.subr.bf16.mxu0 0
        %1013 = vmatpush1.bf16.msra.mxu0 0
        %1014 = vmatprep.subr.bf16.mxu0 0
        %1015 = vmatpush1.bf16.msra.mxu0 0
        %1016 = vmatprep.subr.bf16.mxu0 0
        %1017 = vmatpush1.bf16.msra.mxu0 0
        %1018 = vmatprep.subr.bf16.mxu0 0
        %1019 = vmatpush1.bf16.msra.mxu0 0
        %1020 = vmatprep.subr.bf16.mxu0 0
        %1021 = vmatpush1.bf16.msra.mxu0 0
        %1022 = vmatprep.subr.bf16.mxu0 0
        %1023 = vmatpush1.bf16.msra.mxu0 0
        %1024 = vmatprep.mubr.bf16.mxu0 0
        %1025 = vmatmul.mubr.bf16.gmra.mrb[0].mxu0 %v802
        %v1026 = vpop.f32.mrb[0].mxu0
        %v1027 = vadd.f32 %v667, %v1026
        %v1028 = vpop.f32.mrb[0].mxu0
        %v1029 = vpop.f32.mrb[0].mxu0
        %v1030 = vadd.f32 %v670, %v1029
        %v1031 = vpop.f32.mrb[0].mxu0
        %1032 = vmatprep.mubr.bf16.mxu0 0
        %1033 = vmatmul.mubr.bf16.gmra.mrb[0].mxu0 %v811
        %v1034 = vpop.f32.mrb[0].mxu0
        %v1035 = vadd.f32 %v675, %v1034
        %v1036 = vpop.f32.mrb[0].mxu0
        %v1037 = vpop.f32.mrb[0].mxu0
        %v1038 = vadd.f32 %v678, %v1037
        %v1039 = vpop.f32.mrb[0].mxu0
        %1040 = vmatprep.mubr.bf16.mxu0 0
        %1041 = vmatmul.mubr.bf16.gmra.mrb[0].mxu0 %v820
        %v1042 = vpop.f32.mrb[0].mxu0
        %v1043 = vadd.f32 %v683, %v1042
        %v1044 = vpop.f32.mrb[0].mxu0
        %v1045 = vpop.f32.mrb[0].mxu0
        %v1046 = vadd.f32 %v686, %v1045
        %v1047 = vpop.f32.mrb[0].mxu0
        %1048 = vmatprep.mubr.bf16.mxu0 0
        %1049 = vmatmul.mubr.bf16.gmra.mrb[0].mxu0 %v829
        %v1050 = vpop.f32.mrb[0].mxu0
        %v1051 = vadd.f32 %v691, %v1050
        %v1052 = vpop.f32.mrb[0].mxu0
        %v1053 = vpop.f32.mrb[0].mxu0
        %v1054 = vadd.f32 %v694, %v1053
        %v1055 = vpop.f32.mrb[0].mxu0
        %1056 = vmatprep.mubr.bf16.mxu0 0
        %1057 = vmatmul.mubr.bf16.gmra.mrb[0].mxu0 %v838
        %v1058 = vpop.f32.mrb[0].mxu0
        %v1059 = vadd.f32 %v699, %v1058
        %v1060 = vpop.f32.mrb[0].mxu0
        %v1061 = vpop.f32.mrb[0].mxu0
        %v1062 = vadd.f32 %v702, %v1061
        %v1063 = vpop.f32.mrb[0].mxu0
        %1064 = vmatprep.mubr.bf16.mxu0 0
        %1065 = vmatmul.mubr.bf16.gmra.mrb[0].mxu0 %v847
        %v1066 = vpop.f32.mrb[0].mxu0
        %v1067 = vadd.f32 %v707, %v1066
        %v1068 = vpop.f32.mrb[0].mxu0
        %v1069 = vpop.f32.mrb[0].mxu0
        %v1070 = vadd.f32 %v710, %v1069
        %v1071 = vpop.f32.mrb[0].mxu0
        %1072 = vmatprep.mubr.bf16.mxu0 0
        %1073 = vmatmul.mubr.bf16.gmra.mrb[0].mxu0 %v856
        %v1074 = vpop.f32.mrb[0].mxu0
        %v1075 = vadd.f32 %v715, %v1074
        %v1076 = vpop.f32.mrb[0].mxu0
        %v1077 = vpop.f32.mrb[0].mxu0
        %v1078 = vadd.f32 %v718, %v1077
        %v1079 = vpop.f32.mrb[0].mxu0
        %1080 = vmatprep.mubr.bf16.mxu0 0
        %1081 = vmatmul.mubr.bf16.gmra.mrb[0].mxu0 %v865
        %v1082 = vpop.f32.mrb[0].mxu0
        %v1083 = vadd.f32 %v723, %v1082
        %v1084 = vpop.f32.mrb[0].mxu0
        %v1085 = vpop.f32.mrb[0].mxu0
        %v1086 = vadd.f32 %v726, %v1085
        %v1087 = vpop.f32.mrb[0].mxu0
        %1088 = vmatprep.mubr.bf16.mxu0 0
        %1089 = vmatmul.mubr.bf16.gmra.mrb[0].mxu0 %v874
        %v1090 = vpop.f32.mrb[0].mxu0
        %v1091 = vadd.f32 %v731, %v1090
        %v1092 = vpop.f32.mrb[0].mxu0
        %v1093 = vpop.f32.mrb[0].mxu0
        %v1094 = vadd.f32 %v734, %v1093
        %v1095 = vpop.f32.mrb[0].mxu0
        %1096 = vmatprep.mubr.bf16.mxu0 0
        %1097 = vmatmul.mubr.bf16.gmra.mrb[0].mxu0 %v883
        %v1098 = vpop.f32.mrb[0].mxu0
        %v1099 = vadd.f32 %v739, %v1098
        %v1100 = vpop.f32.mrb[0].mxu0
        %v1101 = vpop.f32.mrb[0].mxu0
        %v1102 = vadd.f32 %v742, %v1101
        %v1103 = vpop.f32.mrb[0].mxu0
        %1104 = vmatprep.mubr.bf16.mxu0 0
        %1105 = vmatmul.mubr.bf16.gmra.mrb[0].mxu0 %v892
        %v1106 = vpop.f32.mrb[0].mxu0
        %v1107 = vadd.f32 %v747, %v1106
        %v1108 = vpop.f32.mrb[0].mxu0
        %v1109 = vpop.f32.mrb[0].mxu0
        %v1110 = vadd.f32 %v750, %v1109
        %v1111 = vpop.f32.mrb[0].mxu0
        %1112 = vmatprep.mubr.bf16.mxu0 0
        %1113 = vmatmul.mubr.bf16.gmra.mrb[0].mxu0 %v901
        %v1114 = vpop.f32.mrb[0].mxu0
        %v1115 = vadd.f32 %v755, %v1114
        %v1116 = vpop.f32.mrb[0].mxu0
        %v1117 = vpop.f32.mrb[0].mxu0
        %v1118 = vadd.f32 %v758, %v1117
        %v1119 = vpop.f32.mrb[0].mxu0
        %1120 = vmatprep.mubr.bf16.mxu0 0
        %1121 = vmatmul.mubr.bf16.gmra.mrb[0].mxu0 %v910
        %v1122 = vpop.f32.mrb[0].mxu0
        %v1123 = vadd.f32 %v763, %v1122
        %v1124 = vpop.f32.mrb[0].mxu0
        %v1125 = vpop.f32.mrb[0].mxu0
        %v1126 = vadd.f32 %v766, %v1125
        %v1127 = vpop.f32.mrb[0].mxu0
        %1128 = vmatprep.mubr.bf16.mxu0 0
        %1129 = vmatmul.mubr.bf16.gmra.mrb[0].mxu0 %v919
        %v1130 = vpop.f32.mrb[0].mxu0
        %v1131 = vadd.f32 %v771, %v1130
        %v1132 = vpop.f32.mrb[0].mxu0
        %v1133 = vpop.f32.mrb[0].mxu0
        %v1134 = vadd.f32 %v774, %v1133
        %v1135 = vpop.f32.mrb[0].mxu0
        %1136 = vmatprep.mubr.bf16.mxu0 0
        %1137 = vmatmul.mubr.bf16.gmra.mrb[0].mxu0 %v928
        %v1138 = vpop.f32.mrb[0].mxu0
        %v1139 = vadd.f32 %v779, %v1138
        %v1140 = vpop.f32.mrb[0].mxu0
        %v1141 = vpop.f32.mrb[0].mxu0
        %v1142 = vadd.f32 %v782, %v1141
        %v1143 = vpop.f32.mrb[0].mxu0
        %1144 = vdwg.mxu0
        %v1145 = vld [vmem:[#allocation2 + $0x80] sm:$0x1f]
        %s1146 = scalar_lea.vmem [#allocation7], 128
        %v1147 = vld [vmem:[%s1146] sm:$0xf]
        %v1148 = vld [vmem:[%s1146 + $0x4] sm:$0xf]
        %v1149 = vld [vmem:[%s1146 + $0x8] sm:$0xf]
        %v1150 = vld [vmem:[%s1146 + $0xc] sm:$0xf]
        %v1151 = vld [vmem:[%s1146 + $0x10] sm:$0xf]
        %v1152 = vld [vmem:[%s1146 + $0x14] sm:$0xf]
        %v1153 = vld [vmem:[%s1146 + $0x18] sm:$0xf]
        %v1154 = vld [vmem:[%s1146 + $0x1c] sm:$0xf]
        %v1155 = vld [vmem:[%s1146 + $0x20] sm:$0xf]
        %v1156 = vld [vmem:[%s1146 + $0x24] sm:$0xf]
        %v1157 = vld [vmem:[%s1146 + $0x28] sm:$0xf]
        %v1158 = vld [vmem:[%s1146 + $0x2c] sm:$0xf]
        %v1159 = vld [vmem:[%s1146 + $0x30] sm:$0xf]
        %v1160 = vld [vmem:[%s1146 + $0x34] sm:$0xf]
        %v1161 = vld [vmem:[%s1146 + $0x38] sm:$0xf]
        %v1162 = vld [vmem:[%s1146 + $0x3c] sm:$0xf]
        %vm1163 = vsmask.f32 3328
        %v1165 = vshrl.u32 %v503, 16
        %v1167 = vrot.slane %v1165, 4
        %v1168 = vshll.u32 %v503, 16
        %v1170 = vrot.slane %v1168, 5
        %v1171 = vor.u32 %v1167, %v1170
        %v1172 = vrot.slane %v795, 4
        %v1173 = vrot.slane %v798, 5
        %v1174 = vor.u32 %v1172, %v1173
        %v1175 = vsel %vm1163, %v1171, %v1174
        %v1176 = vrot.slane %v804, 4
        %v1177 = vrot.slane %v807, 5
        %v1178 = vor.u32 %v1176, %v1177
        %v1179 = vsel %vm1163, %v1174, %v1178
        %v1180 = vrot.slane %v813, 4
        %v1181 = vrot.slane %v816, 5
        %v1182 = vor.u32 %v1180, %v1181
        %v1183 = vsel %vm1163, %v1178, %v1182
        %v1184 = vrot.slane %v822, 4
        %v1185 = vrot.slane %v825, 5
        %v1186 = vor.u32 %v1184, %v1185
        %v1187 = vsel %vm1163, %v1182, %v1186
        %v1188 = vrot.slane %v831, 4
        %v1189 = vrot.slane %v834, 5
        %v1190 = vor.u32 %v1188, %v1189
        %v1191 = vsel %vm1163, %v1186, %v1190
        %v1192 = vrot.slane %v840, 4
        %v1193 = vrot.slane %v843, 5
        %v1194 = vor.u32 %v1192, %v1193
        %v1195 = vsel %vm1163, %v1190, %v1194
        %v1196 = vrot.slane %v849, 4
        %v1197 = vrot.slane %v852, 5
        %v1198 = vor.u32 %v1196, %v1197
        %v1199 = vsel %vm1163, %v1194, %v1198
        %v1200 = vrot.slane %v858, 4
        %v1201 = vrot.slane %v861, 5
        %v1202 = vor.u32 %v1200, %v1201
        %v1203 = vsel %vm1163, %v1198, %v1202
        %v1204 = vrot.slane %v867, 4
        %v1205 = vrot.slane %v870, 5
        %v1206 = vor.u32 %v1204, %v1205
        %v1207 = vsel %vm1163, %v1202, %v1206
        %v1208 = vrot.slane %v876, 4
        %v1209 = vrot.slane %v879, 5
        %v1210 = vor.u32 %v1208, %v1209
        %v1211 = vsel %vm1163, %v1206, %v1210
        %v1212 = vrot.slane %v885, 4
        %v1213 = vrot.slane %v888, 5
        %v1214 = vor.u32 %v1212, %v1213
        %v1215 = vsel %vm1163, %v1210, %v1214
        %v1216 = vrot.slane %v894, 4
        %v1217 = vrot.slane %v897, 5
        %v1218 = vor.u32 %v1216, %v1217
        %v1219 = vsel %vm1163, %v1214, %v1218
        %v1220 = vrot.slane %v903, 4
        %v1221 = vrot.slane %v906, 5
        %v1222 = vor.u32 %v1220, %v1221
        %v1223 = vsel %vm1163, %v1218, %v1222
        %v1224 = vrot.slane %v912, 4
        %v1225 = vrot.slane %v915, 5
        %v1226 = vor.u32 %v1224, %v1225
        %v1227 = vsel %vm1163, %v1222, %v1226
        %v1229 = vshrl.u32 %v1145, 16
        %v1231 = vrot.slane %v1229, 4
        %v1232 = vshll.u32 %v1145, 16
        %v1234 = vrot.slane %v1232, 5
        %v1235 = vor.u32 %v1231, %v1234
        %v1236 = vsel %vm1163, %v1226, %v1235
        %v1268 = vunpack.c.l.b16 %v1147
        %v1269 = vunpack.c.l.b16 %v1148
        %v1270 = vunpack.c.l.b16 %v1149
        %v1271 = vunpack.c.l.b16 %v1150
        %v1272 = vunpack.c.l.b16 %v1151
        %v1273 = vunpack.c.l.b16 %v1152
        %v1274 = vunpack.c.l.b16 %v1153
        %v1275 = vunpack.c.l.b16 %v1154
        %v1276 = vunpack.c.l.b16 %v1155
        %v1277 = vunpack.c.l.b16 %v1156
        %v1278 = vunpack.c.l.b16 %v1157
        %v1279 = vunpack.c.l.b16 %v1158
        %v1280 = vunpack.c.l.b16 %v1159
        %v1281 = vunpack.c.l.b16 %v1160
        %v1282 = vunpack.c.l.b16 %v1161
        %v1283 = vunpack.c.l.b16 %v1162
        %v1284 = vpack.c.b16 %v1269, %v1268
        %v1285 = vpack.c.b16 %v1271, %v1270
        %v1286 = vpack.c.b16 %v1273, %v1272
        %v1287 = vpack.c.b16 %v1275, %v1274
        %v1288 = vpack.c.b16 %v1277, %v1276
        %v1289 = vpack.c.b16 %v1279, %v1278
        %v1290 = vpack.c.b16 %v1281, %v1280
        %v1291 = vpack.c.b16 %v1283, %v1282
        %1300 = vmatprep.subr.bf16.mxu0 0
        %1301 = vmatpush1.bf16.msra.mxu0 %v1284
        %1302 = vmatprep.subr.bf16.mxu0 0
        %1303 = vmatpush1.bf16.msra.mxu0 %v1285
        %1304 = vmatprep.subr.bf16.mxu0 0
        %1305 = vmatpush1.bf16.msra.mxu0 %v1286
        %1306 = vmatprep.subr.bf16.mxu0 0
        %1307 = vmatpush1.bf16.msra.mxu0 %v1287
        %1308 = vmatprep.subr.bf16.mxu0 0
        %1309 = vmatpush1.bf16.msra.mxu0 %v1288
        %1310 = vmatprep.subr.bf16.mxu0 0
        %1311 = vmatpush1.bf16.msra.mxu0 %v1289
        %1312 = vmatprep.subr.bf16.mxu0 0
        %1313 = vmatpush1.bf16.msra.mxu0 %v1290
        %1314 = vmatprep.subr.bf16.mxu0 0
        %1315 = vmatpush1.bf16.msra.mxu0 %v1291
        %1316 = vmatprep.subr.bf16.mxu0 0
        %1317 = vmatpush1.bf16.msra.mxu0 0
        %1318 = vmatprep.subr.bf16.mxu0 0
        %1319 = vmatpush1.bf16.msra.mxu0 0
        %1320 = vmatprep.subr.bf16.mxu0 0
        %1321 = vmatpush1.bf16.msra.mxu0 0
        %1322 = vmatprep.subr.bf16.mxu0 0
        %1323 = vmatpush1.bf16.msra.mxu0 0
        %1324 = vmatprep.subr.bf16.mxu0 0
        %1325 = vmatpush1.bf16.msra.mxu0 0
        %1326 = vmatprep.subr.bf16.mxu0 0
        %1327 = vmatpush1.bf16.msra.mxu0 0
        %1328 = vmatprep.subr.bf16.mxu0 0
        %1329 = vmatpush1.bf16.msra.mxu0 0
        %1330 = vmatprep.subr.bf16.mxu0 0
        %1331 = vmatpush1.bf16.msra.mxu0 0
        %1332 = vmatprep.mubr.bf16.mxu0 0
        %1333 = vmatmul.mubr.bf16.gmra.mrb[0].mxu0 %v1175
        %v1334 = vpop.f32.mrb[0].mxu0
        %v1335 = vadd.f32 0.0, %v1334
        %v1336 = vpop.f32.mrb[0].mxu0
        %v1337 = vpop.f32.mrb[0].mxu0
        %v1338 = vadd.f32 0.0, %v1337
        %v1339 = vpop.f32.mrb[0].mxu0
        %1340 = vmatprep.mubr.bf16.mxu0 0
        %1341 = vmatmul.mubr.bf16.gmra.mrb[0].mxu0 %v1179
        %v1342 = vpop.f32.mrb[0].mxu0
        %v1343 = vadd.f32 0.0, %v1342
        %v1344 = vpop.f32.mrb[0].mxu0
        %v1345 = vpop.f32.mrb[0].mxu0
        %v1346 = vadd.f32 0.0, %v1345
        %v1347 = vpop.f32.mrb[0].mxu0
        %1348 = vmatprep.mubr.bf16.mxu0 0
        %1349 = vmatmul.mubr.bf16.gmra.mrb[0].mxu0 %v1183
        %v1350 = vpop.f32.mrb[0].mxu0
        %v1351 = vadd.f32 0.0, %v1350
        %v1352 = vpop.f32.mrb[0].mxu0
        %v1353 = vpop.f32.mrb[0].mxu0
        %v1354 = vadd.f32 0.0, %v1353
        %v1355 = vpop.f32.mrb[0].mxu0
        %1356 = vmatprep.mubr.bf16.mxu0 0
        %1357 = vmatmul.mubr.bf16.gmra.mrb[0].mxu0 %v1187
        %v1358 = vpop.f32.mrb[0].mxu0
        %v1359 = vadd.f32 0.0, %v1358
        %v1360 = vpop.f32.mrb[0].mxu0
        %v1361 = vpop.f32.mrb[0].mxu0
        %v1362 = vadd.f32 0.0, %v1361
        %v1363 = vpop.f32.mrb[0].mxu0
        %1364 = vmatprep.mubr.bf16.mxu0 0
        %1365 = vmatmul.mubr.bf16.gmra.mrb[0].mxu0 %v1191
        %v1366 = vpop.f32.mrb[0].mxu0
        %v1367 = vadd.f32 0.0, %v1366
        %v1368 = vpop.f32.mrb[0].mxu0
        %v1369 = vpop.f32.mrb[0].mxu0
        %v1370 = vadd.f32 0.0, %v1369
        %v1371 = vpop.f32.mrb[0].mxu0
        %1372 = vmatprep.mubr.bf16.mxu0 0
        %1373 = vmatmul.mubr.bf16.gmra.mrb[0].mxu0 %v1195
        %v1374 = vpop.f32.mrb[0].mxu0
        %v1375 = vadd.f32 0.0, %v1374
        %v1376 = vpop.f32.mrb[0].mxu0
        %v1377 = vpop.f32.mrb[0].mxu0
        %v1378 = vadd.f32 0.0, %v1377
        %v1379 = vpop.f32.mrb[0].mxu0
        %1380 = vmatprep.mubr.bf16.mxu0 0
        %1381 = vmatmul.mubr.bf16.gmra.mrb[0].mxu0 %v1199
        %v1382 = vpop.f32.mrb[0].mxu0
        %v1383 = vadd.f32 0.0, %v1382
        %v1384 = vpop.f32.mrb[0].mxu0
        %v1385 = vpop.f32.mrb[0].mxu0
        %v1386 = vadd.f32 0.0, %v1385
        %v1387 = vpop.f32.mrb[0].mxu0
        %1388 = vmatprep.mubr.bf16.mxu0 0
        %1389 = vmatmul.mubr.bf16.gmra.mrb[0].mxu0 %v1203
        %v1390 = vpop.f32.mrb[0].mxu0
        %v1391 = vadd.f32 0.0, %v1390
        %v1392 = vpop.f32.mrb[0].mxu0
        %v1393 = vpop.f32.mrb[0].mxu0
        %v1394 = vadd.f32 0.0, %v1393
        %v1395 = vpop.f32.mrb[0].mxu0
        %1396 = vmatprep.mubr.bf16.mxu0 0
        %1397 = vmatmul.mubr.bf16.gmra.mrb[0].mxu0 %v1207
        %v1398 = vpop.f32.mrb[0].mxu0
        %v1399 = vadd.f32 0.0, %v1398
        %v1400 = vpop.f32.mrb[0].mxu0
        %v1401 = vpop.f32.mrb[0].mxu0
        %v1402 = vadd.f32 0.0, %v1401
        %v1403 = vpop.f32.mrb[0].mxu0
        %1404 = vmatprep.mubr.bf16.mxu0 0
        %1405 = vmatmul.mubr.bf16.gmra.mrb[0].mxu0 %v1211
        %v1406 = vpop.f32.mrb[0].mxu0
        %v1407 = vadd.f32 0.0, %v1406
        %v1408 = vpop.f32.mrb[0].mxu0
        %v1409 = vpop.f32.mrb[0].mxu0
        %v1410 = vadd.f32 0.0, %v1409
        %v1411 = vpop.f32.mrb[0].mxu0
        %1412 = vmatprep.mubr.bf16.mxu0 0
        %1413 = vmatmul.mubr.bf16.gmra.mrb[0].mxu0 %v1215
        %v1414 = vpop.f32.mrb[0].mxu0
        %v1415 = vadd.f32 0.0, %v1414
        %v1416 = vpop.f32.mrb[0].mxu0
        %v1417 = vpop.f32.mrb[0].mxu0
        %v1418 = vadd.f32 0.0, %v1417
        %v1419 = vpop.f32.mrb[0].mxu0
        %1420 = vmatprep.mubr.bf16.mxu0 0
        %1421 = vmatmul.mubr.bf16.gmra.mrb[0].mxu0 %v1219
        %v1422 = vpop.f32.mrb[0].mxu0
        %v1423 = vadd.f32 0.0, %v1422
        %v1424 = vpop.f32.mrb[0].mxu0
        %v1425 = vpop.f32.mrb[0].mxu0
        %v1426 = vadd.f32 0.0, %v1425
        %v1427 = vpop.f32.mrb[0].mxu0
        %1428 = vmatprep.mubr.bf16.mxu0 0
        %1429 = vmatmul.mubr.bf16.gmra.mrb[0].mxu0 %v1223
        %v1430 = vpop.f32.mrb[0].mxu0
        %v1431 = vadd.f32 0.0, %v1430
        %v1432 = vpop.f32.mrb[0].mxu0
        %v1433 = vpop.f32.mrb[0].mxu0
        %v1434 = vadd.f32 0.0, %v1433
        %v1435 = vpop.f32.mrb[0].mxu0
        %1436 = vmatprep.mubr.bf16.mxu0 0
        %1437 = vmatmul.mubr.bf16.gmra.mrb[0].mxu0 %v1227
        %v1438 = vpop.f32.mrb[0].mxu0
        %v1439 = vadd.f32 0.0, %v1438
        %v1440 = vpop.f32.mrb[0].mxu0
        %v1441 = vpop.f32.mrb[0].mxu0
        %v1442 = vadd.f32 0.0, %v1441
        %v1443 = vpop.f32.mrb[0].mxu0
        %1444 = vmatprep.mubr.bf16.mxu0 0
        %1445 = vmatmul.mubr.bf16.gmra.mrb[0].mxu0 %v1236
        %v1446 = vpop.f32.mrb[0].mxu0
        %v1447 = vadd.f32 0.0, %v1446
        %v1448 = vpop.f32.mrb[0].mxu0
        %v1449 = vpop.f32.mrb[0].mxu0
        %v1450 = vadd.f32 0.0, %v1449
        %v1451 = vpop.f32.mrb[0].mxu0
        %1452 = vdwg.mxu0
        %v1453 = vadd.f32 %v1027, %v1335
        %v1454 = vadd.f32 %v1030, %v1338
        %v1455 = vadd.f32 %v1035, %v1343
        %v1456 = vadd.f32 %v1038, %v1346
        %v1457 = vadd.f32 %v1043, %v1351
        %v1458 = vadd.f32 %v1046, %v1354
        %v1459 = vadd.f32 %v1051, %v1359
        %v1460 = vadd.f32 %v1054, %v1362
        %v1461 = vadd.f32 %v1059, %v1367
        %v1462 = vadd.f32 %v1062, %v1370
        %v1463 = vadd.f32 %v1067, %v1375
        %v1464 = vadd.f32 %v1070, %v1378
        %v1465 = vadd.f32 %v1075, %v1383
        %v1466 = vadd.f32 %v1078, %v1386
        %v1467 = vadd.f32 %v1083, %v1391
        %v1468 = vadd.f32 %v1086, %v1394
        %v1469 = vadd.f32 %v1091, %v1399
        %v1470 = vadd.f32 %v1094, %v1402
        %v1471 = vadd.f32 %v1099, %v1407
        %v1472 = vadd.f32 %v1102, %v1410
        %v1473 = vadd.f32 %v1107, %v1415
        %v1474 = vadd.f32 %v1110, %v1418
        %v1475 = vadd.f32 %v1115, %v1423
        %v1476 = vadd.f32 %v1118, %v1426
        %v1477 = vadd.f32 %v1123, %v1431
        %v1478 = vadd.f32 %v1126, %v1434
        %v1479 = vadd.f32 %v1131, %v1439
        %v1480 = vadd.f32 %v1134, %v1442
        %v1481 = vadd.f32 %v1139, %v1447
        %v1482 = vadd.f32 %v1142, %v1450
        %v1483 = vld [vmem:[#allocation2 + $0x10] sm:$0x80]
        %v1484 = vld [vmem:[#allocation2 + $0x18] sm:$0xff]
        %v1485 = vld [vmem:[#allocation2 + $0x20] sm:$0xff]
        %v1486 = vld [vmem:[#allocation2 + $0x28] sm:$0xff]
        %v1487 = vld [vmem:[#allocation2 + $0x30] sm:$0xff]
        %v1488 = vld [vmem:[#allocation2 + $0x38] sm:$0xff]
        %v1489 = vld [vmem:[#allocation2 + $0x40] sm:$0xff]
        %v1490 = vld [vmem:[#allocation2 + $0x48] sm:$0xff]
        %v1491 = vld [vmem:[#allocation2 + $0x50] sm:$0xff]
        %v1492 = vld [vmem:[#allocation2 + $0x58] sm:$0xff]
        %v1493 = vld [vmem:[#allocation2 + $0x60] sm:$0xff]
        %v1494 = vld [vmem:[#allocation2 + $0x68] sm:$0xff]
        %v1495 = vld [vmem:[#allocation2 + $0x70] sm:$0xff]
        %v1496 = vld [vmem:[#allocation2 + $0x78] sm:$0xff]
        %v1497 = vld [vmem:[#allocation2 + $0x80] sm:$0xff]
        %v1498 = vld [vmem:[#allocation2 + $0x88] sm:$0xff]
        %s1499 = scalar_lea.vmem [#allocation7], 192
        %v1500 = vld [vmem:[%s1499] sm:$0xf]
        %v1501 = vld [vmem:[%s1499 + $0x4] sm:$0xf]
        %v1502 = vld [vmem:[%s1499 + $0x8] sm:$0xf]
        %v1503 = vld [vmem:[%s1499 + $0xc] sm:$0xf]
        %v1504 = vld [vmem:[%s1499 + $0x10] sm:$0xf]
        %v1505 = vld [vmem:[%s1499 + $0x14] sm:$0xf]
        %v1506 = vld [vmem:[%s1499 + $0x18] sm:$0xf]
        %v1507 = vld [vmem:[%s1499 + $0x1c] sm:$0xf]
        %v1508 = vld [vmem:[%s1499 + $0x20] sm:$0xf]
        %v1509 = vld [vmem:[%s1499 + $0x24] sm:$0xf]
        %v1510 = vld [vmem:[%s1499 + $0x28] sm:$0xf]
        %v1511 = vld [vmem:[%s1499 + $0x2c] sm:$0xf]
        %v1512 = vld [vmem:[%s1499 + $0x30] sm:$0xf]
        %v1513 = vld [vmem:[%s1499 + $0x34] sm:$0xf]
        %v1514 = vld [vmem:[%s1499 + $0x38] sm:$0xf]
        %v1515 = vld [vmem:[%s1499 + $0x3c] sm:$0xf]
        %vm1516 = vsmask.f32 256
        %v1518 = vshrl.u32 %v1483, 16
        %v1520 = vrot.slane %v1518, 7
        %v1522 = vshrl.u32 %v1484, 16
        %v1524 = vrot.slane %v1522, 7
        %v1525 = vshll.u32 %v1484, 16
        %v1527 = vor.u32 %v1524, %v1525
        %v1528 = vsel %vm1516, %v1520, %v1527
        %v1530 = vshrl.u32 %v1485, 16
        %v1532 = vrot.slane %v1530, 7
        %v1533 = vshll.u32 %v1485, 16
        %v1535 = vor.u32 %v1532, %v1533
        %v1536 = vsel %vm1516, %v1524, %v1535
        %v1538 = vshrl.u32 %v1486, 16
        %v1540 = vrot.slane %v1538, 7
        %v1541 = vshll.u32 %v1486, 16
        %v1543 = vor.u32 %v1540, %v1541
        %v1544 = vsel %vm1516, %v1532, %v1543
        %v1546 = vshrl.u32 %v1487, 16
        %v1548 = vrot.slane %v1546, 7
        %v1549 = vshll.u32 %v1487, 16
        %v1551 = vor.u32 %v1548, %v1549
        %v1552 = vsel %vm1516, %v1540, %v1551
        %v1554 = vshrl.u32 %v1488, 16
        %v1556 = vrot.slane %v1554, 7
        %v1557 = vshll.u32 %v1488, 16
        %v1559 = vor.u32 %v1556, %v1557
        %v1560 = vsel %vm1516, %v1548, %v1559
        %v1562 = vshrl.u32 %v1489, 16
        %v1564 = vrot.slane %v1562, 7
        %v1565 = vshll.u32 %v1489, 16
        %v1567 = vor.u32 %v1564, %v1565
        %v1568 = vsel %vm1516, %v1556, %v1567
        %v1570 = vshrl.u32 %v1490, 16
        %v1572 = vrot.slane %v1570, 7
        %v1573 = vshll.u32 %v1490, 16
        %v1575 = vor.u32 %v1572, %v1573
        %v1576 = vsel %vm1516, %v1564, %v1575
        %v1578 = vshrl.u32 %v1491, 16
        %v1580 = vrot.slane %v1578, 7
        %v1581 = vshll.u32 %v1491, 16
        %v1583 = vor.u32 %v1580, %v1581
        %v1584 = vsel %vm1516, %v1572, %v1583
        %v1586 = vshrl.u32 %v1492, 16
        %v1588 = vrot.slane %v1586, 7
        %v1589 = vshll.u32 %v1492, 16
        %v1591 = vor.u32 %v1588, %v1589
        %v1592 = vsel %vm1516, %v1580, %v1591
        %v1594 = vshrl.u32 %v1493, 16
        %v1596 = vrot.slane %v1594, 7
        %v1597 = vshll.u32 %v1493, 16
        %v1599 = vor.u32 %v1596, %v1597
        %v1600 = vsel %vm1516, %v1588, %v1599
        %v1602 = vshrl.u32 %v1494, 16
        %v1604 = vrot.slane %v1602, 7
        %v1605 = vshll.u32 %v1494, 16
        %v1607 = vor.u32 %v1604, %v1605
        %v1608 = vsel %vm1516, %v1596, %v1607
        %v1610 = vshrl.u32 %v1495, 16
        %v1612 = vrot.slane %v1610, 7
        %v1613 = vshll.u32 %v1495, 16
        %v1615 = vor.u32 %v1612, %v1613
        %v1616 = vsel %vm1516, %v1604, %v1615
        %v1618 = vshrl.u32 %v1496, 16
        %v1620 = vrot.slane %v1618, 7
        %v1621 = vshll.u32 %v1496, 16
        %v1623 = vor.u32 %v1620, %v1621
        %v1624 = vsel %vm1516, %v1612, %v1623
        %v1626 = vshrl.u32 %v1497, 16
        %v1628 = vrot.slane %v1626, 7
        %v1629 = vshll.u32 %v1497, 16
        %v1631 = vor.u32 %v1628, %v1629
        %v1632 = vsel %vm1516, %v1620, %v1631
        %v1634 = vshrl.u32 %v1498, 16
        %v1636 = vrot.slane %v1634, 7
        %v1637 = vshll.u32 %v1498, 16
        %v1639 = vor.u32 %v1636, %v1637
        %v1640 = vsel %vm1516, %v1628, %v1639
        %v1672 = vunpack.c.l.b16 %v1500
        %v1673 = vunpack.c.l.b16 %v1501
        %v1674 = vunpack.c.l.b16 %v1502
        %v1675 = vunpack.c.l.b16 %v1503
        %v1676 = vunpack.c.l.b16 %v1504
        %v1677 = vunpack.c.l.b16 %v1505
        %v1678 = vunpack.c.l.b16 %v1506
        %v1679 = vunpack.c.l.b16 %v1507
        %v1680 = vunpack.c.l.b16 %v1508
        %v1681 = vunpack.c.l.b16 %v1509
        %v1682 = vunpack.c.l.b16 %v1510
        %v1683 = vunpack.c.l.b16 %v1511
        %v1684 = vunpack.c.l.b16 %v1512
        %v1685 = vunpack.c.l.b16 %v1513
        %v1686 = vunpack.c.l.b16 %v1514
        %v1687 = vunpack.c.l.b16 %v1515
        %v1688 = vpack.c.b16 %v1673, %v1672
        %v1689 = vpack.c.b16 %v1675, %v1674
        %v1690 = vpack.c.b16 %v1677, %v1676
        %v1691 = vpack.c.b16 %v1679, %v1678
        %v1692 = vpack.c.b16 %v1681, %v1680
        %v1693 = vpack.c.b16 %v1683, %v1682
        %v1694 = vpack.c.b16 %v1685, %v1684
        %v1695 = vpack.c.b16 %v1687, %v1686
        %1704 = vmatprep.subr.bf16.mxu0 0
        %1705 = vmatpush1.bf16.msra.mxu0 %v1688
        %1706 = vmatprep.subr.bf16.mxu0 0
        %1707 = vmatpush1.bf16.msra.mxu0 %v1689
        %1708 = vmatprep.subr.bf16.mxu0 0
        %1709 = vmatpush1.bf16.msra.mxu0 %v1690
        %1710 = vmatprep.subr.bf16.mxu0 0
        %1711 = vmatpush1.bf16.msra.mxu0 %v1691
        %1712 = vmatprep.subr.bf16.mxu0 0
        %1713 = vmatpush1.bf16.msra.mxu0 %v1692
        %1714 = vmatprep.subr.bf16.mxu0 0
        %1715 = vmatpush1.bf16.msra.mxu0 %v1693
        %1716 = vmatprep.subr.bf16.mxu0 0
        %1717 = vmatpush1.bf16.msra.mxu0 %v1694
        %1718 = vmatprep.subr.bf16.mxu0 0
        %1719 = vmatpush1.bf16.msra.mxu0 %v1695
        %1720 = vmatprep.subr.bf16.mxu0 0
        %1721 = vmatpush1.bf16.msra.mxu0 0
        %1722 = vmatprep.subr.bf16.mxu0 0
        %1723 = vmatpush1.bf16.msra.mxu0 0
        %1724 = vmatprep.subr.bf16.mxu0 0
        %1725 = vmatpush1.bf16.msra.mxu0 0
        %1726 = vmatprep.subr.bf16.mxu0 0
        %1727 = vmatpush1.bf16.msra.mxu0 0
        %1728 = vmatprep.subr.bf16.mxu0 0
        %1729 = vmatpush1.bf16.msra.mxu0 0
        %1730 = vmatprep.subr.bf16.mxu0 0
        %1731 = vmatpush1.bf16.msra.mxu0 0
        %1732 = vmatprep.subr.bf16.mxu0 0
        %1733 = vmatpush1.bf16.msra.mxu0 0
        %1734 = vmatprep.subr.bf16.mxu0 0
        %1735 = vmatpush1.bf16.msra.mxu0 0
        %1736 = vmatprep.mubr.bf16.mxu0 0
        %1737 = vmatmul.mubr.bf16.gmra.mrb[0].mxu0 %v1528
        %v1738 = vpop.f32.mrb[0].mxu0
        %v1739 = vadd.f32 0.0, %v1738
        %v1740 = vpop.f32.mrb[0].mxu0
        %v1741 = vpop.f32.mrb[0].mxu0
        %v1742 = vadd.f32 0.0, %v1741
        %v1743 = vpop.f32.mrb[0].mxu0
        %1744 = vmatprep.mubr.bf16.mxu0 0
        %1745 = vmatmul.mubr.bf16.gmra.mrb[0].mxu0 %v1536
        %v1746 = vpop.f32.mrb[0].mxu0
        %v1747 = vadd.f32 0.0, %v1746
        %v1748 = vpop.f32.mrb[0].mxu0
        %v1749 = vpop.f32.mrb[0].mxu0
        %v1750 = vadd.f32 0.0, %v1749
        %v1751 = vpop.f32.mrb[0].mxu0
        %1752 = vmatprep.mubr.bf16.mxu0 0
        %1753 = vmatmul.mubr.bf16.gmra.mrb[0].mxu0 %v1544
        %v1754 = vpop.f32.mrb[0].mxu0
        %v1755 = vadd.f32 0.0, %v1754
        %v1756 = vpop.f32.mrb[0].mxu0
        %v1757 = vpop.f32.mrb[0].mxu0
        %v1758 = vadd.f32 0.0, %v1757
        %v1759 = vpop.f32.mrb[0].mxu0
        %1760 = vmatprep.mubr.bf16.mxu0 0
        %1761 = vmatmul.mubr.bf16.gmra.mrb[0].mxu0 %v1552
        %v1762 = vpop.f32.mrb[0].mxu0
        %v1763 = vadd.f32 0.0, %v1762
        %v1764 = vpop.f32.mrb[0].mxu0
        %v1765 = vpop.f32.mrb[0].mxu0
        %v1766 = vadd.f32 0.0, %v1765
        %v1767 = vpop.f32.mrb[0].mxu0
        %1768 = vmatprep.mubr.bf16.mxu0 0
        %1769 = vmatmul.mubr.bf16.gmra.mrb[0].mxu0 %v1560
        %v1770 = vpop.f32.mrb[0].mxu0
        %v1771 = vadd.f32 0.0, %v1770
        %v1772 = vpop.f32.mrb[0].mxu0
        %v1773 = vpop.f32.mrb[0].mxu0
        %v1774 = vadd.f32 0.0, %v1773
        %v1775 = vpop.f32.mrb[0].mxu0
        %1776 = vmatprep.mubr.bf16.mxu0 0
        %1777 = vmatmul.mubr.bf16.gmra.mrb[0].mxu0 %v1568
        %v1778 = vpop.f32.mrb[0].mxu0
        %v1779 = vadd.f32 0.0, %v1778
        %v1780 = vpop.f32.mrb[0].mxu0
        %v1781 = vpop.f32.mrb[0].mxu0
        %v1782 = vadd.f32 0.0, %v1781
        %v1783 = vpop.f32.mrb[0].mxu0
        %1784 = vmatprep.mubr.bf16.mxu0 0
        %1785 = vmatmul.mubr.bf16.gmra.mrb[0].mxu0 %v1576
        %v1786 = vpop.f32.mrb[0].mxu0
        %v1787 = vadd.f32 0.0, %v1786
        %v1788 = vpop.f32.mrb[0].mxu0
        %v1789 = vpop.f32.mrb[0].mxu0
        %v1790 = vadd.f32 0.0, %v1789
        %v1791 = vpop.f32.mrb[0].mxu0
        %1792 = vmatprep.mubr.bf16.mxu0 0
        %1793 = vmatmul.mubr.bf16.gmra.mrb[0].mxu0 %v1584
        %v1794 = vpop.f32.mrb[0].mxu0
        %v1795 = vadd.f32 0.0, %v1794
        %v1796 = vpop.f32.mrb[0].mxu0
        %v1797 = vpop.f32.mrb[0].mxu0
        %v1798 = vadd.f32 0.0, %v1797
        %v1799 = vpop.f32.mrb[0].mxu0
        %1800 = vmatprep.mubr.bf16.mxu0 0
        %1801 = vmatmul.mubr.bf16.gmra.mrb[0].mxu0 %v1592
        %v1802 = vpop.f32.mrb[0].mxu0
        %v1803 = vadd.f32 0.0, %v1802
        %v1804 = vpop.f32.mrb[0].mxu0
        %v1805 = vpop.f32.mrb[0].mxu0
        %v1806 = vadd.f32 0.0, %v1805
        %v1807 = vpop.f32.mrb[0].mxu0
        %1808 = vmatprep.mubr.bf16.mxu0 0
        %1809 = vmatmul.mubr.bf16.gmra.mrb[0].mxu0 %v1600
        %v1810 = vpop.f32.mrb[0].mxu0
        %v1811 = vadd.f32 0.0, %v1810
        %v1812 = vpop.f32.mrb[0].mxu0
        %v1813 = vpop.f32.mrb[0].mxu0
        %v1814 = vadd.f32 0.0, %v1813
        %v1815 = vpop.f32.mrb[0].mxu0
        %1816 = vmatprep.mubr.bf16.mxu0 0
        %1817 = vmatmul.mubr.bf16.gmra.mrb[0].mxu0 %v1608
        %v1818 = vpop.f32.mrb[0].mxu0
        %v1819 = vadd.f32 0.0, %v1818
        %v1820 = vpop.f32.mrb[0].mxu0
        %v1821 = vpop.f32.mrb[0].mxu0
        %v1822 = vadd.f32 0.0, %v1821
        %v1823 = vpop.f32.mrb[0].mxu0
        %1824 = vmatprep.mubr.bf16.mxu0 0
        %1825 = vmatmul.mubr.bf16.gmra.mrb[0].mxu0 %v1616
        %v1826 = vpop.f32.mrb[0].mxu0
        %v1827 = vadd.f32 0.0, %v1826
        %v1828 = vpop.f32.mrb[0].mxu0
        %v1829 = vpop.f32.mrb[0].mxu0
        %v1830 = vadd.f32 0.0, %v1829
        %v1831 = vpop.f32.mrb[0].mxu0
        %1832 = vmatprep.mubr.bf16.mxu0 0
        %1833 = vmatmul.mubr.bf16.gmra.mrb[0].mxu0 %v1624
        %v1834 = vpop.f32.mrb[0].mxu0
        %v1835 = vadd.f32 0.0, %v1834
        %v1836 = vpop.f32.mrb[0].mxu0
        %v1837 = vpop.f32.mrb[0].mxu0
        %v1838 = vadd.f32 0.0, %v1837
        %v1839 = vpop.f32.mrb[0].mxu0
        %1840 = vmatprep.mubr.bf16.mxu0 0
        %1841 = vmatmul.mubr.bf16.gmra.mrb[0].mxu0 %v1632
        %v1842 = vpop.f32.mrb[0].mxu0
        %v1843 = vadd.f32 0.0, %v1842
        %v1844 = vpop.f32.mrb[0].mxu0
        %v1845 = vpop.f32.mrb[0].mxu0
        %v1846 = vadd.f32 0.0, %v1845
        %v1847 = vpop.f32.mrb[0].mxu0
        %1848 = vmatprep.mubr.bf16.mxu0 0
        %1849 = vmatmul.mubr.bf16.gmra.mrb[0].mxu0 %v1640
        %v1850 = vpop.f32.mrb[0].mxu0
        %v1851 = vadd.f32 0.0, %v1850
        %v1852 = vpop.f32.mrb[0].mxu0
        %v1853 = vpop.f32.mrb[0].mxu0
        %v1854 = vadd.f32 0.0, %v1853
        %v1855 = vpop.f32.mrb[0].mxu0
        %1856 = vdwg.mxu0
        %v1857 = vadd.f32 %v1453, %v1739
        %v1858 = vadd.f32 %v1454, %v1742
        %v1859 = vadd.f32 %v1455, %v1747
        %v1860 = vadd.f32 %v1456, %v1750
        %v1861 = vadd.f32 %v1457, %v1755
        %v1862 = vadd.f32 %v1458, %v1758
        %v1863 = vadd.f32 %v1459, %v1763
        %v1864 = vadd.f32 %v1460, %v1766
        %v1865 = vadd.f32 %v1461, %v1771
        %v1866 = vadd.f32 %v1462, %v1774
        %v1867 = vadd.f32 %v1463, %v1779
        %v1868 = vadd.f32 %v1464, %v1782
        %v1869 = vadd.f32 %v1465, %v1787
        %v1870 = vadd.f32 %v1466, %v1790
        %v1871 = vadd.f32 %v1467, %v1795
        %v1872 = vadd.f32 %v1468, %v1798
        %v1873 = vadd.f32 %v1469, %v1803
        %v1874 = vadd.f32 %v1470, %v1806
        %v1875 = vadd.f32 %v1471, %v1811
        %v1876 = vadd.f32 %v1472, %v1814
        %v1877 = vadd.f32 %v1473, %v1819
        %v1878 = vadd.f32 %v1474, %v1822
        %v1879 = vadd.f32 %v1475, %v1827
        %v1880 = vadd.f32 %v1476, %v1830
        %v1881 = vadd.f32 %v1477, %v1835
        %v1882 = vadd.f32 %v1478, %v1838
        %v1883 = vadd.f32 %v1479, %v1843
        %v1884 = vadd.f32 %v1480, %v1846
        %v1885 = vadd.f32 %v1481, %v1851
        %v1886 = vadd.f32 %v1482, %v1854
        %s1887 = scalar_lea.vmem [#allocation7], 256
        %v1888 = vld [vmem:[%s1887] sm:$0xf]
        %v1889 = vld [vmem:[%s1887 + $0x4] sm:$0xf]
        %v1890 = vld [vmem:[%s1887 + $0x8] sm:$0xf]
        %v1891 = vld [vmem:[%s1887 + $0xc] sm:$0xf]
        %v1892 = vld [vmem:[%s1887 + $0x10] sm:$0xf]
        %v1893 = vld [vmem:[%s1887 + $0x14] sm:$0xf]
        %v1894 = vld [vmem:[%s1887 + $0x18] sm:$0xf]
        %v1895 = vld [vmem:[%s1887 + $0x1c] sm:$0xf]
        %v1896 = vld [vmem:[%s1887 + $0x20] sm:$0xf]
        %v1897 = vld [vmem:[%s1887 + $0x24] sm:$0xf]
        %v1898 = vld [vmem:[%s1887 + $0x28] sm:$0xf]
        %v1899 = vld [vmem:[%s1887 + $0x2c] sm:$0xf]
        %v1900 = vld [vmem:[%s1887 + $0x30] sm:$0xf]
        %v1901 = vld [vmem:[%s1887 + $0x34] sm:$0xf]
        %v1902 = vld [vmem:[%s1887 + $0x38] sm:$0xf]
        %v1903 = vld [vmem:[%s1887 + $0x3c] sm:$0xf]
        %v1920 = vunpack.c.l.b16 %v1888
        %v1921 = vunpack.c.l.b16 %v1889
        %v1922 = vunpack.c.l.b16 %v1890
        %v1923 = vunpack.c.l.b16 %v1891
        %v1924 = vunpack.c.l.b16 %v1892
        %v1925 = vunpack.c.l.b16 %v1893
        %v1926 = vunpack.c.l.b16 %v1894
        %v1927 = vunpack.c.l.b16 %v1895
        %v1928 = vunpack.c.l.b16 %v1896
        %v1929 = vunpack.c.l.b16 %v1897
        %v1930 = vunpack.c.l.b16 %v1898
        %v1931 = vunpack.c.l.b16 %v1899
        %v1932 = vunpack.c.l.b16 %v1900
        %v1933 = vunpack.c.l.b16 %v1901
        %v1934 = vunpack.c.l.b16 %v1902
        %v1935 = vunpack.c.l.b16 %v1903
        %v1936 = vpack.c.b16 %v1921, %v1920
        %v1937 = vpack.c.b16 %v1923, %v1922
        %v1938 = vpack.c.b16 %v1925, %v1924
        %v1939 = vpack.c.b16 %v1927, %v1926
        %v1940 = vpack.c.b16 %v1929, %v1928
        %v1941 = vpack.c.b16 %v1931, %v1930
        %v1942 = vpack.c.b16 %v1933, %v1932
        %v1943 = vpack.c.b16 %v1935, %v1934
        %1952 = vmatprep.subr.bf16.mxu0 0
        %1953 = vmatpush1.bf16.msra.mxu0 %v1936
        %1954 = vmatprep.subr.bf16.mxu0 0
        %1955 = vmatpush1.bf16.msra.mxu0 %v1937
        %1956 = vmatprep.subr.bf16.mxu0 0
        %1957 = vmatpush1.bf16.msra.mxu0 %v1938
        %1958 = vmatprep.subr.bf16.mxu0 0
        %1959 = vmatpush1.bf16.msra.mxu0 %v1939
        %1960 = vmatprep.subr.bf16.mxu0 0
        %1961 = vmatpush1.bf16.msra.mxu0 %v1940
        %1962 = vmatprep.subr.bf16.mxu0 0
        %1963 = vmatpush1.bf16.msra.mxu0 %v1941
        %1964 = vmatprep.subr.bf16.mxu0 0
        %1965 = vmatpush1.bf16.msra.mxu0 %v1942
        %1966 = vmatprep.subr.bf16.mxu0 0
        %1967 = vmatpush1.bf16.msra.mxu0 %v1943
        %1968 = vmatprep.subr.bf16.mxu0 0
        %1969 = vmatpush1.bf16.msra.mxu0 0
        %1970 = vmatprep.subr.bf16.mxu0 0
        %1971 = vmatpush1.bf16.msra.mxu0 0
        %1972 = vmatprep.subr.bf16.mxu0 0
        %1973 = vmatpush1.bf16.msra.mxu0 0
        %1974 = vmatprep.subr.bf16.mxu0 0
        %1975 = vmatpush1.bf16.msra.mxu0 0
        %1976 = vmatprep.subr.bf16.mxu0 0
        %1977 = vmatpush1.bf16.msra.mxu0 0
        %1978 = vmatprep.subr.bf16.mxu0 0
        %1979 = vmatpush1.bf16.msra.mxu0 0
        %1980 = vmatprep.subr.bf16.mxu0 0
        %1981 = vmatpush1.bf16.msra.mxu0 0
        %1982 = vmatprep.subr.bf16.mxu0 0
        %1983 = vmatpush1.bf16.msra.mxu0 0
        %1984 = vmatprep.mubr.bf16.mxu0 0
        %1985 = vmatmul.mubr.bf16.gmra.mrb[0].mxu0 %v1484
        %v1986 = vpop.f32.mrb[0].mxu0
        %v1987 = vadd.f32 0.0, %v1986
        %v1988 = vpop.f32.mrb[0].mxu0
        %v1989 = vpop.f32.mrb[0].mxu0
        %v1990 = vadd.f32 0.0, %v1989
        %v1991 = vpop.f32.mrb[0].mxu0
        %1992 = vmatprep.mubr.bf16.mxu0 0
        %1993 = vmatmul.mubr.bf16.gmra.mrb[0].mxu0 %v1485
        %v1994 = vpop.f32.mrb[0].mxu0
        %v1995 = vadd.f32 0.0, %v1994
        %v1996 = vpop.f32.mrb[0].mxu0
        %v1997 = vpop.f32.mrb[0].mxu0
        %v1998 = vadd.f32 0.0, %v1997
        %v1999 = vpop.f32.mrb[0].mxu0
        %2000 = vmatprep.mubr.bf16.mxu0 0
        %2001 = vmatmul.mubr.bf16.gmra.mrb[0].mxu0 %v1486
        %v2002 = vpop.f32.mrb[0].mxu0
        %v2003 = vadd.f32 0.0, %v2002
        %v2004 = vpop.f32.mrb[0].mxu0
        %v2005 = vpop.f32.mrb[0].mxu0
        %v2006 = vadd.f32 0.0, %v2005
        %v2007 = vpop.f32.mrb[0].mxu0
        %2008 = vmatprep.mubr.bf16.mxu0 0
        %2009 = vmatmul.mubr.bf16.gmra.mrb[0].mxu0 %v1487
        %v2010 = vpop.f32.mrb[0].mxu0
        %v2011 = vadd.f32 0.0, %v2010
        %v2012 = vpop.f32.mrb[0].mxu0
        %v2013 = vpop.f32.mrb[0].mxu0
        %v2014 = vadd.f32 0.0, %v2013
        %v2015 = vpop.f32.mrb[0].mxu0
        %2016 = vmatprep.mubr.bf16.mxu0 0
        %2017 = vmatmul.mubr.bf16.gmra.mrb[0].mxu0 %v1488
        %v2018 = vpop.f32.mrb[0].mxu0
        %v2019 = vadd.f32 0.0, %v2018
        %v2020 = vpop.f32.mrb[0].mxu0
        %v2021 = vpop.f32.mrb[0].mxu0
        %v2022 = vadd.f32 0.0, %v2021
        %v2023 = vpop.f32.mrb[0].mxu0
        %2024 = vmatprep.mubr.bf16.mxu0 0
        %2025 = vmatmul.mubr.bf16.gmra.mrb[0].mxu0 %v1489
        %v2026 = vpop.f32.mrb[0].mxu0
        %v2027 = vadd.f32 0.0, %v2026
        %v2028 = vpop.f32.mrb[0].mxu0
        %v2029 = vpop.f32.mrb[0].mxu0
        %v2030 = vadd.f32 0.0, %v2029
        %v2031 = vpop.f32.mrb[0].mxu0
        %2032 = vmatprep.mubr.bf16.mxu0 0
        %2033 = vmatmul.mubr.bf16.gmra.mrb[0].mxu0 %v1490
        %v2034 = vpop.f32.mrb[0].mxu0
        %v2035 = vadd.f32 0.0, %v2034
        %v2036 = vpop.f32.mrb[0].mxu0
        %v2037 = vpop.f32.mrb[0].mxu0
        %v2038 = vadd.f32 0.0, %v2037
        %v2039 = vpop.f32.mrb[0].mxu0
        %2040 = vmatprep.mubr.bf16.mxu0 0
        %2041 = vmatmul.mubr.bf16.gmra.mrb[0].mxu0 %v1491
        %v2042 = vpop.f32.mrb[0].mxu0
        %v2043 = vadd.f32 0.0, %v2042
        %v2044 = vpop.f32.mrb[0].mxu0
        %v2045 = vpop.f32.mrb[0].mxu0
        %v2046 = vadd.f32 0.0, %v2045
        %v2047 = vpop.f32.mrb[0].mxu0
        %2048 = vmatprep.mubr.bf16.mxu0 0
        %2049 = vmatmul.mubr.bf16.gmra.mrb[0].mxu0 %v1492
        %v2050 = vpop.f32.mrb[0].mxu0
        %v2051 = vadd.f32 0.0, %v2050
        %v2052 = vpop.f32.mrb[0].mxu0
        %v2053 = vpop.f32.mrb[0].mxu0
        %v2054 = vadd.f32 0.0, %v2053
        %v2055 = vpop.f32.mrb[0].mxu0
        %2056 = vmatprep.mubr.bf16.mxu0 0
        %2057 = vmatmul.mubr.bf16.gmra.mrb[0].mxu0 %v1493
        %v2058 = vpop.f32.mrb[0].mxu0
        %v2059 = vadd.f32 0.0, %v2058
        %v2060 = vpop.f32.mrb[0].mxu0
        %v2061 = vpop.f32.mrb[0].mxu0
        %v2062 = vadd.f32 0.0, %v2061
        %v2063 = vpop.f32.mrb[0].mxu0
        %2064 = vmatprep.mubr.bf16.mxu0 0
        %2065 = vmatmul.mubr.bf16.gmra.mrb[0].mxu0 %v1494
        %v2066 = vpop.f32.mrb[0].mxu0
        %v2067 = vadd.f32 0.0, %v2066
        %v2068 = vpop.f32.mrb[0].mxu0
        %v2069 = vpop.f32.mrb[0].mxu0
        %v2070 = vadd.f32 0.0, %v2069
        %v2071 = vpop.f32.mrb[0].mxu0
        %2072 = vmatprep.mubr.bf16.mxu0 0
        %2073 = vmatmul.mubr.bf16.gmra.mrb[0].mxu0 %v1495
        %v2074 = vpop.f32.mrb[0].mxu0
        %v2075 = vadd.f32 0.0, %v2074
        %v2076 = vpop.f32.mrb[0].mxu0
        %v2077 = vpop.f32.mrb[0].mxu0
        %v2078 = vadd.f32 0.0, %v2077
        %v2079 = vpop.f32.mrb[0].mxu0
        %2080 = vmatprep.mubr.bf16.mxu0 0
        %2081 = vmatmul.mubr.bf16.gmra.mrb[0].mxu0 %v1496
        %v2082 = vpop.f32.mrb[0].mxu0
        %v2083 = vadd.f32 0.0, %v2082
        %v2084 = vpop.f32.mrb[0].mxu0
        %v2085 = vpop.f32.mrb[0].mxu0
        %v2086 = vadd.f32 0.0, %v2085
        %v2087 = vpop.f32.mrb[0].mxu0
        %2088 = vmatprep.mubr.bf16.mxu0 0
        %2089 = vmatmul.mubr.bf16.gmra.mrb[0].mxu0 %v1497
        %v2090 = vpop.f32.mrb[0].mxu0
        %v2091 = vadd.f32 0.0, %v2090
        %v2092 = vpop.f32.mrb[0].mxu0
        %v2093 = vpop.f32.mrb[0].mxu0
        %v2094 = vadd.f32 0.0, %v2093
        %v2095 = vpop.f32.mrb[0].mxu0
        %2096 = vmatprep.mubr.bf16.mxu0 0
        %2097 = vmatmul.mubr.bf16.gmra.mrb[0].mxu0 %v1498
        %v2098 = vpop.f32.mrb[0].mxu0
        %v2099 = vadd.f32 0.0, %v2098
        %v2100 = vpop.f32.mrb[0].mxu0
        %v2101 = vpop.f32.mrb[0].mxu0
        %v2102 = vadd.f32 0.0, %v2101
        %v2103 = vpop.f32.mrb[0].mxu0
        %2104 = vdwg.mxu0
        %v2105 = vadd.f32 %v1857, %v1987
        %v2106 = vadd.f32 %v1858, %v1990
        %v2107 = vadd.f32 %v1859, %v1995
        %v2108 = vadd.f32 %v1860, %v1998
        %v2109 = vadd.f32 %v1861, %v2003
        %v2110 = vadd.f32 %v1862, %v2006
        %v2111 = vadd.f32 %v1863, %v2011
        %v2112 = vadd.f32 %v1864, %v2014
        %v2113 = vadd.f32 %v1865, %v2019
        %v2114 = vadd.f32 %v1866, %v2022
        %v2115 = vadd.f32 %v1867, %v2027
        %v2116 = vadd.f32 %v1868, %v2030
        %v2117 = vadd.f32 %v1869, %v2035
        %v2118 = vadd.f32 %v1870, %v2038
        %v2119 = vadd.f32 %v1871, %v2043
        %v2120 = vadd.f32 %v1872, %v2046
        %v2121 = vadd.f32 %v1873, %v2051
        %v2122 = vadd.f32 %v1874, %v2054
        %v2123 = vadd.f32 %v1875, %v2059
        %v2124 = vadd.f32 %v1876, %v2062
        %v2125 = vadd.f32 %v1877, %v2067
        %v2126 = vadd.f32 %v1878, %v2070
        %v2127 = vadd.f32 %v1879, %v2075
        %v2128 = vadd.f32 %v1880, %v2078
        %v2129 = vadd.f32 %v1881, %v2083
        %v2130 = vadd.f32 %v1882, %v2086
        %v2131 = vadd.f32 %v1883, %v2091
        %v2132 = vadd.f32 %v1884, %v2094
        %v2133 = vadd.f32 %v1885, %v2099
        %v2134 = vadd.f32 %v1886, %v2102
        %v2135 = vld [vmem:[#allocation2 + $0x18] sm:$0xff]
        %v2136 = vld [vmem:[#allocation2 + $0x20] sm:$0xff]
        %v2137 = vld [vmem:[#allocation2 + $0x28] sm:$0xff]
        %v2138 = vld [vmem:[#allocation2 + $0x30] sm:$0xff]
        %v2139 = vld [vmem:[#allocation2 + $0x38] sm:$0xff]
        %v2140 = vld [vmem:[#allocation2 + $0x40] sm:$0xff]
        %v2141 = vld [vmem:[#allocation2 + $0x48] sm:$0xff]
        %v2142 = vld [vmem:[#allocation2 + $0x50] sm:$0xff]
        %v2143 = vld [vmem:[#allocation2 + $0x58] sm:$0xff]
        %v2144 = vld [vmem:[#allocation2 + $0x60] sm:$0xff]
        %v2145 = vld [vmem:[#allocation2 + $0x68] sm:$0xff]
        %v2146 = vld [vmem:[#allocation2 + $0x70] sm:$0xff]
        %v2147 = vld [vmem:[#allocation2 + $0x78] sm:$0xff]
        %v2148 = vld [vmem:[#allocation2 + $0x80] sm:$0xff]
        %v2149 = vld [vmem:[#allocation2 + $0x88] sm:$0xff]
        %v2150 = vld [vmem:[#allocation2 + $0x90] sm:$0x1]
        %s2151 = scalar_lea.vmem [#allocation7], 320
        %v2152 = vld [vmem:[%s2151] sm:$0xf]
        %v2153 = vld [vmem:[%s2151 + $0x4] sm:$0xf]
        %v2154 = vld [vmem:[%s2151 + $0x8] sm:$0xf]
        %v2155 = vld [vmem:[%s2151 + $0xc] sm:$0xf]
        %v2156 = vld [vmem:[%s2151 + $0x10] sm:$0xf]
        %v2157 = vld [vmem:[%s2151 + $0x14] sm:$0xf]
        %v2158 = vld [vmem:[%s2151 + $0x18] sm:$0xf]
        %v2159 = vld [vmem:[%s2151 + $0x1c] sm:$0xf]
        %v2160 = vld [vmem:[%s2151 + $0x20] sm:$0xf]
        %v2161 = vld [vmem:[%s2151 + $0x24] sm:$0xf]
        %v2162 = vld [vmem:[%s2151 + $0x28] sm:$0xf]
        %v2163 = vld [vmem:[%s2151 + $0x2c] sm:$0xf]
        %v2164 = vld [vmem:[%s2151 + $0x30] sm:$0xf]
        %v2165 = vld [vmem:[%s2151 + $0x34] sm:$0xf]
        %v2166 = vld [vmem:[%s2151 + $0x38] sm:$0xf]
        %v2167 = vld [vmem:[%s2151 + $0x3c] sm:$0xf]
        %vm2168 = vsmask.f32 7424
        %v2170 = vshrl.u32 %v2135, 16
        %v2172 = vshll.u32 %v2135, 16
        %v2174 = vrot.slane %v2172, 1
        %v2175 = vor.u32 %v2170, %v2174
        %v2177 = vshll.u32 %v2136, 16
        %v2179 = vrot.slane %v2177, 1
        %v2180 = vsel %vm2168, %v2175, %v2179
        %v2181 = vshrl.u32 %v2136, 16
        %v2183 = vor.u32 %v2181, %v2179
        %v2185 = vshll.u32 %v2137, 16
        %v2187 = vrot.slane %v2185, 1
        %v2188 = vsel %vm2168, %v2183, %v2187
        %v2189 = vshrl.u32 %v2137, 16
        %v2191 = vor.u32 %v2189, %v2187
        %v2193 = vshll.u32 %v2138, 16
        %v2195 = vrot.slane %v2193, 1
        %v2196 = vsel %vm2168, %v2191, %v2195
        %v2197 = vshrl.u32 %v2138, 16
        %v2199 = vor.u32 %v2197, %v2195
        %v2201 = vshll.u32 %v2139, 16
        %v2203 = vrot.slane %v2201, 1
        %v2204 = vsel %vm2168, %v2199, %v2203
        %v2205 = vshrl.u32 %v2139, 16
        %v2207 = vor.u32 %v2205, %v2203
        %v2209 = vshll.u32 %v2140, 16
        %v2211 = vrot.slane %v2209, 1
        %v2212 = vsel %vm2168, %v2207, %v2211
        %v2213 = vshrl.u32 %v2140, 16
        %v2215 = vor.u32 %v2213, %v2211
        %v2217 = vshll.u32 %v2141, 16
        %v2219 = vrot.slane %v2217, 1
        %v2220 = vsel %vm2168, %v2215, %v2219
        %v2221 = vshrl.u32 %v2141, 16
        %v2223 = vor.u32 %v2221, %v2219
        %v2225 = vshll.u32 %v2142, 16
        %v2227 = vrot.slane %v2225, 1
        %v2228 = vsel %vm2168, %v2223, %v2227
        %v2229 = vshrl.u32 %v2142, 16
        %v2231 = vor.u32 %v2229, %v2227
        %v2233 = vshll.u32 %v2143, 16
        %v2235 = vrot.slane %v2233, 1
        %v2236 = vsel %vm2168, %v2231, %v2235
        %v2237 = vshrl.u32 %v2143, 16
        %v2239 = vor.u32 %v2237, %v2235
        %v2241 = vshll.u32 %v2144, 16
        %v2243 = vrot.slane %v2241, 1
        %v2244 = vsel %vm2168, %v2239, %v2243
        %v2245 = vshrl.u32 %v2144, 16
        %v2247 = vor.u32 %v2245, %v2243
        %v2249 = vshll.u32 %v2145, 16
        %v2251 = vrot.slane %v2249, 1
        %v2252 = vsel %vm2168, %v2247, %v2251
        %v2253 = vshrl.u32 %v2145, 16
        %v2255 = vor.u32 %v2253, %v2251
        %v2257 = vshll.u32 %v2146, 16
        %v2259 = vrot.slane %v2257, 1
        %v2260 = vsel %vm2168, %v2255, %v2259
        %v2261 = vshrl.u32 %v2146, 16
        %v2263 = vor.u32 %v2261, %v2259
        %v2265 = vshll.u32 %v2147, 16
        %v2267 = vrot.slane %v2265, 1
        %v2268 = vsel %vm2168, %v2263, %v2267
        %v2269 = vshrl.u32 %v2147, 16
        %v2271 = vor.u32 %v2269, %v2267
        %v2273 = vshll.u32 %v2148, 16
        %v2275 = vrot.slane %v2273, 1
        %v2276 = vsel %vm2168, %v2271, %v2275
        %v2277 = vshrl.u32 %v2148, 16
        %v2279 = vor.u32 %v2277, %v2275
        %v2281 = vshll.u32 %v2149, 16
        %v2283 = vrot.slane %v2281, 1
        %v2284 = vsel %vm2168, %v2279, %v2283
        %v2285 = vshrl.u32 %v2149, 16
        %v2287 = vor.u32 %v2285, %v2283
        %v2289 = vshll.u32 %v2150, 16
        %v2291 = vrot.slane %v2289, 1
        %v2292 = vsel %vm2168, %v2287, %v2291
        %v2324 = vunpack.c.l.b16 %v2152
        %v2325 = vunpack.c.l.b16 %v2153
        %v2326 = vunpack.c.l.b16 %v2154
        %v2327 = vunpack.c.l.b16 %v2155
        %v2328 = vunpack.c.l.b16 %v2156
        %v2329 = vunpack.c.l.b16 %v2157
        %v2330 = vunpack.c.l.b16 %v2158
        %v2331 = vunpack.c.l.b16 %v2159
        %v2332 = vunpack.c.l.b16 %v2160
        %v2333 = vunpack.c.l.b16 %v2161
        %v2334 = vunpack.c.l.b16 %v2162
        %v2335 = vunpack.c.l.b16 %v2163
        %v2336 = vunpack.c.l.b16 %v2164
        %v2337 = vunpack.c.l.b16 %v2165
        %v2338 = vunpack.c.l.b16 %v2166
        %v2339 = vunpack.c.l.b16 %v2167
        %v2340 = vpack.c.b16 %v2325, %v2324
        %v2341 = vpack.c.b16 %v2327, %v2326
        %v2342 = vpack.c.b16 %v2329, %v2328
        %v2343 = vpack.c.b16 %v2331, %v2330
        %v2344 = vpack.c.b16 %v2333, %v2332
        %v2345 = vpack.c.b16 %v2335, %v2334
        %v2346 = vpack.c.b16 %v2337, %v2336
        %v2347 = vpack.c.b16 %v2339, %v2338
        %2356 = vmatprep.subr.bf16.mxu0 0
        %2357 = vmatpush1.bf16.msra.mxu0 %v2340
        %2358 = vmatprep.subr.bf16.mxu0 0
        %2359 = vmatpush1.bf16.msra.mxu0 %v2341
        %2360 = vmatprep.subr.bf16.mxu0 0
        %2361 = vmatpush1.bf16.msra.mxu0 %v2342
        %2362 = vmatprep.subr.bf16.mxu0 0
        %2363 = vmatpush1.bf16.msra.mxu0 %v2343
        %2364 = vmatprep.subr.bf16.mxu0 0
        %2365 = vmatpush1.bf16.msra.mxu0 %v2344
        %2366 = vmatprep.subr.bf16.mxu0 0
        %2367 = vmatpush1.bf16.msra.mxu0 %v2345
        %2368 = vmatprep.subr.bf16.mxu0 0
        %2369 = vmatpush1.bf16.msra.mxu0 %v2346
        %2370 = vmatprep.subr.bf16.mxu0 0
        %2371 = vmatpush1.bf16.msra.mxu0 %v2347
        %2372 = vmatprep.subr.bf16.mxu0 0
        %2373 = vmatpush1.bf16.msra.mxu0 0
        %2374 = vmatprep.subr.bf16.mxu0 0
        %2375 = vmatpush1.bf16.msra.mxu0 0
        %2376 = vmatprep.subr.bf16.mxu0 0
        %2377 = vmatpush1.bf16.msra.mxu0 0
        %2378 = vmatprep.subr.bf16.mxu0 0
        %2379 = vmatpush1.bf16.msra.mxu0 0
        %2380 = vmatprep.subr.bf16.mxu0 0
        %2381 = vmatpush1.bf16.msra.mxu0 0
        %2382 = vmatprep.subr.bf16.mxu0 0
        %2383 = vmatpush1.bf16.msra.mxu0 0
        %2384 = vmatprep.subr.bf16.mxu0 0
        %2385 = vmatpush1.bf16.msra.mxu0 0
        %2386 = vmatprep.subr.bf16.mxu0 0
        %2387 = vmatpush1.bf16.msra.mxu0 0
        %2388 = vmatprep.mubr.bf16.mxu0 0
        %2389 = vmatmul.mubr.bf16.gmra.mrb[0].mxu0 %v2180
        %v2390 = vpop.f32.mrb[0].mxu0
        %v2391 = vadd.f32 0.0, %v2390
        %v2392 = vpop.f32.mrb[0].mxu0
        %v2393 = vpop.f32.mrb[0].mxu0
        %v2394 = vadd.f32 0.0, %v2393
        %v2395 = vpop.f32.mrb[0].mxu0
        %2396 = vmatprep.mubr.bf16.mxu0 0
        %2397 = vmatmul.mubr.bf16.gmra.mrb[0].mxu0 %v2188
        %v2398 = vpop.f32.mrb[0].mxu0
        %v2399 = vadd.f32 0.0, %v2398
        %v2400 = vpop.f32.mrb[0].mxu0
        %v2401 = vpop.f32.mrb[0].mxu0
        %v2402 = vadd.f32 0.0, %v2401
        %v2403 = vpop.f32.mrb[0].mxu0
        %2404 = vmatprep.mubr.bf16.mxu0 0
        %2405 = vmatmul.mubr.bf16.gmra.mrb[0].mxu0 %v2196
        %v2406 = vpop.f32.mrb[0].mxu0
        %v2407 = vadd.f32 0.0, %v2406
        %v2408 = vpop.f32.mrb[0].mxu0
        %v2409 = vpop.f32.mrb[0].mxu0
        %v2410 = vadd.f32 0.0, %v2409
        %v2411 = vpop.f32.mrb[0].mxu0
        %2412 = vmatprep.mubr.bf16.mxu0 0
        %2413 = vmatmul.mubr.bf16.gmra.mrb[0].mxu0 %v2204
        %v2414 = vpop.f32.mrb[0].mxu0
        %v2415 = vadd.f32 0.0, %v2414
        %v2416 = vpop.f32.mrb[0].mxu0
        %v2417 = vpop.f32.mrb[0].mxu0
        %v2418 = vadd.f32 0.0, %v2417
        %v2419 = vpop.f32.mrb[0].mxu0
        %2420 = vmatprep.mubr.bf16.mxu0 0
        %2421 = vmatmul.mubr.bf16.gmra.mrb[0].mxu0 %v2212
        %v2422 = vpop.f32.mrb[0].mxu0
        %v2423 = vadd.f32 0.0, %v2422
        %v2424 = vpop.f32.mrb[0].mxu0
        %v2425 = vpop.f32.mrb[0].mxu0
        %v2426 = vadd.f32 0.0, %v2425
        %v2427 = vpop.f32.mrb[0].mxu0
        %2428 = vmatprep.mubr.bf16.mxu0 0
        %2429 = vmatmul.mubr.bf16.gmra.mrb[0].mxu0 %v2220
        %v2430 = vpop.f32.mrb[0].mxu0
        %v2431 = vadd.f32 0.0, %v2430
        %v2432 = vpop.f32.mrb[0].mxu0
        %v2433 = vpop.f32.mrb[0].mxu0
        %v2434 = vadd.f32 0.0, %v2433
        %v2435 = vpop.f32.mrb[0].mxu0
        %2436 = vmatprep.mubr.bf16.mxu0 0
        %2437 = vmatmul.mubr.bf16.gmra.mrb[0].mxu0 %v2228
        %v2438 = vpop.f32.mrb[0].mxu0
        %v2439 = vadd.f32 0.0, %v2438
        %v2440 = vpop.f32.mrb[0].mxu0
        %v2441 = vpop.f32.mrb[0].mxu0
        %v2442 = vadd.f32 0.0, %v2441
        %v2443 = vpop.f32.mrb[0].mxu0
        %2444 = vmatprep.mubr.bf16.mxu0 0
        %2445 = vmatmul.mubr.bf16.gmra.mrb[0].mxu0 %v2236
        %v2446 = vpop.f32.mrb[0].mxu0
        %v2447 = vadd.f32 0.0, %v2446
        %v2448 = vpop.f32.mrb[0].mxu0
        %v2449 = vpop.f32.mrb[0].mxu0
        %v2450 = vadd.f32 0.0, %v2449
        %v2451 = vpop.f32.mrb[0].mxu0
        %2452 = vmatprep.mubr.bf16.mxu0 0
        %2453 = vmatmul.mubr.bf16.gmra.mrb[0].mxu0 %v2244
        %v2454 = vpop.f32.mrb[0].mxu0
        %v2455 = vadd.f32 0.0, %v2454
        %v2456 = vpop.f32.mrb[0].mxu0
        %v2457 = vpop.f32.mrb[0].mxu0
        %v2458 = vadd.f32 0.0, %v2457
        %v2459 = vpop.f32.mrb[0].mxu0
        %2460 = vmatprep.mubr.bf16.mxu0 0
        %2461 = vmatmul.mubr.bf16.gmra.mrb[0].mxu0 %v2252
        %v2462 = vpop.f32.mrb[0].mxu0
        %v2463 = vadd.f32 0.0, %v2462
        %v2464 = vpop.f32.mrb[0].mxu0
        %v2465 = vpop.f32.mrb[0].mxu0
        %v2466 = vadd.f32 0.0, %v2465
        %v2467 = vpop.f32.mrb[0].mxu0
        %2468 = vmatprep.mubr.bf16.mxu0 0
        %2469 = vmatmul.mubr.bf16.gmra.mrb[0].mxu0 %v2260
        %v2470 = vpop.f32.mrb[0].mxu0
        %v2471 = vadd.f32 0.0, %v2470
        %v2472 = vpop.f32.mrb[0].mxu0
        %v2473 = vpop.f32.mrb[0].mxu0
        %v2474 = vadd.f32 0.0, %v2473
        %v2475 = vpop.f32.mrb[0].mxu0
        %2476 = vmatprep.mubr.bf16.mxu0 0
        %2477 = vmatmul.mubr.bf16.gmra.mrb[0].mxu0 %v2268
        %v2478 = vpop.f32.mrb[0].mxu0
        %v2479 = vadd.f32 0.0, %v2478
        %v2480 = vpop.f32.mrb[0].mxu0
        %v2481 = vpop.f32.mrb[0].mxu0
        %v2482 = vadd.f32 0.0, %v2481
        %v2483 = vpop.f32.mrb[0].mxu0
        %2484 = vmatprep.mubr.bf16.mxu0 0
        %2485 = vmatmul.mubr.bf16.gmra.mrb[0].mxu0 %v2276
        %v2486 = vpop.f32.mrb[0].mxu0
        %v2487 = vadd.f32 0.0, %v2486
        %v2488 = vpop.f32.mrb[0].mxu0
        %v2489 = vpop.f32.mrb[0].mxu0
        %v2490 = vadd.f32 0.0, %v2489
        %v2491 = vpop.f32.mrb[0].mxu0
        %2492 = vmatprep.mubr.bf16.mxu0 0
        %2493 = vmatmul.mubr.bf16.gmra.mrb[0].mxu0 %v2284
        %v2494 = vpop.f32.mrb[0].mxu0
        %v2495 = vadd.f32 0.0, %v2494
        %v2496 = vpop.f32.mrb[0].mxu0
        %v2497 = vpop.f32.mrb[0].mxu0
        %v2498 = vadd.f32 0.0, %v2497
        %v2499 = vpop.f32.mrb[0].mxu0
        %2500 = vmatprep.mubr.bf16.mxu0 0
        %2501 = vmatmul.mubr.bf16.gmra.mrb[0].mxu0 %v2292
        %v2502 = vpop.f32.mrb[0].mxu0
        %v2503 = vadd.f32 0.0, %v2502
        %v2504 = vpop.f32.mrb[0].mxu0
        %v2505 = vpop.f32.mrb[0].mxu0
        %v2506 = vadd.f32 0.0, %v2505
        %v2507 = vpop.f32.mrb[0].mxu0
        %2508 = vdwg.mxu0
        %v2509 = vadd.f32 %v2105, %v2391
        %v2510 = vadd.f32 %v2106, %v2394
        %v2511 = vadd.f32 %v2107, %v2399
        %v2512 = vadd.f32 %v2108, %v2402
        %v2513 = vadd.f32 %v2109, %v2407
        %v2514 = vadd.f32 %v2110, %v2410
        %v2515 = vadd.f32 %v2111, %v2415
        %v2516 = vadd.f32 %v2112, %v2418
        %v2517 = vadd.f32 %v2113, %v2423
        %v2518 = vadd.f32 %v2114, %v2426
        %v2519 = vadd.f32 %v2115, %v2431
        %v2520 = vadd.f32 %v2116, %v2434
        %v2521 = vadd.f32 %v2117, %v2439
        %v2522 = vadd.f32 %v2118, %v2442
        %v2523 = vadd.f32 %v2119, %v2447
        %v2524 = vadd.f32 %v2120, %v2450
        %v2525 = vadd.f32 %v2121, %v2455
        %v2526 = vadd.f32 %v2122, %v2458
        %v2527 = vadd.f32 %v2123, %v2463
        %v2528 = vadd.f32 %v2124, %v2466
        %v2529 = vadd.f32 %v2125, %v2471
        %v2530 = vadd.f32 %v2126, %v2474
        %v2531 = vadd.f32 %v2127, %v2479
        %v2532 = vadd.f32 %v2128, %v2482
        %v2533 = vadd.f32 %v2129, %v2487
        %v2534 = vadd.f32 %v2130, %v2490
        %v2535 = vadd.f32 %v2131, %v2495
        %v2536 = vadd.f32 %v2132, %v2498
        %v2537 = vadd.f32 %v2133, %v2503
        %v2538 = vadd.f32 %v2134, %v2506
        %v2539 = vld [vmem:[#allocation2 + $0x20] sm:$0xf8]
        %v2540 = vld [vmem:[#allocation2 + $0x28] sm:$0xff]
        %v2541 = vld [vmem:[#allocation2 + $0x30] sm:$0xff]
        %v2542 = vld [vmem:[#allocation2 + $0x38] sm:$0xff]
        %v2543 = vld [vmem:[#allocation2 + $0x40] sm:$0xff]
        %v2544 = vld [vmem:[#allocation2 + $0x48] sm:$0xff]
        %v2545 = vld [vmem:[#allocation2 + $0x50] sm:$0xff]
        %v2546 = vld [vmem:[#allocation2 + $0x58] sm:$0xff]
        %v2547 = vld [vmem:[#allocation2 + $0x60] sm:$0xff]
        %v2548 = vld [vmem:[#allocation2 + $0x68] sm:$0xff]
        %v2549 = vld [vmem:[#allocation2 + $0x70] sm:$0xff]
        %v2550 = vld [vmem:[#allocation2 + $0x78] sm:$0xff]
        %v2551 = vld [vmem:[#allocation2 + $0x80] sm:$0xff]
        %v2552 = vld [vmem:[#allocation2 + $0x88] sm:$0xff]
        %v2553 = vld [vmem:[#allocation2 + $0x90] sm:$0xff]
        %v2554 = vld [vmem:[#allocation2 + $0x98] sm:$0xf]
        %s2555 = scalar_lea.vmem [#allocation7], 384
        %v2556 = vld [vmem:[%s2555] sm:$0xf]
        %v2557 = vld [vmem:[%s2555 + $0x4] sm:$0xf]
        %v2558 = vld [vmem:[%s2555 + $0x8] sm:$0xf]
        %v2559 = vld [vmem:[%s2555 + $0xc] sm:$0xf]
        %v2560 = vld [vmem:[%s2555 + $0x10] sm:$0xf]
        %v2561 = vld [vmem:[%s2555 + $0x14] sm:$0xf]
        %v2562 = vld [vmem:[%s2555 + $0x18] sm:$0xf]
        %v2563 = vld [vmem:[%s2555 + $0x1c] sm:$0xf]
        %v2564 = vld [vmem:[%s2555 + $0x20] sm:$0xf]
        %v2565 = vld [vmem:[%s2555 + $0x24] sm:$0xf]
        %v2566 = vld [vmem:[%s2555 + $0x28] sm:$0xf]
        %v2567 = vld [vmem:[%s2555 + $0x2c] sm:$0xf]
        %v2568 = vld [vmem:[%s2555 + $0x30] sm:$0xf]
        %v2569 = vld [vmem:[%s2555 + $0x34] sm:$0xf]
        %v2570 = vld [vmem:[%s2555 + $0x38] sm:$0xf]
        %v2571 = vld [vmem:[%s2555 + $0x3c] sm:$0xf]
        %v2573 = vshrl.u32 %v2539, 16
        %v2575 = vrot.slane %v2573, 3
        %v2576 = vshll.u32 %v2539, 16
        %v2578 = vrot.slane %v2576, 4
        %v2579 = vor.u32 %v2575, %v2578
        %v2581 = vshrl.u32 %v2540, 16
        %v2583 = vrot.slane %v2581, 3
        %v2584 = vshll.u32 %v2540, 16
        %v2586 = vrot.slane %v2584, 4
        %v2587 = vor.u32 %v2583, %v2586
        %v2588 = vsel %vm785, %v2579, %v2587
        %v2590 = vshrl.u32 %v2541, 16
        %v2592 = vrot.slane %v2590, 3
        %v2593 = vshll.u32 %v2541, 16
        %v2595 = vrot.slane %v2593, 4
        %v2596 = vor.u32 %v2592, %v2595
        %v2597 = vsel %vm785, %v2587, %v2596
        %v2599 = vshrl.u32 %v2542, 16
        %v2601 = vrot.slane %v2599, 3
        %v2602 = vshll.u32 %v2542, 16
        %v2604 = vrot.slane %v2602, 4
        %v2605 = vor.u32 %v2601, %v2604
        %v2606 = vsel %vm785, %v2596, %v2605
        %v2608 = vshrl.u32 %v2543, 16
        %v2610 = vrot.slane %v2608, 3
        %v2611 = vshll.u32 %v2543, 16
        %v2613 = vrot.slane %v2611, 4
        %v2614 = vor.u32 %v2610, %v2613
        %v2615 = vsel %vm785, %v2605, %v2614
        %v2617 = vshrl.u32 %v2544, 16
        %v2619 = vrot.slane %v2617, 3
        %v2620 = vshll.u32 %v2544, 16
        %v2622 = vrot.slane %v2620, 4
        %v2623 = vor.u32 %v2619, %v2622
        %v2624 = vsel %vm785, %v2614, %v2623
        %v2626 = vshrl.u32 %v2545, 16
        %v2628 = vrot.slane %v2626, 3
        %v2629 = vshll.u32 %v2545, 16
        %v2631 = vrot.slane %v2629, 4
        %v2632 = vor.u32 %v2628, %v2631
        %v2633 = vsel %vm785, %v2623, %v2632
        %v2635 = vshrl.u32 %v2546, 16
        %v2637 = vrot.slane %v2635, 3
        %v2638 = vshll.u32 %v2546, 16
        %v2640 = vrot.slane %v2638, 4
        %v2641 = vor.u32 %v2637, %v2640
        %v2642 = vsel %vm785, %v2632, %v2641
        %v2644 = vshrl.u32 %v2547, 16
        %v2646 = vrot.slane %v2644, 3
        %v2647 = vshll.u32 %v2547, 16
        %v2649 = vrot.slane %v2647, 4
        %v2650 = vor.u32 %v2646, %v2649
        %v2651 = vsel %vm785, %v2641, %v2650
        %v2653 = vshrl.u32 %v2548, 16
        %v2655 = vrot.slane %v2653, 3
        %v2656 = vshll.u32 %v2548, 16
        %v2658 = vrot.slane %v2656, 4
        %v2659 = vor.u32 %v2655, %v2658
        %v2660 = vsel %vm785, %v2650, %v2659
        %v2662 = vshrl.u32 %v2549, 16
        %v2664 = vrot.slane %v2662, 3
        %v2665 = vshll.u32 %v2549, 16
        %v2667 = vrot.slane %v2665, 4
        %v2668 = vor.u32 %v2664, %v2667
        %v2669 = vsel %vm785, %v2659, %v2668
        %v2671 = vshrl.u32 %v2550, 16
        %v2673 = vrot.slane %v2671, 3
        %v2674 = vshll.u32 %v2550, 16
        %v2676 = vrot.slane %v2674, 4
        %v2677 = vor.u32 %v2673, %v2676
        %v2678 = vsel %vm785, %v2668, %v2677
        %v2680 = vshrl.u32 %v2551, 16
        %v2682 = vrot.slane %v2680, 3
        %v2683 = vshll.u32 %v2551, 16
        %v2685 = vrot.slane %v2683, 4
        %v2686 = vor.u32 %v2682, %v2685
        %v2687 = vsel %vm785, %v2677, %v2686
        %v2689 = vshrl.u32 %v2552, 16
        %v2691 = vrot.slane %v2689, 3
        %v2692 = vshll.u32 %v2552, 16
        %v2694 = vrot.slane %v2692, 4
        %v2695 = vor.u32 %v2691, %v2694
        %v2696 = vsel %vm785, %v2686, %v2695
        %v2698 = vshrl.u32 %v2553, 16
        %v2700 = vrot.slane %v2698, 3
        %v2701 = vshll.u32 %v2553, 16
        %v2703 = vrot.slane %v2701, 4
        %v2704 = vor.u32 %v2700, %v2703
        %v2705 = vsel %vm785, %v2695, %v2704
        %v2707 = vshrl.u32 %v2554, 16
        %v2709 = vrot.slane %v2707, 3
        %v2710 = vshll.u32 %v2554, 16
        %v2712 = vrot.slane %v2710, 4
        %v2713 = vor.u32 %v2709, %v2712
        %v2714 = vsel %vm785, %v2704, %v2713
        %v2746 = vunpack.c.l.b16 %v2556
        %v2747 = vunpack.c.l.b16 %v2557
        %v2748 = vunpack.c.l.b16 %v2558
        %v2749 = vunpack.c.l.b16 %v2559
        %v2750 = vunpack.c.l.b16 %v2560
        %v2751 = vunpack.c.l.b16 %v2561
        %v2752 = vunpack.c.l.b16 %v2562
        %v2753 = vunpack.c.l.b16 %v2563
        %v2754 = vunpack.c.l.b16 %v2564
        %v2755 = vunpack.c.l.b16 %v2565
        %v2756 = vunpack.c.l.b16 %v2566
        %v2757 = vunpack.c.l.b16 %v2567
        %v2758 = vunpack.c.l.b16 %v2568
        %v2759 = vunpack.c.l.b16 %v2569
        %v2760 = vunpack.c.l.b16 %v2570
        %v2761 = vunpack.c.l.b16 %v2571
        %v2762 = vpack.c.b16 %v2747, %v2746
        %v2763 = vpack.c.b16 %v2749, %v2748
        %v2764 = vpack.c.b16 %v2751, %v2750
        %v2765 = vpack.c.b16 %v2753, %v2752
        %v2766 = vpack.c.b16 %v2755, %v2754
        %v2767 = vpack.c.b16 %v2757, %v2756
        %v2768 = vpack.c.b16 %v2759, %v2758
        %v2769 = vpack.c.b16 %v2761, %v2760
        %2778 = vmatprep.subr.bf16.mxu0 0
        %2779 = vmatpush1.bf16.msra.mxu0 %v2762
        %2780 = vmatprep.subr.bf16.mxu0 0
        %2781 = vmatpush1.bf16.msra.mxu0 %v2763
        %2782 = vmatprep.subr.bf16.mxu0 0
        %2783 = vmatpush1.bf16.msra.mxu0 %v2764
        %2784 = vmatprep.subr.bf16.mxu0 0
        %2785 = vmatpush1.bf16.msra.mxu0 %v2765
        %2786 = vmatprep.subr.bf16.mxu0 0
        %2787 = vmatpush1.bf16.msra.mxu0 %v2766
        %2788 = vmatprep.subr.bf16.mxu0 0
        %2789 = vmatpush1.bf16.msra.mxu0 %v2767
        %2790 = vmatprep.subr.bf16.mxu0 0
        %2791 = vmatpush1.bf16.msra.mxu0 %v2768
        %2792 = vmatprep.subr.bf16.mxu0 0
        %2793 = vmatpush1.bf16.msra.mxu0 %v2769
        %2794 = vmatprep.subr.bf16.mxu0 0
        %2795 = vmatpush1.bf16.msra.mxu0 0
        %2796 = vmatprep.subr.bf16.mxu0 0
        %2797 = vmatpush1.bf16.msra.mxu0 0
        %2798 = vmatprep.subr.bf16.mxu0 0
        %2799 = vmatpush1.bf16.msra.mxu0 0
        %2800 = vmatprep.subr.bf16.mxu0 0
        %2801 = vmatpush1.bf16.msra.mxu0 0
        %2802 = vmatprep.subr.bf16.mxu0 0
        %2803 = vmatpush1.bf16.msra.mxu0 0
        %2804 = vmatprep.subr.bf16.mxu0 0
        %2805 = vmatpush1.bf16.msra.mxu0 0
        %2806 = vmatprep.subr.bf16.mxu0 0
        %2807 = vmatpush1.bf16.msra.mxu0 0
        %2808 = vmatprep.subr.bf16.mxu0 0
        %2809 = vmatpush1.bf16.msra.mxu0 0
        %2810 = vmatprep.mubr.bf16.mxu0 0
        %2811 = vmatmul.mubr.bf16.gmra.mrb[0].mxu0 %v2588
        %v2812 = vpop.f32.mrb[0].mxu0
        %v2813 = vadd.f32 0.0, %v2812
        %v2814 = vpop.f32.mrb[0].mxu0
        %v2815 = vpop.f32.mrb[0].mxu0
        %v2816 = vadd.f32 0.0, %v2815
        %v2817 = vpop.f32.mrb[0].mxu0
        %2818 = vmatprep.mubr.bf16.mxu0 0
        %2819 = vmatmul.mubr.bf16.gmra.mrb[0].mxu0 %v2597
        %v2820 = vpop.f32.mrb[0].mxu0
        %v2821 = vadd.f32 0.0, %v2820
        %v2822 = vpop.f32.mrb[0].mxu0
        %v2823 = vpop.f32.mrb[0].mxu0
        %v2824 = vadd.f32 0.0, %v2823
        %v2825 = vpop.f32.mrb[0].mxu0
        %2826 = vmatprep.mubr.bf16.mxu0 0
        %2827 = vmatmul.mubr.bf16.gmra.mrb[0].mxu0 %v2606
        %v2828 = vpop.f32.mrb[0].mxu0
        %v2829 = vadd.f32 0.0, %v2828
        %v2830 = vpop.f32.mrb[0].mxu0
        %v2831 = vpop.f32.mrb[0].mxu0
        %v2832 = vadd.f32 0.0, %v2831
        %v2833 = vpop.f32.mrb[0].mxu0
        %2834 = vmatprep.mubr.bf16.mxu0 0
        %2835 = vmatmul.mubr.bf16.gmra.mrb[0].mxu0 %v2615
        %v2836 = vpop.f32.mrb[0].mxu0
        %v2837 = vadd.f32 0.0, %v2836
        %v2838 = vpop.f32.mrb[0].mxu0
        %v2839 = vpop.f32.mrb[0].mxu0
        %v2840 = vadd.f32 0.0, %v2839
        %v2841 = vpop.f32.mrb[0].mxu0
        %2842 = vmatprep.mubr.bf16.mxu0 0
        %2843 = vmatmul.mubr.bf16.gmra.mrb[0].mxu0 %v2624
        %v2844 = vpop.f32.mrb[0].mxu0
        %v2845 = vadd.f32 0.0, %v2844
        %v2846 = vpop.f32.mrb[0].mxu0
        %v2847 = vpop.f32.mrb[0].mxu0
        %v2848 = vadd.f32 0.0, %v2847
        %v2849 = vpop.f32.mrb[0].mxu0
        %2850 = vmatprep.mubr.bf16.mxu0 0
        %2851 = vmatmul.mubr.bf16.gmra.mrb[0].mxu0 %v2633
        %v2852 = vpop.f32.mrb[0].mxu0
        %v2853 = vadd.f32 0.0, %v2852
        %v2854 = vpop.f32.mrb[0].mxu0
        %v2855 = vpop.f32.mrb[0].mxu0
        %v2856 = vadd.f32 0.0, %v2855
        %v2857 = vpop.f32.mrb[0].mxu0
        %2858 = vmatprep.mubr.bf16.mxu0 0
        %2859 = vmatmul.mubr.bf16.gmra.mrb[0].mxu0 %v2642
        %v2860 = vpop.f32.mrb[0].mxu0
        %v2861 = vadd.f32 0.0, %v2860
        %v2862 = vpop.f32.mrb[0].mxu0
        %v2863 = vpop.f32.mrb[0].mxu0
        %v2864 = vadd.f32 0.0, %v2863
        %v2865 = vpop.f32.mrb[0].mxu0
        %2866 = vmatprep.mubr.bf16.mxu0 0
        %2867 = vmatmul.mubr.bf16.gmra.mrb[0].mxu0 %v2651
        %v2868 = vpop.f32.mrb[0].mxu0
        %v2869 = vadd.f32 0.0, %v2868
        %v2870 = vpop.f32.mrb[0].mxu0
        %v2871 = vpop.f32.mrb[0].mxu0
        %v2872 = vadd.f32 0.0, %v2871
        %v2873 = vpop.f32.mrb[0].mxu0
        %2874 = vmatprep.mubr.bf16.mxu0 0
        %2875 = vmatmul.mubr.bf16.gmra.mrb[0].mxu0 %v2660
        %v2876 = vpop.f32.mrb[0].mxu0
        %v2877 = vadd.f32 0.0, %v2876
        %v2878 = vpop.f32.mrb[0].mxu0
        %v2879 = vpop.f32.mrb[0].mxu0
        %v2880 = vadd.f32 0.0, %v2879
        %v2881 = vpop.f32.mrb[0].mxu0
        %2882 = vmatprep.mubr.bf16.mxu0 0
        %2883 = vmatmul.mubr.bf16.gmra.mrb[0].mxu0 %v2669
        %v2884 = vpop.f32.mrb[0].mxu0
        %v2885 = vadd.f32 0.0, %v2884
        %v2886 = vpop.f32.mrb[0].mxu0
        %v2887 = vpop.f32.mrb[0].mxu0
        %v2888 = vadd.f32 0.0, %v2887
        %v2889 = vpop.f32.mrb[0].mxu0
        %2890 = vmatprep.mubr.bf16.mxu0 0
        %2891 = vmatmul.mubr.bf16.gmra.mrb[0].mxu0 %v2678
        %v2892 = vpop.f32.mrb[0].mxu0
        %v2893 = vadd.f32 0.0, %v2892
        %v2894 = vpop.f32.mrb[0].mxu0
        %v2895 = vpop.f32.mrb[0].mxu0
        %v2896 = vadd.f32 0.0, %v2895
        %v2897 = vpop.f32.mrb[0].mxu0
        %2898 = vmatprep.mubr.bf16.mxu0 0
        %2899 = vmatmul.mubr.bf16.gmra.mrb[0].mxu0 %v2687
        %v2900 = vpop.f32.mrb[0].mxu0
        %v2901 = vadd.f32 0.0, %v2900
        %v2902 = vpop.f32.mrb[0].mxu0
        %v2903 = vpop.f32.mrb[0].mxu0
        %v2904 = vadd.f32 0.0, %v2903
        %v2905 = vpop.f32.mrb[0].mxu0
        %2906 = vmatprep.mubr.bf16.mxu0 0
        %2907 = vmatmul.mubr.bf16.gmra.mrb[0].mxu0 %v2696
        %v2908 = vpop.f32.mrb[0].mxu0
        %v2909 = vadd.f32 0.0, %v2908
        %v2910 = vpop.f32.mrb[0].mxu0
        %v2911 = vpop.f32.mrb[0].mxu0
        %v2912 = vadd.f32 0.0, %v2911
        %v2913 = vpop.f32.mrb[0].mxu0
        %2914 = vmatprep.mubr.bf16.mxu0 0
        %2915 = vmatmul.mubr.bf16.gmra.mrb[0].mxu0 %v2705
        %v2916 = vpop.f32.mrb[0].mxu0
        %v2917 = vadd.f32 0.0, %v2916
        %v2918 = vpop.f32.mrb[0].mxu0
        %v2919 = vpop.f32.mrb[0].mxu0
        %v2920 = vadd.f32 0.0, %v2919
        %v2921 = vpop.f32.mrb[0].mxu0
        %2922 = vmatprep.mubr.bf16.mxu0 0
        %2923 = vmatmul.mubr.bf16.gmra.mrb[0].mxu0 %v2714
        %v2924 = vpop.f32.mrb[0].mxu0
        %v2925 = vadd.f32 0.0, %v2924
        %v2926 = vpop.f32.mrb[0].mxu0
        %v2927 = vpop.f32.mrb[0].mxu0
        %v2928 = vadd.f32 0.0, %v2927
        %v2929 = vpop.f32.mrb[0].mxu0
        %2930 = vdwg.mxu0
        %v2931 = vadd.f32 %v2509, %v2813
        %v2932 = vadd.f32 %v2510, %v2816
        %v2933 = vadd.f32 %v2511, %v2821
        %v2934 = vadd.f32 %v2512, %v2824
        %v2935 = vadd.f32 %v2513, %v2829
        %v2936 = vadd.f32 %v2514, %v2832
        %v2937 = vadd.f32 %v2515, %v2837
        %v2938 = vadd.f32 %v2516, %v2840
        %v2939 = vadd.f32 %v2517, %v2845
        %v2940 = vadd.f32 %v2518, %v2848
        %v2941 = vadd.f32 %v2519, %v2853
        %v2942 = vadd.f32 %v2520, %v2856
        %v2943 = vadd.f32 %v2521, %v2861
        %v2944 = vadd.f32 %v2522, %v2864
        %v2945 = vadd.f32 %v2523, %v2869
        %v2946 = vadd.f32 %v2524, %v2872
        %v2947 = vadd.f32 %v2525, %v2877
        %v2948 = vadd.f32 %v2526, %v2880
        %v2949 = vadd.f32 %v2527, %v2885
        %v2950 = vadd.f32 %v2528, %v2888
        %v2951 = vadd.f32 %v2529, %v2893
        %v2952 = vadd.f32 %v2530, %v2896
        %v2953 = vadd.f32 %v2531, %v2901
        %v2954 = vadd.f32 %v2532, %v2904
        %v2955 = vadd.f32 %v2533, %v2909
        %v2956 = vadd.f32 %v2534, %v2912
        %v2957 = vadd.f32 %v2535, %v2917
        %v2958 = vadd.f32 %v2536, %v2920
        %v2959 = vadd.f32 %v2537, %v2925
        %v2960 = vadd.f32 %v2538, %v2928
        %v2961 = vld [vmem:[#allocation2 + $0x20] sm:$0xf0]
        %s2962 = scalar_lea.vmem [#allocation7], 448
        %v2963 = vld [vmem:[%s2962] sm:$0xf]
        %v2964 = vld [vmem:[%s2962 + $0x4] sm:$0xf]
        %v2965 = vld [vmem:[%s2962 + $0x8] sm:$0xf]
        %v2966 = vld [vmem:[%s2962 + $0xc] sm:$0xf]
        %v2967 = vld [vmem:[%s2962 + $0x10] sm:$0xf]
        %v2968 = vld [vmem:[%s2962 + $0x14] sm:$0xf]
        %v2969 = vld [vmem:[%s2962 + $0x18] sm:$0xf]
        %v2970 = vld [vmem:[%s2962 + $0x1c] sm:$0xf]
        %v2971 = vld [vmem:[%s2962 + $0x20] sm:$0xf]
        %v2972 = vld [vmem:[%s2962 + $0x24] sm:$0xf]
        %v2973 = vld [vmem:[%s2962 + $0x28] sm:$0xf]
        %v2974 = vld [vmem:[%s2962 + $0x2c] sm:$0xf]
        %v2975 = vld [vmem:[%s2962 + $0x30] sm:$0xf]
        %v2976 = vld [vmem:[%s2962 + $0x34] sm:$0xf]
        %v2977 = vld [vmem:[%s2962 + $0x38] sm:$0xf]
        %v2978 = vld [vmem:[%s2962 + $0x3c] sm:$0xf]
        %v2995 = vrot.slane %v2961, 4
        %v2996 = vrot.slane %v2540, 4
        %v2997 = vsel %vm537, %v2995, %v2996
        %v2998 = vrot.slane %v2541, 4
        %v2999 = vsel %vm537, %v2996, %v2998
        %v3000 = vrot.slane %v2542, 4
        %v3001 = vsel %vm537, %v2998, %v3000
        %v3002 = vrot.slane %v2543, 4
        %v3003 = vsel %vm537, %v3000, %v3002
        %v3004 = vrot.slane %v2544, 4
        %v3005 = vsel %vm537, %v3002, %v3004
        %v3006 = vrot.slane %v2545, 4
        %v3007 = vsel %vm537, %v3004, %v3006
        %v3008 = vrot.slane %v2546, 4
        %v3009 = vsel %vm537, %v3006, %v3008
        %v3010 = vrot.slane %v2547, 4
        %v3011 = vsel %vm537, %v3008, %v3010
        %v3012 = vrot.slane %v2548, 4
        %v3013 = vsel %vm537, %v3010, %v3012
        %v3014 = vrot.slane %v2549, 4
        %v3015 = vsel %vm537, %v3012, %v3014
        %v3016 = vrot.slane %v2550, 4
        %v3017 = vsel %vm537, %v3014, %v3016
        %v3018 = vrot.slane %v2551, 4
        %v3019 = vsel %vm537, %v3016, %v3018
        %v3020 = vrot.slane %v2552, 4
        %v3021 = vsel %vm537, %v3018, %v3020
        %v3022 = vrot.slane %v2553, 4
        %v3023 = vsel %vm537, %v3020, %v3022
        %v3024 = vrot.slane %v2554, 4
        %v3025 = vsel %vm537, %v3022, %v3024
        %v3057 = vunpack.c.l.b16 %v2963
        %v3058 = vunpack.c.l.b16 %v2964
        %v3059 = vunpack.c.l.b16 %v2965
        %v3060 = vunpack.c.l.b16 %v2966
        %v3061 = vunpack.c.l.b16 %v2967
        %v3062 = vunpack.c.l.b16 %v2968
        %v3063 = vunpack.c.l.b16 %v2969
        %v3064 = vunpack.c.l.b16 %v2970
        %v3065 = vunpack.c.l.b16 %v2971
        %v3066 = vunpack.c.l.b16 %v2972
        %v3067 = vunpack.c.l.b16 %v2973
        %v3068 = vunpack.c.l.b16 %v2974
        %v3069 = vunpack.c.l.b16 %v2975
        %v3070 = vunpack.c.l.b16 %v2976
        %v3071 = vunpack.c.l.b16 %v2977
        %v3072 = vunpack.c.l.b16 %v2978
        %v3073 = vpack.c.b16 %v3058, %v3057
        %v3074 = vpack.c.b16 %v3060, %v3059
        %v3075 = vpack.c.b16 %v3062, %v3061
        %v3076 = vpack.c.b16 %v3064, %v3063
        %v3077 = vpack.c.b16 %v3066, %v3065
        %v3078 = vpack.c.b16 %v3068, %v3067
        %v3079 = vpack.c.b16 %v3070, %v3069
        %v3080 = vpack.c.b16 %v3072, %v3071
        %3089 = vmatprep.subr.bf16.mxu0 0
        %3090 = vmatpush1.bf16.msra.mxu0 %v3073
        %3091 = vmatprep.subr.bf16.mxu0 0
        %3092 = vmatpush1.bf16.msra.mxu0 %v3074
        %3093 = vmatprep.subr.bf16.mxu0 0
        %3094 = vmatpush1.bf16.msra.mxu0 %v3075
        %3095 = vmatprep.subr.bf16.mxu0 0
        %3096 = vmatpush1.bf16.msra.mxu0 %v3076
        %3097 = vmatprep.subr.bf16.mxu0 0
        %3098 = vmatpush1.bf16.msra.mxu0 %v3077
        %3099 = vmatprep.subr.bf16.mxu0 0
        %3100 = vmatpush1.bf16.msra.mxu0 %v3078
        %3101 = vmatprep.subr.bf16.mxu0 0
        %3102 = vmatpush1.bf16.msra.mxu0 %v3079
        %3103 = vmatprep.subr.bf16.mxu0 0
        %3104 = vmatpush1.bf16.msra.mxu0 %v3080
        %3105 = vmatprep.subr.bf16.mxu0 0
        %3106 = vmatpush1.bf16.msra.mxu0 0
        %3107 = vmatprep.subr.bf16.mxu0 0
        %3108 = vmatpush1.bf16.msra.mxu0 0
        %3109 = vmatprep.subr.bf16.mxu0 0
        %3110 = vmatpush1.bf16.msra.mxu0 0
        %3111 = vmatprep.subr.bf16.mxu0 0
        %3112 = vmatpush1.bf16.msra.mxu0 0
        %3113 = vmatprep.subr.bf16.mxu0 0
        %3114 = vmatpush1.bf16.msra.mxu0 0
        %3115 = vmatprep.subr.bf16.mxu0 0
        %3116 = vmatpush1.bf16.msra.mxu0 0
        %3117 = vmatprep.subr.bf16.mxu0 0
        %3118 = vmatpush1.bf16.msra.mxu0 0
        %3119 = vmatprep.subr.bf16.mxu0 0
        %3120 = vmatpush1.bf16.msra.mxu0 0
        %3121 = vmatprep.mubr.bf16.mxu0 0
        %3122 = vmatmul.mubr.bf16.gmra.mrb[0].mxu0 %v2997
        %v3123 = vpop.f32.mrb[0].mxu0
        %v3124 = vadd.f32 0.0, %v3123
        %v3125 = vpop.f32.mrb[0].mxu0
        %v3126 = vpop.f32.mrb[0].mxu0
        %v3127 = vadd.f32 0.0, %v3126
        %v3128 = vpop.f32.mrb[0].mxu0
        %3129 = vmatprep.mubr.bf16.mxu0 0
        %3130 = vmatmul.mubr.bf16.gmra.mrb[0].mxu0 %v2999
        %v3131 = vpop.f32.mrb[0].mxu0
        %v3132 = vadd.f32 0.0, %v3131
        %v3133 = vpop.f32.mrb[0].mxu0
        %v3134 = vpop.f32.mrb[0].mxu0
        %v3135 = vadd.f32 0.0, %v3134
        %v3136 = vpop.f32.mrb[0].mxu0
        %3137 = vmatprep.mubr.bf16.mxu0 0
        %3138 = vmatmul.mubr.bf16.gmra.mrb[0].mxu0 %v3001
        %v3139 = vpop.f32.mrb[0].mxu0
        %v3140 = vadd.f32 0.0, %v3139
        %v3141 = vpop.f32.mrb[0].mxu0
        %v3142 = vpop.f32.mrb[0].mxu0
        %v3143 = vadd.f32 0.0, %v3142
        %v3144 = vpop.f32.mrb[0].mxu0
        %3145 = vmatprep.mubr.bf16.mxu0 0
        %3146 = vmatmul.mubr.bf16.gmra.mrb[0].mxu0 %v3003
        %v3147 = vpop.f32.mrb[0].mxu0
        %v3148 = vadd.f32 0.0, %v3147
        %v3149 = vpop.f32.mrb[0].mxu0
        %v3150 = vpop.f32.mrb[0].mxu0
        %v3151 = vadd.f32 0.0, %v3150
        %v3152 = vpop.f32.mrb[0].mxu0
        %3153 = vmatprep.mubr.bf16.mxu0 0
        %3154 = vmatmul.mubr.bf16.gmra.mrb[0].mxu0 %v3005
        %v3155 = vpop.f32.mrb[0].mxu0
        %v3156 = vadd.f32 0.0, %v3155
        %v3157 = vpop.f32.mrb[0].mxu0
        %v3158 = vpop.f32.mrb[0].mxu0
        %v3159 = vadd.f32 0.0, %v3158
        %v3160 = vpop.f32.mrb[0].mxu0
        %3161 = vmatprep.mubr.bf16.mxu0 0
        %3162 = vmatmul.mubr.bf16.gmra.mrb[0].mxu0 %v3007
        %v3163 = vpop.f32.mrb[0].mxu0
        %v3164 = vadd.f32 0.0, %v3163
        %v3165 = vpop.f32.mrb[0].mxu0
        %v3166 = vpop.f32.mrb[0].mxu0
        %v3167 = vadd.f32 0.0, %v3166
        %v3168 = vpop.f32.mrb[0].mxu0
        %3169 = vmatprep.mubr.bf16.mxu0 0
        %3170 = vmatmul.mubr.bf16.gmra.mrb[0].mxu0 %v3009
        %v3171 = vpop.f32.mrb[0].mxu0
        %v3172 = vadd.f32 0.0, %v3171
        %v3173 = vpop.f32.mrb[0].mxu0
        %v3174 = vpop.f32.mrb[0].mxu0
        %v3175 = vadd.f32 0.0, %v3174
        %v3176 = vpop.f32.mrb[0].mxu0
        %3177 = vmatprep.mubr.bf16.mxu0 0
        %3178 = vmatmul.mubr.bf16.gmra.mrb[0].mxu0 %v3011
        %v3179 = vpop.f32.mrb[0].mxu0
        %v3180 = vadd.f32 0.0, %v3179
        %v3181 = vpop.f32.mrb[0].mxu0
        %v3182 = vpop.f32.mrb[0].mxu0
        %v3183 = vadd.f32 0.0, %v3182
        %v3184 = vpop.f32.mrb[0].mxu0
        %3185 = vmatprep.mubr.bf16.mxu0 0
        %3186 = vmatmul.mubr.bf16.gmra.mrb[0].mxu0 %v3013
        %v3187 = vpop.f32.mrb[0].mxu0
        %v3188 = vadd.f32 0.0, %v3187
        %v3189 = vpop.f32.mrb[0].mxu0
        %v3190 = vpop.f32.mrb[0].mxu0
        %v3191 = vadd.f32 0.0, %v3190
        %v3192 = vpop.f32.mrb[0].mxu0
        %3193 = vmatprep.mubr.bf16.mxu0 0
        %3194 = vmatmul.mubr.bf16.gmra.mrb[0].mxu0 %v3015
        %v3195 = vpop.f32.mrb[0].mxu0
        %v3196 = vadd.f32 0.0, %v3195
        %v3197 = vpop.f32.mrb[0].mxu0
        %v3198 = vpop.f32.mrb[0].mxu0
        %v3199 = vadd.f32 0.0, %v3198
        %v3200 = vpop.f32.mrb[0].mxu0
        %3201 = vmatprep.mubr.bf16.mxu0 0
        %3202 = vmatmul.mubr.bf16.gmra.mrb[0].mxu0 %v3017
        %v3203 = vpop.f32.mrb[0].mxu0
        %v3204 = vadd.f32 0.0, %v3203
        %v3205 = vpop.f32.mrb[0].mxu0
        %v3206 = vpop.f32.mrb[0].mxu0
        %v3207 = vadd.f32 0.0, %v3206
        %v3208 = vpop.f32.mrb[0].mxu0
        %3209 = vmatprep.mubr.bf16.mxu0 0
        %3210 = vmatmul.mubr.bf16.gmra.mrb[0].mxu0 %v3019
        %v3211 = vpop.f32.mrb[0].mxu0
        %v3212 = vadd.f32 0.0, %v3211
        %v3213 = vpop.f32.mrb[0].mxu0
        %v3214 = vpop.f32.mrb[0].mxu0
        %v3215 = vadd.f32 0.0, %v3214
        %v3216 = vpop.f32.mrb[0].mxu0
        %3217 = vmatprep.mubr.bf16.mxu0 0
        %3218 = vmatmul.mubr.bf16.gmra.mrb[0].mxu0 %v3021
        %v3219 = vpop.f32.mrb[0].mxu0
        %v3220 = vadd.f32 0.0, %v3219
        %v3221 = vpop.f32.mrb[0].mxu0
        %v3222 = vpop.f32.mrb[0].mxu0
        %v3223 = vadd.f32 0.0, %v3222
        %v3224 = vpop.f32.mrb[0].mxu0
        %3225 = vmatprep.mubr.bf16.mxu0 0
        %3226 = vmatmul.mubr.bf16.gmra.mrb[0].mxu0 %v3023
        %v3227 = vpop.f32.mrb[0].mxu0
        %v3228 = vadd.f32 0.0, %v3227
        %v3229 = vpop.f32.mrb[0].mxu0
        %v3230 = vpop.f32.mrb[0].mxu0
        %v3231 = vadd.f32 0.0, %v3230
        %v3232 = vpop.f32.mrb[0].mxu0
        %3233 = vmatprep.mubr.bf16.mxu0 0
        %3234 = vmatmul.mubr.bf16.gmra.mrb[0].mxu0 %v3025
        %v3235 = vpop.f32.mrb[0].mxu0
        %v3236 = vadd.f32 0.0, %v3235
        %v3237 = vpop.f32.mrb[0].mxu0
        %v3238 = vpop.f32.mrb[0].mxu0
        %v3239 = vadd.f32 0.0, %v3238
        %v3240 = vpop.f32.mrb[0].mxu0
        %3241 = vdwg.mxu0
        %v3242 = vadd.f32 %v2931, %v3124
        %v3243 = vadd.f32 %v2932, %v3127
        %v3244 = vadd.f32 %v2933, %v3132
        %v3245 = vadd.f32 %v2934, %v3135
        %v3246 = vadd.f32 %v2935, %v3140
        %v3247 = vadd.f32 %v2936, %v3143
        %v3248 = vadd.f32 %v2937, %v3148
        %v3249 = vadd.f32 %v2938, %v3151
        %v3250 = vadd.f32 %v2939, %v3156
        %v3251 = vadd.f32 %v2940, %v3159
        %v3252 = vadd.f32 %v2941, %v3164
        %v3253 = vadd.f32 %v2942, %v3167
        %v3254 = vadd.f32 %v2943, %v3172
        %v3255 = vadd.f32 %v2944, %v3175
        %v3256 = vadd.f32 %v2945, %v3180
        %v3257 = vadd.f32 %v2946, %v3183
        %v3258 = vadd.f32 %v2947, %v3188
        %v3259 = vadd.f32 %v2948, %v3191
        %v3260 = vadd.f32 %v2949, %v3196
        %v3261 = vadd.f32 %v2950, %v3199
        %v3262 = vadd.f32 %v2951, %v3204
        %v3263 = vadd.f32 %v2952, %v3207
        %v3264 = vadd.f32 %v2953, %v3212
        %v3265 = vadd.f32 %v2954, %v3215
        %v3266 = vadd.f32 %v2955, %v3220
        %v3267 = vadd.f32 %v2956, %v3223
        %v3268 = vadd.f32 %v2957, %v3228
        %v3269 = vadd.f32 %v2958, %v3231
        %v3270 = vadd.f32 %v2959, %v3236
        %v3271 = vadd.f32 %v2960, %v3239
        %v3272 = vld [vmem:[#allocation2 + $0x98] sm:$0x1f]
        %s3273 = scalar_lea.vmem [#allocation7], 512
        %v3274 = vld [vmem:[%s3273] sm:$0xf]
        %v3275 = vld [vmem:[%s3273 + $0x4] sm:$0xf]
        %v3276 = vld [vmem:[%s3273 + $0x8] sm:$0xf]
        %v3277 = vld [vmem:[%s3273 + $0xc] sm:$0xf]
        %v3278 = vld [vmem:[%s3273 + $0x10] sm:$0xf]
        %v3279 = vld [vmem:[%s3273 + $0x14] sm:$0xf]
        %v3280 = vld [vmem:[%s3273 + $0x18] sm:$0xf]
        %v3281 = vld [vmem:[%s3273 + $0x1c] sm:$0xf]
        %v3282 = vld [vmem:[%s3273 + $0x20] sm:$0xf]
        %v3283 = vld [vmem:[%s3273 + $0x24] sm:$0xf]
        %v3284 = vld [vmem:[%s3273 + $0x28] sm:$0xf]
        %v3285 = vld [vmem:[%s3273 + $0x2c] sm:$0xf]
        %v3286 = vld [vmem:[%s3273 + $0x30] sm:$0xf]
        %v3287 = vld [vmem:[%s3273 + $0x34] sm:$0xf]
        %v3288 = vld [vmem:[%s3273 + $0x38] sm:$0xf]
        %v3289 = vld [vmem:[%s3273 + $0x3c] sm:$0xf]
        %v3291 = vshrl.u32 %v2961, 16
        %v3293 = vrot.slane %v3291, 4
        %v3294 = vshll.u32 %v2961, 16
        %v3296 = vrot.slane %v3294, 5
        %v3297 = vor.u32 %v3293, %v3296
        %v3298 = vrot.slane %v2581, 4
        %v3299 = vrot.slane %v2584, 5
        %v3300 = vor.u32 %v3298, %v3299
        %v3301 = vsel %vm1163, %v3297, %v3300
        %v3302 = vrot.slane %v2590, 4
        %v3303 = vrot.slane %v2593, 5
        %v3304 = vor.u32 %v3302, %v3303
        %v3305 = vsel %vm1163, %v3300, %v3304
        %v3306 = vrot.slane %v2599, 4
        %v3307 = vrot.slane %v2602, 5
        %v3308 = vor.u32 %v3306, %v3307
        %v3309 = vsel %vm1163, %v3304, %v3308
        %v3310 = vrot.slane %v2608, 4
        %v3311 = vrot.slane %v2611, 5
        %v3312 = vor.u32 %v3310, %v3311
        %v3313 = vsel %vm1163, %v3308, %v3312
        %v3314 = vrot.slane %v2617, 4
        %v3315 = vrot.slane %v2620, 5
        %v3316 = vor.u32 %v3314, %v3315
        %v3317 = vsel %vm1163, %v3312, %v3316
        %v3318 = vrot.slane %v2626, 4
        %v3319 = vrot.slane %v2629, 5
        %v3320 = vor.u32 %v3318, %v3319
        %v3321 = vsel %vm1163, %v3316, %v3320
        %v3322 = vrot.slane %v2635, 4
        %v3323 = vrot.slane %v2638, 5
        %v3324 = vor.u32 %v3322, %v3323
        %v3325 = vsel %vm1163, %v3320, %v3324
        %v3326 = vrot.slane %v2644, 4
        %v3327 = vrot.slane %v2647, 5
        %v3328 = vor.u32 %v3326, %v3327
        %v3329 = vsel %vm1163, %v3324, %v3328
        %v3330 = vrot.slane %v2653, 4
        %v3331 = vrot.slane %v2656, 5
        %v3332 = vor.u32 %v3330, %v3331
        %v3333 = vsel %vm1163, %v3328, %v3332
        %v3334 = vrot.slane %v2662, 4
        %v3335 = vrot.slane %v2665, 5
        %v3336 = vor.u32 %v3334, %v3335
        %v3337 = vsel %vm1163, %v3332, %v3336
        %v3338 = vrot.slane %v2671, 4
        %v3339 = vrot.slane %v2674, 5
        %v3340 = vor.u32 %v3338, %v3339
        %v3341 = vsel %vm1163, %v3336, %v3340
        %v3342 = vrot.slane %v2680, 4
        %v3343 = vrot.slane %v2683, 5
        %v3344 = vor.u32 %v3342, %v3343
        %v3345 = vsel %vm1163, %v3340, %v3344
        %v3346 = vrot.slane %v2689, 4
        %v3347 = vrot.slane %v2692, 5
        %v3348 = vor.u32 %v3346, %v3347
        %v3349 = vsel %vm1163, %v3344, %v3348
        %v3350 = vrot.slane %v2698, 4
        %v3351 = vrot.slane %v2701, 5
        %v3352 = vor.u32 %v3350, %v3351
        %v3353 = vsel %vm1163, %v3348, %v3352
        %v3355 = vshrl.u32 %v3272, 16
        %v3357 = vrot.slane %v3355, 4
        %v3358 = vshll.u32 %v3272, 16
        %v3360 = vrot.slane %v3358, 5
        %v3361 = vor.u32 %v3357, %v3360
        %v3362 = vsel %vm1163, %v3352, %v3361
        %v3394 = vunpack.c.l.b16 %v3274
        %v3395 = vunpack.c.l.b16 %v3275
        %v3396 = vunpack.c.l.b16 %v3276
        %v3397 = vunpack.c.l.b16 %v3277
        %v3398 = vunpack.c.l.b16 %v3278
        %v3399 = vunpack.c.l.b16 %v3279
        %v3400 = vunpack.c.l.b16 %v3280
        %v3401 = vunpack.c.l.b16 %v3281
        %v3402 = vunpack.c.l.b16 %v3282
        %v3403 = vunpack.c.l.b16 %v3283
        %v3404 = vunpack.c.l.b16 %v3284
        %v3405 = vunpack.c.l.b16 %v3285
        %v3406 = vunpack.c.l.b16 %v3286
        %v3407 = vunpack.c.l.b16 %v3287
        %v3408 = vunpack.c.l.b16 %v3288
        %v3409 = vunpack.c.l.b16 %v3289
        %v3410 = vpack.c.b16 %v3395, %v3394
        %v3411 = vpack.c.b16 %v3397, %v3396
        %v3412 = vpack.c.b16 %v3399, %v3398
        %v3413 = vpack.c.b16 %v3401, %v3400
        %v3414 = vpack.c.b16 %v3403, %v3402
        %v3415 = vpack.c.b16 %v3405, %v3404
        %v3416 = vpack.c.b16 %v3407, %v3406
        %v3417 = vpack.c.b16 %v3409, %v3408
        %3426 = vmatprep.subr.bf16.mxu0 0
        %3427 = vmatpush1.bf16.msra.mxu0 %v3410
        %3428 = vmatprep.subr.bf16.mxu0 0
        %3429 = vmatpush1.bf16.msra.mxu0 %v3411
        %3430 = vmatprep.subr.bf16.mxu0 0
        %3431 = vmatpush1.bf16.msra.mxu0 %v3412
        %3432 = vmatprep.subr.bf16.mxu0 0
        %3433 = vmatpush1.bf16.msra.mxu0 %v3413
        %3434 = vmatprep.subr.bf16.mxu0 0
        %3435 = vmatpush1.bf16.msra.mxu0 %v3414
        %3436 = vmatprep.subr.bf16.mxu0 0
        %3437 = vmatpush1.bf16.msra.mxu0 %v3415
        %3438 = vmatprep.subr.bf16.mxu0 0
        %3439 = vmatpush1.bf16.msra.mxu0 %v3416
        %3440 = vmatprep.subr.bf16.mxu0 0
        %3441 = vmatpush1.bf16.msra.mxu0 %v3417
        %3442 = vmatprep.subr.bf16.mxu0 0
        %3443 = vmatpush1.bf16.msra.mxu0 0
        %3444 = vmatprep.subr.bf16.mxu0 0
        %3445 = vmatpush1.bf16.msra.mxu0 0
        %3446 = vmatprep.subr.bf16.mxu0 0
        %3447 = vmatpush1.bf16.msra.mxu0 0
        %3448 = vmatprep.subr.bf16.mxu0 0
        %3449 = vmatpush1.bf16.msra.mxu0 0
        %3450 = vmatprep.subr.bf16.mxu0 0
        %3451 = vmatpush1.bf16.msra.mxu0 0
        %3452 = vmatprep.subr.bf16.mxu0 0
        %3453 = vmatpush1.bf16.msra.mxu0 0
        %3454 = vmatprep.subr.bf16.mxu0 0
        %3455 = vmatpush1.bf16.msra.mxu0 0
        %3456 = vmatprep.subr.bf16.mxu0 0
        %3457 = vmatpush1.bf16.msra.mxu0 0
        %3458 = vmatprep.mubr.bf16.mxu0 0
        %3459 = vmatmul.mubr.bf16.gmra.mrb[0].mxu0 %v3301
        %v3460 = vpop.f32.mrb[0].mxu0
        %v3461 = vadd.f32 0.0, %v3460
        %v3462 = vpop.f32.mrb[0].mxu0
        %v3463 = vpop.f32.mrb[0].mxu0
        %v3464 = vadd.f32 0.0, %v3463
        %v3465 = vpop.f32.mrb[0].mxu0
        %3466 = vmatprep.mubr.bf16.mxu0 0
        %3467 = vmatmul.mubr.bf16.gmra.mrb[0].mxu0 %v3305
        %v3468 = vpop.f32.mrb[0].mxu0
        %v3469 = vadd.f32 0.0, %v3468
        %v3470 = vpop.f32.mrb[0].mxu0
        %v3471 = vpop.f32.mrb[0].mxu0
        %v3472 = vadd.f32 0.0, %v3471
        %v3473 = vpop.f32.mrb[0].mxu0
        %3474 = vmatprep.mubr.bf16.mxu0 0
        %3475 = vmatmul.mubr.bf16.gmra.mrb[0].mxu0 %v3309
        %v3476 = vpop.f32.mrb[0].mxu0
        %v3477 = vadd.f32 0.0, %v3476
        %v3478 = vpop.f32.mrb[0].mxu0
        %v3479 = vpop.f32.mrb[0].mxu0
        %v3480 = vadd.f32 0.0, %v3479
        %v3481 = vpop.f32.mrb[0].mxu0
        %3482 = vmatprep.mubr.bf16.mxu0 0
        %3483 = vmatmul.mubr.bf16.gmra.mrb[0].mxu0 %v3313
        %v3484 = vpop.f32.mrb[0].mxu0
        %v3485 = vadd.f32 0.0, %v3484
        %v3486 = vpop.f32.mrb[0].mxu0
        %v3487 = vpop.f32.mrb[0].mxu0
        %v3488 = vadd.f32 0.0, %v3487
        %v3489 = vpop.f32.mrb[0].mxu0
        %3490 = vmatprep.mubr.bf16.mxu0 0
        %3491 = vmatmul.mubr.bf16.gmra.mrb[0].mxu0 %v3317
        %v3492 = vpop.f32.mrb[0].mxu0
        %v3493 = vadd.f32 0.0, %v3492
        %v3494 = vpop.f32.mrb[0].mxu0
        %v3495 = vpop.f32.mrb[0].mxu0
        %v3496 = vadd.f32 0.0, %v3495
        %v3497 = vpop.f32.mrb[0].mxu0
        %3498 = vmatprep.mubr.bf16.mxu0 0
        %3499 = vmatmul.mubr.bf16.gmra.mrb[0].mxu0 %v3321
        %v3500 = vpop.f32.mrb[0].mxu0
        %v3501 = vadd.f32 0.0, %v3500
        %v3502 = vpop.f32.mrb[0].mxu0
        %v3503 = vpop.f32.mrb[0].mxu0
        %v3504 = vadd.f32 0.0, %v3503
        %v3505 = vpop.f32.mrb[0].mxu0
        %3506 = vmatprep.mubr.bf16.mxu0 0
        %3507 = vmatmul.mubr.bf16.gmra.mrb[0].mxu0 %v3325
        %v3508 = vpop.f32.mrb[0].mxu0
        %v3509 = vadd.f32 0.0, %v3508
        %v3510 = vpop.f32.mrb[0].mxu0
        %v3511 = vpop.f32.mrb[0].mxu0
        %v3512 = vadd.f32 0.0, %v3511
        %v3513 = vpop.f32.mrb[0].mxu0
        %3514 = vmatprep.mubr.bf16.mxu0 0
        %3515 = vmatmul.mubr.bf16.gmra.mrb[0].mxu0 %v3329
        %v3516 = vpop.f32.mrb[0].mxu0
        %v3517 = vadd.f32 0.0, %v3516
        %v3518 = vpop.f32.mrb[0].mxu0
        %v3519 = vpop.f32.mrb[0].mxu0
        %v3520 = vadd.f32 0.0, %v3519
        %v3521 = vpop.f32.mrb[0].mxu0
        %3522 = vmatprep.mubr.bf16.mxu0 0
        %3523 = vmatmul.mubr.bf16.gmra.mrb[0].mxu0 %v3333
        %v3524 = vpop.f32.mrb[0].mxu0
        %v3525 = vadd.f32 0.0, %v3524
        %v3526 = vpop.f32.mrb[0].mxu0
        %v3527 = vpop.f32.mrb[0].mxu0
        %v3528 = vadd.f32 0.0, %v3527
        %v3529 = vpop.f32.mrb[0].mxu0
        %3530 = vmatprep.mubr.bf16.mxu0 0
        %3531 = vmatmul.mubr.bf16.gmra.mrb[0].mxu0 %v3337
        %v3532 = vpop.f32.mrb[0].mxu0
        %v3533 = vadd.f32 0.0, %v3532
        %v3534 = vpop.f32.mrb[0].mxu0
        %v3535 = vpop.f32.mrb[0].mxu0
        %v3536 = vadd.f32 0.0, %v3535
        %v3537 = vpop.f32.mrb[0].mxu0
        %3538 = vmatprep.mubr.bf16.mxu0 0
        %3539 = vmatmul.mubr.bf16.gmra.mrb[0].mxu0 %v3341
        %v3540 = vpop.f32.mrb[0].mxu0
        %v3541 = vadd.f32 0.0, %v3540
        %v3542 = vpop.f32.mrb[0].mxu0
        %v3543 = vpop.f32.mrb[0].mxu0
        %v3544 = vadd.f32 0.0, %v3543
        %v3545 = vpop.f32.mrb[0].mxu0
        %3546 = vmatprep.mubr.bf16.mxu0 0
        %3547 = vmatmul.mubr.bf16.gmra.mrb[0].mxu0 %v3345
        %v3548 = vpop.f32.mrb[0].mxu0
        %v3549 = vadd.f32 0.0, %v3548
        %v3550 = vpop.f32.mrb[0].mxu0
        %v3551 = vpop.f32.mrb[0].mxu0
        %v3552 = vadd.f32 0.0, %v3551
        %v3553 = vpop.f32.mrb[0].mxu0
        %3554 = vmatprep.mubr.bf16.mxu0 0
        %3555 = vmatmul.mubr.bf16.gmra.mrb[0].mxu0 %v3349
        %v3556 = vpop.f32.mrb[0].mxu0
        %v3557 = vadd.f32 0.0, %v3556
        %v3558 = vpop.f32.mrb[0].mxu0
        %v3559 = vpop.f32.mrb[0].mxu0
        %v3560 = vadd.f32 0.0, %v3559
        %v3561 = vpop.f32.mrb[0].mxu0
        %3562 = vmatprep.mubr.bf16.mxu0 0
        %3563 = vmatmul.mubr.bf16.gmra.mrb[0].mxu0 %v3353
        %v3564 = vpop.f32.mrb[0].mxu0
        %v3565 = vadd.f32 0.0, %v3564
        %v3566 = vpop.f32.mrb[0].mxu0
        %v3567 = vpop.f32.mrb[0].mxu0
        %v3568 = vadd.f32 0.0, %v3567
        %v3569 = vpop.f32.mrb[0].mxu0
        %3570 = vmatprep.mubr.bf16.mxu0 0
        %3571 = vmatmul.mubr.bf16.gmra.mrb[0].mxu0 %v3362
        %v3572 = vpop.f32.mrb[0].mxu0
        %v3573 = vadd.f32 0.0, %v3572
        %v3574 = vpop.f32.mrb[0].mxu0
        %v3575 = vpop.f32.mrb[0].mxu0
        %v3576 = vadd.f32 0.0, %v3575
        %v3577 = vpop.f32.mrb[0].mxu0
        %3578 = vdwg.mxu0
        %v3579 = vadd.f32 %v3242, %v3461
        %v3580 = vadd.f32 %v3243, %v3464
        %v3581 = vadd.f32 %v3244, %v3469
        %v3582 = vadd.f32 %v3245, %v3472
        %v3583 = vadd.f32 %v3246, %v3477
        %v3584 = vadd.f32 %v3247, %v3480
        %v3585 = vadd.f32 %v3248, %v3485
        %v3586 = vadd.f32 %v3249, %v3488
        %v3587 = vadd.f32 %v3250, %v3493
        %v3588 = vadd.f32 %v3251, %v3496
        %v3589 = vadd.f32 %v3252, %v3501
        %v3590 = vadd.f32 %v3253, %v3504
        %v3591 = vadd.f32 %v3254, %v3509
        %v3592 = vadd.f32 %v3255, %v3512
        %v3593 = vadd.f32 %v3256, %v3517
        %v3594 = vadd.f32 %v3257, %v3520
        %v3595 = vadd.f32 %v3258, %v3525
        %v3596 = vadd.f32 %v3259, %v3528
        %v3597 = vadd.f32 %v3260, %v3533
        %v3598 = vadd.f32 %v3261, %v3536
        %v3599 = vadd.f32 %v3262, %v3541
        %v3600 = vadd.f32 %v3263, %v3544
        %v3601 = vadd.f32 %v3264, %v3549
        %v3602 = vadd.f32 %v3265, %v3552
        %v3603 = vadd.f32 %v3266, %v3557
        %v3604 = vadd.f32 %v3267, %v3560
        %v3605 = vadd.f32 %v3268, %v3565
        %v3606 = vadd.f32 %v3269, %v3568
        %v3607 = vadd.f32 %v3270, %v3573
        %v3608 = vadd.f32 %v3271, %v3576
        %v3609 = vld [vmem:[%s3] sm:$0x1]
        %v3611 = vlaneseq
        %v3612 = vshrl.u32 %v3611, 7
        %v3613 = vsub.s32 0, %v3612
        %v3614 = vrot.slane %v3609, %v3613
        %v3616 = vadd.f32 %v3579, %v3614
        %v3617 = vadd.f32 %v3580, %v3614
        %v3618 = vadd.f32 %v3581, %v3614
        %v3619 = vadd.f32 %v3582, %v3614
        %v3620 = vadd.f32 %v3583, %v3614
        %v3621 = vadd.f32 %v3584, %v3614
        %v3622 = vadd.f32 %v3585, %v3614
        %v3623 = vadd.f32 %v3586, %v3614
        %v3624 = vadd.f32 %v3587, %v3614
        %v3625 = vadd.f32 %v3588, %v3614
        %v3626 = vadd.f32 %v3589, %v3614
        %v3627 = vadd.f32 %v3590, %v3614
        %v3628 = vadd.f32 %v3591, %v3614
        %v3629 = vadd.f32 %v3592, %v3614
        %v3630 = vadd.f32 %v3593, %v3614
        %v3631 = vadd.f32 %v3594, %v3614
        %v3632 = vadd.f32 %v3595, %v3614
        %v3633 = vadd.f32 %v3596, %v3614
        %v3634 = vadd.f32 %v3597, %v3614
        %v3635 = vadd.f32 %v3598, %v3614
        %v3636 = vadd.f32 %v3599, %v3614
        %v3637 = vadd.f32 %v3600, %v3614
        %v3638 = vadd.f32 %v3601, %v3614
        %v3639 = vadd.f32 %v3602, %v3614
        %v3640 = vadd.f32 %v3603, %v3614
        %v3641 = vadd.f32 %v3604, %v3614
        %v3642 = vadd.f32 %v3605, %v3614
        %v3643 = vadd.f32 %v3606, %v3614
        %v3644 = vadd.f32 %v3607, %v3614
        %v3645 = vadd.f32 %v3608, %v3614
        %v3646 = vmax.f32 %v3616, 0.0
        %v3647 = vmax.f32 %v3617, 0.0
        %v3648 = vmax.f32 %v3618, 0.0
        %v3649 = vmax.f32 %v3619, 0.0
        %v3650 = vmax.f32 %v3620, 0.0
        %v3651 = vmax.f32 %v3621, 0.0
        %v3652 = vmax.f32 %v3622, 0.0
        %v3653 = vmax.f32 %v3623, 0.0
        %v3654 = vmax.f32 %v3624, 0.0
        %v3655 = vmax.f32 %v3625, 0.0
        %v3656 = vmax.f32 %v3626, 0.0
        %v3657 = vmax.f32 %v3627, 0.0
        %v3658 = vmax.f32 %v3628, 0.0
        %v3659 = vmax.f32 %v3629, 0.0
        %v3660 = vmax.f32 %v3630, 0.0
        %v3661 = vmax.f32 %v3631, 0.0
        %v3662 = vmax.f32 %v3632, 0.0
        %v3663 = vmax.f32 %v3633, 0.0
        %v3664 = vmax.f32 %v3634, 0.0
        %v3665 = vmax.f32 %v3635, 0.0
        %v3666 = vmax.f32 %v3636, 0.0
        %v3667 = vmax.f32 %v3637, 0.0
        %v3668 = vmax.f32 %v3638, 0.0
        %v3669 = vmax.f32 %v3639, 0.0
        %v3670 = vmax.f32 %v3640, 0.0
        %v3671 = vmax.f32 %v3641, 0.0
        %v3672 = vmax.f32 %v3642, 0.0
        %v3673 = vmax.f32 %v3643, 0.0
        %v3674 = vmax.f32 %v3644, 0.0
        %v3675 = vmax.f32 %v3645, 0.0
        %v3676 = vlaneseq
        %v3677 = vshrl.u32 %v3676, 7
        %v3678 = vadd.s32 %v3677, 8
        %v3679 = vadd.s32 %v3677, 16
        %vm3680 = vcmp.eq.s32.totalorder %v3677, 0
        %vm3681 = vcmp.eq.s32.totalorder %v3678, 0
        %vm3682 = vcmp.eq.s32.totalorder %v3679, 0
        %vm3683 = vcmp.ge.s32.totalorder %v3677, 17
        %vm3684 = vcmp.ge.s32.totalorder %v3678, 17
        %vm3685 = vcmp.ge.s32.totalorder %v3679, 17
        %vm3686 = vmor %vm3680, %vm3683
        %vm3687 = vmor %vm3681, %vm3684
        %vm3688 = vmor %vm3682, %vm3685
        %p3689 = scmp.eq.s32.totalorder %s28, 0
        %s3690 = scalar_select %p3689, 1, 0
        %v3691 = vstv %s3690
        %vm3692 = vcmp.eq.s32.totalorder %v3691, 1
        %vm3693 = vmor %vm3686, %vm3692
        %vm3694 = vmor %vm3687, %vm3692
        %vm3695 = vmor %vm3688, %vm3692
        %vm3696 = vmor %vm3686, 0
        %vm3697 = vmor %vm3687, 0
        %vm3698 = vmor %vm3688, 0
        %p3699 = scmp.eq.s32.totalorder %s28, 1
        %s3700 = scalar_select %p3699, 1, 0
        %v3701 = vstv %s3700
        %vm3702 = vcmp.eq.s32.totalorder %v3701, 1
        %vm3703 = vmor %vm3693, 0
        %vm3704 = vmor %vm3694, 0
        %vm3705 = vmor %vm3695, 0
        %vm3706 = vmor %vm3696, 0
        %vm3707 = vmor %vm3697, 0
        %vm3708 = vmor %vm3698, 0
        %vm3709 = vmor %vm3696, %vm3702
        %vm3710 = vmor %vm3697, %vm3702
        %vm3711 = vmor %vm3698, %vm3702
        %v3712 = vsel %vm3703, 1, 0
        %v3713 = vsel %vm3704, 1, 0
        %v3714 = vsel %vm3705, 1, 0
        %v3715 = vsel %vm3706, 1, 0
        %v3716 = vsel %vm3707, 1, 0
        %v3717 = vsel %vm3708, 1, 0
        %v3718 = vsel %vm3709, 1, 0
        %v3719 = vsel %vm3710, 1, 0
        %v3720 = vsel %vm3711, 1, 0
        %vm3721 = vcmp.eq.s32.totalorder %v3712, 1
        %vm3722 = vcmp.eq.s32.totalorder %v3713, 1
        %vm3723 = vcmp.eq.s32.totalorder %v3714, 1
        %vm3724 = vcmp.eq.s32.totalorder %v3715, 1
        %vm3725 = vcmp.eq.s32.totalorder %v3716, 1
        %vm3726 = vcmp.eq.s32.totalorder %v3717, 1
        %vm3727 = vcmp.eq.s32.totalorder %v3718, 1
        %vm3728 = vcmp.eq.s32.totalorder %v3719, 1
        %vm3729 = vcmp.eq.s32.totalorder %v3720, 1
        %v3730 = vsel %vm3721, 0.0, %v3646
        %v3731 = vsel %vm3722, 0.0, %v3647
        %v3732 = vsel %vm3723, 0.0, %v3648
        %v3733 = vsel %vm3724, 0.0, %v3649
        %v3734 = vsel %vm3725, 0.0, %v3650
        %v3735 = vsel %vm3726, 0.0, %v3651
        %v3736 = vsel %vm3724, 0.0, %v3652
        %v3737 = vsel %vm3725, 0.0, %v3653
        %v3738 = vsel %vm3726, 0.0, %v3654
        %v3739 = vsel %vm3724, 0.0, %v3655
        %v3740 = vsel %vm3725, 0.0, %v3656
        %v3741 = vsel %vm3726, 0.0, %v3657
        %v3742 = vsel %vm3724, 0.0, %v3658
        %v3743 = vsel %vm3725, 0.0, %v3659
        %v3744 = vsel %vm3726, 0.0, %v3660
        %v3745 = vsel %vm3724, 0.0, %v3661
        %v3746 = vsel %vm3725, 0.0, %v3662
        %v3747 = vsel %vm3726, 0.0, %v3663
        %v3748 = vsel %vm3724, 0.0, %v3664
        %v3749 = vsel %vm3725, 0.0, %v3665
        %v3750 = vsel %vm3726, 0.0, %v3666
        %v3751 = vsel %vm3724, 0.0, %v3667
        %v3752 = vsel %vm3725, 0.0, %v3668
        %v3753 = vsel %vm3726, 0.0, %v3669
        %v3754 = vsel %vm3724, 0.0, %v3670
        %v3755 = vsel %vm3725, 0.0, %v3671
        %v3756 = vsel %vm3726, 0.0, %v3672
        %v3757 = vsel %vm3727, 0.0, %v3673
        %v3758 = vsel %vm3728, 0.0, %v3674
        %v3759 = vsel %vm3729, 0.0, %v3675
        %v3760 = vpack.c.bf16 %v3731, %v3730
        %v3761 = vpack.c.bf16 %v3733, %v3732
        %v3762 = vpack.c.bf16 %v3735, %v3734
        %v3763 = vpack.c.bf16 %v3737, %v3736
        %v3764 = vpack.c.bf16 %v3739, %v3738
        %v3765 = vpack.c.bf16 %v3741, %v3740
        %v3766 = vpack.c.bf16 %v3743, %v3742
        %v3767 = vpack.c.bf16 %v3745, %v3744
        %v3768 = vpack.c.bf16 %v3747, %v3746
        %v3769 = vpack.c.bf16 %v3749, %v3748
        %v3770 = vpack.c.bf16 %v3751, %v3750
        %v3771 = vpack.c.bf16 %v3753, %v3752
        %v3772 = vpack.c.bf16 %v3755, %v3754
        %v3773 = vpack.c.bf16 %v3757, %v3756
        %v3774 = vpack.c.bf16 %v3759, %v3758
        %v3790 = vunpack.c.l.b16 %v3760
        %v3791 = vunpack.c.h.b16 %v3760
        %v3792 = vunpack.c.l.b16 %v3761
        %v3793 = vunpack.c.h.b16 %v3761
        %v3794 = vunpack.c.l.b16 %v3762
        %v3795 = vunpack.c.h.b16 %v3762
        %v3796 = vunpack.c.l.b16 %v3763
        %v3797 = vunpack.c.h.b16 %v3763
        %v3798 = vunpack.c.l.b16 %v3764
        %v3799 = vunpack.c.h.b16 %v3764
        %v3800 = vunpack.c.l.b16 %v3765
        %v3801 = vunpack.c.h.b16 %v3765
        %v3802 = vunpack.c.l.b16 %v3766
        %v3803 = vunpack.c.h.b16 %v3766
        %v3804 = vunpack.c.l.b16 %v3767
        %v3805 = vunpack.c.h.b16 %v3767
        %v3806 = vunpack.c.l.b16 %v3768
        %v3807 = vunpack.c.h.b16 %v3768
        %v3808 = vunpack.c.l.b16 %v3769
        %v3809 = vunpack.c.h.b16 %v3769
        %v3810 = vunpack.c.l.b16 %v3770
        %v3811 = vunpack.c.h.b16 %v3770
        %v3812 = vunpack.c.l.b16 %v3771
        %v3813 = vunpack.c.h.b16 %v3771
        %v3814 = vunpack.c.l.b16 %v3772
        %v3815 = vunpack.c.h.b16 %v3772
        %v3816 = vunpack.c.l.b16 %v3773
        %v3817 = vunpack.c.h.b16 %v3773
        %v3818 = vunpack.c.l.b16 %v3774
        %v3819 = vunpack.c.h.b16 %v3774
        %v3820 = vpack.c.b16 %v3790, %v3790
        %v3821 = vpack.c.b16 %v3791, %v3791
        %v3822 = vpack.c.b16 %v3792, %v3792
        %v3823 = vpack.c.b16 %v3793, %v3793
        %v3824 = vpack.c.b16 %v3794, %v3794
        %v3825 = vpack.c.b16 %v3795, %v3795
        %v3826 = vpack.c.b16 %v3796, %v3796
        %v3827 = vpack.c.b16 %v3797, %v3797
        %v3828 = vpack.c.b16 %v3798, %v3798
        %v3829 = vpack.c.b16 %v3799, %v3799
        %v3830 = vpack.c.b16 %v3800, %v3800
        %v3831 = vpack.c.b16 %v3801, %v3801
        %v3832 = vpack.c.b16 %v3802, %v3802
        %v3833 = vpack.c.b16 %v3803, %v3803
        %v3834 = vpack.c.b16 %v3804, %v3804
        %v3835 = vpack.c.b16 %v3805, %v3805
        %v3836 = vpack.c.b16 %v3806, %v3806
        %v3837 = vpack.c.b16 %v3807, %v3807
        %v3838 = vpack.c.b16 %v3808, %v3808
        %v3839 = vpack.c.b16 %v3809, %v3809
        %v3840 = vpack.c.b16 %v3810, %v3810
        %v3841 = vpack.c.b16 %v3811, %v3811
        %v3842 = vpack.c.b16 %v3812, %v3812
        %v3843 = vpack.c.b16 %v3813, %v3813
        %v3844 = vpack.c.b16 %v3814, %v3814
        %v3845 = vpack.c.b16 %v3815, %v3815
        %v3846 = vpack.c.b16 %v3816, %v3816
        %v3847 = vpack.c.b16 %v3817, %v3817
        %v3848 = vpack.c.b16 %v3818, %v3818
        %v3849 = vpack.c.b16 %v3819, %v3819
        %3880 = vst [vmem:[#allocation3] sm:$0xf] %v3820
        %3881 = vst [vmem:[#allocation3 + $0x4] sm:$0xf] %v3821
        %3882 = vst [vmem:[#allocation3 + $0x8] sm:$0xf] %v3822
        %3883 = vst [vmem:[#allocation3 + $0xc] sm:$0xf] %v3823
        %3884 = vst [vmem:[#allocation3 + $0x10] sm:$0xf] %v3824
        %3885 = vst [vmem:[#allocation3 + $0x14] sm:$0xf] %v3825
        %3886 = vst [vmem:[#allocation3 + $0x18] sm:$0xf] %v3826
        %3887 = vst [vmem:[#allocation3 + $0x1c] sm:$0xf] %v3827
        %3888 = vst [vmem:[#allocation3 + $0x20] sm:$0xf] %v3828
        %3889 = vst [vmem:[#allocation3 + $0x24] sm:$0xf] %v3829
        %3890 = vst [vmem:[#allocation3 + $0x28] sm:$0xf] %v3830
        %3891 = vst [vmem:[#allocation3 + $0x2c] sm:$0xf] %v3831
        %3892 = vst [vmem:[#allocation3 + $0x30] sm:$0xf] %v3832
        %3893 = vst [vmem:[#allocation3 + $0x34] sm:$0xf] %v3833
        %3894 = vst [vmem:[#allocation3 + $0x38] sm:$0xf] %v3834
        %3895 = vst [vmem:[#allocation3 + $0x3c] sm:$0xf] %v3835
        %3896 = vst [vmem:[#allocation3 + $0x40] sm:$0xf] %v3836
        %3897 = vst [vmem:[#allocation3 + $0x44] sm:$0xf] %v3837
        %3898 = vst [vmem:[#allocation3 + $0x48] sm:$0xf] %v3838
        %3899 = vst [vmem:[#allocation3 + $0x4c] sm:$0xf] %v3839
        %3900 = vst [vmem:[#allocation3 + $0x50] sm:$0xf] %v3840
        %3901 = vst [vmem:[#allocation3 + $0x54] sm:$0xf] %v3841
        %3902 = vst [vmem:[#allocation3 + $0x58] sm:$0xf] %v3842
        %3903 = vst [vmem:[#allocation3 + $0x5c] sm:$0xf] %v3843
        %3904 = vst [vmem:[#allocation3 + $0x60] sm:$0xf] %v3844
        %3905 = vst [vmem:[#allocation3 + $0x64] sm:$0xf] %v3845
        %3906 = vst [vmem:[#allocation3 + $0x68] sm:$0xf] %v3846
        %3907 = vst [vmem:[#allocation3 + $0x6c] sm:$0xf] %v3847
        %3908 = vst [vmem:[#allocation3 + $0x70] sm:$0xf] %v3848
        %3909 = vst [vmem:[#allocation3 + $0x74] sm:$0xf] %v3849
        %3910 = vst [vmem:[#allocation3 + $0x78] sm:$0xf] 0
        %v3911 = vld [vmem:[#allocation3] sm:$0xf]
        %v3912 = vld [vmem:[#allocation3 + $0x4] sm:$0xf]
        %v3913 = vld [vmem:[#allocation3 + $0x8] sm:$0xf]
        %v3914 = vld [vmem:[#allocation3 + $0xc] sm:$0xf]
        %v3915 = vld [vmem:[#allocation3 + $0x10] sm:$0xf]
        %v3916 = vld [vmem:[#allocation3 + $0x14] sm:$0xf]
        %v3917 = vld [vmem:[#allocation3 + $0x18] sm:$0xf]
        %v3918 = vld [vmem:[#allocation3 + $0x1c] sm:$0xf]
        %v3919 = vld [vmem:[#allocation3 + $0x20] sm:$0xf]
        %v3920 = vld [vmem:[#allocation3 + $0x24] sm:$0xf]
        %v3921 = vld [vmem:[#allocation3 + $0x28] sm:$0xf]
        %v3922 = vld [vmem:[#allocation3 + $0x2c] sm:$0xf]
        %v3923 = vld [vmem:[#allocation3 + $0x30] sm:$0xf]
        %v3924 = vld [vmem:[#allocation3 + $0x34] sm:$0xf]
        %v3925 = vld [vmem:[#allocation3 + $0x38] sm:$0xf]
        %v3926 = vld [vmem:[#allocation3 + $0x3c] sm:$0xf]
        %v3927 = vld [vmem:[#allocation3 + $0x40] sm:$0xf]
        %v3928 = vld [vmem:[#allocation3 + $0x44] sm:$0xf]
        %v3929 = vld [vmem:[#allocation3 + $0x48] sm:$0xf]
        %v3930 = vld [vmem:[#allocation3 + $0x4c] sm:$0xf]
        %v3931 = vld [vmem:[#allocation3 + $0x50] sm:$0xf]
        %v3932 = vld [vmem:[#allocation3 + $0x54] sm:$0xf]
        %v3933 = vld [vmem:[#allocation3 + $0x58] sm:$0xf]
        %v3934 = vld [vmem:[#allocation3 + $0x5c] sm:$0xf]
        %v3935 = vld [vmem:[#allocation9] sm:$0xf]
        %v3936 = vld [vmem:[#allocation9 + $0x4] sm:$0xf]
        %v3937 = vld [vmem:[#allocation9 + $0x8] sm:$0xf]
        %v3938 = vld [vmem:[#allocation9 + $0xc] sm:$0xf]
        %v3939 = vld [vmem:[#allocation9 + $0x10] sm:$0xf]
        %v3940 = vld [vmem:[#allocation9 + $0x14] sm:$0xf]
        %v3941 = vld [vmem:[#allocation9 + $0x18] sm:$0xf]
        %v3942 = vld [vmem:[#allocation9 + $0x1c] sm:$0xf]
        %v3943 = vld [vmem:[#allocation9 + $0x20] sm:$0xf]
        %v3944 = vld [vmem:[#allocation9 + $0x24] sm:$0xf]
        %v3945 = vld [vmem:[#allocation9 + $0x28] sm:$0xf]
        %v3946 = vld [vmem:[#allocation9 + $0x2c] sm:$0xf]
        %v3947 = vld [vmem:[#allocation9 + $0x30] sm:$0xf]
        %v3948 = vld [vmem:[#allocation9 + $0x34] sm:$0xf]
        %v3949 = vld [vmem:[#allocation9 + $0x38] sm:$0xf]
        %v3950 = vld [vmem:[#allocation9 + $0x3c] sm:$0xf]
        %v3951 = vld [vmem:[#allocation3 + $0x60] sm:$0x1]
        %s3952 = scalar_lea.vmem [#allocation9], 64
        %v3953 = vld [vmem:[%s3952] sm:$0xf]
        %v3954 = vld [vmem:[%s3952 + $0x4] sm:$0xf]
        %v3955 = vld [vmem:[%s3952 + $0x8] sm:$0xf]
        %v3956 = vld [vmem:[%s3952 + $0xc] sm:$0xf]
        %v3957 = vld [vmem:[%s3952 + $0x10] sm:$0xf]
        %v3958 = vld [vmem:[%s3952 + $0x14] sm:$0xf]
        %v3959 = vld [vmem:[%s3952 + $0x18] sm:$0xf]
        %v3960 = vld [vmem:[%s3952 + $0x1c] sm:$0xf]
        %v3961 = vld [vmem:[%s3952 + $0x20] sm:$0xf]
        %v3962 = vld [vmem:[%s3952 + $0x24] sm:$0xf]
        %v3963 = vld [vmem:[%s3952 + $0x28] sm:$0xf]
        %v3964 = vld [vmem:[%s3952 + $0x2c] sm:$0xf]
        %v3965 = vld [vmem:[%s3952 + $0x30] sm:$0xf]
        %v3966 = vld [vmem:[%s3952 + $0x34] sm:$0xf]
        %v3967 = vld [vmem:[%s3952 + $0x38] sm:$0xf]
        %v3968 = vld [vmem:[%s3952 + $0x3c] sm:$0xf]
        %v3994 = vunpack.c.l.b16 %v3911
        %v3995 = vunpack.c.l.b16 %v3912
        %v3996 = vunpack.c.l.b16 %v3913
        %v3997 = vunpack.c.l.b16 %v3914
        %v3998 = vunpack.c.l.b16 %v3915
        %v3999 = vunpack.c.l.b16 %v3916
        %v4000 = vunpack.c.l.b16 %v3917
        %v4001 = vunpack.c.l.b16 %v3918
        %v4002 = vunpack.c.l.b16 %v3919
        %v4003 = vunpack.c.l.b16 %v3920
        %v4004 = vunpack.c.l.b16 %v3921
        %v4005 = vunpack.c.l.b16 %v3922
        %v4006 = vunpack.c.l.b16 %v3923
        %v4007 = vunpack.c.l.b16 %v3924
        %v4008 = vunpack.c.l.b16 %v3925
        %v4009 = vunpack.c.l.b16 %v3926
        %v4010 = vunpack.c.l.b16 %v3927
        %v4011 = vunpack.c.l.b16 %v3928
        %v4012 = vunpack.c.l.b16 %v3929
        %v4013 = vunpack.c.l.b16 %v3930
        %v4014 = vunpack.c.l.b16 %v3931
        %v4015 = vunpack.c.l.b16 %v3932
        %v4016 = vunpack.c.l.b16 %v3933
        %v4017 = vunpack.c.l.b16 %v3934
        %v4018 = vunpack.c.l.b16 %v3951
        %v4019 = vpack.c.b16 %v3995, %v3994
        %v4020 = vpack.c.b16 %v3997, %v3996
        %v4021 = vpack.c.b16 %v3999, %v3998
        %v4022 = vpack.c.b16 %v4001, %v4000
        %v4023 = vpack.c.b16 %v4003, %v4002
        %v4024 = vpack.c.b16 %v4005, %v4004
        %v4025 = vpack.c.b16 %v4007, %v4006
        %v4026 = vpack.c.b16 %v4009, %v4008
        %v4027 = vpack.c.b16 %v4011, %v4010
        %v4028 = vpack.c.b16 %v4013, %v4012
        %v4029 = vpack.c.b16 %v4015, %v4014
        %v4030 = vpack.c.b16 %v4017, %v4016
        %v4031 = vpack.c.b16 %v4018, %v4018
        %v4033 = vshrl.u32 %v4019, 16
        %v4035 = vshll.u32 %v4019, 16
        %v4037 = vrot.slane %v4035, 1
        %v4038 = vor.u32 %v4033, %v4037
        %v4040 = vshll.u32 %v4020, 16
        %v4042 = vrot.slane %v4040, 1
        %v4043 = vsel %vm2168, %v4038, %v4042
        %v4044 = vshrl.u32 %v4020, 16
        %v4046 = vor.u32 %v4044, %v4042
        %v4048 = vshll.u32 %v4021, 16
        %v4050 = vrot.slane %v4048, 1
        %v4051 = vsel %vm2168, %v4046, %v4050
        %v4052 = vshrl.u32 %v4021, 16
        %v4054 = vor.u32 %v4052, %v4050
        %v4056 = vshll.u32 %v4022, 16
        %v4058 = vrot.slane %v4056, 1
        %v4059 = vsel %vm2168, %v4054, %v4058
        %v4060 = vshrl.u32 %v4022, 16
        %v4062 = vor.u32 %v4060, %v4058
        %v4064 = vshll.u32 %v4023, 16
        %v4066 = vrot.slane %v4064, 1
        %v4067 = vsel %vm2168, %v4062, %v4066
        %v4068 = vshrl.u32 %v4023, 16
        %v4070 = vor.u32 %v4068, %v4066
        %v4072 = vshll.u32 %v4024, 16
        %v4074 = vrot.slane %v4072, 1
        %v4075 = vsel %vm2168, %v4070, %v4074
        %v4076 = vshrl.u32 %v4024, 16
        %v4078 = vor.u32 %v4076, %v4074
        %v4080 = vshll.u32 %v4025, 16
        %v4082 = vrot.slane %v4080, 1
        %v4083 = vsel %vm2168, %v4078, %v4082
        %v4084 = vshrl.u32 %v4025, 16
        %v4086 = vor.u32 %v4084, %v4082
        %v4088 = vshll.u32 %v4026, 16
        %v4090 = vrot.slane %v4088, 1
        %v4091 = vsel %vm2168, %v4086, %v4090
        %v4092 = vshrl.u32 %v4026, 16
        %v4094 = vor.u32 %v4092, %v4090
        %v4096 = vshll.u32 %v4027, 16
        %v4098 = vrot.slane %v4096, 1
        %v4099 = vsel %vm2168, %v4094, %v4098
        %v4100 = vshrl.u32 %v4027, 16
        %v4102 = vor.u32 %v4100, %v4098
        %v4104 = vshll.u32 %v4028, 16
        %v4106 = vrot.slane %v4104, 1
        %v4107 = vsel %vm2168, %v4102, %v4106
        %v4108 = vshrl.u32 %v4028, 16
        %v4110 = vor.u32 %v4108, %v4106
        %v4112 = vshll.u32 %v4029, 16
        %v4114 = vrot.slane %v4112, 1
        %v4115 = vsel %vm2168, %v4110, %v4114
        %v4116 = vshrl.u32 %v4029, 16
        %v4118 = vor.u32 %v4116, %v4114
        %v4120 = vshll.u32 %v4030, 16
        %v4122 = vrot.slane %v4120, 1
        %v4123 = vsel %vm2168, %v4118, %v4122
        %v4124 = vshrl.u32 %v4030, 16
        %v4126 = vor.u32 %v4124, %v4122
        %v4128 = vshll.u32 %v4031, 16
        %v4130 = vrot.slane %v4128, 1
        %v4131 = vsel %vm2168, %v4126, %v4130
        %v4160 = vunpack.c.l.b16 %v3953
        %v4161 = vunpack.c.l.b16 %v3954
        %v4162 = vunpack.c.l.b16 %v3955
        %v4163 = vunpack.c.l.b16 %v3956
        %v4164 = vunpack.c.l.b16 %v3957
        %v4165 = vunpack.c.l.b16 %v3958
        %v4166 = vunpack.c.l.b16 %v3959
        %v4167 = vunpack.c.l.b16 %v3960
        %v4168 = vunpack.c.l.b16 %v3961
        %v4169 = vunpack.c.l.b16 %v3962
        %v4170 = vunpack.c.l.b16 %v3963
        %v4171 = vunpack.c.l.b16 %v3964
        %v4172 = vunpack.c.l.b16 %v3965
        %v4173 = vunpack.c.l.b16 %v3966
        %v4174 = vunpack.c.l.b16 %v3967
        %v4175 = vunpack.c.l.b16 %v3968
        %v4176 = vpack.c.b16 %v4161, %v4160
        %v4177 = vpack.c.b16 %v4163, %v4162
        %v4178 = vpack.c.b16 %v4165, %v4164
        %v4179 = vpack.c.b16 %v4167, %v4166
        %v4180 = vpack.c.b16 %v4169, %v4168
        %v4181 = vpack.c.b16 %v4171, %v4170
        %v4182 = vpack.c.b16 %v4173, %v4172
        %v4183 = vpack.c.b16 %v4175, %v4174
        %4192 = vmatprep.subr.bf16.mxu0 0
        %4193 = vmatpush1.bf16.msra.mxu0 %v4176
        %4194 = vmatprep.subr.bf16.mxu0 0
        %4195 = vmatpush1.bf16.msra.mxu0 %v4177
        %4196 = vmatprep.subr.bf16.mxu0 0
        %4197 = vmatpush1.bf16.msra.mxu0 %v4178
        %4198 = vmatprep.subr.bf16.mxu0 0
        %4199 = vmatpush1.bf16.msra.mxu0 %v4179
        %4200 = vmatprep.subr.bf16.mxu0 0
        %4201 = vmatpush1.bf16.msra.mxu0 %v4180
        %4202 = vmatprep.subr.bf16.mxu0 0
        %4203 = vmatpush1.bf16.msra.mxu0 %v4181
        %4204 = vmatprep.subr.bf16.mxu0 0
        %4205 = vmatpush1.bf16.msra.mxu0 %v4182
        %4206 = vmatprep.subr.bf16.mxu0 0
        %4207 = vmatpush1.bf16.msra.mxu0 %v4183
        %4208 = vmatprep.subr.bf16.mxu0 0
        %4209 = vmatpush1.bf16.msra.mxu0 0
        %4210 = vmatprep.subr.bf16.mxu0 0
        %4211 = vmatpush1.bf16.msra.mxu0 0
        %4212 = vmatprep.subr.bf16.mxu0 0
        %4213 = vmatpush1.bf16.msra.mxu0 0
        %4214 = vmatprep.subr.bf16.mxu0 0
        %4215 = vmatpush1.bf16.msra.mxu0 0
        %4216 = vmatprep.subr.bf16.mxu0 0
        %4217 = vmatpush1.bf16.msra.mxu0 0
        %4218 = vmatprep.subr.bf16.mxu0 0
        %4219 = vmatpush1.bf16.msra.mxu0 0
        %4220 = vmatprep.subr.bf16.mxu0 0
        %4221 = vmatpush1.bf16.msra.mxu0 0
        %4222 = vmatprep.subr.bf16.mxu0 0
        %4223 = vmatpush1.bf16.msra.mxu0 0
        %4224 = vmatprep.mubr.bf16.mxu0 0
        %4225 = vmatmul.mubr.bf16.gmra.mrb[0].mxu0 %v4043
        %v4226 = vpop.f32.mrb[0].mxu0
        %v4227 = vadd.f32 0.0, %v4226
        %v4228 = vpop.f32.mrb[0].mxu0
        %v4229 = vpop.f32.mrb[0].mxu0
        %v4230 = vadd.f32 0.0, %v4229
        %v4231 = vpop.f32.mrb[0].mxu0
        %4232 = vmatprep.mubr.bf16.mxu0 0
        %4233 = vmatmul.mubr.bf16.gmra.mrb[0].mxu0 %v4051
        %v4234 = vpop.f32.mrb[0].mxu0
        %v4235 = vpop.f32.mrb[0].mxu0
        %v4236 = vpop.f32.mrb[0].mxu0
        %v4237 = vadd.f32 0.0, %v4236
        %v4238 = vpop.f32.mrb[0].mxu0
        %4239 = vmatprep.mubr.bf16.mxu0 0
        %4240 = vmatmul.mubr.bf16.gmra.mrb[0].mxu0 %v4059
        %v4241 = vpop.f32.mrb[0].mxu0
        %v4242 = vadd.f32 0.0, %v4241
        %v4243 = vpop.f32.mrb[0].mxu0
        %v4244 = vpop.f32.mrb[0].mxu0
        %v4245 = vpop.f32.mrb[0].mxu0
        %4246 = vmatprep.mubr.bf16.mxu0 0
        %4247 = vmatmul.mubr.bf16.gmra.mrb[0].mxu0 %v4067
        %v4248 = vpop.f32.mrb[0].mxu0
        %v4249 = vadd.f32 0.0, %v4248
        %v4250 = vpop.f32.mrb[0].mxu0
        %v4251 = vpop.f32.mrb[0].mxu0
        %v4252 = vadd.f32 0.0, %v4251
        %v4253 = vpop.f32.mrb[0].mxu0
        %4254 = vmatprep.mubr.bf16.mxu0 0
        %4255 = vmatmul.mubr.bf16.gmra.mrb[0].mxu0 %v4075
        %v4256 = vpop.f32.mrb[0].mxu0
        %v4257 = vpop.f32.mrb[0].mxu0
        %v4258 = vpop.f32.mrb[0].mxu0
        %v4259 = vadd.f32 0.0, %v4258
        %v4260 = vpop.f32.mrb[0].mxu0
        %4261 = vmatprep.mubr.bf16.mxu0 0
        %4262 = vmatmul.mubr.bf16.gmra.mrb[0].mxu0 %v4083
        %v4263 = vpop.f32.mrb[0].mxu0
        %v4264 = vadd.f32 0.0, %v4263
        %v4265 = vpop.f32.mrb[0].mxu0
        %v4266 = vpop.f32.mrb[0].mxu0
        %v4267 = vpop.f32.mrb[0].mxu0
        %4268 = vmatprep.mubr.bf16.mxu0 0
        %4269 = vmatmul.mubr.bf16.gmra.mrb[0].mxu0 %v4091
        %v4270 = vpop.f32.mrb[0].mxu0
        %v4271 = vadd.f32 0.0, %v4270
        %v4272 = vpop.f32.mrb[0].mxu0
        %v4273 = vpop.f32.mrb[0].mxu0
        %v4274 = vadd.f32 0.0, %v4273
        %v4275 = vpop.f32.mrb[0].mxu0
        %4276 = vmatprep.mubr.bf16.mxu0 0
        %4277 = vmatmul.mubr.bf16.gmra.mrb[0].mxu0 %v4099
        %v4278 = vpop.f32.mrb[0].mxu0
        %v4279 = vpop.f32.mrb[0].mxu0
        %v4280 = vpop.f32.mrb[0].mxu0
        %v4281 = vadd.f32 0.0, %v4280
        %v4282 = vpop.f32.mrb[0].mxu0
        %4283 = vmatprep.mubr.bf16.mxu0 0
        %4284 = vmatmul.mubr.bf16.gmra.mrb[0].mxu0 %v4107
        %v4285 = vpop.f32.mrb[0].mxu0
        %v4286 = vadd.f32 0.0, %v4285
        %v4287 = vpop.f32.mrb[0].mxu0
        %v4288 = vpop.f32.mrb[0].mxu0
        %v4289 = vpop.f32.mrb[0].mxu0
        %4290 = vmatprep.mubr.bf16.mxu0 0
        %4291 = vmatmul.mubr.bf16.gmra.mrb[0].mxu0 %v4115
        %v4292 = vpop.f32.mrb[0].mxu0
        %v4293 = vadd.f32 0.0, %v4292
        %v4294 = vpop.f32.mrb[0].mxu0
        %v4295 = vpop.f32.mrb[0].mxu0
        %v4296 = vadd.f32 0.0, %v4295
        %v4297 = vpop.f32.mrb[0].mxu0
        %4298 = vmatprep.mubr.bf16.mxu0 0
        %4299 = vmatmul.mubr.bf16.gmra.mrb[0].mxu0 %v4123
        %v4300 = vpop.f32.mrb[0].mxu0
        %v4301 = vpop.f32.mrb[0].mxu0
        %v4302 = vpop.f32.mrb[0].mxu0
        %v4303 = vadd.f32 0.0, %v4302
        %v4304 = vpop.f32.mrb[0].mxu0
        %4305 = vmatprep.mubr.bf16.mxu0 0
        %4306 = vmatmul.mubr.bf16.gmra.mrb[0].mxu0 %v4131
        %v4307 = vpop.f32.mrb[0].mxu0
        %v4308 = vadd.f32 0.0, %v4307
        %v4309 = vpop.f32.mrb[0].mxu0
        %v4310 = vpop.f32.mrb[0].mxu0
        %v4311 = vpop.f32.mrb[0].mxu0
        %4312 = vdwg.mxu0
        %v4341 = vunpack.c.l.b16 %v3935
        %v4342 = vunpack.c.l.b16 %v3936
        %v4343 = vunpack.c.l.b16 %v3937
        %v4344 = vunpack.c.l.b16 %v3938
        %v4345 = vunpack.c.l.b16 %v3939
        %v4346 = vunpack.c.l.b16 %v3940
        %v4347 = vunpack.c.l.b16 %v3941
        %v4348 = vunpack.c.l.b16 %v3942
        %v4349 = vunpack.c.l.b16 %v3943
        %v4350 = vunpack.c.l.b16 %v3944
        %v4351 = vunpack.c.l.b16 %v3945
        %v4352 = vunpack.c.l.b16 %v3946
        %v4353 = vunpack.c.l.b16 %v3947
        %v4354 = vunpack.c.l.b16 %v3948
        %v4355 = vunpack.c.l.b16 %v3949
        %v4356 = vunpack.c.l.b16 %v3950
        %v4357 = vpack.c.b16 %v4342, %v4341
        %v4358 = vpack.c.b16 %v4344, %v4343
        %v4359 = vpack.c.b16 %v4346, %v4345
        %v4360 = vpack.c.b16 %v4348, %v4347
        %v4361 = vpack.c.b16 %v4350, %v4349
        %v4362 = vpack.c.b16 %v4352, %v4351
        %v4363 = vpack.c.b16 %v4354, %v4353
        %v4364 = vpack.c.b16 %v4356, %v4355
        %4373 = vmatprep.subr.bf16.mxu0 0
        %4374 = vmatpush1.bf16.msra.mxu0 %v4357
        %4375 = vmatprep.subr.bf16.mxu0 0
        %4376 = vmatpush1.bf16.msra.mxu0 %v4358
        %4377 = vmatprep.subr.bf16.mxu0 0
        %4378 = vmatpush1.bf16.msra.mxu0 %v4359
        %4379 = vmatprep.subr.bf16.mxu0 0
        %4380 = vmatpush1.bf16.msra.mxu0 %v4360
        %4381 = vmatprep.subr.bf16.mxu0 0
        %4382 = vmatpush1.bf16.msra.mxu0 %v4361
        %4383 = vmatprep.subr.bf16.mxu0 0
        %4384 = vmatpush1.bf16.msra.mxu0 %v4362
        %4385 = vmatprep.subr.bf16.mxu0 0
        %4386 = vmatpush1.bf16.msra.mxu0 %v4363
        %4387 = vmatprep.subr.bf16.mxu0 0
        %4388 = vmatpush1.bf16.msra.mxu0 %v4364
        %4389 = vmatprep.subr.bf16.mxu0 0
        %4390 = vmatpush1.bf16.msra.mxu0 0
        %4391 = vmatprep.subr.bf16.mxu0 0
        %4392 = vmatpush1.bf16.msra.mxu0 0
        %4393 = vmatprep.subr.bf16.mxu0 0
        %4394 = vmatpush1.bf16.msra.mxu0 0
        %4395 = vmatprep.subr.bf16.mxu0 0
        %4396 = vmatpush1.bf16.msra.mxu0 0
        %4397 = vmatprep.subr.bf16.mxu0 0
        %4398 = vmatpush1.bf16.msra.mxu0 0
        %4399 = vmatprep.subr.bf16.mxu0 0
        %4400 = vmatpush1.bf16.msra.mxu0 0
        %4401 = vmatprep.subr.bf16.mxu0 0
        %4402 = vmatpush1.bf16.msra.mxu0 0
        %4403 = vmatprep.subr.bf16.mxu0 0
        %4404 = vmatpush1.bf16.msra.mxu0 0
        %4405 = vmatprep.mubr.bf16.mxu0 0
        %4406 = vmatmul.mubr.bf16.gmra.mrb[0].mxu0 %v4019
        %v4407 = vpop.f32.mrb[0].mxu0
        %v4408 = vadd.f32 %v4227, %v4407
        %v4409 = vpop.f32.mrb[0].mxu0
        %v4410 = vpop.f32.mrb[0].mxu0
        %v4411 = vadd.f32 %v4230, %v4410
        %v4412 = vpop.f32.mrb[0].mxu0
        %4413 = vmatprep.mubr.bf16.mxu0 0
        %4414 = vmatmul.mubr.bf16.gmra.mrb[0].mxu0 %v4020
        %v4415 = vpop.f32.mrb[0].mxu0
        %v4416 = vpop.f32.mrb[0].mxu0
        %v4417 = vpop.f32.mrb[0].mxu0
        %v4418 = vadd.f32 %v4237, %v4417
        %v4419 = vpop.f32.mrb[0].mxu0
        %4420 = vmatprep.mubr.bf16.mxu0 0
        %4421 = vmatmul.mubr.bf16.gmra.mrb[0].mxu0 %v4021
        %v4422 = vpop.f32.mrb[0].mxu0
        %v4423 = vadd.f32 %v4242, %v4422
        %v4424 = vpop.f32.mrb[0].mxu0
        %v4425 = vpop.f32.mrb[0].mxu0
        %v4426 = vpop.f32.mrb[0].mxu0
        %4427 = vmatprep.mubr.bf16.mxu0 0
        %4428 = vmatmul.mubr.bf16.gmra.mrb[0].mxu0 %v4022
        %v4429 = vpop.f32.mrb[0].mxu0
        %v4430 = vadd.f32 %v4249, %v4429
        %v4431 = vpop.f32.mrb[0].mxu0
        %v4432 = vpop.f32.mrb[0].mxu0
        %v4433 = vadd.f32 %v4252, %v4432
        %v4434 = vpop.f32.mrb[0].mxu0
        %4435 = vmatprep.mubr.bf16.mxu0 0
        %4436 = vmatmul.mubr.bf16.gmra.mrb[0].mxu0 %v4023
        %v4437 = vpop.f32.mrb[0].mxu0
        %v4438 = vpop.f32.mrb[0].mxu0
        %v4439 = vpop.f32.mrb[0].mxu0
        %v4440 = vadd.f32 %v4259, %v4439
        %v4441 = vpop.f32.mrb[0].mxu0
        %4442 = vmatprep.mubr.bf16.mxu0 0
        %4443 = vmatmul.mubr.bf16.gmra.mrb[0].mxu0 %v4024
        %v4444 = vpop.f32.mrb[0].mxu0
        %v4445 = vadd.f32 %v4264, %v4444
        %v4446 = vpop.f32.mrb[0].mxu0
        %v4447 = vpop.f32.mrb[0].mxu0
        %v4448 = vpop.f32.mrb[0].mxu0
        %4449 = vmatprep.mubr.bf16.mxu0 0
        %4450 = vmatmul.mubr.bf16.gmra.mrb[0].mxu0 %v4025
        %v4451 = vpop.f32.mrb[0].mxu0
        %v4452 = vadd.f32 %v4271, %v4451
        %v4453 = vpop.f32.mrb[0].mxu0
        %v4454 = vpop.f32.mrb[0].mxu0
        %v4455 = vadd.f32 %v4274, %v4454
        %v4456 = vpop.f32.mrb[0].mxu0
        %4457 = vmatprep.mubr.bf16.mxu0 0
        %4458 = vmatmul.mubr.bf16.gmra.mrb[0].mxu0 %v4026
        %v4459 = vpop.f32.mrb[0].mxu0
        %v4460 = vpop.f32.mrb[0].mxu0
        %v4461 = vpop.f32.mrb[0].mxu0
        %v4462 = vadd.f32 %v4281, %v4461
        %v4463 = vpop.f32.mrb[0].mxu0
        %4464 = vmatprep.mubr.bf16.mxu0 0
        %4465 = vmatmul.mubr.bf16.gmra.mrb[0].mxu0 %v4027
        %v4466 = vpop.f32.mrb[0].mxu0
        %v4467 = vadd.f32 %v4286, %v4466
        %v4468 = vpop.f32.mrb[0].mxu0
        %v4469 = vpop.f32.mrb[0].mxu0
        %v4470 = vpop.f32.mrb[0].mxu0
        %4471 = vmatprep.mubr.bf16.mxu0 0
        %4472 = vmatmul.mubr.bf16.gmra.mrb[0].mxu0 %v4028
        %v4473 = vpop.f32.mrb[0].mxu0
        %v4474 = vadd.f32 %v4293, %v4473
        %v4475 = vpop.f32.mrb[0].mxu0
        %v4476 = vpop.f32.mrb[0].mxu0
        %v4477 = vadd.f32 %v4296, %v4476
        %v4478 = vpop.f32.mrb[0].mxu0
        %4479 = vmatprep.mubr.bf16.mxu0 0
        %4480 = vmatmul.mubr.bf16.gmra.mrb[0].mxu0 %v4029
        %v4481 = vpop.f32.mrb[0].mxu0
        %v4482 = vpop.f32.mrb[0].mxu0
        %v4483 = vpop.f32.mrb[0].mxu0
        %v4484 = vadd.f32 %v4303, %v4483
        %v4485 = vpop.f32.mrb[0].mxu0
        %4486 = vmatprep.mubr.bf16.mxu0 0
        %4487 = vmatmul.mubr.bf16.gmra.mrb[0].mxu0 %v4030
        %v4488 = vpop.f32.mrb[0].mxu0
        %v4489 = vadd.f32 %v4308, %v4488
        %v4490 = vpop.f32.mrb[0].mxu0
        %v4491 = vpop.f32.mrb[0].mxu0
        %v4492 = vpop.f32.mrb[0].mxu0
        %4493 = vdwg.mxu0
        %v4494 = vld [vmem:[#allocation3] sm:$0xe]
        %s4495 = scalar_lea.vmem [#allocation9], 128
        %v4496 = vld [vmem:[%s4495] sm:$0xf]
        %v4497 = vld [vmem:[%s4495 + $0x4] sm:$0xf]
        %v4498 = vld [vmem:[%s4495 + $0x8] sm:$0xf]
        %v4499 = vld [vmem:[%s4495 + $0xc] sm:$0xf]
        %v4500 = vld [vmem:[%s4495 + $0x10] sm:$0xf]
        %v4501 = vld [vmem:[%s4495 + $0x14] sm:$0xf]
        %v4502 = vld [vmem:[%s4495 + $0x18] sm:$0xf]
        %v4503 = vld [vmem:[%s4495 + $0x1c] sm:$0xf]
        %v4504 = vld [vmem:[%s4495 + $0x20] sm:$0xf]
        %v4505 = vld [vmem:[%s4495 + $0x24] sm:$0xf]
        %v4506 = vld [vmem:[%s4495 + $0x28] sm:$0xf]
        %v4507 = vld [vmem:[%s4495 + $0x2c] sm:$0xf]
        %v4508 = vld [vmem:[%s4495 + $0x30] sm:$0xf]
        %v4509 = vld [vmem:[%s4495 + $0x34] sm:$0xf]
        %v4510 = vld [vmem:[%s4495 + $0x38] sm:$0xf]
        %v4511 = vld [vmem:[%s4495 + $0x3c] sm:$0xf]
        %v4513 = vunpack.c.l.b16 %v4494
        %v4514 = vpack.c.b16 %v3995, %v4513
        %vm4515 = vcmask 1046528
        %v4516 = vrot.slane %v4514, 1
        %v4517 = vrot.slane %v4020, 1
        %v4518 = vsel %vm4515, %v4516, %v4517
        %v4519 = vrot.slane %v4021, 1
        %v4520 = vsel %vm4515, %v4517, %v4519
        %v4521 = vrot.slane %v4022, 1
        %v4522 = vsel %vm4515, %v4519, %v4521
        %v4523 = vrot.slane %v4023, 1
        %v4524 = vsel %vm4515, %v4521, %v4523
        %v4525 = vrot.slane %v4024, 1
        %v4526 = vsel %vm4515, %v4523, %v4525
        %v4527 = vrot.slane %v4025, 1
        %v4528 = vsel %vm4515, %v4525, %v4527
        %v4529 = vrot.slane %v4026, 1
        %v4530 = vsel %vm4515, %v4527, %v4529
        %v4531 = vrot.slane %v4027, 1
        %v4532 = vsel %vm4515, %v4529, %v4531
        %v4533 = vrot.slane %v4028, 1
        %v4534 = vsel %vm4515, %v4531, %v4533
        %v4535 = vrot.slane %v4029, 1
        %v4536 = vsel %vm4515, %v4533, %v4535
        %v4537 = vrot.slane %v4030, 1
        %v4538 = vsel %vm4515, %v4535, %v4537
        %v4539 = vrot.slane %v4031, 1
        %v4540 = vsel %vm4515, %v4537, %v4539
        %v4569 = vunpack.c.l.b16 %v4496
        %v4570 = vunpack.c.l.b16 %v4497
        %v4571 = vunpack.c.l.b16 %v4498
        %v4572 = vunpack.c.l.b16 %v4499
        %v4573 = vunpack.c.l.b16 %v4500
        %v4574 = vunpack.c.l.b16 %v4501
        %v4575 = vunpack.c.l.b16 %v4502
        %v4576 = vunpack.c.l.b16 %v4503
        %v4577 = vunpack.c.l.b16 %v4504
        %v4578 = vunpack.c.l.b16 %v4505
        %v4579 = vunpack.c.l.b16 %v4506
        %v4580 = vunpack.c.l.b16 %v4507
        %v4581 = vunpack.c.l.b16 %v4508
        %v4582 = vunpack.c.l.b16 %v4509
        %v4583 = vunpack.c.l.b16 %v4510
        %v4584 = vunpack.c.l.b16 %v4511
        %v4585 = vpack.c.b16 %v4570, %v4569
        %v4586 = vpack.c.b16 %v4572, %v4571
        %v4587 = vpack.c.b16 %v4574, %v4573
        %v4588 = vpack.c.b16 %v4576, %v4575
        %v4589 = vpack.c.b16 %v4578, %v4577
        %v4590 = vpack.c.b16 %v4580, %v4579
        %v4591 = vpack.c.b16 %v4582, %v4581
        %v4592 = vpack.c.b16 %v4584, %v4583
        %4601 = vmatprep.subr.bf16.mxu0 0
        %4602 = vmatpush1.bf16.msra.mxu0 %v4585
        %4603 = vmatprep.subr.bf16.mxu0 0
        %4604 = vmatpush1.bf16.msra.mxu0 %v4586
        %4605 = vmatprep.subr.bf16.mxu0 0
        %4606 = vmatpush1.bf16.msra.mxu0 %v4587
        %4607 = vmatprep.subr.bf16.mxu0 0
        %4608 = vmatpush1.bf16.msra.mxu0 %v4588
        %4609 = vmatprep.subr.bf16.mxu0 0
        %4610 = vmatpush1.bf16.msra.mxu0 %v4589
        %4611 = vmatprep.subr.bf16.mxu0 0
        %4612 = vmatpush1.bf16.msra.mxu0 %v4590
        %4613 = vmatprep.subr.bf16.mxu0 0
        %4614 = vmatpush1.bf16.msra.mxu0 %v4591
        %4615 = vmatprep.subr.bf16.mxu0 0
        %4616 = vmatpush1.bf16.msra.mxu0 %v4592
        %4617 = vmatprep.subr.bf16.mxu0 0
        %4618 = vmatpush1.bf16.msra.mxu0 0
        %4619 = vmatprep.subr.bf16.mxu0 0
        %4620 = vmatpush1.bf16.msra.mxu0 0
        %4621 = vmatprep.subr.bf16.mxu0 0
        %4622 = vmatpush1.bf16.msra.mxu0 0
        %4623 = vmatprep.subr.bf16.mxu0 0
        %4624 = vmatpush1.bf16.msra.mxu0 0
        %4625 = vmatprep.subr.bf16.mxu0 0
        %4626 = vmatpush1.bf16.msra.mxu0 0
        %4627 = vmatprep.subr.bf16.mxu0 0
        %4628 = vmatpush1.bf16.msra.mxu0 0
        %4629 = vmatprep.subr.bf16.mxu0 0
        %4630 = vmatpush1.bf16.msra.mxu0 0
        %4631 = vmatprep.subr.bf16.mxu0 0
        %4632 = vmatpush1.bf16.msra.mxu0 0
        %4633 = vmatprep.mubr.bf16.mxu0 0
        %4634 = vmatmul.mubr.bf16.gmra.mrb[0].mxu0 %v4518
        %v4635 = vpop.f32.mrb[0].mxu0
        %v4636 = vadd.f32 0.0, %v4635
        %v4637 = vpop.f32.mrb[0].mxu0
        %v4638 = vpop.f32.mrb[0].mxu0
        %v4639 = vadd.f32 0.0, %v4638
        %v4640 = vpop.f32.mrb[0].mxu0
        %4641 = vmatprep.mubr.bf16.mxu0 0
        %4642 = vmatmul.mubr.bf16.gmra.mrb[0].mxu0 %v4520
        %v4643 = vpop.f32.mrb[0].mxu0
        %v4644 = vpop.f32.mrb[0].mxu0
        %v4645 = vpop.f32.mrb[0].mxu0
        %v4646 = vadd.f32 0.0, %v4645
        %v4647 = vpop.f32.mrb[0].mxu0
        %4648 = vmatprep.mubr.bf16.mxu0 0
        %4649 = vmatmul.mubr.bf16.gmra.mrb[0].mxu0 %v4522
        %v4650 = vpop.f32.mrb[0].mxu0
        %v4651 = vadd.f32 0.0, %v4650
        %v4652 = vpop.f32.mrb[0].mxu0
        %v4653 = vpop.f32.mrb[0].mxu0
        %v4654 = vpop.f32.mrb[0].mxu0
        %4655 = vmatprep.mubr.bf16.mxu0 0
        %4656 = vmatmul.mubr.bf16.gmra.mrb[0].mxu0 %v4524
        %v4657 = vpop.f32.mrb[0].mxu0
        %v4658 = vadd.f32 0.0, %v4657
        %v4659 = vpop.f32.mrb[0].mxu0
        %v4660 = vpop.f32.mrb[0].mxu0
        %v4661 = vadd.f32 0.0, %v4660
        %v4662 = vpop.f32.mrb[0].mxu0
        %4663 = vmatprep.mubr.bf16.mxu0 0
        %4664 = vmatmul.mubr.bf16.gmra.mrb[0].mxu0 %v4526
        %v4665 = vpop.f32.mrb[0].mxu0
        %v4666 = vpop.f32.mrb[0].mxu0
        %v4667 = vpop.f32.mrb[0].mxu0
        %v4668 = vadd.f32 0.0, %v4667
        %v4669 = vpop.f32.mrb[0].mxu0
        %4670 = vmatprep.mubr.bf16.mxu0 0
        %4671 = vmatmul.mubr.bf16.gmra.mrb[0].mxu0 %v4528
        %v4672 = vpop.f32.mrb[0].mxu0
        %v4673 = vadd.f32 0.0, %v4672
        %v4674 = vpop.f32.mrb[0].mxu0
        %v4675 = vpop.f32.mrb[0].mxu0
        %v4676 = vpop.f32.mrb[0].mxu0
        %4677 = vmatprep.mubr.bf16.mxu0 0
        %4678 = vmatmul.mubr.bf16.gmra.mrb[0].mxu0 %v4530
        %v4679 = vpop.f32.mrb[0].mxu0
        %v4680 = vadd.f32 0.0, %v4679
        %v4681 = vpop.f32.mrb[0].mxu0
        %v4682 = vpop.f32.mrb[0].mxu0
        %v4683 = vadd.f32 0.0, %v4682
        %v4684 = vpop.f32.mrb[0].mxu0
        %4685 = vmatprep.mubr.bf16.mxu0 0
        %4686 = vmatmul.mubr.bf16.gmra.mrb[0].mxu0 %v4532
        %v4687 = vpop.f32.mrb[0].mxu0
        %v4688 = vpop.f32.mrb[0].mxu0
        %v4689 = vpop.f32.mrb[0].mxu0
        %v4690 = vadd.f32 0.0, %v4689
        %v4691 = vpop.f32.mrb[0].mxu0
        %4692 = vmatprep.mubr.bf16.mxu0 0
        %4693 = vmatmul.mubr.bf16.gmra.mrb[0].mxu0 %v4534
        %v4694 = vpop.f32.mrb[0].mxu0
        %v4695 = vadd.f32 0.0, %v4694
        %v4696 = vpop.f32.mrb[0].mxu0
        %v4697 = vpop.f32.mrb[0].mxu0
        %v4698 = vpop.f32.mrb[0].mxu0
        %4699 = vmatprep.mubr.bf16.mxu0 0
        %4700 = vmatmul.mubr.bf16.gmra.mrb[0].mxu0 %v4536
        %v4701 = vpop.f32.mrb[0].mxu0
        %v4702 = vadd.f32 0.0, %v4701
        %v4703 = vpop.f32.mrb[0].mxu0
        %v4704 = vpop.f32.mrb[0].mxu0
        %v4705 = vadd.f32 0.0, %v4704
        %v4706 = vpop.f32.mrb[0].mxu0
        %4707 = vmatprep.mubr.bf16.mxu0 0
        %4708 = vmatmul.mubr.bf16.gmra.mrb[0].mxu0 %v4538
        %v4709 = vpop.f32.mrb[0].mxu0
        %v4710 = vpop.f32.mrb[0].mxu0
        %v4711 = vpop.f32.mrb[0].mxu0
        %v4712 = vadd.f32 0.0, %v4711
        %v4713 = vpop.f32.mrb[0].mxu0
        %4714 = vmatprep.mubr.bf16.mxu0 0
        %4715 = vmatmul.mubr.bf16.gmra.mrb[0].mxu0 %v4540
        %v4716 = vpop.f32.mrb[0].mxu0
        %v4717 = vadd.f32 0.0, %v4716
        %v4718 = vpop.f32.mrb[0].mxu0
        %v4719 = vpop.f32.mrb[0].mxu0
        %v4720 = vpop.f32.mrb[0].mxu0
        %4721 = vdwg.mxu0
        %v4722 = vadd.f32 %v4408, %v4636
        %v4723 = vadd.f32 %v4411, %v4639
        %v4724 = vadd.f32 %v4418, %v4646
        %v4725 = vadd.f32 %v4423, %v4651
        %v4726 = vadd.f32 %v4430, %v4658
        %v4727 = vadd.f32 %v4433, %v4661
        %v4728 = vadd.f32 %v4440, %v4668
        %v4729 = vadd.f32 %v4445, %v4673
        %v4730 = vadd.f32 %v4452, %v4680
        %v4731 = vadd.f32 %v4455, %v4683
        %v4732 = vadd.f32 %v4462, %v4690
        %v4733 = vadd.f32 %v4467, %v4695
        %v4734 = vadd.f32 %v4474, %v4702
        %v4735 = vadd.f32 %v4477, %v4705
        %v4736 = vadd.f32 %v4484, %v4712
        %v4737 = vadd.f32 %v4489, %v4717
        %v4738 = vld [vmem:[#allocation3 + $0xc] sm:$0xf]
        %v4739 = vld [vmem:[#allocation3 + $0x10] sm:$0xf]
        %v4740 = vld [vmem:[#allocation3 + $0x14] sm:$0xf]
        %v4741 = vld [vmem:[#allocation3 + $0x18] sm:$0xf]
        %v4742 = vld [vmem:[#allocation3 + $0x1c] sm:$0xf]
        %v4743 = vld [vmem:[#allocation3 + $0x20] sm:$0xf]
        %v4744 = vld [vmem:[#allocation3 + $0x24] sm:$0xf]
        %v4745 = vld [vmem:[#allocation3 + $0x28] sm:$0xf]
        %v4746 = vld [vmem:[#allocation3 + $0x2c] sm:$0xf]
        %v4747 = vld [vmem:[#allocation3 + $0x30] sm:$0xf]
        %v4748 = vld [vmem:[#allocation3 + $0x34] sm:$0xf]
        %v4749 = vld [vmem:[#allocation3 + $0x38] sm:$0xf]
        %v4750 = vld [vmem:[#allocation3 + $0x3c] sm:$0xf]
        %v4751 = vld [vmem:[#allocation3 + $0x40] sm:$0xf]
        %v4752 = vld [vmem:[#allocation3 + $0x44] sm:$0xf]
        %v4753 = vld [vmem:[#allocation3 + $0x48] sm:$0xf]
        %v4754 = vld [vmem:[#allocation3 + $0x4c] sm:$0xf]
        %v4755 = vld [vmem:[#allocation3 + $0x50] sm:$0xf]
        %v4756 = vld [vmem:[#allocation3 + $0x54] sm:$0xf]
        %v4757 = vld [vmem:[#allocation3 + $0x58] sm:$0xf]
        %v4758 = vld [vmem:[#allocation3 + $0x5c] sm:$0xf]
        %v4759 = vld [vmem:[#allocation3 + $0x60] sm:$0xf]
        %v4760 = vld [vmem:[#allocation3 + $0x64] sm:$0xf]
        %v4761 = vld [vmem:[#allocation3 + $0x68] sm:$0xf]
        %s4762 = scalar_lea.vmem [#allocation9], 192
        %v4763 = vld [vmem:[%s4762] sm:$0xf]
        %v4764 = vld [vmem:[%s4762 + $0x4] sm:$0xf]
        %v4765 = vld [vmem:[%s4762 + $0x8] sm:$0xf]
        %v4766 = vld [vmem:[%s4762 + $0xc] sm:$0xf]
        %v4767 = vld [vmem:[%s4762 + $0x10] sm:$0xf]
        %v4768 = vld [vmem:[%s4762 + $0x14] sm:$0xf]
        %v4769 = vld [vmem:[%s4762 + $0x18] sm:$0xf]
        %v4770 = vld [vmem:[%s4762 + $0x1c] sm:$0xf]
        %v4771 = vld [vmem:[%s4762 + $0x20] sm:$0xf]
        %v4772 = vld [vmem:[%s4762 + $0x24] sm:$0xf]
        %v4773 = vld [vmem:[%s4762 + $0x28] sm:$0xf]
        %v4774 = vld [vmem:[%s4762 + $0x2c] sm:$0xf]
        %v4775 = vld [vmem:[%s4762 + $0x30] sm:$0xf]
        %v4776 = vld [vmem:[%s4762 + $0x34] sm:$0xf]
        %v4777 = vld [vmem:[%s4762 + $0x38] sm:$0xf]
        %v4778 = vld [vmem:[%s4762 + $0x3c] sm:$0xf]
        %v4803 = vunpack.c.l.b16 %v4738
        %v4804 = vunpack.c.l.b16 %v4739
        %v4805 = vunpack.c.l.b16 %v4740
        %v4806 = vunpack.c.l.b16 %v4741
        %v4807 = vunpack.c.l.b16 %v4742
        %v4808 = vunpack.c.l.b16 %v4743
        %v4809 = vunpack.c.l.b16 %v4744
        %v4810 = vunpack.c.l.b16 %v4745
        %v4811 = vunpack.c.l.b16 %v4746
        %v4812 = vunpack.c.l.b16 %v4747
        %v4813 = vunpack.c.l.b16 %v4748
        %v4814 = vunpack.c.l.b16 %v4749
        %v4815 = vunpack.c.l.b16 %v4750
        %v4816 = vunpack.c.l.b16 %v4751
        %v4817 = vunpack.c.l.b16 %v4752
        %v4818 = vunpack.c.l.b16 %v4753
        %v4819 = vunpack.c.l.b16 %v4754
        %v4820 = vunpack.c.l.b16 %v4755
        %v4821 = vunpack.c.l.b16 %v4756
        %v4822 = vunpack.c.l.b16 %v4757
        %v4823 = vunpack.c.l.b16 %v4758
        %v4824 = vunpack.c.l.b16 %v4759
        %v4825 = vunpack.c.l.b16 %v4760
        %v4826 = vunpack.c.l.b16 %v4761
        %v4827 = vpack.c.b16 %v4804, %v4803
        %v4828 = vpack.c.b16 %v4806, %v4805
        %v4829 = vpack.c.b16 %v4808, %v4807
        %v4830 = vpack.c.b16 %v4810, %v4809
        %v4831 = vpack.c.b16 %v4812, %v4811
        %v4832 = vpack.c.b16 %v4814, %v4813
        %v4833 = vpack.c.b16 %v4816, %v4815
        %v4834 = vpack.c.b16 %v4818, %v4817
        %v4835 = vpack.c.b16 %v4820, %v4819
        %v4836 = vpack.c.b16 %v4822, %v4821
        %v4837 = vpack.c.b16 %v4824, %v4823
        %v4838 = vpack.c.b16 %v4826, %v4825
        %v4867 = vunpack.c.l.b16 %v4763
        %v4868 = vunpack.c.l.b16 %v4764
        %v4869 = vunpack.c.l.b16 %v4765
        %v4870 = vunpack.c.l.b16 %v4766
        %v4871 = vunpack.c.l.b16 %v4767
        %v4872 = vunpack.c.l.b16 %v4768
        %v4873 = vunpack.c.l.b16 %v4769
        %v4874 = vunpack.c.l.b16 %v4770
        %v4875 = vunpack.c.l.b16 %v4771
        %v4876 = vunpack.c.l.b16 %v4772
        %v4877 = vunpack.c.l.b16 %v4773
        %v4878 = vunpack.c.l.b16 %v4774
        %v4879 = vunpack.c.l.b16 %v4775
        %v4880 = vunpack.c.l.b16 %v4776
        %v4881 = vunpack.c.l.b16 %v4777
        %v4882 = vunpack.c.l.b16 %v4778
        %v4883 = vpack.c.b16 %v4868, %v4867
        %v4884 = vpack.c.b16 %v4870, %v4869
        %v4885 = vpack.c.b16 %v4872, %v4871
        %v4886 = vpack.c.b16 %v4874, %v4873
        %v4887 = vpack.c.b16 %v4876, %v4875
        %v4888 = vpack.c.b16 %v4878, %v4877
        %v4889 = vpack.c.b16 %v4880, %v4879
        %v4890 = vpack.c.b16 %v4882, %v4881
        %4899 = vmatprep.subr.bf16.mxu0 0
        %4900 = vmatpush1.bf16.msra.mxu0 %v4883
        %4901 = vmatprep.subr.bf16.mxu0 0
        %4902 = vmatpush1.bf16.msra.mxu0 %v4884
        %4903 = vmatprep.subr.bf16.mxu0 0
        %4904 = vmatpush1.bf16.msra.mxu0 %v4885
        %4905 = vmatprep.subr.bf16.mxu0 0
        %4906 = vmatpush1.bf16.msra.mxu0 %v4886
        %4907 = vmatprep.subr.bf16.mxu0 0
        %4908 = vmatpush1.bf16.msra.mxu0 %v4887
        %4909 = vmatprep.subr.bf16.mxu0 0
        %4910 = vmatpush1.bf16.msra.mxu0 %v4888
        %4911 = vmatprep.subr.bf16.mxu0 0
        %4912 = vmatpush1.bf16.msra.mxu0 %v4889
        %4913 = vmatprep.subr.bf16.mxu0 0
        %4914 = vmatpush1.bf16.msra.mxu0 %v4890
        %4915 = vmatprep.subr.bf16.mxu0 0
        %4916 = vmatpush1.bf16.msra.mxu0 0
        %4917 = vmatprep.subr.bf16.mxu0 0
        %4918 = vmatpush1.bf16.msra.mxu0 0
        %4919 = vmatprep.subr.bf16.mxu0 0
        %4920 = vmatpush1.bf16.msra.mxu0 0
        %4921 = vmatprep.subr.bf16.mxu0 0
        %4922 = vmatpush1.bf16.msra.mxu0 0
        %4923 = vmatprep.subr.bf16.mxu0 0
        %4924 = vmatpush1.bf16.msra.mxu0 0
        %4925 = vmatprep.subr.bf16.mxu0 0
        %4926 = vmatpush1.bf16.msra.mxu0 0
        %4927 = vmatprep.subr.bf16.mxu0 0
        %4928 = vmatpush1.bf16.msra.mxu0 0
        %4929 = vmatprep.subr.bf16.mxu0 0
        %4930 = vmatpush1.bf16.msra.mxu0 0
        %4931 = vmatprep.mubr.bf16.mxu0 0
        %4932 = vmatmul.mubr.bf16.gmra.mrb[0].mxu0 %v4827
        %v4933 = vpop.f32.mrb[0].mxu0
        %v4934 = vadd.f32 0.0, %v4933
        %v4935 = vpop.f32.mrb[0].mxu0
        %v4936 = vpop.f32.mrb[0].mxu0
        %v4937 = vadd.f32 0.0, %v4936
        %v4938 = vpop.f32.mrb[0].mxu0
        %4939 = vmatprep.mubr.bf16.mxu0 0
        %4940 = vmatmul.mubr.bf16.gmra.mrb[0].mxu0 %v4828
        %v4941 = vpop.f32.mrb[0].mxu0
        %v4942 = vpop.f32.mrb[0].mxu0
        %v4943 = vpop.f32.mrb[0].mxu0
        %v4944 = vadd.f32 0.0, %v4943
        %v4945 = vpop.f32.mrb[0].mxu0
        %4946 = vmatprep.mubr.bf16.mxu0 0
        %4947 = vmatmul.mubr.bf16.gmra.mrb[0].mxu0 %v4829
        %v4948 = vpop.f32.mrb[0].mxu0
        %v4949 = vadd.f32 0.0, %v4948
        %v4950 = vpop.f32.mrb[0].mxu0
        %v4951 = vpop.f32.mrb[0].mxu0
        %v4952 = vpop.f32.mrb[0].mxu0
        %4953 = vmatprep.mubr.bf16.mxu0 0
        %4954 = vmatmul.mubr.bf16.gmra.mrb[0].mxu0 %v4830
        %v4955 = vpop.f32.mrb[0].mxu0
        %v4956 = vadd.f32 0.0, %v4955
        %v4957 = vpop.f32.mrb[0].mxu0
        %v4958 = vpop.f32.mrb[0].mxu0
        %v4959 = vadd.f32 0.0, %v4958
        %v4960 = vpop.f32.mrb[0].mxu0
        %4961 = vmatprep.mubr.bf16.mxu0 0
        %4962 = vmatmul.mubr.bf16.gmra.mrb[0].mxu0 %v4831
        %v4963 = vpop.f32.mrb[0].mxu0
        %v4964 = vpop.f32.mrb[0].mxu0
        %v4965 = vpop.f32.mrb[0].mxu0
        %v4966 = vadd.f32 0.0, %v4965
        %v4967 = vpop.f32.mrb[0].mxu0
        %4968 = vmatprep.mubr.bf16.mxu0 0
        %4969 = vmatmul.mubr.bf16.gmra.mrb[0].mxu0 %v4832
        %v4970 = vpop.f32.mrb[0].mxu0
        %v4971 = vadd.f32 0.0, %v4970
        %v4972 = vpop.f32.mrb[0].mxu0
        %v4973 = vpop.f32.mrb[0].mxu0
        %v4974 = vpop.f32.mrb[0].mxu0
        %4975 = vmatprep.mubr.bf16.mxu0 0
        %4976 = vmatmul.mubr.bf16.gmra.mrb[0].mxu0 %v4833
        %v4977 = vpop.f32.mrb[0].mxu0
        %v4978 = vadd.f32 0.0, %v4977
        %v4979 = vpop.f32.mrb[0].mxu0
        %v4980 = vpop.f32.mrb[0].mxu0
        %v4981 = vadd.f32 0.0, %v4980
        %v4982 = vpop.f32.mrb[0].mxu0
        %4983 = vmatprep.mubr.bf16.mxu0 0
        %4984 = vmatmul.mubr.bf16.gmra.mrb[0].mxu0 %v4834
        %v4985 = vpop.f32.mrb[0].mxu0
        %v4986 = vpop.f32.mrb[0].mxu0
        %v4987 = vpop.f32.mrb[0].mxu0
        %v4988 = vadd.f32 0.0, %v4987
        %v4989 = vpop.f32.mrb[0].mxu0
        %4990 = vmatprep.mubr.bf16.mxu0 0
        %4991 = vmatmul.mubr.bf16.gmra.mrb[0].mxu0 %v4835
        %v4992 = vpop.f32.mrb[0].mxu0
        %v4993 = vadd.f32 0.0, %v4992
        %v4994 = vpop.f32.mrb[0].mxu0
        %v4995 = vpop.f32.mrb[0].mxu0
        %v4996 = vpop.f32.mrb[0].mxu0
        %4997 = vmatprep.mubr.bf16.mxu0 0
        %4998 = vmatmul.mubr.bf16.gmra.mrb[0].mxu0 %v4836
        %v4999 = vpop.f32.mrb[0].mxu0
        %v5000 = vadd.f32 0.0, %v4999
        %v5001 = vpop.f32.mrb[0].mxu0
        %v5002 = vpop.f32.mrb[0].mxu0
        %v5003 = vadd.f32 0.0, %v5002
        %v5004 = vpop.f32.mrb[0].mxu0
        %5005 = vmatprep.mubr.bf16.mxu0 0
        %5006 = vmatmul.mubr.bf16.gmra.mrb[0].mxu0 %v4837
        %v5007 = vpop.f32.mrb[0].mxu0
        %v5008 = vpop.f32.mrb[0].mxu0
        %v5009 = vpop.f32.mrb[0].mxu0
        %v5010 = vadd.f32 0.0, %v5009
        %v5011 = vpop.f32.mrb[0].mxu0
        %5012 = vmatprep.mubr.bf16.mxu0 0
        %5013 = vmatmul.mubr.bf16.gmra.mrb[0].mxu0 %v4838
        %v5014 = vpop.f32.mrb[0].mxu0
        %v5015 = vadd.f32 0.0, %v5014
        %v5016 = vpop.f32.mrb[0].mxu0
        %v5017 = vpop.f32.mrb[0].mxu0
        %v5018 = vpop.f32.mrb[0].mxu0
        %5019 = vdwg.mxu0
        %v5020 = vadd.f32 %v4722, %v4934
        %v5021 = vadd.f32 %v4723, %v4937
        %v5022 = vadd.f32 %v4724, %v4944
        %v5023 = vadd.f32 %v4725, %v4949
        %v5024 = vadd.f32 %v4726, %v4956
        %v5025 = vadd.f32 %v4727, %v4959
        %v5026 = vadd.f32 %v4728, %v4966
        %v5027 = vadd.f32 %v4729, %v4971
        %v5028 = vadd.f32 %v4730, %v4978
        %v5029 = vadd.f32 %v4731, %v4981
        %v5030 = vadd.f32 %v4732, %v4988
        %v5031 = vadd.f32 %v4733, %v4993
        %v5032 = vadd.f32 %v4734, %v5000
        %v5033 = vadd.f32 %v4735, %v5003
        %v5034 = vadd.f32 %v4736, %v5010
        %v5035 = vadd.f32 %v4737, %v5015
        %v5036 = vld [vmem:[#allocation3 + $0xc] sm:$0xf]
        %v5037 = vld [vmem:[#allocation3 + $0x10] sm:$0xf]
        %v5038 = vld [vmem:[#allocation3 + $0x14] sm:$0xf]
        %v5039 = vld [vmem:[#allocation3 + $0x18] sm:$0xf]
        %v5040 = vld [vmem:[#allocation3 + $0x1c] sm:$0xf]
        %v5041 = vld [vmem:[#allocation3 + $0x20] sm:$0xf]
        %v5042 = vld [vmem:[#allocation3 + $0x24] sm:$0xf]
        %v5043 = vld [vmem:[#allocation3 + $0x28] sm:$0xf]
        %v5044 = vld [vmem:[#allocation3 + $0x2c] sm:$0xf]
        %v5045 = vld [vmem:[#allocation3 + $0x30] sm:$0xf]
        %v5046 = vld [vmem:[#allocation3 + $0x34] sm:$0xf]
        %v5047 = vld [vmem:[#allocation3 + $0x38] sm:$0xf]
        %v5048 = vld [vmem:[#allocation3 + $0x3c] sm:$0xf]
        %v5049 = vld [vmem:[#allocation3 + $0x40] sm:$0xf]
        %v5050 = vld [vmem:[#allocation3 + $0x44] sm:$0xf]
        %v5051 = vld [vmem:[#allocation3 + $0x48] sm:$0xf]
        %v5052 = vld [vmem:[#allocation3 + $0x4c] sm:$0xf]
        %v5053 = vld [vmem:[#allocation3 + $0x50] sm:$0xf]
        %v5054 = vld [vmem:[#allocation3 + $0x54] sm:$0xf]
        %v5055 = vld [vmem:[#allocation3 + $0x58] sm:$0xf]
        %v5056 = vld [vmem:[#allocation3 + $0x5c] sm:$0xf]
        %v5057 = vld [vmem:[#allocation3 + $0x60] sm:$0xf]
        %v5058 = vld [vmem:[#allocation3 + $0x64] sm:$0xf]
        %v5059 = vld [vmem:[#allocation3 + $0x68] sm:$0xf]
        %v5060 = vld [vmem:[#allocation3 + $0x6c] sm:$0x1]
        %s5061 = scalar_lea.vmem [#allocation9], 256
        %v5062 = vld [vmem:[%s5061] sm:$0xf]
        %v5063 = vld [vmem:[%s5061 + $0x4] sm:$0xf]
        %v5064 = vld [vmem:[%s5061 + $0x8] sm:$0xf]
        %v5065 = vld [vmem:[%s5061 + $0xc] sm:$0xf]
        %v5066 = vld [vmem:[%s5061 + $0x10] sm:$0xf]
        %v5067 = vld [vmem:[%s5061 + $0x14] sm:$0xf]
        %v5068 = vld [vmem:[%s5061 + $0x18] sm:$0xf]
        %v5069 = vld [vmem:[%s5061 + $0x1c] sm:$0xf]
        %v5070 = vld [vmem:[%s5061 + $0x20] sm:$0xf]
        %v5071 = vld [vmem:[%s5061 + $0x24] sm:$0xf]
        %v5072 = vld [vmem:[%s5061 + $0x28] sm:$0xf]
        %v5073 = vld [vmem:[%s5061 + $0x2c] sm:$0xf]
        %v5074 = vld [vmem:[%s5061 + $0x30] sm:$0xf]
        %v5075 = vld [vmem:[%s5061 + $0x34] sm:$0xf]
        %v5076 = vld [vmem:[%s5061 + $0x38] sm:$0xf]
        %v5077 = vld [vmem:[%s5061 + $0x3c] sm:$0xf]
        %v5103 = vunpack.c.l.b16 %v5036
        %v5104 = vunpack.c.l.b16 %v5037
        %v5105 = vunpack.c.l.b16 %v5038
        %v5106 = vunpack.c.l.b16 %v5039
        %v5107 = vunpack.c.l.b16 %v5040
        %v5108 = vunpack.c.l.b16 %v5041
        %v5109 = vunpack.c.l.b16 %v5042
        %v5110 = vunpack.c.l.b16 %v5043
        %v5111 = vunpack.c.l.b16 %v5044
        %v5112 = vunpack.c.l.b16 %v5045
        %v5113 = vunpack.c.l.b16 %v5046
        %v5114 = vunpack.c.l.b16 %v5047
        %v5115 = vunpack.c.l.b16 %v5048
        %v5116 = vunpack.c.l.b16 %v5049
        %v5117 = vunpack.c.l.b16 %v5050
        %v5118 = vunpack.c.l.b16 %v5051
        %v5119 = vunpack.c.l.b16 %v5052
        %v5120 = vunpack.c.l.b16 %v5053
        %v5121 = vunpack.c.l.b16 %v5054
        %v5122 = vunpack.c.l.b16 %v5055
        %v5123 = vunpack.c.l.b16 %v5056
        %v5124 = vunpack.c.l.b16 %v5057
        %v5125 = vunpack.c.l.b16 %v5058
        %v5126 = vunpack.c.l.b16 %v5059
        %v5127 = vunpack.c.l.b16 %v5060
        %v5128 = vpack.c.b16 %v5104, %v5103
        %v5129 = vpack.c.b16 %v5106, %v5105
        %v5130 = vpack.c.b16 %v5108, %v5107
        %v5131 = vpack.c.b16 %v5110, %v5109
        %v5132 = vpack.c.b16 %v5112, %v5111
        %v5133 = vpack.c.b16 %v5114, %v5113
        %v5134 = vpack.c.b16 %v5116, %v5115
        %v5135 = vpack.c.b16 %v5118, %v5117
        %v5136 = vpack.c.b16 %v5120, %v5119
        %v5137 = vpack.c.b16 %v5122, %v5121
        %v5138 = vpack.c.b16 %v5124, %v5123
        %v5139 = vpack.c.b16 %v5126, %v5125
        %v5140 = vpack.c.b16 %v5127, %v5127
        %v5142 = vshrl.u32 %v5128, 16
        %v5144 = vshll.u32 %v5128, 16
        %v5146 = vrot.slane %v5144, 1
        %v5147 = vor.u32 %v5142, %v5146
        %v5149 = vshll.u32 %v5129, 16
        %v5151 = vrot.slane %v5149, 1
        %v5152 = vsel %vm2168, %v5147, %v5151
        %v5153 = vshrl.u32 %v5129, 16
        %v5155 = vor.u32 %v5153, %v5151
        %v5157 = vshll.u32 %v5130, 16
        %v5159 = vrot.slane %v5157, 1
        %v5160 = vsel %vm2168, %v5155, %v5159
        %v5161 = vshrl.u32 %v5130, 16
        %v5163 = vor.u32 %v5161, %v5159
        %v5165 = vshll.u32 %v5131, 16
        %v5167 = vrot.slane %v5165, 1
        %v5168 = vsel %vm2168, %v5163, %v5167
        %v5169 = vshrl.u32 %v5131, 16
        %v5171 = vor.u32 %v5169, %v5167
        %v5173 = vshll.u32 %v5132, 16
        %v5175 = vrot.slane %v5173, 1
        %v5176 = vsel %vm2168, %v5171, %v5175
        %v5177 = vshrl.u32 %v5132, 16
        %v5179 = vor.u32 %v5177, %v5175
        %v5181 = vshll.u32 %v5133, 16
        %v5183 = vrot.slane %v5181, 1
        %v5184 = vsel %vm2168, %v5179, %v5183
        %v5185 = vshrl.u32 %v5133, 16
        %v5187 = vor.u32 %v5185, %v5183
        %v5189 = vshll.u32 %v5134, 16
        %v5191 = vrot.slane %v5189, 1
        %v5192 = vsel %vm2168, %v5187, %v5191
        %v5193 = vshrl.u32 %v5134, 16
        %v5195 = vor.u32 %v5193, %v5191
        %v5197 = vshll.u32 %v5135, 16
        %v5199 = vrot.slane %v5197, 1
        %v5200 = vsel %vm2168, %v5195, %v5199
        %v5201 = vshrl.u32 %v5135, 16
        %v5203 = vor.u32 %v5201, %v5199
        %v5205 = vshll.u32 %v5136, 16
        %v5207 = vrot.slane %v5205, 1
        %v5208 = vsel %vm2168, %v5203, %v5207
        %v5209 = vshrl.u32 %v5136, 16
        %v5211 = vor.u32 %v5209, %v5207
        %v5213 = vshll.u32 %v5137, 16
        %v5215 = vrot.slane %v5213, 1
        %v5216 = vsel %vm2168, %v5211, %v5215
        %v5217 = vshrl.u32 %v5137, 16
        %v5219 = vor.u32 %v5217, %v5215
        %v5221 = vshll.u32 %v5138, 16
        %v5223 = vrot.slane %v5221, 1
        %v5224 = vsel %vm2168, %v5219, %v5223
        %v5225 = vshrl.u32 %v5138, 16
        %v5227 = vor.u32 %v5225, %v5223
        %v5229 = vshll.u32 %v5139, 16
        %v5231 = vrot.slane %v5229, 1
        %v5232 = vsel %vm2168, %v5227, %v5231
        %v5233 = vshrl.u32 %v5139, 16
        %v5235 = vor.u32 %v5233, %v5231
        %v5237 = vshll.u32 %v5140, 16
        %v5239 = vrot.slane %v5237, 1
        %v5240 = vsel %vm2168, %v5235, %v5239
        %v5269 = vunpack.c.l.b16 %v5062
        %v5270 = vunpack.c.l.b16 %v5063
        %v5271 = vunpack.c.l.b16 %v5064
        %v5272 = vunpack.c.l.b16 %v5065
        %v5273 = vunpack.c.l.b16 %v5066
        %v5274 = vunpack.c.l.b16 %v5067
        %v5275 = vunpack.c.l.b16 %v5068
        %v5276 = vunpack.c.l.b16 %v5069
        %v5277 = vunpack.c.l.b16 %v5070
        %v5278 = vunpack.c.l.b16 %v5071
        %v5279 = vunpack.c.l.b16 %v5072
        %v5280 = vunpack.c.l.b16 %v5073
        %v5281 = vunpack.c.l.b16 %v5074
        %v5282 = vunpack.c.l.b16 %v5075
        %v5283 = vunpack.c.l.b16 %v5076
        %v5284 = vunpack.c.l.b16 %v5077
        %v5285 = vpack.c.b16 %v5270, %v5269
        %v5286 = vpack.c.b16 %v5272, %v5271
        %v5287 = vpack.c.b16 %v5274, %v5273
        %v5288 = vpack.c.b16 %v5276, %v5275
        %v5289 = vpack.c.b16 %v5278, %v5277
        %v5290 = vpack.c.b16 %v5280, %v5279
        %v5291 = vpack.c.b16 %v5282, %v5281
        %v5292 = vpack.c.b16 %v5284, %v5283
        %5301 = vmatprep.subr.bf16.mxu0 0
        %5302 = vmatpush1.bf16.msra.mxu0 %v5285
        %5303 = vmatprep.subr.bf16.mxu0 0
        %5304 = vmatpush1.bf16.msra.mxu0 %v5286
        %5305 = vmatprep.subr.bf16.mxu0 0
        %5306 = vmatpush1.bf16.msra.mxu0 %v5287
        %5307 = vmatprep.subr.bf16.mxu0 0
        %5308 = vmatpush1.bf16.msra.mxu0 %v5288
        %5309 = vmatprep.subr.bf16.mxu0 0
        %5310 = vmatpush1.bf16.msra.mxu0 %v5289
        %5311 = vmatprep.subr.bf16.mxu0 0
        %5312 = vmatpush1.bf16.msra.mxu0 %v5290
        %5313 = vmatprep.subr.bf16.mxu0 0
        %5314 = vmatpush1.bf16.msra.mxu0 %v5291
        %5315 = vmatprep.subr.bf16.mxu0 0
        %5316 = vmatpush1.bf16.msra.mxu0 %v5292
        %5317 = vmatprep.subr.bf16.mxu0 0
        %5318 = vmatpush1.bf16.msra.mxu0 0
        %5319 = vmatprep.subr.bf16.mxu0 0
        %5320 = vmatpush1.bf16.msra.mxu0 0
        %5321 = vmatprep.subr.bf16.mxu0 0
        %5322 = vmatpush1.bf16.msra.mxu0 0
        %5323 = vmatprep.subr.bf16.mxu0 0
        %5324 = vmatpush1.bf16.msra.mxu0 0
        %5325 = vmatprep.subr.bf16.mxu0 0
        %5326 = vmatpush1.bf16.msra.mxu0 0
        %5327 = vmatprep.subr.bf16.mxu0 0
        %5328 = vmatpush1.bf16.msra.mxu0 0
        %5329 = vmatprep.subr.bf16.mxu0 0
        %5330 = vmatpush1.bf16.msra.mxu0 0
        %5331 = vmatprep.subr.bf16.mxu0 0
        %5332 = vmatpush1.bf16.msra.mxu0 0
        %5333 = vmatprep.mubr.bf16.mxu0 0
        %5334 = vmatmul.mubr.bf16.gmra.mrb[0].mxu0 %v5152
        %v5335 = vpop.f32.mrb[0].mxu0
        %v5336 = vadd.f32 0.0, %v5335
        %v5337 = vpop.f32.mrb[0].mxu0
        %v5338 = vpop.f32.mrb[0].mxu0
        %v5339 = vadd.f32 0.0, %v5338
        %v5340 = vpop.f32.mrb[0].mxu0
        %5341 = vmatprep.mubr.bf16.mxu0 0
        %5342 = vmatmul.mubr.bf16.gmra.mrb[0].mxu0 %v5160
        %v5343 = vpop.f32.mrb[0].mxu0
        %v5344 = vpop.f32.mrb[0].mxu0
        %v5345 = vpop.f32.mrb[0].mxu0
        %v5346 = vadd.f32 0.0, %v5345
        %v5347 = vpop.f32.mrb[0].mxu0
        %5348 = vmatprep.mubr.bf16.mxu0 0
        %5349 = vmatmul.mubr.bf16.gmra.mrb[0].mxu0 %v5168
        %v5350 = vpop.f32.mrb[0].mxu0
        %v5351 = vadd.f32 0.0, %v5350
        %v5352 = vpop.f32.mrb[0].mxu0
        %v5353 = vpop.f32.mrb[0].mxu0
        %v5354 = vpop.f32.mrb[0].mxu0
        %5355 = vmatprep.mubr.bf16.mxu0 0
        %5356 = vmatmul.mubr.bf16.gmra.mrb[0].mxu0 %v5176
        %v5357 = vpop.f32.mrb[0].mxu0
        %v5358 = vadd.f32 0.0, %v5357
        %v5359 = vpop.f32.mrb[0].mxu0
        %v5360 = vpop.f32.mrb[0].mxu0
        %v5361 = vadd.f32 0.0, %v5360
        %v5362 = vpop.f32.mrb[0].mxu0
        %5363 = vmatprep.mubr.bf16.mxu0 0
        %5364 = vmatmul.mubr.bf16.gmra.mrb[0].mxu0 %v5184
        %v5365 = vpop.f32.mrb[0].mxu0
        %v5366 = vpop.f32.mrb[0].mxu0
        %v5367 = vpop.f32.mrb[0].mxu0
        %v5368 = vadd.f32 0.0, %v5367
        %v5369 = vpop.f32.mrb[0].mxu0
        %5370 = vmatprep.mubr.bf16.mxu0 0
        %5371 = vmatmul.mubr.bf16.gmra.mrb[0].mxu0 %v5192
        %v5372 = vpop.f32.mrb[0].mxu0
        %v5373 = vadd.f32 0.0, %v5372
        %v5374 = vpop.f32.mrb[0].mxu0
        %v5375 = vpop.f32.mrb[0].mxu0
        %v5376 = vpop.f32.mrb[0].mxu0
        %5377 = vmatprep.mubr.bf16.mxu0 0
        %5378 = vmatmul.mubr.bf16.gmra.mrb[0].mxu0 %v5200
        %v5379 = vpop.f32.mrb[0].mxu0
        %v5380 = vadd.f32 0.0, %v5379
        %v5381 = vpop.f32.mrb[0].mxu0
        %v5382 = vpop.f32.mrb[0].mxu0
        %v5383 = vadd.f32 0.0, %v5382
        %v5384 = vpop.f32.mrb[0].mxu0
        %5385 = vmatprep.mubr.bf16.mxu0 0
        %5386 = vmatmul.mubr.bf16.gmra.mrb[0].mxu0 %v5208
        %v5387 = vpop.f32.mrb[0].mxu0
        %v5388 = vpop.f32.mrb[0].mxu0
        %v5389 = vpop.f32.mrb[0].mxu0
        %v5390 = vadd.f32 0.0, %v5389
        %v5391 = vpop.f32.mrb[0].mxu0
        %5392 = vmatprep.mubr.bf16.mxu0 0
        %5393 = vmatmul.mubr.bf16.gmra.mrb[0].mxu0 %v5216
        %v5394 = vpop.f32.mrb[0].mxu0
        %v5395 = vadd.f32 0.0, %v5394
        %v5396 = vpop.f32.mrb[0].mxu0
        %v5397 = vpop.f32.mrb[0].mxu0
        %v5398 = vpop.f32.mrb[0].mxu0
        %5399 = vmatprep.mubr.bf16.mxu0 0
        %5400 = vmatmul.mubr.bf16.gmra.mrb[0].mxu0 %v5224
        %v5401 = vpop.f32.mrb[0].mxu0
        %v5402 = vadd.f32 0.0, %v5401
        %v5403 = vpop.f32.mrb[0].mxu0
        %v5404 = vpop.f32.mrb[0].mxu0
        %v5405 = vadd.f32 0.0, %v5404
        %v5406 = vpop.f32.mrb[0].mxu0
        %5407 = vmatprep.mubr.bf16.mxu0 0
        %5408 = vmatmul.mubr.bf16.gmra.mrb[0].mxu0 %v5232
        %v5409 = vpop.f32.mrb[0].mxu0
        %v5410 = vpop.f32.mrb[0].mxu0
        %v5411 = vpop.f32.mrb[0].mxu0
        %v5412 = vadd.f32 0.0, %v5411
        %v5413 = vpop.f32.mrb[0].mxu0
        %5414 = vmatprep.mubr.bf16.mxu0 0
        %5415 = vmatmul.mubr.bf16.gmra.mrb[0].mxu0 %v5240
        %v5416 = vpop.f32.mrb[0].mxu0
        %v5417 = vadd.f32 0.0, %v5416
        %v5418 = vpop.f32.mrb[0].mxu0
        %v5419 = vpop.f32.mrb[0].mxu0
        %v5420 = vpop.f32.mrb[0].mxu0
        %5421 = vdwg.mxu0
        %v5422 = vadd.f32 %v5020, %v5336
        %v5423 = vadd.f32 %v5021, %v5339
        %v5424 = vadd.f32 %v5022, %v5346
        %v5425 = vadd.f32 %v5023, %v5351
        %v5426 = vadd.f32 %v5024, %v5358
        %v5427 = vadd.f32 %v5025, %v5361
        %v5428 = vadd.f32 %v5026, %v5368
        %v5429 = vadd.f32 %v5027, %v5373
        %v5430 = vadd.f32 %v5028, %v5380
        %v5431 = vadd.f32 %v5029, %v5383
        %v5432 = vadd.f32 %v5030, %v5390
        %v5433 = vadd.f32 %v5031, %v5395
        %v5434 = vadd.f32 %v5032, %v5402
        %v5435 = vadd.f32 %v5033, %v5405
        %v5436 = vadd.f32 %v5034, %v5412
        %v5437 = vadd.f32 %v5035, %v5417
        %v5438 = vld [vmem:[#allocation3 + $0xc] sm:$0xe]
        %s5439 = scalar_lea.vmem [#allocation9], 320
        %v5440 = vld [vmem:[%s5439] sm:$0xf]
        %v5441 = vld [vmem:[%s5439 + $0x4] sm:$0xf]
        %v5442 = vld [vmem:[%s5439 + $0x8] sm:$0xf]
        %v5443 = vld [vmem:[%s5439 + $0xc] sm:$0xf]
        %v5444 = vld [vmem:[%s5439 + $0x10] sm:$0xf]
        %v5445 = vld [vmem:[%s5439 + $0x14] sm:$0xf]
        %v5446 = vld [vmem:[%s5439 + $0x18] sm:$0xf]
        %v5447 = vld [vmem:[%s5439 + $0x1c] sm:$0xf]
        %v5448 = vld [vmem:[%s5439 + $0x20] sm:$0xf]
        %v5449 = vld [vmem:[%s5439 + $0x24] sm:$0xf]
        %v5450 = vld [vmem:[%s5439 + $0x28] sm:$0xf]
        %v5451 = vld [vmem:[%s5439 + $0x2c] sm:$0xf]
        %v5452 = vld [vmem:[%s5439 + $0x30] sm:$0xf]
        %v5453 = vld [vmem:[%s5439 + $0x34] sm:$0xf]
        %v5454 = vld [vmem:[%s5439 + $0x38] sm:$0xf]
        %v5455 = vld [vmem:[%s5439 + $0x3c] sm:$0xf]
        %v5457 = vunpack.c.l.b16 %v5438
        %v5458 = vpack.c.b16 %v5104, %v5457
        %v5459 = vrot.slane %v5458, 1
        %v5460 = vrot.slane %v5129, 1
        %v5461 = vsel %vm4515, %v5459, %v5460
        %v5462 = vrot.slane %v5130, 1
        %v5463 = vsel %vm4515, %v5460, %v5462
        %v5464 = vrot.slane %v5131, 1
        %v5465 = vsel %vm4515, %v5462, %v5464
        %v5466 = vrot.slane %v5132, 1
        %v5467 = vsel %vm4515, %v5464, %v5466
        %v5468 = vrot.slane %v5133, 1
        %v5469 = vsel %vm4515, %v5466, %v5468
        %v5470 = vrot.slane %v5134, 1
        %v5471 = vsel %vm4515, %v5468, %v5470
        %v5472 = vrot.slane %v5135, 1
        %v5473 = vsel %vm4515, %v5470, %v5472
        %v5474 = vrot.slane %v5136, 1
        %v5475 = vsel %vm4515, %v5472, %v5474
        %v5476 = vrot.slane %v5137, 1
        %v5477 = vsel %vm4515, %v5474, %v5476
        %v5478 = vrot.slane %v5138, 1
        %v5479 = vsel %vm4515, %v5476, %v5478
        %v5480 = vrot.slane %v5139, 1
        %v5481 = vsel %vm4515, %v5478, %v5480
        %v5482 = vrot.slane %v5140, 1
        %v5483 = vsel %vm4515, %v5480, %v5482
        %v5512 = vunpack.c.l.b16 %v5440
        %v5513 = vunpack.c.l.b16 %v5441
        %v5514 = vunpack.c.l.b16 %v5442
        %v5515 = vunpack.c.l.b16 %v5443
        %v5516 = vunpack.c.l.b16 %v5444
        %v5517 = vunpack.c.l.b16 %v5445
        %v5518 = vunpack.c.l.b16 %v5446
        %v5519 = vunpack.c.l.b16 %v5447
        %v5520 = vunpack.c.l.b16 %v5448
        %v5521 = vunpack.c.l.b16 %v5449
        %v5522 = vunpack.c.l.b16 %v5450
        %v5523 = vunpack.c.l.b16 %v5451
        %v5524 = vunpack.c.l.b16 %v5452
        %v5525 = vunpack.c.l.b16 %v5453
        %v5526 = vunpack.c.l.b16 %v5454
        %v5527 = vunpack.c.l.b16 %v5455
        %v5528 = vpack.c.b16 %v5513, %v5512
        %v5529 = vpack.c.b16 %v5515, %v5514
        %v5530 = vpack.c.b16 %v5517, %v5516
        %v5531 = vpack.c.b16 %v5519, %v5518
        %v5532 = vpack.c.b16 %v5521, %v5520
        %v5533 = vpack.c.b16 %v5523, %v5522
        %v5534 = vpack.c.b16 %v5525, %v5524
        %v5535 = vpack.c.b16 %v5527, %v5526
        %5544 = vmatprep.subr.bf16.mxu0 0
        %5545 = vmatpush1.bf16.msra.mxu0 %v5528
        %5546 = vmatprep.subr.bf16.mxu0 0
        %5547 = vmatpush1.bf16.msra.mxu0 %v5529
        %5548 = vmatprep.subr.bf16.mxu0 0
        %5549 = vmatpush1.bf16.msra.mxu0 %v5530
        %5550 = vmatprep.subr.bf16.mxu0 0
        %5551 = vmatpush1.bf16.msra.mxu0 %v5531
        %5552 = vmatprep.subr.bf16.mxu0 0
        %5553 = vmatpush1.bf16.msra.mxu0 %v5532
        %5554 = vmatprep.subr.bf16.mxu0 0
        %5555 = vmatpush1.bf16.msra.mxu0 %v5533
        %5556 = vmatprep.subr.bf16.mxu0 0
        %5557 = vmatpush1.bf16.msra.mxu0 %v5534
        %5558 = vmatprep.subr.bf16.mxu0 0
        %5559 = vmatpush1.bf16.msra.mxu0 %v5535
        %5560 = vmatprep.subr.bf16.mxu0 0
        %5561 = vmatpush1.bf16.msra.mxu0 0
        %5562 = vmatprep.subr.bf16.mxu0 0
        %5563 = vmatpush1.bf16.msra.mxu0 0
        %5564 = vmatprep.subr.bf16.mxu0 0
        %5565 = vmatpush1.bf16.msra.mxu0 0
        %5566 = vmatprep.subr.bf16.mxu0 0
        %5567 = vmatpush1.bf16.msra.mxu0 0
        %5568 = vmatprep.subr.bf16.mxu0 0
        %5569 = vmatpush1.bf16.msra.mxu0 0
        %5570 = vmatprep.subr.bf16.mxu0 0
        %5571 = vmatpush1.bf16.msra.mxu0 0
        %5572 = vmatprep.subr.bf16.mxu0 0
        %5573 = vmatpush1.bf16.msra.mxu0 0
        %5574 = vmatprep.subr.bf16.mxu0 0
        %5575 = vmatpush1.bf16.msra.mxu0 0
        %5576 = vmatprep.mubr.bf16.mxu0 0
        %5577 = vmatmul.mubr.bf16.gmra.mrb[0].mxu0 %v5461
        %v5578 = vpop.f32.mrb[0].mxu0
        %v5579 = vadd.f32 0.0, %v5578
        %v5580 = vpop.f32.mrb[0].mxu0
        %v5581 = vpop.f32.mrb[0].mxu0
        %v5582 = vadd.f32 0.0, %v5581
        %v5583 = vpop.f32.mrb[0].mxu0
        %5584 = vmatprep.mubr.bf16.mxu0 0
        %5585 = vmatmul.mubr.bf16.gmra.mrb[0].mxu0 %v5463
        %v5586 = vpop.f32.mrb[0].mxu0
        %v5587 = vpop.f32.mrb[0].mxu0
        %v5588 = vpop.f32.mrb[0].mxu0
        %v5589 = vadd.f32 0.0, %v5588
        %v5590 = vpop.f32.mrb[0].mxu0
        %5591 = vmatprep.mubr.bf16.mxu0 0
        %5592 = vmatmul.mubr.bf16.gmra.mrb[0].mxu0 %v5465
        %v5593 = vpop.f32.mrb[0].mxu0
        %v5594 = vadd.f32 0.0, %v5593
        %v5595 = vpop.f32.mrb[0].mxu0
        %v5596 = vpop.f32.mrb[0].mxu0
        %v5597 = vpop.f32.mrb[0].mxu0
        %5598 = vmatprep.mubr.bf16.mxu0 0
        %5599 = vmatmul.mubr.bf16.gmra.mrb[0].mxu0 %v5467
        %v5600 = vpop.f32.mrb[0].mxu0
        %v5601 = vadd.f32 0.0, %v5600
        %v5602 = vpop.f32.mrb[0].mxu0
        %v5603 = vpop.f32.mrb[0].mxu0
        %v5604 = vadd.f32 0.0, %v5603
        %v5605 = vpop.f32.mrb[0].mxu0
        %5606 = vmatprep.mubr.bf16.mxu0 0
        %5607 = vmatmul.mubr.bf16.gmra.mrb[0].mxu0 %v5469
        %v5608 = vpop.f32.mrb[0].mxu0
        %v5609 = vpop.f32.mrb[0].mxu0
        %v5610 = vpop.f32.mrb[0].mxu0
        %v5611 = vadd.f32 0.0, %v5610
        %v5612 = vpop.f32.mrb[0].mxu0
        %5613 = vmatprep.mubr.bf16.mxu0 0
        %5614 = vmatmul.mubr.bf16.gmra.mrb[0].mxu0 %v5471
        %v5615 = vpop.f32.mrb[0].mxu0
        %v5616 = vadd.f32 0.0, %v5615
        %v5617 = vpop.f32.mrb[0].mxu0
        %v5618 = vpop.f32.mrb[0].mxu0
        %v5619 = vpop.f32.mrb[0].mxu0
        %5620 = vmatprep.mubr.bf16.mxu0 0
        %5621 = vmatmul.mubr.bf16.gmra.mrb[0].mxu0 %v5473
        %v5622 = vpop.f32.mrb[0].mxu0
        %v5623 = vadd.f32 0.0, %v5622
        %v5624 = vpop.f32.mrb[0].mxu0
        %v5625 = vpop.f32.mrb[0].mxu0
        %v5626 = vadd.f32 0.0, %v5625
        %v5627 = vpop.f32.mrb[0].mxu0
        %5628 = vmatprep.mubr.bf16.mxu0 0
        %5629 = vmatmul.mubr.bf16.gmra.mrb[0].mxu0 %v5475
        %v5630 = vpop.f32.mrb[0].mxu0
        %v5631 = vpop.f32.mrb[0].mxu0
        %v5632 = vpop.f32.mrb[0].mxu0
        %v5633 = vadd.f32 0.0, %v5632
        %v5634 = vpop.f32.mrb[0].mxu0
        %5635 = vmatprep.mubr.bf16.mxu0 0
        %5636 = vmatmul.mubr.bf16.gmra.mrb[0].mxu0 %v5477
        %v5637 = vpop.f32.mrb[0].mxu0
        %v5638 = vadd.f32 0.0, %v5637
        %v5639 = vpop.f32.mrb[0].mxu0
        %v5640 = vpop.f32.mrb[0].mxu0
        %v5641 = vpop.f32.mrb[0].mxu0
        %5642 = vmatprep.mubr.bf16.mxu0 0
        %5643 = vmatmul.mubr.bf16.gmra.mrb[0].mxu0 %v5479
        %v5644 = vpop.f32.mrb[0].mxu0
        %v5645 = vadd.f32 0.0, %v5644
        %v5646 = vpop.f32.mrb[0].mxu0
        %v5647 = vpop.f32.mrb[0].mxu0
        %v5648 = vadd.f32 0.0, %v5647
        %v5649 = vpop.f32.mrb[0].mxu0
        %5650 = vmatprep.mubr.bf16.mxu0 0
        %5651 = vmatmul.mubr.bf16.gmra.mrb[0].mxu0 %v5481
        %v5652 = vpop.f32.mrb[0].mxu0
        %v5653 = vpop.f32.mrb[0].mxu0
        %v5654 = vpop.f32.mrb[0].mxu0
        %v5655 = vadd.f32 0.0, %v5654
        %v5656 = vpop.f32.mrb[0].mxu0
        %5657 = vmatprep.mubr.bf16.mxu0 0
        %5658 = vmatmul.mubr.bf16.gmra.mrb[0].mxu0 %v5483
        %v5659 = vpop.f32.mrb[0].mxu0
        %v5660 = vadd.f32 0.0, %v5659
        %v5661 = vpop.f32.mrb[0].mxu0
        %v5662 = vpop.f32.mrb[0].mxu0
        %v5663 = vpop.f32.mrb[0].mxu0
        %5664 = vdwg.mxu0
        %v5665 = vadd.f32 %v5422, %v5579
        %v5666 = vadd.f32 %v5423, %v5582
        %v5667 = vadd.f32 %v5424, %v5589
        %v5668 = vadd.f32 %v5425, %v5594
        %v5669 = vadd.f32 %v5426, %v5601
        %v5670 = vadd.f32 %v5427, %v5604
        %v5671 = vadd.f32 %v5428, %v5611
        %v5672 = vadd.f32 %v5429, %v5616
        %v5673 = vadd.f32 %v5430, %v5623
        %v5674 = vadd.f32 %v5431, %v5626
        %v5675 = vadd.f32 %v5432, %v5633
        %v5676 = vadd.f32 %v5433, %v5638
        %v5677 = vadd.f32 %v5434, %v5645
        %v5678 = vadd.f32 %v5435, %v5648
        %v5679 = vadd.f32 %v5436, %v5655
        %v5680 = vadd.f32 %v5437, %v5660
        %v5681 = vld [vmem:[#allocation3 + $0x18] sm:$0xf]
        %v5682 = vld [vmem:[#allocation3 + $0x1c] sm:$0xf]
        %v5683 = vld [vmem:[#allocation3 + $0x20] sm:$0xf]
        %v5684 = vld [vmem:[#allocation3 + $0x24] sm:$0xf]
        %v5685 = vld [vmem:[#allocation3 + $0x28] sm:$0xf]
        %v5686 = vld [vmem:[#allocation3 + $0x2c] sm:$0xf]
        %v5687 = vld [vmem:[#allocation3 + $0x30] sm:$0xf]
        %v5688 = vld [vmem:[#allocation3 + $0x34] sm:$0xf]
        %v5689 = vld [vmem:[#allocation3 + $0x38] sm:$0xf]
        %v5690 = vld [vmem:[#allocation3 + $0x3c] sm:$0xf]
        %v5691 = vld [vmem:[#allocation3 + $0x40] sm:$0xf]
        %v5692 = vld [vmem:[#allocation3 + $0x44] sm:$0xf]
        %v5693 = vld [vmem:[#allocation3 + $0x48] sm:$0xf]
        %v5694 = vld [vmem:[#allocation3 + $0x4c] sm:$0xf]
        %v5695 = vld [vmem:[#allocation3 + $0x50] sm:$0xf]
        %v5696 = vld [vmem:[#allocation3 + $0x54] sm:$0xf]
        %v5697 = vld [vmem:[#allocation3 + $0x58] sm:$0xf]
        %v5698 = vld [vmem:[#allocation3 + $0x5c] sm:$0xf]
        %v5699 = vld [vmem:[#allocation3 + $0x60] sm:$0xf]
        %v5700 = vld [vmem:[#allocation3 + $0x64] sm:$0xf]
        %v5701 = vld [vmem:[#allocation3 + $0x68] sm:$0xf]
        %v5702 = vld [vmem:[#allocation3 + $0x6c] sm:$0xf]
        %v5703 = vld [vmem:[#allocation3 + $0x70] sm:$0xf]
        %v5704 = vld [vmem:[#allocation3 + $0x74] sm:$0xf]
        %s5705 = scalar_lea.vmem [#allocation9], 384
        %v5706 = vld [vmem:[%s5705] sm:$0xf]
        %v5707 = vld [vmem:[%s5705 + $0x4] sm:$0xf]
        %v5708 = vld [vmem:[%s5705 + $0x8] sm:$0xf]
        %v5709 = vld [vmem:[%s5705 + $0xc] sm:$0xf]
        %v5710 = vld [vmem:[%s5705 + $0x10] sm:$0xf]
        %v5711 = vld [vmem:[%s5705 + $0x14] sm:$0xf]
        %v5712 = vld [vmem:[%s5705 + $0x18] sm:$0xf]
        %v5713 = vld [vmem:[%s5705 + $0x1c] sm:$0xf]
        %v5714 = vld [vmem:[%s5705 + $0x20] sm:$0xf]
        %v5715 = vld [vmem:[%s5705 + $0x24] sm:$0xf]
        %v5716 = vld [vmem:[%s5705 + $0x28] sm:$0xf]
        %v5717 = vld [vmem:[%s5705 + $0x2c] sm:$0xf]
        %v5718 = vld [vmem:[%s5705 + $0x30] sm:$0xf]
        %v5719 = vld [vmem:[%s5705 + $0x34] sm:$0xf]
        %v5720 = vld [vmem:[%s5705 + $0x38] sm:$0xf]
        %v5721 = vld [vmem:[%s5705 + $0x3c] sm:$0xf]
        %v5746 = vunpack.c.l.b16 %v5681
        %v5747 = vunpack.c.l.b16 %v5682
        %v5748 = vunpack.c.l.b16 %v5683
        %v5749 = vunpack.c.l.b16 %v5684
        %v5750 = vunpack.c.l.b16 %v5685
        %v5751 = vunpack.c.l.b16 %v5686
        %v5752 = vunpack.c.l.b16 %v5687
        %v5753 = vunpack.c.l.b16 %v5688
        %v5754 = vunpack.c.l.b16 %v5689
        %v5755 = vunpack.c.l.b16 %v5690
        %v5756 = vunpack.c.l.b16 %v5691
        %v5757 = vunpack.c.l.b16 %v5692
        %v5758 = vunpack.c.l.b16 %v5693
        %v5759 = vunpack.c.l.b16 %v5694
        %v5760 = vunpack.c.l.b16 %v5695
        %v5761 = vunpack.c.l.b16 %v5696
        %v5762 = vunpack.c.l.b16 %v5697
        %v5763 = vunpack.c.l.b16 %v5698
        %v5764 = vunpack.c.l.b16 %v5699
        %v5765 = vunpack.c.l.b16 %v5700
        %v5766 = vunpack.c.l.b16 %v5701
        %v5767 = vunpack.c.l.b16 %v5702
        %v5768 = vunpack.c.l.b16 %v5703
        %v5769 = vunpack.c.l.b16 %v5704
        %v5770 = vpack.c.b16 %v5747, %v5746
        %v5771 = vpack.c.b16 %v5749, %v5748
        %v5772 = vpack.c.b16 %v5751, %v5750
        %v5773 = vpack.c.b16 %v5753, %v5752
        %v5774 = vpack.c.b16 %v5755, %v5754
        %v5775 = vpack.c.b16 %v5757, %v5756
        %v5776 = vpack.c.b16 %v5759, %v5758
        %v5777 = vpack.c.b16 %v5761, %v5760
        %v5778 = vpack.c.b16 %v5763, %v5762
        %v5779 = vpack.c.b16 %v5765, %v5764
        %v5780 = vpack.c.b16 %v5767, %v5766
        %v5781 = vpack.c.b16 %v5769, %v5768
        %v5810 = vunpack.c.l.b16 %v5706
        %v5811 = vunpack.c.l.b16 %v5707
        %v5812 = vunpack.c.l.b16 %v5708
        %v5813 = vunpack.c.l.b16 %v5709
        %v5814 = vunpack.c.l.b16 %v5710
        %v5815 = vunpack.c.l.b16 %v5711
        %v5816 = vunpack.c.l.b16 %v5712
        %v5817 = vunpack.c.l.b16 %v5713
        %v5818 = vunpack.c.l.b16 %v5714
        %v5819 = vunpack.c.l.b16 %v5715
        %v5820 = vunpack.c.l.b16 %v5716
        %v5821 = vunpack.c.l.b16 %v5717
        %v5822 = vunpack.c.l.b16 %v5718
        %v5823 = vunpack.c.l.b16 %v5719
        %v5824 = vunpack.c.l.b16 %v5720
        %v5825 = vunpack.c.l.b16 %v5721
        %v5826 = vpack.c.b16 %v5811, %v5810
        %v5827 = vpack.c.b16 %v5813, %v5812
        %v5828 = vpack.c.b16 %v5815, %v5814
        %v5829 = vpack.c.b16 %v5817, %v5816
        %v5830 = vpack.c.b16 %v5819, %v5818
        %v5831 = vpack.c.b16 %v5821, %v5820
        %v5832 = vpack.c.b16 %v5823, %v5822
        %v5833 = vpack.c.b16 %v5825, %v5824
        %5842 = vmatprep.subr.bf16.mxu0 0
        %5843 = vmatpush1.bf16.msra.mxu0 %v5826
        %5844 = vmatprep.subr.bf16.mxu0 0
        %5845 = vmatpush1.bf16.msra.mxu0 %v5827
        %5846 = vmatprep.subr.bf16.mxu0 0
        %5847 = vmatpush1.bf16.msra.mxu0 %v5828
        %5848 = vmatprep.subr.bf16.mxu0 0
        %5849 = vmatpush1.bf16.msra.mxu0 %v5829
        %5850 = vmatprep.subr.bf16.mxu0 0
        %5851 = vmatpush1.bf16.msra.mxu0 %v5830
        %5852 = vmatprep.subr.bf16.mxu0 0
        %5853 = vmatpush1.bf16.msra.mxu0 %v5831
        %5854 = vmatprep.subr.bf16.mxu0 0
        %5855 = vmatpush1.bf16.msra.mxu0 %v5832
        %5856 = vmatprep.subr.bf16.mxu0 0
        %5857 = vmatpush1.bf16.msra.mxu0 %v5833
        %5858 = vmatprep.subr.bf16.mxu0 0
        %5859 = vmatpush1.bf16.msra.mxu0 0
        %5860 = vmatprep.subr.bf16.mxu0 0
        %5861 = vmatpush1.bf16.msra.mxu0 0
        %5862 = vmatprep.subr.bf16.mxu0 0
        %5863 = vmatpush1.bf16.msra.mxu0 0
        %5864 = vmatprep.subr.bf16.mxu0 0
        %5865 = vmatpush1.bf16.msra.mxu0 0
        %5866 = vmatprep.subr.bf16.mxu0 0
        %5867 = vmatpush1.bf16.msra.mxu0 0
        %5868 = vmatprep.subr.bf16.mxu0 0
        %5869 = vmatpush1.bf16.msra.mxu0 0
        %5870 = vmatprep.subr.bf16.mxu0 0
        %5871 = vmatpush1.bf16.msra.mxu0 0
        %5872 = vmatprep.subr.bf16.mxu0 0
        %5873 = vmatpush1.bf16.msra.mxu0 0
        %5874 = vmatprep.mubr.bf16.mxu0 0
        %5875 = vmatmul.mubr.bf16.gmra.mrb[0].mxu0 %v5770
        %v5876 = vpop.f32.mrb[0].mxu0
        %v5877 = vadd.f32 0.0, %v5876
        %v5878 = vpop.f32.mrb[0].mxu0
        %v5879 = vpop.f32.mrb[0].mxu0
        %v5880 = vadd.f32 0.0, %v5879
        %v5881 = vpop.f32.mrb[0].mxu0
        %5882 = vmatprep.mubr.bf16.mxu0 0
        %5883 = vmatmul.mubr.bf16.gmra.mrb[0].mxu0 %v5771
        %v5884 = vpop.f32.mrb[0].mxu0
        %v5885 = vpop.f32.mrb[0].mxu0
        %v5886 = vpop.f32.mrb[0].mxu0
        %v5887 = vadd.f32 0.0, %v5886
        %v5888 = vpop.f32.mrb[0].mxu0
        %5889 = vmatprep.mubr.bf16.mxu0 0
        %5890 = vmatmul.mubr.bf16.gmra.mrb[0].mxu0 %v5772
        %v5891 = vpop.f32.mrb[0].mxu0
        %v5892 = vadd.f32 0.0, %v5891
        %v5893 = vpop.f32.mrb[0].mxu0
        %v5894 = vpop.f32.mrb[0].mxu0
        %v5895 = vpop.f32.mrb[0].mxu0
        %5896 = vmatprep.mubr.bf16.mxu0 0
        %5897 = vmatmul.mubr.bf16.gmra.mrb[0].mxu0 %v5773
        %v5898 = vpop.f32.mrb[0].mxu0
        %v5899 = vadd.f32 0.0, %v5898
        %v5900 = vpop.f32.mrb[0].mxu0
        %v5901 = vpop.f32.mrb[0].mxu0
        %v5902 = vadd.f32 0.0, %v5901
        %v5903 = vpop.f32.mrb[0].mxu0
        %5904 = vmatprep.mubr.bf16.mxu0 0
        %5905 = vmatmul.mubr.bf16.gmra.mrb[0].mxu0 %v5774
        %v5906 = vpop.f32.mrb[0].mxu0
        %v5907 = vpop.f32.mrb[0].mxu0
        %v5908 = vpop.f32.mrb[0].mxu0
        %v5909 = vadd.f32 0.0, %v5908
        %v5910 = vpop.f32.mrb[0].mxu0
        %5911 = vmatprep.mubr.bf16.mxu0 0
        %5912 = vmatmul.mubr.bf16.gmra.mrb[0].mxu0 %v5775
        %v5913 = vpop.f32.mrb[0].mxu0
        %v5914 = vadd.f32 0.0, %v5913
        %v5915 = vpop.f32.mrb[0].mxu0
        %v5916 = vpop.f32.mrb[0].mxu0
        %v5917 = vpop.f32.mrb[0].mxu0
        %5918 = vmatprep.mubr.bf16.mxu0 0
        %5919 = vmatmul.mubr.bf16.gmra.mrb[0].mxu0 %v5776
        %v5920 = vpop.f32.mrb[0].mxu0
        %v5921 = vadd.f32 0.0, %v5920
        %v5922 = vpop.f32.mrb[0].mxu0
        %v5923 = vpop.f32.mrb[0].mxu0
        %v5924 = vadd.f32 0.0, %v5923
        %v5925 = vpop.f32.mrb[0].mxu0
        %5926 = vmatprep.mubr.bf16.mxu0 0
        %5927 = vmatmul.mubr.bf16.gmra.mrb[0].mxu0 %v5777
        %v5928 = vpop.f32.mrb[0].mxu0
        %v5929 = vpop.f32.mrb[0].mxu0
        %v5930 = vpop.f32.mrb[0].mxu0
        %v5931 = vadd.f32 0.0, %v5930
        %v5932 = vpop.f32.mrb[0].mxu0
        %5933 = vmatprep.mubr.bf16.mxu0 0
        %5934 = vmatmul.mubr.bf16.gmra.mrb[0].mxu0 %v5778
        %v5935 = vpop.f32.mrb[0].mxu0
        %v5936 = vadd.f32 0.0, %v5935
        %v5937 = vpop.f32.mrb[0].mxu0
        %v5938 = vpop.f32.mrb[0].mxu0
        %v5939 = vpop.f32.mrb[0].mxu0
        %5940 = vmatprep.mubr.bf16.mxu0 0
        %5941 = vmatmul.mubr.bf16.gmra.mrb[0].mxu0 %v5779
        %v5942 = vpop.f32.mrb[0].mxu0
        %v5943 = vadd.f32 0.0, %v5942
        %v5944 = vpop.f32.mrb[0].mxu0
        %v5945 = vpop.f32.mrb[0].mxu0
        %v5946 = vadd.f32 0.0, %v5945
        %v5947 = vpop.f32.mrb[0].mxu0
        %5948 = vmatprep.mubr.bf16.mxu0 0
        %5949 = vmatmul.mubr.bf16.gmra.mrb[0].mxu0 %v5780
        %v5950 = vpop.f32.mrb[0].mxu0
        %v5951 = vpop.f32.mrb[0].mxu0
        %v5952 = vpop.f32.mrb[0].mxu0
        %v5953 = vadd.f32 0.0, %v5952
        %v5954 = vpop.f32.mrb[0].mxu0
        %5955 = vmatprep.mubr.bf16.mxu0 0
        %5956 = vmatmul.mubr.bf16.gmra.mrb[0].mxu0 %v5781
        %v5957 = vpop.f32.mrb[0].mxu0
        %v5958 = vadd.f32 0.0, %v5957
        %v5959 = vpop.f32.mrb[0].mxu0
        %v5960 = vpop.f32.mrb[0].mxu0
        %v5961 = vpop.f32.mrb[0].mxu0
        %5962 = vdwg.mxu0
        %v5963 = vadd.f32 %v5665, %v5877
        %v5964 = vadd.f32 %v5666, %v5880
        %v5965 = vadd.f32 %v5667, %v5887
        %v5966 = vadd.f32 %v5668, %v5892
        %v5967 = vadd.f32 %v5669, %v5899
        %v5968 = vadd.f32 %v5670, %v5902
        %v5969 = vadd.f32 %v5671, %v5909
        %v5970 = vadd.f32 %v5672, %v5914
        %v5971 = vadd.f32 %v5673, %v5921
        %v5972 = vadd.f32 %v5674, %v5924
        %v5973 = vadd.f32 %v5675, %v5931
        %v5974 = vadd.f32 %v5676, %v5936
        %v5975 = vadd.f32 %v5677, %v5943
        %v5976 = vadd.f32 %v5678, %v5946
        %v5977 = vadd.f32 %v5679, %v5953
        %v5978 = vadd.f32 %v5680, %v5958
        %v5979 = vld [vmem:[#allocation3 + $0x18] sm:$0xf]
        %v5980 = vld [vmem:[#allocation3 + $0x1c] sm:$0xf]
        %v5981 = vld [vmem:[#allocation3 + $0x20] sm:$0xf]
        %v5982 = vld [vmem:[#allocation3 + $0x24] sm:$0xf]
        %v5983 = vld [vmem:[#allocation3 + $0x28] sm:$0xf]
        %v5984 = vld [vmem:[#allocation3 + $0x2c] sm:$0xf]
        %v5985 = vld [vmem:[#allocation3 + $0x30] sm:$0xf]
        %v5986 = vld [vmem:[#allocation3 + $0x34] sm:$0xf]
        %v5987 = vld [vmem:[#allocation3 + $0x38] sm:$0xf]
        %v5988 = vld [vmem:[#allocation3 + $0x3c] sm:$0xf]
        %v5989 = vld [vmem:[#allocation3 + $0x40] sm:$0xf]
        %v5990 = vld [vmem:[#allocation3 + $0x44] sm:$0xf]
        %v5991 = vld [vmem:[#allocation3 + $0x48] sm:$0xf]
        %v5992 = vld [vmem:[#allocation3 + $0x4c] sm:$0xf]
        %v5993 = vld [vmem:[#allocation3 + $0x50] sm:$0xf]
        %v5994 = vld [vmem:[#allocation3 + $0x54] sm:$0xf]
        %v5995 = vld [vmem:[#allocation3 + $0x58] sm:$0xf]
        %v5996 = vld [vmem:[#allocation3 + $0x5c] sm:$0xf]
        %v5997 = vld [vmem:[#allocation3 + $0x60] sm:$0xf]
        %v5998 = vld [vmem:[#allocation3 + $0x64] sm:$0xf]
        %v5999 = vld [vmem:[#allocation3 + $0x68] sm:$0xf]
        %v6000 = vld [vmem:[#allocation3 + $0x6c] sm:$0xf]
        %v6001 = vld [vmem:[#allocation3 + $0x70] sm:$0xf]
        %v6002 = vld [vmem:[#allocation3 + $0x74] sm:$0xf]
        %v6003 = vld [vmem:[#allocation3 + $0x78] sm:$0x1]
        %s6004 = scalar_lea.vmem [#allocation9], 448
        %v6005 = vld [vmem:[%s6004] sm:$0xf]
        %v6006 = vld [vmem:[%s6004 + $0x4] sm:$0xf]
        %v6007 = vld [vmem:[%s6004 + $0x8] sm:$0xf]
        %v6008 = vld [vmem:[%s6004 + $0xc] sm:$0xf]
        %v6009 = vld [vmem:[%s6004 + $0x10] sm:$0xf]
        %v6010 = vld [vmem:[%s6004 + $0x14] sm:$0xf]
        %v6011 = vld [vmem:[%s6004 + $0x18] sm:$0xf]
        %v6012 = vld [vmem:[%s6004 + $0x1c] sm:$0xf]
        %v6013 = vld [vmem:[%s6004 + $0x20] sm:$0xf]
        %v6014 = vld [vmem:[%s6004 + $0x24] sm:$0xf]
        %v6015 = vld [vmem:[%s6004 + $0x28] sm:$0xf]
        %v6016 = vld [vmem:[%s6004 + $0x2c] sm:$0xf]
        %v6017 = vld [vmem:[%s6004 + $0x30] sm:$0xf]
        %v6018 = vld [vmem:[%s6004 + $0x34] sm:$0xf]
        %v6019 = vld [vmem:[%s6004 + $0x38] sm:$0xf]
        %v6020 = vld [vmem:[%s6004 + $0x3c] sm:$0xf]
        %v6046 = vunpack.c.l.b16 %v5979
        %v6047 = vunpack.c.l.b16 %v5980
        %v6048 = vunpack.c.l.b16 %v5981
        %v6049 = vunpack.c.l.b16 %v5982
        %v6050 = vunpack.c.l.b16 %v5983
        %v6051 = vunpack.c.l.b16 %v5984
        %v6052 = vunpack.c.l.b16 %v5985
        %v6053 = vunpack.c.l.b16 %v5986
        %v6054 = vunpack.c.l.b16 %v5987
        %v6055 = vunpack.c.l.b16 %v5988
        %v6056 = vunpack.c.l.b16 %v5989
        %v6057 = vunpack.c.l.b16 %v5990
        %v6058 = vunpack.c.l.b16 %v5991
        %v6059 = vunpack.c.l.b16 %v5992
        %v6060 = vunpack.c.l.b16 %v5993
        %v6061 = vunpack.c.l.b16 %v5994
        %v6062 = vunpack.c.l.b16 %v5995
        %v6063 = vunpack.c.l.b16 %v5996
        %v6064 = vunpack.c.l.b16 %v5997
        %v6065 = vunpack.c.l.b16 %v5998
        %v6066 = vunpack.c.l.b16 %v5999
        %v6067 = vunpack.c.l.b16 %v6000
        %v6068 = vunpack.c.l.b16 %v6001
        %v6069 = vunpack.c.l.b16 %v6002
        %v6070 = vunpack.c.l.b16 %v6003
        %v6071 = vpack.c.b16 %v6047, %v6046
        %v6072 = vpack.c.b16 %v6049, %v6048
        %v6073 = vpack.c.b16 %v6051, %v6050
        %v6074 = vpack.c.b16 %v6053, %v6052
        %v6075 = vpack.c.b16 %v6055, %v6054
        %v6076 = vpack.c.b16 %v6057, %v6056
        %v6077 = vpack.c.b16 %v6059, %v6058
        %v6078 = vpack.c.b16 %v6061, %v6060
        %v6079 = vpack.c.b16 %v6063, %v6062
        %v6080 = vpack.c.b16 %v6065, %v6064
        %v6081 = vpack.c.b16 %v6067, %v6066
        %v6082 = vpack.c.b16 %v6069, %v6068
        %v6083 = vpack.c.b16 %v6070, %v6070
        %v6085 = vshrl.u32 %v6071, 16
        %v6087 = vshll.u32 %v6071, 16
        %v6089 = vrot.slane %v6087, 1
        %v6090 = vor.u32 %v6085, %v6089
        %v6092 = vshll.u32 %v6072, 16
        %v6094 = vrot.slane %v6092, 1
        %v6095 = vsel %vm2168, %v6090, %v6094
        %v6096 = vshrl.u32 %v6072, 16
        %v6098 = vor.u32 %v6096, %v6094
        %v6100 = vshll.u32 %v6073, 16
        %v6102 = vrot.slane %v6100, 1
        %v6103 = vsel %vm2168, %v6098, %v6102
        %v6104 = vshrl.u32 %v6073, 16
        %v6106 = vor.u32 %v6104, %v6102
        %v6108 = vshll.u32 %v6074, 16
        %v6110 = vrot.slane %v6108, 1
        %v6111 = vsel %vm2168, %v6106, %v6110
        %v6112 = vshrl.u32 %v6074, 16
        %v6114 = vor.u32 %v6112, %v6110
        %v6116 = vshll.u32 %v6075, 16
        %v6118 = vrot.slane %v6116, 1
        %v6119 = vsel %vm2168, %v6114, %v6118
        %v6120 = vshrl.u32 %v6075, 16
        %v6122 = vor.u32 %v6120, %v6118
        %v6124 = vshll.u32 %v6076, 16
        %v6126 = vrot.slane %v6124, 1
        %v6127 = vsel %vm2168, %v6122, %v6126
        %v6128 = vshrl.u32 %v6076, 16
        %v6130 = vor.u32 %v6128, %v6126
        %v6132 = vshll.u32 %v6077, 16
        %v6134 = vrot.slane %v6132, 1
        %v6135 = vsel %vm2168, %v6130, %v6134
        %v6136 = vshrl.u32 %v6077, 16
        %v6138 = vor.u32 %v6136, %v6134
        %v6140 = vshll.u32 %v6078, 16
        %v6142 = vrot.slane %v6140, 1
        %v6143 = vsel %vm2168, %v6138, %v6142
        %v6144 = vshrl.u32 %v6078, 16
        %v6146 = vor.u32 %v6144, %v6142
        %v6148 = vshll.u32 %v6079, 16
        %v6150 = vrot.slane %v6148, 1
        %v6151 = vsel %vm2168, %v6146, %v6150
        %v6152 = vshrl.u32 %v6079, 16
        %v6154 = vor.u32 %v6152, %v6150
        %v6156 = vshll.u32 %v6080, 16
        %v6158 = vrot.slane %v6156, 1
        %v6159 = vsel %vm2168, %v6154, %v6158
        %v6160 = vshrl.u32 %v6080, 16
        %v6162 = vor.u32 %v6160, %v6158
        %v6164 = vshll.u32 %v6081, 16
        %v6166 = vrot.slane %v6164, 1
        %v6167 = vsel %vm2168, %v6162, %v6166
        %v6168 = vshrl.u32 %v6081, 16
        %v6170 = vor.u32 %v6168, %v6166
        %v6172 = vshll.u32 %v6082, 16
        %v6174 = vrot.slane %v6172, 1
        %v6175 = vsel %vm2168, %v6170, %v6174
        %v6176 = vshrl.u32 %v6082, 16
        %v6178 = vor.u32 %v6176, %v6174
        %v6180 = vshll.u32 %v6083, 16
        %v6182 = vrot.slane %v6180, 1
        %v6183 = vsel %vm2168, %v6178, %v6182
        %v6212 = vunpack.c.l.b16 %v6005
        %v6213 = vunpack.c.l.b16 %v6006
        %v6214 = vunpack.c.l.b16 %v6007
        %v6215 = vunpack.c.l.b16 %v6008
        %v6216 = vunpack.c.l.b16 %v6009
        %v6217 = vunpack.c.l.b16 %v6010
        %v6218 = vunpack.c.l.b16 %v6011
        %v6219 = vunpack.c.l.b16 %v6012
        %v6220 = vunpack.c.l.b16 %v6013
        %v6221 = vunpack.c.l.b16 %v6014
        %v6222 = vunpack.c.l.b16 %v6015
        %v6223 = vunpack.c.l.b16 %v6016
        %v6224 = vunpack.c.l.b16 %v6017
        %v6225 = vunpack.c.l.b16 %v6018
        %v6226 = vunpack.c.l.b16 %v6019
        %v6227 = vunpack.c.l.b16 %v6020
        %v6228 = vpack.c.b16 %v6213, %v6212
        %v6229 = vpack.c.b16 %v6215, %v6214
        %v6230 = vpack.c.b16 %v6217, %v6216
        %v6231 = vpack.c.b16 %v6219, %v6218
        %v6232 = vpack.c.b16 %v6221, %v6220
        %v6233 = vpack.c.b16 %v6223, %v6222
        %v6234 = vpack.c.b16 %v6225, %v6224
        %v6235 = vpack.c.b16 %v6227, %v6226
        %6244 = vmatprep.subr.bf16.mxu0 0
        %6245 = vmatpush1.bf16.msra.mxu0 %v6228
        %6246 = vmatprep.subr.bf16.mxu0 0
        %6247 = vmatpush1.bf16.msra.mxu0 %v6229
        %6248 = vmatprep.subr.bf16.mxu0 0
        %6249 = vmatpush1.bf16.msra.mxu0 %v6230
        %6250 = vmatprep.subr.bf16.mxu0 0
        %6251 = vmatpush1.bf16.msra.mxu0 %v6231
        %6252 = vmatprep.subr.bf16.mxu0 0
        %6253 = vmatpush1.bf16.msra.mxu0 %v6232
        %6254 = vmatprep.subr.bf16.mxu0 0
        %6255 = vmatpush1.bf16.msra.mxu0 %v6233
        %6256 = vmatprep.subr.bf16.mxu0 0
        %6257 = vmatpush1.bf16.msra.mxu0 %v6234
        %6258 = vmatprep.subr.bf16.mxu0 0
        %6259 = vmatpush1.bf16.msra.mxu0 %v6235
        %6260 = vmatprep.subr.bf16.mxu0 0
        %6261 = vmatpush1.bf16.msra.mxu0 0
        %6262 = vmatprep.subr.bf16.mxu0 0
        %6263 = vmatpush1.bf16.msra.mxu0 0
        %6264 = vmatprep.subr.bf16.mxu0 0
        %6265 = vmatpush1.bf16.msra.mxu0 0
        %6266 = vmatprep.subr.bf16.mxu0 0
        %6267 = vmatpush1.bf16.msra.mxu0 0
        %6268 = vmatprep.subr.bf16.mxu0 0
        %6269 = vmatpush1.bf16.msra.mxu0 0
        %6270 = vmatprep.subr.bf16.mxu0 0
        %6271 = vmatpush1.bf16.msra.mxu0 0
        %6272 = vmatprep.subr.bf16.mxu0 0
        %6273 = vmatpush1.bf16.msra.mxu0 0
        %6274 = vmatprep.subr.bf16.mxu0 0
        %6275 = vmatpush1.bf16.msra.mxu0 0
        %6276 = vmatprep.mubr.bf16.mxu0 0
        %6277 = vmatmul.mubr.bf16.gmra.mrb[0].mxu0 %v6095
        %v6278 = vpop.f32.mrb[0].mxu0
        %v6279 = vadd.f32 0.0, %v6278
        %v6280 = vpop.f32.mrb[0].mxu0
        %v6281 = vpop.f32.mrb[0].mxu0
        %v6282 = vadd.f32 0.0, %v6281
        %v6283 = vpop.f32.mrb[0].mxu0
        %6284 = vmatprep.mubr.bf16.mxu0 0
        %6285 = vmatmul.mubr.bf16.gmra.mrb[0].mxu0 %v6103
        %v6286 = vpop.f32.mrb[0].mxu0
        %v6287 = vpop.f32.mrb[0].mxu0
        %v6288 = vpop.f32.mrb[0].mxu0
        %v6289 = vadd.f32 0.0, %v6288
        %v6290 = vpop.f32.mrb[0].mxu0
        %6291 = vmatprep.mubr.bf16.mxu0 0
        %6292 = vmatmul.mubr.bf16.gmra.mrb[0].mxu0 %v6111
        %v6293 = vpop.f32.mrb[0].mxu0
        %v6294 = vadd.f32 0.0, %v6293
        %v6295 = vpop.f32.mrb[0].mxu0
        %v6296 = vpop.f32.mrb[0].mxu0
        %v6297 = vpop.f32.mrb[0].mxu0
        %6298 = vmatprep.mubr.bf16.mxu0 0
        %6299 = vmatmul.mubr.bf16.gmra.mrb[0].mxu0 %v6119
        %v6300 = vpop.f32.mrb[0].mxu0
        %v6301 = vadd.f32 0.0, %v6300
        %v6302 = vpop.f32.mrb[0].mxu0
        %v6303 = vpop.f32.mrb[0].mxu0
        %v6304 = vadd.f32 0.0, %v6303
        %v6305 = vpop.f32.mrb[0].mxu0
        %6306 = vmatprep.mubr.bf16.mxu0 0
        %6307 = vmatmul.mubr.bf16.gmra.mrb[0].mxu0 %v6127
        %v6308 = vpop.f32.mrb[0].mxu0
        %v6309 = vpop.f32.mrb[0].mxu0
        %v6310 = vpop.f32.mrb[0].mxu0
        %v6311 = vadd.f32 0.0, %v6310
        %v6312 = vpop.f32.mrb[0].mxu0
        %6313 = vmatprep.mubr.bf16.mxu0 0
        %6314 = vmatmul.mubr.bf16.gmra.mrb[0].mxu0 %v6135
        %v6315 = vpop.f32.mrb[0].mxu0
        %v6316 = vadd.f32 0.0, %v6315
        %v6317 = vpop.f32.mrb[0].mxu0
        %v6318 = vpop.f32.mrb[0].mxu0
        %v6319 = vpop.f32.mrb[0].mxu0
        %6320 = vmatprep.mubr.bf16.mxu0 0
        %6321 = vmatmul.mubr.bf16.gmra.mrb[0].mxu0 %v6143
        %v6322 = vpop.f32.mrb[0].mxu0
        %v6323 = vadd.f32 0.0, %v6322
        %v6324 = vpop.f32.mrb[0].mxu0
        %v6325 = vpop.f32.mrb[0].mxu0
        %v6326 = vadd.f32 0.0, %v6325
        %v6327 = vpop.f32.mrb[0].mxu0
        %6328 = vmatprep.mubr.bf16.mxu0 0
        %6329 = vmatmul.mubr.bf16.gmra.mrb[0].mxu0 %v6151
        %v6330 = vpop.f32.mrb[0].mxu0
        %v6331 = vpop.f32.mrb[0].mxu0
        %v6332 = vpop.f32.mrb[0].mxu0
        %v6333 = vadd.f32 0.0, %v6332
        %v6334 = vpop.f32.mrb[0].mxu0
        %6335 = vmatprep.mubr.bf16.mxu0 0
        %6336 = vmatmul.mubr.bf16.gmra.mrb[0].mxu0 %v6159
        %v6337 = vpop.f32.mrb[0].mxu0
        %v6338 = vadd.f32 0.0, %v6337
        %v6339 = vpop.f32.mrb[0].mxu0
        %v6340 = vpop.f32.mrb[0].mxu0
        %v6341 = vpop.f32.mrb[0].mxu0
        %6342 = vmatprep.mubr.bf16.mxu0 0
        %6343 = vmatmul.mubr.bf16.gmra.mrb[0].mxu0 %v6167
        %v6344 = vpop.f32.mrb[0].mxu0
        %v6345 = vadd.f32 0.0, %v6344
        %v6346 = vpop.f32.mrb[0].mxu0
        %v6347 = vpop.f32.mrb[0].mxu0
        %v6348 = vadd.f32 0.0, %v6347
        %v6349 = vpop.f32.mrb[0].mxu0
        %6350 = vmatprep.mubr.bf16.mxu0 0
        %6351 = vmatmul.mubr.bf16.gmra.mrb[0].mxu0 %v6175
        %v6352 = vpop.f32.mrb[0].mxu0
        %v6353 = vpop.f32.mrb[0].mxu0
        %v6354 = vpop.f32.mrb[0].mxu0
        %v6355 = vadd.f32 0.0, %v6354
        %v6356 = vpop.f32.mrb[0].mxu0
        %6357 = vmatprep.mubr.bf16.mxu0 0
        %6358 = vmatmul.mubr.bf16.gmra.mrb[0].mxu0 %v6183
        %v6359 = vpop.f32.mrb[0].mxu0
        %v6360 = vadd.f32 0.0, %v6359
        %v6361 = vpop.f32.mrb[0].mxu0
        %v6362 = vpop.f32.mrb[0].mxu0
        %v6363 = vpop.f32.mrb[0].mxu0
        %6364 = vdwg.mxu0
        %v6365 = vadd.f32 %v5963, %v6279
        %v6366 = vadd.f32 %v5964, %v6282
        %v6367 = vadd.f32 %v5965, %v6289
        %v6368 = vadd.f32 %v5966, %v6294
        %v6369 = vadd.f32 %v5967, %v6301
        %v6370 = vadd.f32 %v5968, %v6304
        %v6371 = vadd.f32 %v5969, %v6311
        %v6372 = vadd.f32 %v5970, %v6316
        %v6373 = vadd.f32 %v5971, %v6323
        %v6374 = vadd.f32 %v5972, %v6326
        %v6375 = vadd.f32 %v5973, %v6333
        %v6376 = vadd.f32 %v5974, %v6338
        %v6377 = vadd.f32 %v5975, %v6345
        %v6378 = vadd.f32 %v5976, %v6348
        %v6379 = vadd.f32 %v5977, %v6355
        %v6380 = vadd.f32 %v5978, %v6360
        %v6381 = vld [vmem:[#allocation3 + $0x18] sm:$0xe]
        %s6382 = scalar_lea.vmem [#allocation9], 512
        %v6383 = vld [vmem:[%s6382] sm:$0xf]
        %v6384 = vld [vmem:[%s6382 + $0x4] sm:$0xf]
        %v6385 = vld [vmem:[%s6382 + $0x8] sm:$0xf]
        %v6386 = vld [vmem:[%s6382 + $0xc] sm:$0xf]
        %v6387 = vld [vmem:[%s6382 + $0x10] sm:$0xf]
        %v6388 = vld [vmem:[%s6382 + $0x14] sm:$0xf]
        %v6389 = vld [vmem:[%s6382 + $0x18] sm:$0xf]
        %v6390 = vld [vmem:[%s6382 + $0x1c] sm:$0xf]
        %v6391 = vld [vmem:[%s6382 + $0x20] sm:$0xf]
        %v6392 = vld [vmem:[%s6382 + $0x24] sm:$0xf]
        %v6393 = vld [vmem:[%s6382 + $0x28] sm:$0xf]
        %v6394 = vld [vmem:[%s6382 + $0x2c] sm:$0xf]
        %v6395 = vld [vmem:[%s6382 + $0x30] sm:$0xf]
        %v6396 = vld [vmem:[%s6382 + $0x34] sm:$0xf]
        %v6397 = vld [vmem:[%s6382 + $0x38] sm:$0xf]
        %v6398 = vld [vmem:[%s6382 + $0x3c] sm:$0xf]
        %v6400 = vunpack.c.l.b16 %v6381
        %v6401 = vpack.c.b16 %v6047, %v6400
        %v6402 = vrot.slane %v6401, 1
        %v6403 = vrot.slane %v6072, 1
        %v6404 = vsel %vm4515, %v6402, %v6403
        %v6405 = vrot.slane %v6073, 1
        %v6406 = vsel %vm4515, %v6403, %v6405
        %v6407 = vrot.slane %v6074, 1
        %v6408 = vsel %vm4515, %v6405, %v6407
        %v6409 = vrot.slane %v6075, 1
        %v6410 = vsel %vm4515, %v6407, %v6409
        %v6411 = vrot.slane %v6076, 1
        %v6412 = vsel %vm4515, %v6409, %v6411
        %v6413 = vrot.slane %v6077, 1
        %v6414 = vsel %vm4515, %v6411, %v6413
        %v6415 = vrot.slane %v6078, 1
        %v6416 = vsel %vm4515, %v6413, %v6415
        %v6417 = vrot.slane %v6079, 1
        %v6418 = vsel %vm4515, %v6415, %v6417
        %v6419 = vrot.slane %v6080, 1
        %v6420 = vsel %vm4515, %v6417, %v6419
        %v6421 = vrot.slane %v6081, 1
        %v6422 = vsel %vm4515, %v6419, %v6421
        %v6423 = vrot.slane %v6082, 1
        %v6424 = vsel %vm4515, %v6421, %v6423
        %v6425 = vrot.slane %v6083, 1
        %v6426 = vsel %vm4515, %v6423, %v6425
        %v6455 = vunpack.c.l.b16 %v6383
        %v6456 = vunpack.c.l.b16 %v6384
        %v6457 = vunpack.c.l.b16 %v6385
        %v6458 = vunpack.c.l.b16 %v6386
        %v6459 = vunpack.c.l.b16 %v6387
        %v6460 = vunpack.c.l.b16 %v6388
        %v6461 = vunpack.c.l.b16 %v6389
        %v6462 = vunpack.c.l.b16 %v6390
        %v6463 = vunpack.c.l.b16 %v6391
        %v6464 = vunpack.c.l.b16 %v6392
        %v6465 = vunpack.c.l.b16 %v6393
        %v6466 = vunpack.c.l.b16 %v6394
        %v6467 = vunpack.c.l.b16 %v6395
        %v6468 = vunpack.c.l.b16 %v6396
        %v6469 = vunpack.c.l.b16 %v6397
        %v6470 = vunpack.c.l.b16 %v6398
        %v6471 = vpack.c.b16 %v6456, %v6455
        %v6472 = vpack.c.b16 %v6458, %v6457
        %v6473 = vpack.c.b16 %v6460, %v6459
        %v6474 = vpack.c.b16 %v6462, %v6461
        %v6475 = vpack.c.b16 %v6464, %v6463
        %v6476 = vpack.c.b16 %v6466, %v6465
        %v6477 = vpack.c.b16 %v6468, %v6467
        %v6478 = vpack.c.b16 %v6470, %v6469
        %6487 = vmatprep.subr.bf16.mxu0 0
        %6488 = vmatpush1.bf16.msra.mxu0 %v6471
        %6489 = vmatprep.subr.bf16.mxu0 0
        %6490 = vmatpush1.bf16.msra.mxu0 %v6472
        %6491 = vmatprep.subr.bf16.mxu0 0
        %6492 = vmatpush1.bf16.msra.mxu0 %v6473
        %6493 = vmatprep.subr.bf16.mxu0 0
        %6494 = vmatpush1.bf16.msra.mxu0 %v6474
        %6495 = vmatprep.subr.bf16.mxu0 0
        %6496 = vmatpush1.bf16.msra.mxu0 %v6475
        %6497 = vmatprep.subr.bf16.mxu0 0
        %6498 = vmatpush1.bf16.msra.mxu0 %v6476
        %6499 = vmatprep.subr.bf16.mxu0 0
        %6500 = vmatpush1.bf16.msra.mxu0 %v6477
        %6501 = vmatprep.subr.bf16.mxu0 0
        %6502 = vmatpush1.bf16.msra.mxu0 %v6478
        %6503 = vmatprep.subr.bf16.mxu0 0
        %6504 = vmatpush1.bf16.msra.mxu0 0
        %6505 = vmatprep.subr.bf16.mxu0 0
        %6506 = vmatpush1.bf16.msra.mxu0 0
        %6507 = vmatprep.subr.bf16.mxu0 0
        %6508 = vmatpush1.bf16.msra.mxu0 0
        %6509 = vmatprep.subr.bf16.mxu0 0
        %6510 = vmatpush1.bf16.msra.mxu0 0
        %6511 = vmatprep.subr.bf16.mxu0 0
        %6512 = vmatpush1.bf16.msra.mxu0 0
        %6513 = vmatprep.subr.bf16.mxu0 0
        %6514 = vmatpush1.bf16.msra.mxu0 0
        %6515 = vmatprep.subr.bf16.mxu0 0
        %6516 = vmatpush1.bf16.msra.mxu0 0
        %6517 = vmatprep.subr.bf16.mxu0 0
        %6518 = vmatpush1.bf16.msra.mxu0 0
        %6519 = vmatprep.mubr.bf16.mxu0 0
        %6520 = vmatmul.mubr.bf16.gmra.mrb[0].mxu0 %v6404
        %v6521 = vpop.f32.mrb[0].mxu0
        %v6522 = vadd.f32 0.0, %v6521
        %v6523 = vpop.f32.mrb[0].mxu0
        %v6524 = vpop.f32.mrb[0].mxu0
        %v6525 = vadd.f32 0.0, %v6524
        %v6526 = vpop.f32.mrb[0].mxu0
        %6527 = vmatprep.mubr.bf16.mxu0 0
        %6528 = vmatmul.mubr.bf16.gmra.mrb[0].mxu0 %v6406
        %v6529 = vpop.f32.mrb[0].mxu0
        %v6530 = vpop.f32.mrb[0].mxu0
        %v6531 = vpop.f32.mrb[0].mxu0
        %v6532 = vadd.f32 0.0, %v6531
        %v6533 = vpop.f32.mrb[0].mxu0
        %6534 = vmatprep.mubr.bf16.mxu0 0
        %6535 = vmatmul.mubr.bf16.gmra.mrb[0].mxu0 %v6408
        %v6536 = vpop.f32.mrb[0].mxu0
        %v6537 = vadd.f32 0.0, %v6536
        %v6538 = vpop.f32.mrb[0].mxu0
        %v6539 = vpop.f32.mrb[0].mxu0
        %v6540 = vpop.f32.mrb[0].mxu0
        %6541 = vmatprep.mubr.bf16.mxu0 0
        %6542 = vmatmul.mubr.bf16.gmra.mrb[0].mxu0 %v6410
        %v6543 = vpop.f32.mrb[0].mxu0
        %v6544 = vadd.f32 0.0, %v6543
        %v6545 = vpop.f32.mrb[0].mxu0
        %v6546 = vpop.f32.mrb[0].mxu0
        %v6547 = vadd.f32 0.0, %v6546
        %v6548 = vpop.f32.mrb[0].mxu0
        %6549 = vmatprep.mubr.bf16.mxu0 0
        %6550 = vmatmul.mubr.bf16.gmra.mrb[0].mxu0 %v6412
        %v6551 = vpop.f32.mrb[0].mxu0
        %v6552 = vpop.f32.mrb[0].mxu0
        %v6553 = vpop.f32.mrb[0].mxu0
        %v6554 = vadd.f32 0.0, %v6553
        %v6555 = vpop.f32.mrb[0].mxu0
        %6556 = vmatprep.mubr.bf16.mxu0 0
        %6557 = vmatmul.mubr.bf16.gmra.mrb[0].mxu0 %v6414
        %v6558 = vpop.f32.mrb[0].mxu0
        %v6559 = vadd.f32 0.0, %v6558
        %v6560 = vpop.f32.mrb[0].mxu0
        %v6561 = vpop.f32.mrb[0].mxu0
        %v6562 = vpop.f32.mrb[0].mxu0
        %6563 = vmatprep.mubr.bf16.mxu0 0
        %6564 = vmatmul.mubr.bf16.gmra.mrb[0].mxu0 %v6416
        %v6565 = vpop.f32.mrb[0].mxu0
        %v6566 = vadd.f32 0.0, %v6565
        %v6567 = vpop.f32.mrb[0].mxu0
        %v6568 = vpop.f32.mrb[0].mxu0
        %v6569 = vadd.f32 0.0, %v6568
        %v6570 = vpop.f32.mrb[0].mxu0
        %6571 = vmatprep.mubr.bf16.mxu0 0
        %6572 = vmatmul.mubr.bf16.gmra.mrb[0].mxu0 %v6418
        %v6573 = vpop.f32.mrb[0].mxu0
        %v6574 = vpop.f32.mrb[0].mxu0
        %v6575 = vpop.f32.mrb[0].mxu0
        %v6576 = vadd.f32 0.0, %v6575
        %v6577 = vpop.f32.mrb[0].mxu0
        %6578 = vmatprep.mubr.bf16.mxu0 0
        %6579 = vmatmul.mubr.bf16.gmra.mrb[0].mxu0 %v6420
        %v6580 = vpop.f32.mrb[0].mxu0
        %v6581 = vadd.f32 0.0, %v6580
        %v6582 = vpop.f32.mrb[0].mxu0
        %v6583 = vpop.f32.mrb[0].mxu0
        %v6584 = vpop.f32.mrb[0].mxu0
        %6585 = vmatprep.mubr.bf16.mxu0 0
        %6586 = vmatmul.mubr.bf16.gmra.mrb[0].mxu0 %v6422
        %v6587 = vpop.f32.mrb[0].mxu0
        %v6588 = vadd.f32 0.0, %v6587
        %v6589 = vpop.f32.mrb[0].mxu0
        %v6590 = vpop.f32.mrb[0].mxu0
        %v6591 = vadd.f32 0.0, %v6590
        %v6592 = vpop.f32.mrb[0].mxu0
        %6593 = vmatprep.mubr.bf16.mxu0 0
        %6594 = vmatmul.mubr.bf16.gmra.mrb[0].mxu0 %v6424
        %v6595 = vpop.f32.mrb[0].mxu0
        %v6596 = vpop.f32.mrb[0].mxu0
        %v6597 = vpop.f32.mrb[0].mxu0
        %v6598 = vadd.f32 0.0, %v6597
        %v6599 = vpop.f32.mrb[0].mxu0
        %6600 = vmatprep.mubr.bf16.mxu0 0
        %6601 = vmatmul.mubr.bf16.gmra.mrb[0].mxu0 %v6426
        %v6602 = vpop.f32.mrb[0].mxu0
        %v6603 = vadd.f32 0.0, %v6602
        %v6604 = vpop.f32.mrb[0].mxu0
        %v6605 = vpop.f32.mrb[0].mxu0
        %v6606 = vpop.f32.mrb[0].mxu0
        %6607 = vdwg.mxu0
        %v6608 = vadd.f32 %v6365, %v6522
        %v6609 = vadd.f32 %v6366, %v6525
        %v6610 = vadd.f32 %v6367, %v6532
        %v6611 = vadd.f32 %v6368, %v6537
        %v6612 = vadd.f32 %v6369, %v6544
        %v6613 = vadd.f32 %v6370, %v6547
        %v6614 = vadd.f32 %v6371, %v6554
        %v6615 = vadd.f32 %v6372, %v6559
        %v6616 = vadd.f32 %v6373, %v6566
        %v6617 = vadd.f32 %v6374, %v6569
        %v6618 = vadd.f32 %v6375, %v6576
        %v6619 = vadd.f32 %v6376, %v6581
        %v6620 = vadd.f32 %v6377, %v6588
        %v6621 = vadd.f32 %v6378, %v6591
        %v6622 = vadd.f32 %v6379, %v6598
        %v6623 = vadd.f32 %v6380, %v6603
        %v6624 = vld [vmem:[#allocation2 + $0x20] sm:$0xf0]
        %v6625 = vld [vmem:[#allocation2 + $0x28] sm:$0xff]
        %v6626 = vld [vmem:[#allocation2 + $0x30] sm:$0xff]
        %v6627 = vld [vmem:[#allocation2 + $0x38] sm:$0xff]
        %v6628 = vld [vmem:[#allocation2 + $0x40] sm:$0xff]
        %v6629 = vld [vmem:[#allocation2 + $0x48] sm:$0xff]
        %v6630 = vld [vmem:[#allocation2 + $0x50] sm:$0xff]
        %v6631 = vld [vmem:[#allocation2 + $0x58] sm:$0xff]
        %v6632 = vld [vmem:[#allocation2 + $0x60] sm:$0xff]
        %v6633 = vld [vmem:[#allocation2 + $0x68] sm:$0xff]
        %v6634 = vld [vmem:[#allocation2 + $0x70] sm:$0xff]
        %v6635 = vld [vmem:[#allocation2 + $0x78] sm:$0xff]
        %v6636 = vld [vmem:[#allocation2 + $0x80] sm:$0x1f]
        %v6650 = vunpack.c.h.b16 %v6624
        %v6651 = vunpack.c.l.b16 %v6625
        %v6652 = vunpack.c.h.b16 %v6625
        %v6653 = vunpack.c.l.b16 %v6626
        %v6654 = vunpack.c.h.b16 %v6626
        %v6655 = vunpack.c.l.b16 %v6627
        %v6656 = vunpack.c.h.b16 %v6627
        %v6657 = vunpack.c.l.b16 %v6628
        %v6658 = vunpack.c.h.b16 %v6628
        %v6659 = vunpack.c.l.b16 %v6629
        %v6660 = vunpack.c.h.b16 %v6629
        %v6661 = vunpack.c.l.b16 %v6630
        %v6662 = vunpack.c.h.b16 %v6630
        %v6663 = vunpack.c.l.b16 %v6631
        %v6664 = vunpack.c.h.b16 %v6631
        %v6665 = vunpack.c.l.b16 %v6632
        %v6666 = vunpack.c.h.b16 %v6632
        %v6667 = vunpack.c.l.b16 %v6633
        %v6668 = vunpack.c.h.b16 %v6633
        %v6669 = vunpack.c.l.b16 %v6634
        %v6670 = vunpack.c.h.b16 %v6634
        %v6671 = vunpack.c.l.b16 %v6635
        %v6672 = vunpack.c.h.b16 %v6635
        %v6673 = vunpack.c.l.b16 %v6636
        %v6674 = vpack.c.b16 %v6650, %v6650
        %v6675 = vpack.c.b16 %v6651, %v6651
        %v6676 = vpack.c.b16 %v6652, %v6652
        %v6677 = vpack.c.b16 %v6653, %v6653
        %v6678 = vpack.c.b16 %v6654, %v6654
        %v6679 = vpack.c.b16 %v6655, %v6655
        %v6680 = vpack.c.b16 %v6656, %v6656
        %v6681 = vpack.c.b16 %v6657, %v6657
        %v6682 = vpack.c.b16 %v6658, %v6658
        %v6683 = vpack.c.b16 %v6659, %v6659
        %v6684 = vpack.c.b16 %v6660, %v6660
        %v6685 = vpack.c.b16 %v6661, %v6661
        %v6686 = vpack.c.b16 %v6662, %v6662
        %v6687 = vpack.c.b16 %v6663, %v6663
        %v6688 = vpack.c.b16 %v6664, %v6664
        %v6689 = vpack.c.b16 %v6665, %v6665
        %v6690 = vpack.c.b16 %v6666, %v6666
        %v6691 = vpack.c.b16 %v6667, %v6667
        %v6692 = vpack.c.b16 %v6668, %v6668
        %v6693 = vpack.c.b16 %v6669, %v6669
        %v6694 = vpack.c.b16 %v6670, %v6670
        %v6695 = vpack.c.b16 %v6671, %v6671
        %v6696 = vpack.c.b16 %v6672, %v6672
        %v6697 = vpack.c.b16 %v6673, %v6673
        %vm6698 = vsmask.f32 7440
        %vm6699 = vmor %vm1163, %vm6698
        %v6701 = vshrl.u32 %v6674, 16
        %v6703 = vrot.slane %v6701, 4
        %v6704 = vshll.u32 %v6674, 16
        %v6706 = vrot.slane %v6704, 5
        %v6707 = vor.u32 %v6703, %v6706
        %v6708 = vrot.slane %v6707, 4
        %v6710 = vshll.u32 %v6675, 16
        %v6712 = vrot.slane %v6710, 5
        %v6713 = vsel %vm6699, %v6708, %v6712
        %v6714 = vshrl.u32 %v6675, 16
        %v6716 = vrot.slane %v6714, 4
        %v6717 = vor.u32 %v6716, %v6712
        %v6718 = vrot.slane %v6717, 4
        %v6720 = vshll.u32 %v6676, 16
        %v6722 = vrot.slane %v6720, 5
        %v6723 = vsel %vm6699, %v6718, %v6722
        %v6725 = vshrl.u32 %v6677, 16
        %v6727 = vrot.slane %v6725, 4
        %v6728 = vshll.u32 %v6677, 16
        %v6730 = vrot.slane %v6728, 5
        %v6731 = vor.u32 %v6727, %v6730
        %v6732 = vrot.slane %v6731, 4
        %v6734 = vshll.u32 %v6678, 16
        %v6736 = vrot.slane %v6734, 5
        %v6737 = vsel %vm6699, %v6732, %v6736
        %v6738 = vshrl.u32 %v6678, 16
        %v6740 = vrot.slane %v6738, 4
        %v6741 = vor.u32 %v6740, %v6736
        %v6742 = vrot.slane %v6741, 4
        %v6744 = vshll.u32 %v6679, 16
        %v6746 = vrot.slane %v6744, 5
        %v6747 = vsel %vm6699, %v6742, %v6746
        %v6749 = vshrl.u32 %v6680, 16
        %v6751 = vrot.slane %v6749, 4
        %v6752 = vshll.u32 %v6680, 16
        %v6754 = vrot.slane %v6752, 5
        %v6755 = vor.u32 %v6751, %v6754
        %v6756 = vrot.slane %v6755, 4
        %v6758 = vshll.u32 %v6681, 16
        %v6760 = vrot.slane %v6758, 5
        %v6761 = vsel %vm6699, %v6756, %v6760
        %v6762 = vshrl.u32 %v6681, 16
        %v6764 = vrot.slane %v6762, 4
        %v6765 = vor.u32 %v6764, %v6760
        %v6766 = vrot.slane %v6765, 4
        %v6768 = vshll.u32 %v6682, 16
        %v6770 = vrot.slane %v6768, 5
        %v6771 = vsel %vm6699, %v6766, %v6770
        %v6773 = vshrl.u32 %v6683, 16
        %v6775 = vrot.slane %v6773, 4
        %v6776 = vshll.u32 %v6683, 16
        %v6778 = vrot.slane %v6776, 5
        %v6779 = vor.u32 %v6775, %v6778
        %v6780 = vrot.slane %v6779, 4
        %v6782 = vshll.u32 %v6684, 16
        %v6784 = vrot.slane %v6782, 5
        %v6785 = vsel %vm6699, %v6780, %v6784
        %v6786 = vshrl.u32 %v6684, 16
        %v6788 = vrot.slane %v6786, 4
        %v6789 = vor.u32 %v6788, %v6784
        %v6790 = vrot.slane %v6789, 4
        %v6792 = vshll.u32 %v6685, 16
        %v6794 = vrot.slane %v6792, 5
        %v6795 = vsel %vm6699, %v6790, %v6794
        %v6797 = vshrl.u32 %v6686, 16
        %v6799 = vrot.slane %v6797, 4
        %v6800 = vshll.u32 %v6686, 16
        %v6802 = vrot.slane %v6800, 5
        %v6803 = vor.u32 %v6799, %v6802
        %v6804 = vrot.slane %v6803, 4
        %v6806 = vshll.u32 %v6687, 16
        %v6808 = vrot.slane %v6806, 5
        %v6809 = vsel %vm6699, %v6804, %v6808
        %v6810 = vshrl.u32 %v6687, 16
        %v6812 = vrot.slane %v6810, 4
        %v6813 = vor.u32 %v6812, %v6808
        %v6814 = vrot.slane %v6813, 4
        %v6816 = vshll.u32 %v6688, 16
        %v6818 = vrot.slane %v6816, 5
        %v6819 = vsel %vm6699, %v6814, %v6818
        %v6821 = vshrl.u32 %v6689, 16
        %v6823 = vrot.slane %v6821, 4
        %v6824 = vshll.u32 %v6689, 16
        %v6826 = vrot.slane %v6824, 5
        %v6827 = vor.u32 %v6823, %v6826
        %v6828 = vrot.slane %v6827, 4
        %v6830 = vshll.u32 %v6690, 16
        %v6832 = vrot.slane %v6830, 5
        %v6833 = vsel %vm6699, %v6828, %v6832
        %v6834 = vshrl.u32 %v6690, 16
        %v6836 = vrot.slane %v6834, 4
        %v6837 = vor.u32 %v6836, %v6832
        %v6838 = vrot.slane %v6837, 4
        %v6840 = vshll.u32 %v6691, 16
        %v6842 = vrot.slane %v6840, 5
        %v6843 = vsel %vm6699, %v6838, %v6842
        %v6845 = vshrl.u32 %v6692, 16
        %v6847 = vrot.slane %v6845, 4
        %v6848 = vshll.u32 %v6692, 16
        %v6850 = vrot.slane %v6848, 5
        %v6851 = vor.u32 %v6847, %v6850
        %v6852 = vrot.slane %v6851, 4
        %v6854 = vshll.u32 %v6693, 16
        %v6856 = vrot.slane %v6854, 5
        %v6857 = vsel %vm6699, %v6852, %v6856
        %v6858 = vshrl.u32 %v6693, 16
        %v6860 = vrot.slane %v6858, 4
        %v6861 = vor.u32 %v6860, %v6856
        %v6862 = vrot.slane %v6861, 4
        %v6864 = vshll.u32 %v6694, 16
        %v6866 = vrot.slane %v6864, 5
        %v6867 = vsel %vm6699, %v6862, %v6866
        %v6869 = vshrl.u32 %v6695, 16
        %v6871 = vrot.slane %v6869, 4
        %v6872 = vshll.u32 %v6695, 16
        %v6874 = vrot.slane %v6872, 5
        %v6875 = vor.u32 %v6871, %v6874
        %v6876 = vrot.slane %v6875, 4
        %v6878 = vshll.u32 %v6696, 16
        %v6880 = vrot.slane %v6878, 5
        %v6881 = vsel %vm6699, %v6876, %v6880
        %v6882 = vshrl.u32 %v6696, 16
        %v6884 = vrot.slane %v6882, 4
        %v6885 = vor.u32 %v6884, %v6880
        %v6886 = vrot.slane %v6885, 4
        %v6888 = vshll.u32 %v6697, 16
        %v6890 = vrot.slane %v6888, 5
        %v6891 = vsel %vm6699, %v6886, %v6890
        %v6908 = vld [vmem:[%s4] sm:$0x1]
        %v6910 = vlaneseq
        %v6911 = vshrl.u32 %v6910, 7
        %v6912 = vsub.s32 0, %v6911
        %v6913 = vrot.slane %v6908, %v6912
        %v6915 = vadd.f32 %v6608, %v6913
        %v6916 = vadd.f32 %v6609, %v6913
        %v6917 = vadd.f32 %v6610, %v6913
        %v6918 = vadd.f32 %v6611, %v6913
        %v6919 = vadd.f32 %v6612, %v6913
        %v6920 = vadd.f32 %v6613, %v6913
        %v6921 = vadd.f32 %v6614, %v6913
        %v6922 = vadd.f32 %v6615, %v6913
        %v6923 = vadd.f32 %v6616, %v6913
        %v6924 = vadd.f32 %v6617, %v6913
        %v6925 = vadd.f32 %v6618, %v6913
        %v6926 = vadd.f32 %v6619, %v6913
        %v6927 = vadd.f32 %v6620, %v6913
        %v6928 = vadd.f32 %v6621, %v6913
        %v6929 = vadd.f32 %v6622, %v6913
        %v6930 = vadd.f32 %v6623, %v6913
        %v6931 = vunpack.c.l.bf16 %v6713
        %v6932 = vunpack.c.l.bf16 %v6723
        %v6933 = vunpack.c.l.bf16 %v6737
        %v6934 = vunpack.c.l.bf16 %v6747
        %v6935 = vunpack.c.l.bf16 %v6761
        %v6936 = vunpack.c.l.bf16 %v6771
        %v6937 = vunpack.c.l.bf16 %v6785
        %v6938 = vunpack.c.l.bf16 %v6795
        %v6939 = vunpack.c.l.bf16 %v6809
        %v6940 = vunpack.c.l.bf16 %v6819
        %v6941 = vunpack.c.l.bf16 %v6833
        %v6942 = vunpack.c.l.bf16 %v6843
        %v6943 = vunpack.c.l.bf16 %v6857
        %v6944 = vunpack.c.l.bf16 %v6867
        %v6945 = vunpack.c.l.bf16 %v6881
        %v6946 = vunpack.c.l.bf16 %v6891
        %v6947 = vadd.f32 %v6915, %v6931
        %v6948 = vadd.f32 %v6916, %v6932
        %v6949 = vadd.f32 %v6917, %v6933
        %v6950 = vadd.f32 %v6918, %v6934
        %v6951 = vadd.f32 %v6919, %v6935
        %v6952 = vadd.f32 %v6920, %v6936
        %v6953 = vadd.f32 %v6921, %v6937
        %v6954 = vadd.f32 %v6922, %v6938
        %v6955 = vadd.f32 %v6923, %v6939
        %v6956 = vadd.f32 %v6924, %v6940
        %v6957 = vadd.f32 %v6925, %v6941
        %v6958 = vadd.f32 %v6926, %v6942
        %v6959 = vadd.f32 %v6927, %v6943
        %v6960 = vadd.f32 %v6928, %v6944
        %v6961 = vadd.f32 %v6929, %v6945
        %v6962 = vadd.f32 %v6930, %v6946
        %v6963 = vmax.f32 %v6947, 0.0
        %v6964 = vmax.f32 %v6948, 0.0
        %v6965 = vmax.f32 %v6949, 0.0
        %v6966 = vmax.f32 %v6950, 0.0
        %v6967 = vmax.f32 %v6951, 0.0
        %v6968 = vmax.f32 %v6952, 0.0
        %v6969 = vmax.f32 %v6953, 0.0
        %v6970 = vmax.f32 %v6954, 0.0
        %v6971 = vmax.f32 %v6955, 0.0
        %v6972 = vmax.f32 %v6956, 0.0
        %v6973 = vmax.f32 %v6957, 0.0
        %v6974 = vmax.f32 %v6958, 0.0
        %v6975 = vmax.f32 %v6959, 0.0
        %v6976 = vmax.f32 %v6960, 0.0
        %v6977 = vmax.f32 %v6961, 0.0
        %v6978 = vmax.f32 %v6962, 0.0
        %v6979 = vpack.c.bf16 %v6964, %v6963
        %v6980 = vpack.c.bf16 %v6966, %v6965
        %v6981 = vpack.c.bf16 %v6968, %v6967
        %v6982 = vpack.c.bf16 %v6970, %v6969
        %v6983 = vpack.c.bf16 %v6972, %v6971
        %v6984 = vpack.c.bf16 %v6974, %v6973
        %v6985 = vpack.c.bf16 %v6976, %v6975
        %v6986 = vpack.c.bf16 %v6978, %v6977
        %v6995 = vunpack.c.l.b16 %v6979
        %v6996 = vunpack.c.h.b16 %v6979
        %v6997 = vunpack.c.l.b16 %v6980
        %v6998 = vunpack.c.h.b16 %v6980
        %v6999 = vunpack.c.l.b16 %v6981
        %v7000 = vunpack.c.h.b16 %v6981
        %v7001 = vunpack.c.l.b16 %v6982
        %v7002 = vunpack.c.h.b16 %v6982
        %v7003 = vunpack.c.l.b16 %v6983
        %v7004 = vunpack.c.h.b16 %v6983
        %v7005 = vunpack.c.l.b16 %v6984
        %v7006 = vunpack.c.h.b16 %v6984
        %v7007 = vunpack.c.l.b16 %v6985
        %v7008 = vunpack.c.h.b16 %v6985
        %v7009 = vunpack.c.l.b16 %v6986
        %v7010 = vunpack.c.h.b16 %v6986
        %v7011 = vpack.c.b16 %v6995, %v6995
        %v7012 = vpack.c.b16 %v6996, %v6996
        %v7013 = vpack.c.b16 %v6997, %v6997
        %v7014 = vpack.c.b16 %v6998, %v6998
        %v7015 = vpack.c.b16 %v6999, %v6999
        %v7016 = vpack.c.b16 %v7000, %v7000
        %v7017 = vpack.c.b16 %v7001, %v7001
        %v7018 = vpack.c.b16 %v7002, %v7002
        %v7019 = vpack.c.b16 %v7003, %v7003
        %v7020 = vpack.c.b16 %v7004, %v7004
        %v7021 = vpack.c.b16 %v7005, %v7005
        %v7022 = vpack.c.b16 %v7006, %v7006
        %v7023 = vpack.c.b16 %v7007, %v7007
        %v7024 = vpack.c.b16 %v7008, %v7008
        %v7025 = vpack.c.b16 %v7009, %v7009
        %v7026 = vpack.c.b16 %v7010, %v7010
        %7043 = vst [vmem:[%s285] sm:$0xf] %v7011
        %7044 = vst [vmem:[%s285 + $0x4] sm:$0xf] %v7012
        %7045 = vst [vmem:[%s285 + $0x8] sm:$0xf] %v7013
        %7046 = vst [vmem:[%s285 + $0xc] sm:$0xf] %v7014
        %7047 = vst [vmem:[%s285 + $0x10] sm:$0xf] %v7015
        %7048 = vst [vmem:[%s285 + $0x14] sm:$0xf] %v7016
        %7049 = vst [vmem:[%s285 + $0x18] sm:$0xf] %v7017
        %7050 = vst [vmem:[%s285 + $0x1c] sm:$0xf] %v7018
        %7051 = vst [vmem:[%s285 + $0x20] sm:$0xf] %v7019
        %7052 = vst [vmem:[%s285 + $0x24] sm:$0xf] %v7020
        %7053 = vst [vmem:[%s285 + $0x28] sm:$0xf] %v7021
        %7054 = vst [vmem:[%s285 + $0x2c] sm:$0xf] %v7022
        %7055 = vst [vmem:[%s285 + $0x30] sm:$0xf] %v7023
        %7056 = vst [vmem:[%s285 + $0x34] sm:$0xf] %v7024
        %7057 = vst [vmem:[%s285 + $0x38] sm:$0xf] %v7025
        %7058 = vst [vmem:[%s285 + $0x3c] sm:$0xf] %v7026
        %s7059 = sand.u32 %s155, 1
        %s7060 = scalar_lea.sflag [#allocation6], %s7059
        %s7061 = sand.u32 %s155, 1
        %s7062 = smul.addr %s7061, 64
        %s7063 = scalar_lea.vmem [#allocation10], %s7062
        // Predicated region
        $region53: #{tpu_custom_call.1} parent=39 // pred_check
          %p7064 = pneg %p165
        $region54: #{tpu_custom_call.1} parent=39 // pred_check_branch
          %7066 = sbr.rel (%p7064) target = $region56
        $region55: #{tpu_custom_call.1} parent=39 // pred_region
          %s7067 = smul.u32 8, %s28
          %s7069 = ssub.s32 1024, 1024
          %7070 = vsyncadd %s7060, %s7069
          %s7071 = smul.addr %s7067, 2
          %s7072 = smul.addr %s27, 32
          %s7073 = sadd.s32 %s7071, %s7072
          %s7074 = smul.addr %s7073, 64
          %s7075 = scalar_lea.hbm %s5, %s7074
          %s7076 = sshll.u32 %s7063, 4
          %s7077 = int_to_ptr.vmem [resolvable:$true] %s7076
          %7082 = dma.vmem_to_hbm [thread:$0]  %s7077, 1024, %s7075, %s7060, 64, 64, 4
        $region56: #{tpu_custom_call.1} parent=39 // pred_fallthru
          _
      $region40: #{tpu_custom_call.1} parent=5 // pred_fallthru
        _
      %p7083 = scmp.le.s32.totalorder 2, %s18
      // Predicated region
      $region57: #{tpu_custom_call.1} parent=5 // pred_check
        %p7084 = pneg %p7083
      $region58: #{tpu_custom_call.1} parent=5 // pred_check_branch
        %7086 = sbr.rel (%p7084) target = $region60
      $region59: #{tpu_custom_call.1} parent=5 // pred_region
        %s7087 = ssub.s32 %s18, 2
        // Predicated region
        $region61: #{tpu_custom_call.1} parent=59 // pred_check
          %p7088 = pneg %p171
        $region62: #{tpu_custom_call.1} parent=59 // pred_check_branch
          %7090 = sbr.rel (%p7088) target = $region64
        $region63: #{tpu_custom_call.1} parent=59 // pred_region
          %s7091 = sand.u32 %s156, 1
          %s7092 = scalar_lea.sflag [#allocation6], %s7091
          %s7093 = sand.u32 %s156, 1
          %s7094 = smul.addr %s7093, 64
          %s7095 = scalar_lea.vmem [#allocation10], %s7094
          %7096 = dma.done %s7092, 1024
        $region64: #{tpu_custom_call.1} parent=59 // pred_fallthru
          _
      $region60: #{tpu_custom_call.1} parent=5 // pred_fallthru
        _
    $region6: #{tpu_custom_call.1} parent=1 // loop_footer
      %s22 = sadd.s32 1, %s18
    $region7: #{tpu_custom_call.1} parent=1 // loop_footer_branch
      %17 = sbr.rel target = $region3
    $region8: #{tpu_custom_call.1} parent=1 // loop_exit
      _
    %7097 = vsyncpa [#allocation5], 1
    %s7098 = scalar_lea.sflag [#allocation5], 1
    %7099 = vsyncpa %s7098, 1
    %7100 = vsyncpa [#allocation8], 1
    %7101 = vsyncpa [#allocation6], 1
    %s7102 = scalar_lea.sflag [#allocation6], 1
    %7103 = vsyncpa %s7102, 1

</llo_original>
